<compile_context>
chip_gen: v7x
topology: tpu7x:2x2x1
jax: 0.10.0
libtpu: 0.0.40
codegen_flags: <defaults>
</compile_context>

<pallas_src>
import jax
import jax.numpy as jnp
from jax.experimental import pallas as pl
from jax.experimental.pallas import tpu as pltpu


# ----------------------------------------------------------------------------
# Fused network kernel (one grid step = one batch tile, fully VMEM-resident)
# ----------------------------------------------------------------------------
def _mycnn_fused_kernel(col1_ref, w1_ref, b1_ref, w2_ref, b2_ref, w3_ref, b3_ref,
                        fc1w_ref, fc1b_ref, fc2w_ref, fc2b_ref,
                        out_ref,
                        y1_ref, a1_ref, col2_ref, y2_ref, a2_ref, col3_ref,
                        y3_ref, f1col_ref):
    B = out_ref.shape[0]
    f32 = jnp.float32

    def conv3x3_relu_fusedK(ap_ref, col_ref, w_ref, b_ref, y_ref):
        """y_ref = relu(conv3x3(ap) + b) via ONE K=9*Cin matmul.
        ap_ref is the zero-padded NHWC input; col_ref is the im2col scratch
        [B*H*W, 9*Cin] built with 9 lane-aligned slab writes (Cin divides 128)."""
        B_, H, W, Cout = y_ref.shape
        Cin = ap_ref.shape[-1]
        for t in range(9):                       # static python loop (unrolled)
            dh, dw = t // 3, t % 3
            patch = ap_ref[:, dh:dh + H, dw:dw + W, :]          # [B,H,W,Cin]
            col_ref[:, t * Cin:(t + 1) * Cin] = patch.reshape(B_ * H * W, Cin)
        y = jnp.dot(col_ref[...], w_ref[...], preferred_element_type=f32)
        y = jnp.maximum(y + b_ref[...], 0.0)
        y_ref[...] = y.reshape(B_, H, W, Cout)

    def maxpool_2x2(y_ref):
        """F.max_pool2d(y, 2, 2) -> [B, H//2, W//2, C] (VPU max only).
        Keeps the previously-validated lowering pattern: strided read on W,
        leading-dim split + reduce on H (C stays on the lane axis)."""
        B_, H, W, C = y_ref.shape
        Ho, Wo = H // 2, W // 2
        yw = jnp.maximum(y_ref[:, :, pl.ds(0, Wo, 2), :],
                         y_ref[:, :, pl.ds(1, Wo, 2), :])       # [B, H, Wo, C]
        return jnp.max(yw.reshape(B_, Ho, 2, Wo, C), axis=2)    # [B, Ho, Wo, C]

    def zero_border(ref):
        """Zero only the 1-pixel border ring (interior is overwritten below)."""
        B_, Hp, Wp, C = ref.shape
        zrow = jnp.zeros((B_, 1, Wp, C), f32)
        zcol = jnp.zeros((B_, Hp, 1, C), f32)
        ref[:, 0:1, :, :] = zrow
        ref[:, Hp - 1:Hp, :, :] = zrow
        ref[:, :, 0:1, :] = zcol
        ref[:, :, Wp - 1:Wp, :] = zcol

    # ---- conv1 -> relu (im2col precomputed in wrapper; one K=27 matmul) -----
    c1 = col1_ref[...].reshape(B * 32 * 32, 27)
    y = jnp.dot(c1, w1_ref[...], preferred_element_type=f32)
    y1_ref[...] = jnp.maximum(y + b1_ref[...], 0.0).reshape(B, 32, 32, 16)

    # ---- pool1 -> zero-padded activation ------------------------------------
    zero_border(a1_ref)
    a1_ref[:, 1:17, 1:17, :] = maxpool_2x2(y1_ref)              # [B,16,16,16]

    # ---- conv2 -> relu -> pool (one K=144 matmul) ---------------------------
    conv3x3_relu_fusedK(a1_ref, col2_ref, w2_ref, b2_ref, y2_ref)
    zero_border(a2_ref)
    a2_ref[:, 1:9, 1:9, :] = maxpool_2x2(y2_ref)                # [B, 8, 8,32]

    # ---- conv3 -> relu -> pool (one K=288 matmul) ---------------------------
    conv3x3_relu_fusedK(a2_ref, col3_ref, w3_ref, b3_ref, y3_ref)
    p3 = maxpool_2x2(y3_ref)                                    # [B, 4, 4,64]

    # ---- fc1 + ReLU: flatten to (h, w, c) order and do ONE K=1024 matmul ----
    for t in range(16):
        h, w = t // 4, t % 4
        f1col_ref[:, t * 64:(t + 1) * 64] = p3[:, h, w, :]      # lane-aligned
    h1 = jnp.dot(f1col_ref[...], fc1w_ref[...], preferred_element_type=f32)
    h1 = jnp.maximum(h1 + fc1b_ref[...], 0.0)

    # dropout(p=0.5) is identity in eval/inference mode.

    # ---- fc2 ----------------------------------------------------------------
    logits = jnp.dot(h1, fc2w_ref[...], preferred_element_type=f32)
    out_ref[...] = logits + fc2b_ref[...]


# ----------------------------------------------------------------------------
# Parameters: PyTorch layout init + one-time re-layout for the kernel
# ----------------------------------------------------------------------------
def init_params(key):
    """PyTorch-layout parameters, PyTorch-style uniform(+-1/sqrt(fan_in))."""
    def uni(k, shape, fan_in):
        bound = 1.0 / float(fan_in) ** 0.5
        return jax.random.uniform(k, shape, jnp.float32, -bound, bound)

    ks = jax.random.split(key, 10)
    return {
        "conv1_w": uni(ks[0], (16, 3, 3, 3), 3 * 9),
        "conv1_b": uni(ks[1], (16,), 3 * 9),
        "conv2_w": uni(ks[2], (32, 16, 3, 3), 16 * 9),
        "conv2_b": uni(ks[3], (32,), 16 * 9),
        "conv3_w": uni(ks[4], (64, 32, 3, 3), 32 * 9),
        "conv3_b": uni(ks[5], (64,), 32 * 9),
        "fc1_w":   uni(ks[6], (500, 4 * 4 * 64), 4 * 4 * 64),
        "fc1_b":   uni(ks[7], (500,), 4 * 4 * 64),
        "fc2_w":   uni(ks[8], (10, 500), 500),
        "fc2_b":   uni(ks[9], (10,), 500),
    }


def prepare_params(p):
    """One-time re-layout of PyTorch weights into the kernel's layout
    (done at init so no per-forward transposes hit HBM)."""
    def conv_w(w):  # [Cout, Cin, 3, 3] -> [9*Cin, Cout], rows in (dh,dw,cin) order
        cout, cin = w.shape[0], w.shape[1]
        return jnp.transpose(w, (2, 3, 1, 0)).reshape(9 * cin, cout)

    # PyTorch fc1 consumes the NCHW flatten (c*16 + h*4 + w); our flatten is
    # (h, w, c), so permute the weight's input axis to that order once here.
    fc1w = p["fc1_w"].reshape(500, 64, 4, 4)           # [n, c, h, w]
    fc1w = jnp.transpose(fc1w, (2, 3, 1, 0))           # [h, w, c, n]
    fc1w = fc1w.reshape(4 * 4 * 64, 500)               # [(h,w,c), n]

    return {
        "w1": conv_w(p["conv1_w"]), "b1": p["conv1_b"].reshape(1, 16),
        "w2": conv_w(p["conv2_w"]), "b2": p["conv2_b"].reshape(1, 32),
        "w3": conv_w(p["conv3_w"]), "b3": p["conv3_b"].reshape(1, 64),
        "fc1w": fc1w,               "fc1b": p["fc1_b"].reshape(1, 500),
        "fc2w": p["fc2_w"].T,       "fc2b": p["fc2_b"].reshape(1, 10),
    }


# ----------------------------------------------------------------------------
# Forward pass (matches MyCNN.forward in eval mode)
# ----------------------------------------------------------------------------
def mycnn_forward(x_nchw, kparams, *, max_batch_tile=8):
    B = x_nchw.shape[0]
    x = jnp.transpose(x_nchw, (0, 2, 3, 1)).astype(jnp.float32)   # NCHW -> NHWC
    xp = jnp.pad(x, ((0, 0), (1, 1), (1, 1), (0, 0)))             # [B,34,34,3]

    # conv1 im2col done here (input-layout preprocessing): Cin=3 is pathological
    # for both the MXU contraction depth and the VMEM lane layout, so ship the
    # kernel a [B, 1024, 27] slab instead of the raw padded image.
    cols = [xp[:, dh:dh + 32, dw:dw + 32, :] for dh in range(3) for dw in range(3)]
    col1 = jnp.concatenate(cols, axis=-1).reshape(B, 32 * 32, 27)  # (dh,dw,cin)

    # Batch tiling: one VMEM-resident block when small, else chunks of
    # `max_batch_tile` (default 8: ~25 MiB/step, fits v5e/v6e and v7x's VMEM;
    # v5e/v6e users may raise the tile + vmem_limit_bytes together).
    tb = min(B, max_batch_tile)
    Bp = pl.cdiv(B, tb) * tb
    if Bp != B:
        col1 = jnp.pad(col1, ((0, Bp - B), (0, 0), (0, 0)))

    p = kparams
    f32 = jnp.float32
    out = pl.pallas_call(
        _mycnn_fused_kernel,
        out_shape=jax.ShapeDtypeStruct((Bp, 10), f32),
        grid=(Bp // tb,),
        in_specs=[
            pl.BlockSpec((tb, 1024, 27), lambda i: (i, 0, 0)),   # conv1 im2col
            pl.BlockSpec((27, 16),       lambda i: (0, 0)),      # w1 [9*3, 16]
            pl.BlockSpec((1, 16),        lambda i: (0, 0)),
            pl.BlockSpec((144, 32),      lambda i: (0, 0)),      # w2 [9*16, 32]
            pl.BlockSpec((1, 32),        lambda i: (0, 0)),
            pl.BlockSpec((288, 64),      lambda i: (0, 0)),      # w3 [9*32, 64]
            pl.BlockSpec((1, 64),        lambda i: (0, 0)),
            pl.BlockSpec((1024, 500),    lambda i: (0, 0)),      # fc1w
            pl.BlockSpec((1, 500),       lambda i: (0, 0)),
            pl.BlockSpec((500, 10),      lambda i: (0, 0)),      # fc2w
            pl.BlockSpec((1, 10),        lambda i: (0, 0)),
        ],
        out_specs=pl.BlockSpec((tb, 10), lambda i: (i, 0)),
        scratch_shapes=[
            pltpu.VMEM((tb, 32, 32, 16), f32),        # y1: conv1 out (pre-pool)
            pltpu.VMEM((tb, 18, 18, 16), f32),        # a1: pooled conv1, padded
            pltpu.VMEM((tb * 16 * 16, 9 * 16), f32),  # col2: conv2 im2col
            pltpu.VMEM((tb, 16, 16, 32), f32),        # y2: conv2 out (pre-pool)
            pltpu.VMEM((tb, 10, 10, 32), f32),        # a2: pooled conv2, padded
            pltpu.VMEM((tb * 8 * 8, 9 * 32), f32),    # col3: conv3 im2col
            pltpu.VMEM((tb, 8, 8, 64), f32),          # y3: conv3 out (pre-pool)
            pltpu.VMEM((tb, 4 * 4 * 64), f32),        # f1col: fc1 input slab
        ],
        compiler_params=pltpu.CompilerParams(
            dimension_semantics=("parallel",),        # shard batch tiles on 2xTC
            vmem_limit_bytes=48 * 1024 * 1024,        # safe on v5e/v6e/v7x
        ),
    )(col1, p["w1"], p["b1"], p["w2"], p["b2"], p["w3"], p["b3"],
      p["fc1w"], p["fc1b"], p["fc2w"], p["fc2b"])
    return out[:B]


# ----------------------------------------------------------------------------
# Pure-JAX (XLA) reference for validation
# ----------------------------------------------------------------------------
def _reference_forward(x_nchw, p):
    def conv_relu(x, w, b):            # x: NHWC, w: [Cout, Cin, 3, 3]
        B, H, W, Cin = x.shape
        xp = jnp.pad(x, ((0, 0), (1, 1), (1, 1), (0, 0)))
        cols = [xp[:, dh:dh + H, dw:dw + W, :]
                for dh in range(3) for dw in range(3)]
        A = jnp.stack(cols, axis=3).reshape(B * H * W, 9 * Cin)
        Wm = jnp.transpose(w, (2, 3, 1, 0)).reshape(9 * Cin, w.shape[0])
        return jnp.maximum(A @ Wm + b, 0.0).reshape(B, H, W, w.shape[0])

    def pool(x):
        B, H, W, C = x.shape
        return jnp.max(x.reshape(B, H // 2, 2, W // 2, 2, C), axis=(2, 4))

    x = jnp.transpose(x_nchw, (0, 2, 3, 1)).astype(jnp.float32)
    x = pool(conv_relu(x, p["conv1_w"], p["conv1_b"]))
    x = pool(conv_relu(x, p["conv2_w"], p["conv2_b"]))
    x = pool(conv_relu(x, p["conv3_w"], p["conv3_b"]))
    B = x.shape[0]
    x = jnp.transpose(x, (0, 3, 1, 2)).reshape(B, 4 * 4 * 64)   # NCHW flatten
    x = jnp.maximum(x @ p["fc1_w"].T + p["fc1_b"], 0.0)         # dropout = id
    return x @ p["fc2_w"].T + p["fc2_b"]


if __name__ == "__main__":
    key = jax.random.PRNGKey(0)
    pkey, xkey = jax.random.split(key)
    torch_params = init_params(pkey)
    kparams = prepare_params(torch_params)
    # fc1 expects 4*4*64 after three /2 pools => 32x32 spatial input, 3 chans.
    x = jax.random.normal(xkey, (2, 3, 32, 32), dtype=jnp.float32)

    out = jax.block_until_ready(jax.jit(mycnn_forward)(x, kparams))
    ref = jax.block_until_ready(_reference_forward(x, torch_params))

    assert out.shape == (2, 10) and out.dtype == jnp.float32
    assert jnp.allclose(out, ref, atol=1e-3, rtol=1e-3)
    print("KERNEL_OK")
</pallas_src>

<mosaic_0001>
module attributes {stable_mosaic.version = 11 : i64} {
  func.func @_mycnn_fused_kernel(%arg0: i32, %arg1: memref<2x1024x27xf32, #tpu.memory_space<vmem>>, %arg2: memref<27x16xf32, #tpu.memory_space<vmem>>, %arg3: memref<1x16xf32, #tpu.memory_space<vmem>>, %arg4: memref<144x32xf32, #tpu.memory_space<vmem>>, %arg5: memref<1x32xf32, #tpu.memory_space<vmem>>, %arg6: memref<288x64xf32, #tpu.memory_space<vmem>>, %arg7: memref<1x64xf32, #tpu.memory_space<vmem>>, %arg8: memref<1024x500xf32, #tpu.memory_space<vmem>>, %arg9: memref<1x500xf32, #tpu.memory_space<vmem>>, %arg10: memref<500x10xf32, #tpu.memory_space<vmem>>, %arg11: memref<1x10xf32, #tpu.memory_space<vmem>>, %arg12: memref<2x10xf32, #tpu.memory_space<vmem>>, %arg13: memref<2x32x32x16xf32, #tpu.memory_space<vmem>>, %arg14: memref<2x18x18x16xf32, #tpu.memory_space<vmem>>, %arg15: memref<512x144xf32, #tpu.memory_space<vmem>>, %arg16: memref<2x16x16x32xf32, #tpu.memory_space<vmem>>, %arg17: memref<2x10x10x32xf32, #tpu.memory_space<vmem>>, %arg18: memref<128x288xf32, #tpu.memory_space<vmem>>, %arg19: memref<2x8x8x64xf32, #tpu.memory_space<vmem>>, %arg20: memref<2x1024xf32, #tpu.memory_space<vmem>>) attributes {dimension_semantics = [#tpu.dimension_semantics<parallel>], iteration_bounds = array<i64: 1>, scalar_prefetch = 0 : i64, scratch_operands = 8 : i64, tpu.core_type = #tpu.core_type<tc>, window_params = [{transform_indices = @transform_0, window_bounds = array<i64: 2, 1024, 27>}, {pipeline_mode = #tpu.pipeline_mode<synchronous>, transform_indices = @transform_1, window_bounds = array<i64: 27, 16>}, {pipeline_mode = #tpu.pipeline_mode<synchronous>, transform_indices = @transform_2, window_bounds = array<i64: 1, 16>}, {pipeline_mode = #tpu.pipeline_mode<synchronous>, transform_indices = @transform_3, window_bounds = array<i64: 144, 32>}, {pipeline_mode = #tpu.pipeline_mode<synchronous>, transform_indices = @transform_4, window_bounds = array<i64: 1, 32>}, {pipeline_mode = #tpu.pipeline_mode<synchronous>, transform_indices = @transform_5, window_bounds = array<i64: 288, 64>}, {pipeline_mode = #tpu.pipeline_mode<synchronous>, transform_indices = @transform_6, window_bounds = array<i64: 1, 64>}, {pipeline_mode = #tpu.pipeline_mode<synchronous>, transform_indices = @transform_7, window_bounds = array<i64: 1024, 500>}, {pipeline_mode = #tpu.pipeline_mode<synchronous>, transform_indices = @transform_8, window_bounds = array<i64: 1, 500>}, {pipeline_mode = #tpu.pipeline_mode<synchronous>, transform_indices = @transform_9, window_bounds = array<i64: 500, 10>}, {pipeline_mode = #tpu.pipeline_mode<synchronous>, transform_indices = @transform_10, window_bounds = array<i64: 1, 10>}, {transform_indices = @transform_11, window_bounds = array<i64: 2, 10>}]} {
    %c0 = arith.constant 0 : index
    %c0_0 = arith.constant 0 : index
    %c0_1 = arith.constant 0 : index
    %0 = vector.load %arg1[%c0, %c0_0, %c0_1] : memref<2x1024x27xf32, #tpu.memory_space<vmem>>, vector<2x1024x27xf32>
    %1 = vector.shape_cast %0 : vector<2x1024x27xf32> to vector<2048x27xf32>
    %c0_2 = arith.constant 0 : index
    %c0_3 = arith.constant 0 : index
    %2 = vector.load %arg2[%c0_2, %c0_3] : memref<27x16xf32, #tpu.memory_space<vmem>>, vector<27x16xf32>
    %cst = arith.constant dense<0.000000e+00> : vector<2048x16xf32>
    %3 = tpu.matmul %1, %2, %cst {dimension_numbers = #tpu.dot_dimension_numbers<[1], [0], [0], [1], [0, 0, 1, 1], [], []>} : vector<2048x27xf32>, vector<27x16xf32>, vector<2048x16xf32> -> vector<2048x16xf32>
    %c0_4 = arith.constant 0 : index
    %c0_5 = arith.constant 0 : index
    %4 = vector.load %arg3[%c0_4, %c0_5] : memref<1x16xf32, #tpu.memory_space<vmem>>, vector<1x16xf32>
    %5 = vector.broadcast %4 : vector<1x16xf32> to vector<2048x16xf32>
    %6 = arith.addf %3, %5 : vector<2048x16xf32>
    %cst_6 = arith.constant 0.000000e+00 : f32
    %7 = vector.broadcast %cst_6 : f32 to vector<2048x16xf32>
    %8 = arith.maximumf %6, %7 : vector<2048x16xf32>
    %9 = vector.shape_cast %8 : vector<2048x16xf32> to vector<2x32x32x16xf32>
    %c0_7 = arith.constant 0 : index
    %c0_8 = arith.constant 0 : index
    %c0_9 = arith.constant 0 : index
    %c0_10 = arith.constant 0 : index
    %10 = vector.load %arg13[%c0_7, %c0_8, %c0_9, %c0_10] : memref<2x32x32x16xf32, #tpu.memory_space<vmem>>, vector<2x32x32x16xf32>
    tpu.vector_store %arg13[%c0_7, %c0_8, %c0_9, %c0_10], %9 {strides = array<i32>} : memref<2x32x32x16xf32, #tpu.memory_space<vmem>>, vector<2x32x32x16xf32>,
    %cst_11 = arith.constant 0.000000e+00 : f32
    %11 = vector.broadcast %cst_11 : f32 to vector<2x1x18x16xf32>
    %cst_12 = arith.constant 0.000000e+00 : f32
    %12 = vector.broadcast %cst_12 : f32 to vector<2x18x1x16xf32>
    %c0_13 = arith.constant 0 : index
    %c0_14 = arith.constant 0 : index
    %c0_15 = arith.constant 0 : index
    %c0_16 = arith.constant 0 : index
    %13 = vector.load %arg14[%c0_13, %c0_14, %c0_15, %c0_16] : memref<2x18x18x16xf32, #tpu.memory_space<vmem>>, vector<2x1x18x16xf32>
    tpu.vector_store %arg14[%c0_13, %c0_14, %c0_15, %c0_16], %11 {strides = array<i32>} : memref<2x18x18x16xf32, #tpu.memory_space<vmem>>, vector<2x1x18x16xf32>,
    %c0_17 = arith.constant 0 : index
    %c17 = arith.constant 17 : index
    %c0_18 = arith.constant 0 : index
    %c0_19 = arith.constant 0 : index
    %14 = vector.load %arg14[%c0_17, %c17, %c0_18, %c0_19] : memref<2x18x18x16xf32, #tpu.memory_space<vmem>>, vector<2x1x18x16xf32>
    tpu.vector_store %arg14[%c0_17, %c17, %c0_18, %c0_19], %11 {strides = array<i32>} : memref<2x18x18x16xf32, #tpu.memory_space<vmem>>, vector<2x1x18x16xf32>,
    %c0_20 = arith.constant 0 : index
    %c0_21 = arith.constant 0 : index
    %c0_22 = arith.constant 0 : index
    %c0_23 = arith.constant 0 : index
    %15 = vector.load %arg14[%c0_20, %c0_21, %c0_22, %c0_23] : memref<2x18x18x16xf32, #tpu.memory_space<vmem>>, vector<2x18x1x16xf32>
    tpu.vector_store %arg14[%c0_20, %c0_21, %c0_22, %c0_23], %12 {strides = array<i32>} : memref<2x18x18x16xf32, #tpu.memory_space<vmem>>, vector<2x18x1x16xf32>,
    %c0_24 = arith.constant 0 : index
    %c0_25 = arith.constant 0 : index
    %c17_26 = arith.constant 17 : index
    %c0_27 = arith.constant 0 : index
    %16 = vector.load %arg14[%c0_24, %c0_25, %c17_26, %c0_27] : memref<2x18x18x16xf32, #tpu.memory_space<vmem>>, vector<2x18x1x16xf32>
    tpu.vector_store %arg14[%c0_24, %c0_25, %c17_26, %c0_27], %12 {strides = array<i32>} : memref<2x18x18x16xf32, #tpu.memory_space<vmem>>, vector<2x18x1x16xf32>,
    %c0_28 = arith.constant 0 : index
    %c0_29 = arith.constant 0 : index
    %c0_30 = arith.constant 0 : index
    %c0_31 = arith.constant 0 : index
    %17 = tpu.strided_load %arg13[%c0_28, %c0_29, %c0_30, %c0_31] {strides = array<i32: 1, 1, 2, 1>} : memref<2x32x32x16xf32, #tpu.memory_space<vmem>>, vector<2x32x16x16xf32>
    %c0_32 = arith.constant 0 : index
    %c0_33 = arith.constant 0 : index
    %c1 = arith.constant 1 : index
    %c0_34 = arith.constant 0 : index
    %18 = tpu.strided_load %arg13[%c0_32, %c0_33, %c1, %c0_34] {strides = array<i32: 1, 1, 2, 1>} : memref<2x32x32x16xf32, #tpu.memory_space<vmem>>, vector<2x32x16x16xf32>
    %19 = arith.maximumf %17, %18 : vector<2x32x16x16xf32>
    %20 = vector.shape_cast %19 : vector<2x32x16x16xf32> to vector<2x16x2x16x16xf32>
    %cst_35 = arith.constant dense<0xFF800000> : vector<2x16x16x16xf32>
    %21 = vector.multi_reduction <maximumf>, %20, %cst_35 [2] : vector<2x16x2x16x16xf32> to vector<2x16x16x16xf32>
    %c0_36 = arith.constant 0 : index
    %c1_37 = arith.constant 1 : index
    %c1_38 = arith.constant 1 : index
    %c0_39 = arith.constant 0 : index
    %22 = vector.load %arg14[%c0_36, %c1_37, %c1_38, %c0_39] : memref<2x18x18x16xf32, #tpu.memory_space<vmem>>, vector<2x16x16x16xf32>
    tpu.vector_store %arg14[%c0_36, %c1_37, %c1_38, %c0_39], %21 {strides = array<i32>} : memref<2x18x18x16xf32, #tpu.memory_space<vmem>>, vector<2x16x16x16xf32>,
    %c0_40 = arith.constant 0 : index
    %c0_41 = arith.constant 0 : index
    %c0_42 = arith.constant 0 : index
    %c0_43 = arith.constant 0 : index
    %23 = vector.load %arg14[%c0_40, %c0_41, %c0_42, %c0_43] : memref<2x18x18x16xf32, #tpu.memory_space<vmem>>, vector<2x16x16x16xf32>
    %24 = vector.shape_cast %23 : vector<2x16x16x16xf32> to vector<512x16xf32>
    %c0_44 = arith.constant 0 : index
    %c0_45 = arith.constant 0 : index
    %25 = vector.load %arg15[%c0_44, %c0_45] : memref<512x144xf32, #tpu.memory_space<vmem>>, vector<512x16xf32>
    tpu.vector_store %arg15[%c0_44, %c0_45], %24 {strides = array<i32>} : memref<512x144xf32, #tpu.memory_space<vmem>>, vector<512x16xf32>,
    %c0_46 = arith.constant 0 : index
    %c0_47 = arith.constant 0 : index
    %c1_48 = arith.constant 1 : index
    %c0_49 = arith.constant 0 : index
    %26 = vector.load %arg14[%c0_46, %c0_47, %c1_48, %c0_49] : memref<2x18x18x16xf32, #tpu.memory_space<vmem>>, vector<2x16x16x16xf32>
    %27 = vector.shape_cast %26 : vector<2x16x16x16xf32> to vector<512x16xf32>
    %c0_50 = arith.constant 0 : index
    %c16 = arith.constant 16 : index
    %28 = vector.load %arg15[%c0_50, %c16] : memref<512x144xf32, #tpu.memory_space<vmem>>, vector<512x16xf32>
    tpu.vector_store %arg15[%c0_50, %c16], %27 {strides = array<i32>} : memref<512x144xf32, #tpu.memory_space<vmem>>, vector<512x16xf32>,
    %c0_51 = arith.constant 0 : index
    %c0_52 = arith.constant 0 : index
    %c2 = arith.constant 2 : index
    %c0_53 = arith.constant 0 : index
    %29 = vector.load %arg14[%c0_51, %c0_52, %c2, %c0_53] : memref<2x18x18x16xf32, #tpu.memory_space<vmem>>, vector<2x16x16x16xf32>
    %30 = vector.shape_cast %29 : vector<2x16x16x16xf32> to vector<512x16xf32>
    %c0_54 = arith.constant 0 : index
    %c32 = arith.constant 32 : index
    %31 = vector.load %arg15[%c0_54, %c32] : memref<512x144xf32, #tpu.memory_space<vmem>>, vector<512x16xf32>
    tpu.vector_store %arg15[%c0_54, %c32], %30 {strides = array<i32>} : memref<512x144xf32, #tpu.memory_space<vmem>>, vector<512x16xf32>,
    %c0_55 = arith.constant 0 : index
    %c1_56 = arith.constant 1 : index
    %c0_57 = arith.constant 0 : index
    %c0_58 = arith.constant 0 : index
    %32 = vector.load %arg14[%c0_55, %c1_56, %c0_57, %c0_58] : memref<2x18x18x16xf32, #tpu.memory_space<vmem>>, vector<2x16x16x16xf32>
    %33 = vector.shape_cast %32 : vector<2x16x16x16xf32> to vector<512x16xf32>
    %c0_59 = arith.constant 0 : index
    %c48 = arith.constant 48 : index
    %34 = vector.load %arg15[%c0_59, %c48] : memref<512x144xf32, #tpu.memory_space<vmem>>, vector<512x16xf32>
    tpu.vector_store %arg15[%c0_59, %c48], %33 {strides = array<i32>} : memref<512x144xf32, #tpu.memory_space<vmem>>, vector<512x16xf32>,
    %c0_60 = arith.constant 0 : index
    %c1_61 = arith.constant 1 : index
    %c1_62 = arith.constant 1 : index
    %c0_63 = arith.constant 0 : index
    %35 = vector.load %arg14[%c0_60, %c1_61, %c1_62, %c0_63] : memref<2x18x18x16xf32, #tpu.memory_space<vmem>>, vector<2x16x16x16xf32>
    %36 = vector.shape_cast %35 : vector<2x16x16x16xf32> to vector<512x16xf32>
    %c0_64 = arith.constant 0 : index
    %c64 = arith.constant 64 : index
    %37 = vector.load %arg15[%c0_64, %c64] : memref<512x144xf32, #tpu.memory_space<vmem>>, vector<512x16xf32>
    tpu.vector_store %arg15[%c0_64, %c64], %36 {strides = array<i32>} : memref<512x144xf32, #tpu.memory_space<vmem>>, vector<512x16xf32>,
    %c0_65 = arith.constant 0 : index
    %c1_66 = arith.constant 1 : index
    %c2_67 = arith.constant 2 : index
    %c0_68 = arith.constant 0 : index
    %38 = vector.load %arg14[%c0_65, %c1_66, %c2_67, %c0_68] : memref<2x18x18x16xf32, #tpu.memory_space<vmem>>, vector<2x16x16x16xf32>
    %39 = vector.shape_cast %38 : vector<2x16x16x16xf32> to vector<512x16xf32>
    %c0_69 = arith.constant 0 : index
    %c80 = arith.constant 80 : index
    %40 = vector.load %arg15[%c0_69, %c80] : memref<512x144xf32, #tpu.memory_space<vmem>>, vector<512x16xf32>
    tpu.vector_store %arg15[%c0_69, %c80], %39 {strides = array<i32>} : memref<512x144xf32, #tpu.memory_space<vmem>>, vector<512x16xf32>,
    %c0_70 = arith.constant 0 : index
    %c2_71 = arith.constant 2 : index
    %c0_72 = arith.constant 0 : index
    %c0_73 = arith.constant 0 : index
    %41 = vector.load %arg14[%c0_70, %c2_71, %c0_72, %c0_73] : memref<2x18x18x16xf32, #tpu.memory_space<vmem>>, vector<2x16x16x16xf32>
    %42 = vector.shape_cast %41 : vector<2x16x16x16xf32> to vector<512x16xf32>
    %c0_74 = arith.constant 0 : index
    %c96 = arith.constant 96 : index
    %43 = vector.load %arg15[%c0_74, %c96] : memref<512x144xf32, #tpu.memory_space<vmem>>, vector<512x16xf32>
    tpu.vector_store %arg15[%c0_74, %c96], %42 {strides = array<i32>} : memref<512x144xf32, #tpu.memory_space<vmem>>, vector<512x16xf32>,
    %c0_75 = arith.constant 0 : index
    %c2_76 = arith.constant 2 : index
    %c1_77 = arith.constant 1 : index
    %c0_78 = arith.constant 0 : index
    %44 = vector.load %arg14[%c0_75, %c2_76, %c1_77, %c0_78] : memref<2x18x18x16xf32, #tpu.memory_space<vmem>>, vector<2x16x16x16xf32>
    %45 = vector.shape_cast %44 : vector<2x16x16x16xf32> to vector<512x16xf32>
    %c0_79 = arith.constant 0 : index
    %c112 = arith.constant 112 : index
    %46 = vector.load %arg15[%c0_79, %c112] : memref<512x144xf32, #tpu.memory_space<vmem>>, vector<512x16xf32>
    tpu.vector_store %arg15[%c0_79, %c112], %45 {strides = array<i32>} : memref<512x144xf32, #tpu.memory_space<vmem>>, vector<512x16xf32>,
    %c0_80 = arith.constant 0 : index
    %c2_81 = arith.constant 2 : index
    %c2_82 = arith.constant 2 : index
    %c0_83 = arith.constant 0 : index
    %47 = vector.load %arg14[%c0_80, %c2_81, %c2_82, %c0_83] : memref<2x18x18x16xf32, #tpu.memory_space<vmem>>, vector<2x16x16x16xf32>
    %48 = vector.shape_cast %47 : vector<2x16x16x16xf32> to vector<512x16xf32>
    %c0_84 = arith.constant 0 : index
    %c128 = arith.constant 128 : index
    %49 = vector.load %arg15[%c0_84, %c128] : memref<512x144xf32, #tpu.memory_space<vmem>>, vector<512x16xf32>
    tpu.vector_store %arg15[%c0_84, %c128], %48 {strides = array<i32>} : memref<512x144xf32, #tpu.memory_space<vmem>>, vector<512x16xf32>,
    %c0_85 = arith.constant 0 : index
    %c0_86 = arith.constant 0 : index
    %50 = vector.load %arg15[%c0_85, %c0_86] : memref<512x144xf32, #tpu.memory_space<vmem>>, vector<512x144xf32>
    %c0_87 = arith.constant 0 : index
    %c0_88 = arith.constant 0 : index
    %51 = vector.load %arg4[%c0_87, %c0_88] : memref<144x32xf32, #tpu.memory_space<vmem>>, vector<144x32xf32>
    %cst_89 = arith.constant dense<0.000000e+00> : vector<512x32xf32>
    %52 = tpu.matmul %50, %51, %cst_89 {dimension_numbers = #tpu.dot_dimension_numbers<[1], [0], [0], [1], [0, 0, 1, 1], [], []>} : vector<512x144xf32>, vector<144x32xf32>, vector<512x32xf32> -> vector<512x32xf32>
    %c0_90 = arith.constant 0 : index
    %c0_91 = arith.constant 0 : index
    %53 = vector.load %arg5[%c0_90, %c0_91] : memref<1x32xf32, #tpu.memory_space<vmem>>, vector<1x32xf32>
    %54 = vector.broadcast %53 : vector<1x32xf32> to vector<512x32xf32>
    %55 = arith.addf %52, %54 : vector<512x32xf32>
    %cst_92 = arith.constant 0.000000e+00 : f32
    %56 = vector.broadcast %cst_92 : f32 to vector<512x32xf32>
    %57 = arith.maximumf %55, %56 : vector<512x32xf32>
    %58 = vector.shape_cast %57 : vector<512x32xf32> to vector<2x16x16x32xf32>
    %c0_93 = arith.constant 0 : index
    %c0_94 = arith.constant 0 : index
    %c0_95 = arith.constant 0 : index
    %c0_96 = arith.constant 0 : index
    %59 = vector.load %arg16[%c0_93, %c0_94, %c0_95, %c0_96] : memref<2x16x16x32xf32, #tpu.memory_space<vmem>>, vector<2x16x16x32xf32>
    tpu.vector_store %arg16[%c0_93, %c0_94, %c0_95, %c0_96], %58 {strides = array<i32>} : memref<2x16x16x32xf32, #tpu.memory_space<vmem>>, vector<2x16x16x32xf32>,
    %cst_97 = arith.constant 0.000000e+00 : f32
    %60 = vector.broadcast %cst_97 : f32 to vector<2x1x10x32xf32>
    %cst_98 = arith.constant 0.000000e+00 : f32
    %61 = vector.broadcast %cst_98 : f32 to vector<2x10x1x32xf32>
    %c0_99 = arith.constant 0 : index
    %c0_100 = arith.constant 0 : index
    %c0_101 = arith.constant 0 : index
    %c0_102 = arith.constant 0 : index
    %62 = vector.load %arg17[%c0_99, %c0_100, %c0_101, %c0_102] : memref<2x10x10x32xf32, #tpu.memory_space<vmem>>, vector<2x1x10x32xf32>
    tpu.vector_store %arg17[%c0_99, %c0_100, %c0_101, %c0_102], %60 {strides = array<i32>} : memref<2x10x10x32xf32, #tpu.memory_space<vmem>>, vector<2x1x10x32xf32>,
    %c0_103 = arith.constant 0 : index
    %c9 = arith.constant 9 : index
    %c0_104 = arith.constant 0 : index
    %c0_105 = arith.constant 0 : index
    %63 = vector.load %arg17[%c0_103, %c9, %c0_104, %c0_105] : memref<2x10x10x32xf32, #tpu.memory_space<vmem>>, vector<2x1x10x32xf32>
    tpu.vector_store %arg17[%c0_103, %c9, %c0_104, %c0_105], %60 {strides = array<i32>} : memref<2x10x10x32xf32, #tpu.memory_space<vmem>>, vector<2x1x10x32xf32>,
    %c0_106 = arith.constant 0 : index
    %c0_107 = arith.constant 0 : index
    %c0_108 = arith.constant 0 : index
    %c0_109 = arith.constant 0 : index
    %64 = vector.load %arg17[%c0_106, %c0_107, %c0_108, %c0_109] : memref<2x10x10x32xf32, #tpu.memory_space<vmem>>, vector<2x10x1x32xf32>
    tpu.vector_store %arg17[%c0_106, %c0_107, %c0_108, %c0_109], %61 {strides = array<i32>} : memref<2x10x10x32xf32, #tpu.memory_space<vmem>>, vector<2x10x1x32xf32>,
    %c0_110 = arith.constant 0 : index
    %c0_111 = arith.constant 0 : index
    %c9_112 = arith.constant 9 : index
    %c0_113 = arith.constant 0 : index
    %65 = vector.load %arg17[%c0_110, %c0_111, %c9_112, %c0_113] : memref<2x10x10x32xf32, #tpu.memory_space<vmem>>, vector<2x10x1x32xf32>
    tpu.vector_store %arg17[%c0_110, %c0_111, %c9_112, %c0_113], %61 {strides = array<i32>} : memref<2x10x10x32xf32, #tpu.memory_space<vmem>>, vector<2x10x1x32xf32>,
    %c0_114 = arith.constant 0 : index
    %c0_115 = arith.constant 0 : index
    %c0_116 = arith.constant 0 : index
    %c0_117 = arith.constant 0 : index
    %66 = tpu.strided_load %arg16[%c0_114, %c0_115, %c0_116, %c0_117] {strides = array<i32: 1, 1, 2, 1>} : memref<2x16x16x32xf32, #tpu.memory_space<vmem>>, vector<2x16x8x32xf32>
    %c0_118 = arith.constant 0 : index
    %c0_119 = arith.constant 0 : index
    %c1_120 = arith.constant 1 : index
    %c0_121 = arith.constant 0 : index
    %67 = tpu.strided_load %arg16[%c0_118, %c0_119, %c1_120, %c0_121] {strides = array<i32: 1, 1, 2, 1>} : memref<2x16x16x32xf32, #tpu.memory_space<vmem>>, vector<2x16x8x32xf32>
    %68 = arith.maximumf %66, %67 : vector<2x16x8x32xf32>
    %69 = vector.shape_cast %68 : vector<2x16x8x32xf32> to vector<2x8x2x8x32xf32>
    %cst_122 = arith.constant dense<0xFF800000> : vector<2x8x8x32xf32>
    %70 = vector.multi_reduction <maximumf>, %69, %cst_122 [2] : vector<2x8x2x8x32xf32> to vector<2x8x8x32xf32>
    %c0_123 = arith.constant 0 : index
    %c1_124 = arith.constant 1 : index
    %c1_125 = arith.constant 1 : index
    %c0_126 = arith.constant 0 : index
    %71 = vector.load %arg17[%c0_123, %c1_124, %c1_125, %c0_126] : memref<2x10x10x32xf32, #tpu.memory_space<vmem>>, vector<2x8x8x32xf32>
    tpu.vector_store %arg17[%c0_123, %c1_124, %c1_125, %c0_126], %70 {strides = array<i32>} : memref<2x10x10x32xf32, #tpu.memory_space<vmem>>, vector<2x8x8x32xf32>,
    %c0_127 = arith.constant 0 : index
    %c0_128 = arith.constant 0 : index
    %c0_129 = arith.constant 0 : index
    %c0_130 = arith.constant 0 : index
    %72 = vector.load %arg17[%c0_127, %c0_128, %c0_129, %c0_130] : memref<2x10x10x32xf32, #tpu.memory_space<vmem>>, vector<2x8x8x32xf32>
    %73 = vector.shape_cast %72 : vector<2x8x8x32xf32> to vector<128x32xf32>
    %c0_131 = arith.constant 0 : index
    %c0_132 = arith.constant 0 : index
    %74 = vector.load %arg18[%c0_131, %c0_132] : memref<128x288xf32, #tpu.memory_space<vmem>>, vector<128x32xf32>
    tpu.vector_store %arg18[%c0_131, %c0_132], %73 {strides = array<i32>} : memref<128x288xf32, #tpu.memory_space<vmem>>, vector<128x32xf32>,
    %c0_133 = arith.constant 0 : index
    %c0_134 = arith.constant 0 : index
    %c1_135 = arith.constant 1 : index
    %c0_136 = arith.constant 0 : index
    %75 = vector.load %arg17[%c0_133, %c0_134, %c1_135, %c0_136] : memref<2x10x10x32xf32, #tpu.memory_space<vmem>>, vector<2x8x8x32xf32>
    %76 = vector.shape_cast %75 : vector<2x8x8x32xf32> to vector<128x32xf32>
    %c0_137 = arith.constant 0 : index
    %c32_138 = arith.constant 32 : index
    %77 = vector.load %arg18[%c0_137, %c32_138] : memref<128x288xf32, #tpu.memory_space<vmem>>, vector<128x32xf32>
    tpu.vector_store %arg18[%c0_137, %c32_138], %76 {strides = array<i32>} : memref<128x288xf32, #tpu.memory_space<vmem>>, vector<128x32xf32>,
    %c0_139 = arith.constant 0 : index
    %c0_140 = arith.constant 0 : index
    %c2_141 = arith.constant 2 : index
    %c0_142 = arith.constant 0 : index
    %78 = vector.load %arg17[%c0_139, %c0_140, %c2_141, %c0_142] : memref<2x10x10x32xf32, #tpu.memory_space<vmem>>, vector<2x8x8x32xf32>
    %79 = vector.shape_cast %78 : vector<2x8x8x32xf32> to vector<128x32xf32>
    %c0_143 = arith.constant 0 : index
    %c64_144 = arith.constant 64 : index
    %80 = vector.load %arg18[%c0_143, %c64_144] : memref<128x288xf32, #tpu.memory_space<vmem>>, vector<128x32xf32>
    tpu.vector_store %arg18[%c0_143, %c64_144], %79 {strides = array<i32>} : memref<128x288xf32, #tpu.memory_space<vmem>>, vector<128x32xf32>,
    %c0_145 = arith.constant 0 : index
    %c1_146 = arith.constant 1 : index
    %c0_147 = arith.constant 0 : index
    %c0_148 = arith.constant 0 : index
    %81 = vector.load %arg17[%c0_145, %c1_146, %c0_147, %c0_148] : memref<2x10x10x32xf32, #tpu.memory_space<vmem>>, vector<2x8x8x32xf32>
    %82 = vector.shape_cast %81 : vector<2x8x8x32xf32> to vector<128x32xf32>
    %c0_149 = arith.constant 0 : index
    %c96_150 = arith.constant 96 : index
    %83 = vector.load %arg18[%c0_149, %c96_150] : memref<128x288xf32, #tpu.memory_space<vmem>>, vector<128x32xf32>
    tpu.vector_store %arg18[%c0_149, %c96_150], %82 {strides = array<i32>} : memref<128x288xf32, #tpu.memory_space<vmem>>, vector<128x32xf32>,
    %c0_151 = arith.constant 0 : index
    %c1_152 = arith.constant 1 : index
    %c1_153 = arith.constant 1 : index
    %c0_154 = arith.constant 0 : index
    %84 = vector.load %arg17[%c0_151, %c1_152, %c1_153, %c0_154] : memref<2x10x10x32xf32, #tpu.memory_space<vmem>>, vector<2x8x8x32xf32>
    %85 = vector.shape_cast %84 : vector<2x8x8x32xf32> to vector<128x32xf32>
    %c0_155 = arith.constant 0 : index
    %c128_156 = arith.constant 128 : index
    %86 = vector.load %arg18[%c0_155, %c128_156] : memref<128x288xf32, #tpu.memory_space<vmem>>, vector<128x32xf32>
    tpu.vector_store %arg18[%c0_155, %c128_156], %85 {strides = array<i32>} : memref<128x288xf32, #tpu.memory_space<vmem>>, vector<128x32xf32>,
    %c0_157 = arith.constant 0 : index
    %c1_158 = arith.constant 1 : index
    %c2_159 = arith.constant 2 : index
    %c0_160 = arith.constant 0 : index
    %87 = vector.load %arg17[%c0_157, %c1_158, %c2_159, %c0_160] : memref<2x10x10x32xf32, #tpu.memory_space<vmem>>, vector<2x8x8x32xf32>
    %88 = vector.shape_cast %87 : vector<2x8x8x32xf32> to vector<128x32xf32>
    %c0_161 = arith.constant 0 : index
    %c160 = arith.constant 160 : index
    %89 = vector.load %arg18[%c0_161, %c160] : memref<128x288xf32, #tpu.memory_space<vmem>>, vector<128x32xf32>
    tpu.vector_store %arg18[%c0_161, %c160], %88 {strides = array<i32>} : memref<128x288xf32, #tpu.memory_space<vmem>>, vector<128x32xf32>,
    %c0_162 = arith.constant 0 : index
    %c2_163 = arith.constant 2 : index
    %c0_164 = arith.constant 0 : index
    %c0_165 = arith.constant 0 : index
    %90 = vector.load %arg17[%c0_162, %c2_163, %c0_164, %c0_165] : memref<2x10x10x32xf32, #tpu.memory_space<vmem>>, vector<2x8x8x32xf32>
    %91 = vector.shape_cast %90 : vector<2x8x8x32xf32> to vector<128x32xf32>
    %c0_166 = arith.constant 0 : index
    %c192 = arith.constant 192 : index
    %92 = vector.load %arg18[%c0_166, %c192] : memref<128x288xf32, #tpu.memory_space<vmem>>, vector<128x32xf32>
    tpu.vector_store %arg18[%c0_166, %c192], %91 {strides = array<i32>} : memref<128x288xf32, #tpu.memory_space<vmem>>, vector<128x32xf32>,
    %c0_167 = arith.constant 0 : index
    %c2_168 = arith.constant 2 : index
    %c1_169 = arith.constant 1 : index
    %c0_170 = arith.constant 0 : index
    %93 = vector.load %arg17[%c0_167, %c2_168, %c1_169, %c0_170] : memref<2x10x10x32xf32, #tpu.memory_space<vmem>>, vector<2x8x8x32xf32>
    %94 = vector.shape_cast %93 : vector<2x8x8x32xf32> to vector<128x32xf32>
    %c0_171 = arith.constant 0 : index
    %c224 = arith.constant 224 : index
    %95 = vector.load %arg18[%c0_171, %c224] : memref<128x288xf32, #tpu.memory_space<vmem>>, vector<128x32xf32>
    tpu.vector_store %arg18[%c0_171, %c224], %94 {strides = array<i32>} : memref<128x288xf32, #tpu.memory_space<vmem>>, vector<128x32xf32>,
    %c0_172 = arith.constant 0 : index
    %c2_173 = arith.constant 2 : index
    %c2_174 = arith.constant 2 : index
    %c0_175 = arith.constant 0 : index
    %96 = vector.load %arg17[%c0_172, %c2_173, %c2_174, %c0_175] : memref<2x10x10x32xf32, #tpu.memory_space<vmem>>, vector<2x8x8x32xf32>
    %97 = vector.shape_cast %96 : vector<2x8x8x32xf32> to vector<128x32xf32>
    %c0_176 = arith.constant 0 : index
    %c256 = arith.constant 256 : index
    %98 = vector.load %arg18[%c0_176, %c256] : memref<128x288xf32, #tpu.memory_space<vmem>>, vector<128x32xf32>
    tpu.vector_store %arg18[%c0_176, %c256], %97 {strides = array<i32>} : memref<128x288xf32, #tpu.memory_space<vmem>>, vector<128x32xf32>,
    %c0_177 = arith.constant 0 : index
    %c0_178 = arith.constant 0 : index
    %99 = vector.load %arg18[%c0_177, %c0_178] : memref<128x288xf32, #tpu.memory_space<vmem>>, vector<128x288xf32>
    %c0_179 = arith.constant 0 : index
    %c0_180 = arith.constant 0 : index
    %100 = vector.load %arg6[%c0_179, %c0_180] : memref<288x64xf32, #tpu.memory_space<vmem>>, vector<288x64xf32>
    %cst_181 = arith.constant dense<0.000000e+00> : vector<128x64xf32>
    %101 = tpu.matmul %99, %100, %cst_181 {dimension_numbers = #tpu.dot_dimension_numbers<[1], [0], [0], [1], [0, 0, 1, 1], [], []>} : vector<128x288xf32>, vector<288x64xf32>, vector<128x64xf32> -> vector<128x64xf32>
    %c0_182 = arith.constant 0 : index
    %c0_183 = arith.constant 0 : index
    %102 = vector.load %arg7[%c0_182, %c0_183] : memref<1x64xf32, #tpu.memory_space<vmem>>, vector<1x64xf32>
    %103 = vector.broadcast %102 : vector<1x64xf32> to vector<128x64xf32>
    %104 = arith.addf %101, %103 : vector<128x64xf32>
    %cst_184 = arith.constant 0.000000e+00 : f32
    %105 = vector.broadcast %cst_184 : f32 to vector<128x64xf32>
    %106 = arith.maximumf %104, %105 : vector<128x64xf32>
    %107 = vector.shape_cast %106 : vector<128x64xf32> to vector<2x8x8x64xf32>
    %c0_185 = arith.constant 0 : index
    %c0_186 = arith.constant 0 : index
    %c0_187 = arith.constant 0 : index
    %c0_188 = arith.constant 0 : index
    %108 = vector.load %arg19[%c0_185, %c0_186, %c0_187, %c0_188] : memref<2x8x8x64xf32, #tpu.memory_space<vmem>>, vector<2x8x8x64xf32>
    tpu.vector_store %arg19[%c0_185, %c0_186, %c0_187, %c0_188], %107 {strides = array<i32>} : memref<2x8x8x64xf32, #tpu.memory_space<vmem>>, vector<2x8x8x64xf32>,
    %c0_189 = arith.constant 0 : index
    %c0_190 = arith.constant 0 : index
    %c0_191 = arith.constant 0 : index
    %c0_192 = arith.constant 0 : index
    %109 = tpu.strided_load %arg19[%c0_189, %c0_190, %c0_191, %c0_192] {strides = array<i32: 1, 1, 2, 1>} : memref<2x8x8x64xf32, #tpu.memory_space<vmem>>, vector<2x8x4x64xf32>
    %c0_193 = arith.constant 0 : index
    %c0_194 = arith.constant 0 : index
    %c1_195 = arith.constant 1 : index
    %c0_196 = arith.constant 0 : index
    %110 = tpu.strided_load %arg19[%c0_193, %c0_194, %c1_195, %c0_196] {strides = array<i32: 1, 1, 2, 1>} : memref<2x8x8x64xf32, #tpu.memory_space<vmem>>, vector<2x8x4x64xf32>
    %111 = arith.maximumf %109, %110 : vector<2x8x4x64xf32>
    %112 = vector.shape_cast %111 : vector<2x8x4x64xf32> to vector<2x4x2x4x64xf32>
    %cst_197 = arith.constant dense<0xFF800000> : vector<2x4x4x64xf32>
    %113 = vector.multi_reduction <maximumf>, %112, %cst_197 [2] : vector<2x4x2x4x64xf32> to vector<2x4x4x64xf32>
    %114 = vector.extract_strided_slice %113 {offsets = [0, 0, 0, 0], sizes = [2, 1, 1, 64], strides = [1, 1, 1, 1]} : vector<2x4x4x64xf32> to vector<2x1x1x64xf32>
    %115 = vector.shape_cast %114 : vector<2x1x1x64xf32> to vector<2x64xf32>
    %c0_198 = arith.constant 0 : index
    %c0_199 = arith.constant 0 : index
    %116 = vector.load %arg20[%c0_198, %c0_199] : memref<2x1024xf32, #tpu.memory_space<vmem>>, vector<2x64xf32>
    tpu.vector_store %arg20[%c0_198, %c0_199], %115 {strides = array<i32>} : memref<2x1024xf32, #tpu.memory_space<vmem>>, vector<2x64xf32>,
    %117 = vector.extract_strided_slice %113 {offsets = [0, 0, 1, 0], sizes = [2, 1, 1, 64], strides = [1, 1, 1, 1]} : vector<2x4x4x64xf32> to vector<2x1x1x64xf32>
    %118 = vector.shape_cast %117 : vector<2x1x1x64xf32> to vector<2x64xf32>
    %c0_200 = arith.constant 0 : index
    %c64_201 = arith.constant 64 : index
    %119 = vector.load %arg20[%c0_200, %c64_201] : memref<2x1024xf32, #tpu.memory_space<vmem>>, vector<2x64xf32>
    tpu.vector_store %arg20[%c0_200, %c64_201], %118 {strides = array<i32>} : memref<2x1024xf32, #tpu.memory_space<vmem>>, vector<2x64xf32>,
    %120 = vector.extract_strided_slice %113 {offsets = [0, 0, 2, 0], sizes = [2, 1, 1, 64], strides = [1, 1, 1, 1]} : vector<2x4x4x64xf32> to vector<2x1x1x64xf32>
    %121 = vector.shape_cast %120 : vector<2x1x1x64xf32> to vector<2x64xf32>
    %c0_202 = arith.constant 0 : index
    %c128_203 = arith.constant 128 : index
    %122 = vector.load %arg20[%c0_202, %c128_203] : memref<2x1024xf32, #tpu.memory_space<vmem>>, vector<2x64xf32>
    tpu.vector_store %arg20[%c0_202, %c128_203], %121 {strides = array<i32>} : memref<2x1024xf32, #tpu.memory_space<vmem>>, vector<2x64xf32>,
    %123 = vector.extract_strided_slice %113 {offsets = [0, 0, 3, 0], sizes = [2, 1, 1, 64], strides = [1, 1, 1, 1]} : vector<2x4x4x64xf32> to vector<2x1x1x64xf32>
    %124 = vector.shape_cast %123 : vector<2x1x1x64xf32> to vector<2x64xf32>
    %c0_204 = arith.constant 0 : index
    %c192_205 = arith.constant 192 : index
    %125 = vector.load %arg20[%c0_204, %c192_205] : memref<2x1024xf32, #tpu.memory_space<vmem>>, vector<2x64xf32>
    tpu.vector_store %arg20[%c0_204, %c192_205], %124 {strides = array<i32>} : memref<2x1024xf32, #tpu.memory_space<vmem>>, vector<2x64xf32>,
    %126 = vector.extract_strided_slice %113 {offsets = [0, 1, 0, 0], sizes = [2, 1, 1, 64], strides = [1, 1, 1, 1]} : vector<2x4x4x64xf32> to vector<2x1x1x64xf32>
    %127 = vector.shape_cast %126 : vector<2x1x1x64xf32> to vector<2x64xf32>
    %c0_206 = arith.constant 0 : index
    %c256_207 = arith.constant 256 : index
    %128 = vector.load %arg20[%c0_206, %c256_207] : memref<2x1024xf32, #tpu.memory_space<vmem>>, vector<2x64xf32>
    tpu.vector_store %arg20[%c0_206, %c256_207], %127 {strides = array<i32>} : memref<2x1024xf32, #tpu.memory_space<vmem>>, vector<2x64xf32>,
    %129 = vector.extract_strided_slice %113 {offsets = [0, 1, 1, 0], sizes = [2, 1, 1, 64], strides = [1, 1, 1, 1]} : vector<2x4x4x64xf32> to vector<2x1x1x64xf32>
    %130 = vector.shape_cast %129 : vector<2x1x1x64xf32> to vector<2x64xf32>
    %c0_208 = arith.constant 0 : index
    %c320 = arith.constant 320 : index
    %131 = vector.load %arg20[%c0_208, %c320] : memref<2x1024xf32, #tpu.memory_space<vmem>>, vector<2x64xf32>
    tpu.vector_store %arg20[%c0_208, %c320], %130 {strides = array<i32>} : memref<2x1024xf32, #tpu.memory_space<vmem>>, vector<2x64xf32>,
    %132 = vector.extract_strided_slice %113 {offsets = [0, 1, 2, 0], sizes = [2, 1, 1, 64], strides = [1, 1, 1, 1]} : vector<2x4x4x64xf32> to vector<2x1x1x64xf32>
    %133 = vector.shape_cast %132 : vector<2x1x1x64xf32> to vector<2x64xf32>
    %c0_209 = arith.constant 0 : index
    %c384 = arith.constant 384 : index
    %134 = vector.load %arg20[%c0_209, %c384] : memref<2x1024xf32, #tpu.memory_space<vmem>>, vector<2x64xf32>
    tpu.vector_store %arg20[%c0_209, %c384], %133 {strides = array<i32>} : memref<2x1024xf32, #tpu.memory_space<vmem>>, vector<2x64xf32>,
    %135 = vector.extract_strided_slice %113 {offsets = [0, 1, 3, 0], sizes = [2, 1, 1, 64], strides = [1, 1, 1, 1]} : vector<2x4x4x64xf32> to vector<2x1x1x64xf32>
    %136 = vector.shape_cast %135 : vector<2x1x1x64xf32> to vector<2x64xf32>
    %c0_210 = arith.constant 0 : index
    %c448 = arith.constant 448 : index
    %137 = vector.load %arg20[%c0_210, %c448] : memref<2x1024xf32, #tpu.memory_space<vmem>>, vector<2x64xf32>
    tpu.vector_store %arg20[%c0_210, %c448], %136 {strides = array<i32>} : memref<2x1024xf32, #tpu.memory_space<vmem>>, vector<2x64xf32>,
    %138 = vector.extract_strided_slice %113 {offsets = [0, 2, 0, 0], sizes = [2, 1, 1, 64], strides = [1, 1, 1, 1]} : vector<2x4x4x64xf32> to vector<2x1x1x64xf32>
    %139 = vector.shape_cast %138 : vector<2x1x1x64xf32> to vector<2x64xf32>
    %c0_211 = arith.constant 0 : index
    %c512 = arith.constant 512 : index
    %140 = vector.load %arg20[%c0_211, %c512] : memref<2x1024xf32, #tpu.memory_space<vmem>>, vector<2x64xf32>
    tpu.vector_store %arg20[%c0_211, %c512], %139 {strides = array<i32>} : memref<2x1024xf32, #tpu.memory_space<vmem>>, vector<2x64xf32>,
    %141 = vector.extract_strided_slice %113 {offsets = [0, 2, 1, 0], sizes = [2, 1, 1, 64], strides = [1, 1, 1, 1]} : vector<2x4x4x64xf32> to vector<2x1x1x64xf32>
    %142 = vector.shape_cast %141 : vector<2x1x1x64xf32> to vector<2x64xf32>
    %c0_212 = arith.constant 0 : index
    %c576 = arith.constant 576 : index
    %143 = vector.load %arg20[%c0_212, %c576] : memref<2x1024xf32, #tpu.memory_space<vmem>>, vector<2x64xf32>
    tpu.vector_store %arg20[%c0_212, %c576], %142 {strides = array<i32>} : memref<2x1024xf32, #tpu.memory_space<vmem>>, vector<2x64xf32>,
    %144 = vector.extract_strided_slice %113 {offsets = [0, 2, 2, 0], sizes = [2, 1, 1, 64], strides = [1, 1, 1, 1]} : vector<2x4x4x64xf32> to vector<2x1x1x64xf32>
    %145 = vector.shape_cast %144 : vector<2x1x1x64xf32> to vector<2x64xf32>
    %c0_213 = arith.constant 0 : index
    %c640 = arith.constant 640 : index
    %146 = vector.load %arg20[%c0_213, %c640] : memref<2x1024xf32, #tpu.memory_space<vmem>>, vector<2x64xf32>
    tpu.vector_store %arg20[%c0_213, %c640], %145 {strides = array<i32>} : memref<2x1024xf32, #tpu.memory_space<vmem>>, vector<2x64xf32>,
    %147 = vector.extract_strided_slice %113 {offsets = [0, 2, 3, 0], sizes = [2, 1, 1, 64], strides = [1, 1, 1, 1]} : vector<2x4x4x64xf32> to vector<2x1x1x64xf32>
    %148 = vector.shape_cast %147 : vector<2x1x1x64xf32> to vector<2x64xf32>
    %c0_214 = arith.constant 0 : index
    %c704 = arith.constant 704 : index
    %149 = vector.load %arg20[%c0_214, %c704] : memref<2x1024xf32, #tpu.memory_space<vmem>>, vector<2x64xf32>
    tpu.vector_store %arg20[%c0_214, %c704], %148 {strides = array<i32>} : memref<2x1024xf32, #tpu.memory_space<vmem>>, vector<2x64xf32>,
    %150 = vector.extract_strided_slice %113 {offsets = [0, 3, 0, 0], sizes = [2, 1, 1, 64], strides = [1, 1, 1, 1]} : vector<2x4x4x64xf32> to vector<2x1x1x64xf32>
    %151 = vector.shape_cast %150 : vector<2x1x1x64xf32> to vector<2x64xf32>
    %c0_215 = arith.constant 0 : index
    %c768 = arith.constant 768 : index
    %152 = vector.load %arg20[%c0_215, %c768] : memref<2x1024xf32, #tpu.memory_space<vmem>>, vector<2x64xf32>
    tpu.vector_store %arg20[%c0_215, %c768], %151 {strides = array<i32>} : memref<2x1024xf32, #tpu.memory_space<vmem>>, vector<2x64xf32>,
    %153 = vector.extract_strided_slice %113 {offsets = [0, 3, 1, 0], sizes = [2, 1, 1, 64], strides = [1, 1, 1, 1]} : vector<2x4x4x64xf32> to vector<2x1x1x64xf32>
    %154 = vector.shape_cast %153 : vector<2x1x1x64xf32> to vector<2x64xf32>
    %c0_216 = arith.constant 0 : index
    %c832 = arith.constant 832 : index
    %155 = vector.load %arg20[%c0_216, %c832] : memref<2x1024xf32, #tpu.memory_space<vmem>>, vector<2x64xf32>
    tpu.vector_store %arg20[%c0_216, %c832], %154 {strides = array<i32>} : memref<2x1024xf32, #tpu.memory_space<vmem>>, vector<2x64xf32>,
    %156 = vector.extract_strided_slice %113 {offsets = [0, 3, 2, 0], sizes = [2, 1, 1, 64], strides = [1, 1, 1, 1]} : vector<2x4x4x64xf32> to vector<2x1x1x64xf32>
    %157 = vector.shape_cast %156 : vector<2x1x1x64xf32> to vector<2x64xf32>
    %c0_217 = arith.constant 0 : index
    %c896 = arith.constant 896 : index
    %158 = vector.load %arg20[%c0_217, %c896] : memref<2x1024xf32, #tpu.memory_space<vmem>>, vector<2x64xf32>
    tpu.vector_store %arg20[%c0_217, %c896], %157 {strides = array<i32>} : memref<2x1024xf32, #tpu.memory_space<vmem>>, vector<2x64xf32>,
    %159 = vector.extract_strided_slice %113 {offsets = [0, 3, 3, 0], sizes = [2, 1, 1, 64], strides = [1, 1, 1, 1]} : vector<2x4x4x64xf32> to vector<2x1x1x64xf32>
    %160 = vector.shape_cast %159 : vector<2x1x1x64xf32> to vector<2x64xf32>
    %c0_218 = arith.constant 0 : index
    %c960 = arith.constant 960 : index
    %161 = vector.load %arg20[%c0_218, %c960] : memref<2x1024xf32, #tpu.memory_space<vmem>>, vector<2x64xf32>
    tpu.vector_store %arg20[%c0_218, %c960], %160 {strides = array<i32>} : memref<2x1024xf32, #tpu.memory_space<vmem>>, vector<2x64xf32>,
    %c0_219 = arith.constant 0 : index
    %c0_220 = arith.constant 0 : index
    %162 = vector.load %arg20[%c0_219, %c0_220] : memref<2x1024xf32, #tpu.memory_space<vmem>>, vector<2x1024xf32>
    %c0_221 = arith.constant 0 : index
    %c0_222 = arith.constant 0 : index
    %163 = vector.load %arg8[%c0_221, %c0_222] : memref<1024x500xf32, #tpu.memory_space<vmem>>, vector<1024x500xf32>
    %cst_223 = arith.constant dense<0.000000e+00> : vector<2x500xf32>
    %164 = tpu.matmul %162, %163, %cst_223 {dimension_numbers = #tpu.dot_dimension_numbers<[1], [0], [0], [1], [0, 0, 1, 1], [], []>} : vector<2x1024xf32>, vector<1024x500xf32>, vector<2x500xf32> -> vector<2x500xf32>
    %c0_224 = arith.constant 0 : index
    %c0_225 = arith.constant 0 : index
    %165 = vector.load %arg9[%c0_224, %c0_225] : memref<1x500xf32, #tpu.memory_space<vmem>>, vector<1x500xf32>
    %166 = vector.broadcast %165 : vector<1x500xf32> to vector<2x500xf32>
    %167 = arith.addf %164, %166 : vector<2x500xf32>
    %cst_226 = arith.constant 0.000000e+00 : f32
    %168 = vector.broadcast %cst_226 : f32 to vector<2x500xf32>
    %169 = arith.maximumf %167, %168 : vector<2x500xf32>
    %c0_227 = arith.constant 0 : index
    %c0_228 = arith.constant 0 : index
    %170 = vector.load %arg10[%c0_227, %c0_228] : memref<500x10xf32, #tpu.memory_space<vmem>>, vector<500x10xf32>
    %cst_229 = arith.constant dense<0.000000e+00> : vector<2x10xf32>
    %171 = tpu.matmul %169, %170, %cst_229 {dimension_numbers = #tpu.dot_dimension_numbers<[1], [0], [0], [1], [0, 0, 1, 1], [], []>} : vector<2x500xf32>, vector<500x10xf32>, vector<2x10xf32> -> vector<2x10xf32>
    %c0_230 = arith.constant 0 : index
    %c0_231 = arith.constant 0 : index
    %172 = vector.load %arg11[%c0_230, %c0_231] : memref<1x10xf32, #tpu.memory_space<vmem>>, vector<1x10xf32>
    %173 = vector.broadcast %172 : vector<1x10xf32> to vector<2x10xf32>
    %174 = arith.addf %171, %173 : vector<2x10xf32>
    %c0_232 = arith.constant 0 : index
    %c0_233 = arith.constant 0 : index
    %175 = vector.load %arg12[%c0_232, %c0_233] : memref<2x10xf32, #tpu.memory_space<vmem>>, vector<2x10xf32>
    tpu.vector_store %arg12[%c0_232, %c0_233], %174 {strides = array<i32>} : memref<2x10xf32, #tpu.memory_space<vmem>>, vector<2x10xf32>,
    return
  }
  func.func @transform_0(%arg0: i32) -> (i32, i32, i32) {
    %c0_i32 = arith.constant 0 : i32
    %c0_i32_0 = arith.constant 0 : i32
    %c0_i32_1 = arith.constant 0 : i32
    return %arg0, %c0_i32, %c0_i32_0 : i32, i32, i32
  }
  func.func @transform_1(%arg0: i32) -> (i32, i32) {
    %c0_i32 = arith.constant 0 : i32
    %c0_i32_0 = arith.constant 0 : i32
    %c0_i32_1 = arith.constant 0 : i32
    return %c0_i32, %c0_i32_0 : i32, i32
  }
  func.func @transform_2(%arg0: i32) -> (i32, i32) {
    %c0_i32 = arith.constant 0 : i32
    %c0_i32_0 = arith.constant 0 : i32
    %c0_i32_1 = arith.constant 0 : i32
    return %c0_i32, %c0_i32_0 : i32, i32
  }
  func.func @transform_3(%arg0: i32) -> (i32, i32) {
    %c0_i32 = arith.constant 0 : i32
    %c0_i32_0 = arith.constant 0 : i32
    %c0_i32_1 = arith.constant 0 : i32
    return %c0_i32, %c0_i32_0 : i32, i32
  }
  func.func @transform_4(%arg0: i32) -> (i32, i32) {
    %c0_i32 = arith.constant 0 : i32
    %c0_i32_0 = arith.constant 0 : i32
    %c0_i32_1 = arith.constant 0 : i32
    return %c0_i32, %c0_i32_0 : i32, i32
  }
  func.func @transform_5(%arg0: i32) -> (i32, i32) {
    %c0_i32 = arith.constant 0 : i32
    %c0_i32_0 = arith.constant 0 : i32
    %c0_i32_1 = arith.constant 0 : i32
    return %c0_i32, %c0_i32_0 : i32, i32
  }
  func.func @transform_6(%arg0: i32) -> (i32, i32) {
    %c0_i32 = arith.constant 0 : i32
    %c0_i32_0 = arith.constant 0 : i32
    %c0_i32_1 = arith.constant 0 : i32
    return %c0_i32, %c0_i32_0 : i32, i32
  }
  func.func @transform_7(%arg0: i32) -> (i32, i32) {
    %c0_i32 = arith.constant 0 : i32
    %c0_i32_0 = arith.constant 0 : i32
    %c0_i32_1 = arith.constant 0 : i32
    return %c0_i32, %c0_i32_0 : i32, i32
  }
  func.func @transform_8(%arg0: i32) -> (i32, i32) {
    %c0_i32 = arith.constant 0 : i32
    %c0_i32_0 = arith.constant 0 : i32
    %c0_i32_1 = arith.constant 0 : i32
    return %c0_i32, %c0_i32_0 : i32, i32
  }
  func.func @transform_9(%arg0: i32) -> (i32, i32) {
    %c0_i32 = arith.constant 0 : i32
    %c0_i32_0 = arith.constant 0 : i32
    %c0_i32_1 = arith.constant 0 : i32
    return %c0_i32, %c0_i32_0 : i32, i32
  }
  func.func @transform_10(%arg0: i32) -> (i32, i32) {
    %c0_i32 = arith.constant 0 : i32
    %c0_i32_0 = arith.constant 0 : i32
    %c0_i32_1 = arith.constant 0 : i32
    return %c0_i32, %c0_i32_0 : i32, i32
  }
  func.func @transform_11(%arg0: i32) -> (i32, i32) {
    %c0_i32 = arith.constant 0 : i32
    %c0_i32_0 = arith.constant 0 : i32
    return %arg0, %c0_i32 : i32, i32
  }
}

</mosaic_0001>

<llo_original>
// kernel: mycnn_forward.1
$region0: #{mycnn_forward.1}
  #allocation0 [shape = 'u32[]', space=smem, size = 0x4, offset = 0x4, fixed_abs, tag = 'smem constant byte address 0x4 - core index']
  #allocation1 [shape = 'u32[144,128]{1,0:T(1,128)}', space=vmem, size = 0x12000, scoped, tag = 'internal scratch']
  #allocation2 [shape = 'f32[2,32,32,16]{3,2,1,0:T(8,128)}', space=vmem, size = 0x100000, scoped, tag = 'scratch operand']
  #allocation3 [shape = 'f32[2,18,18,16]{3,2,1,0:T(8,128)}', space=vmem, size = 0x6c000, scoped, tag = 'scratch operand']
  #allocation4 [shape = 'f32[512,144]{1,0:T(8,128)}', space=vmem, size = 0x80000, scoped, tag = 'scratch operand']
  #allocation5 [shape = 'f32[2,16,16,32]{3,2,1,0:T(8,128)}', space=vmem, size = 0x40000, scoped, tag = 'scratch operand']
  #allocation6 [shape = 'f32[2,10,10,32]{3,2,1,0:T(8,128)}', space=vmem, size = 0x28000, scoped, tag = 'scratch operand']
  #allocation7 [shape = 'f32[128,288]{1,0:T(8,128)}', space=vmem, size = 0x30000, scoped, tag = 'scratch operand']
  #allocation8 [shape = 'f32[2,8,8,64]{3,2,1,0:T(8,128)}', space=vmem, size = 0x10000, scoped, tag = 'scratch operand']
  #allocation9 [shape = 'f32[2,1024]{1,0:T(2,128)}', space=vmem, size = 0x2000, scoped, tag = 'scratch operand']
  %s0 = inlined_call_operand.vmem [shape: f32[2,1024,27], index: 0, kind: input, shape index: {}]
  %s1 = inlined_call_operand.vmem [shape: f32[27,16], index: 1, kind: input, shape index: {}]
  %s2 = inlined_call_operand.vmem [shape: f32[1,16], index: 2, kind: input, shape index: {}]
  %s3 = inlined_call_operand.vmem [shape: f32[144,32], index: 3, kind: input, shape index: {}]
  %s4 = inlined_call_operand.vmem [shape: f32[1,32], index: 4, kind: input, shape index: {}]
  %s5 = inlined_call_operand.vmem [shape: f32[288,64], index: 5, kind: input, shape index: {}]
  %s6 = inlined_call_operand.vmem [shape: f32[1,64], index: 6, kind: input, shape index: {}]
  %s7 = inlined_call_operand.vmem [shape: f32[1024,500], index: 7, kind: input, shape index: {}]
  %s8 = inlined_call_operand.vmem [shape: f32[1,500], index: 8, kind: input, shape index: {}]
  %s9 = inlined_call_operand.vmem [shape: f32[500,10], index: 9, kind: input, shape index: {}]
  %s10 = inlined_call_operand.vmem [shape: f32[1,10], index: 10, kind: input, shape index: {}]
  %s11 = inlined_call_operand.hbm [shape: f32[2,10], index: 11, kind: output, shape index: {}]
  %s12 = sld [smem:[#allocation0]]
  $region54: #{mycnn_forward.1} parent=0
    _
  %s14 = ssub.s32 1, %s12
  %s15 = scalar_select 0, %s14, %s12
  $region1: #{mycnn_forward.1} parent=0
    #allocation10 [shape = 'u8[1024]{0}', space=vmem, size = 0x400, scoped, tag = 'output window, operand 0, single buffered']
    #allocation11 [shape = 's32[1]{0}', space=sflag, size = 0x4, scoped, tag = 'scoped memory for mycnn_forward.1']
    %16 = vsyncpa [#allocation11], 0
    // Predicated region
    $region2: #{mycnn_forward.1} parent=1 // pred_check
      _
    $region3: #{mycnn_forward.1} parent=1 // pred_check_branch
      %18 = sbr.rel (0) target = $region5
    $region4: #{mycnn_forward.1} parent=1 // pred_region
      _
    $region5: #{mycnn_forward.1} parent=1 // pred_fallthru
      _
    // Predicated region
    $region6: #{mycnn_forward.1} parent=1 // pred_check
      _
    $region7: #{mycnn_forward.1} parent=1 // pred_check_branch
      %20 = sbr.rel (0) target = $region9
    $region8: #{mycnn_forward.1} parent=1 // pred_region
      _
    $region9: #{mycnn_forward.1} parent=1 // pred_fallthru
      _
    // Predicated region
    $region10: #{mycnn_forward.1} parent=1 // pred_check
      _
    $region11: #{mycnn_forward.1} parent=1 // pred_check_branch
      %22 = sbr.rel (0) target = $region13
    $region12: #{mycnn_forward.1} parent=1 // pred_region
      _
    $region13: #{mycnn_forward.1} parent=1 // pred_fallthru
      _
    // Predicated region
    $region14: #{mycnn_forward.1} parent=1 // pred_check
      _
    $region15: #{mycnn_forward.1} parent=1 // pred_check_branch
      %24 = sbr.rel (0) target = $region17
    $region16: #{mycnn_forward.1} parent=1 // pred_region
      _
    $region17: #{mycnn_forward.1} parent=1 // pred_fallthru
      _
    // Predicated region
    $region18: #{mycnn_forward.1} parent=1 // pred_check
      _
    $region19: #{mycnn_forward.1} parent=1 // pred_check_branch
      %26 = sbr.rel (0) target = $region21
    $region20: #{mycnn_forward.1} parent=1 // pred_region
      _
    $region21: #{mycnn_forward.1} parent=1 // pred_fallthru
      _
    // Predicated region
    $region22: #{mycnn_forward.1} parent=1 // pred_check
      _
    $region23: #{mycnn_forward.1} parent=1 // pred_check_branch
      %28 = sbr.rel (0) target = $region25
    $region24: #{mycnn_forward.1} parent=1 // pred_region
      _
    $region25: #{mycnn_forward.1} parent=1 // pred_fallthru
      _
    // Predicated region
    $region26: #{mycnn_forward.1} parent=1 // pred_check
      _
    $region27: #{mycnn_forward.1} parent=1 // pred_check_branch
      %30 = sbr.rel (0) target = $region29
    $region28: #{mycnn_forward.1} parent=1 // pred_region
      _
    $region29: #{mycnn_forward.1} parent=1 // pred_fallthru
      _
    // Predicated region
    $region30: #{mycnn_forward.1} parent=1 // pred_check
      _
    $region31: #{mycnn_forward.1} parent=1 // pred_check_branch
      %32 = sbr.rel (0) target = $region33
    $region32: #{mycnn_forward.1} parent=1 // pred_region
      _
    $region33: #{mycnn_forward.1} parent=1 // pred_fallthru
      _
    // Predicated region
    $region34: #{mycnn_forward.1} parent=1 // pred_check
      _
    $region35: #{mycnn_forward.1} parent=1 // pred_check_branch
      %34 = sbr.rel (0) target = $region37
    $region36: #{mycnn_forward.1} parent=1 // pred_region
      _
    $region37: #{mycnn_forward.1} parent=1 // pred_fallthru
      _
    // Predicated region
    $region38: #{mycnn_forward.1} parent=1 // pred_check
      _
    $region39: #{mycnn_forward.1} parent=1 // pred_check_branch
      %36 = sbr.rel (0) target = $region41
    $region40: #{mycnn_forward.1} parent=1 // pred_region
      _
    $region41: #{mycnn_forward.1} parent=1 // pred_fallthru
      _
    // Predicated region
    $region42: #{mycnn_forward.1} parent=1 // pred_check
      _
    $region43: #{mycnn_forward.1} parent=1 // pred_check_branch
      %38 = sbr.rel (0) target = $region45
    $region44: #{mycnn_forward.1} parent=1 // pred_region
      _
    $region45: #{mycnn_forward.1} parent=1 // pred_fallthru
      _
    %v39 = vld [vmem:[%s0] sm:$0xff]
    %v40 = vld [vmem:[%s0 + $0x8] sm:$0xff]
    %v41 = vld [vmem:[%s0 + $0x10] sm:$0xff]
    %v42 = vld [vmem:[%s0 + $0x18] sm:$0xff]
    %v43 = vld [vmem:[%s0 + $0x20] sm:$0xff]
    %v44 = vld [vmem:[%s0 + $0x28] sm:$0xff]
    %v45 = vld [vmem:[%s0 + $0x30] sm:$0xff]
    %v46 = vld [vmem:[%s0 + $0x38] sm:$0xff]
    %v47 = vld [vmem:[%s0 + $0x40] sm:$0xff]
    %v48 = vld [vmem:[%s0 + $0x48] sm:$0xff]
    %v49 = vld [vmem:[%s0 + $0x50] sm:$0xff]
    %v50 = vld [vmem:[%s0 + $0x58] sm:$0xff]
    %v51 = vld [vmem:[%s0 + $0x60] sm:$0xff]
    %v52 = vld [vmem:[%s0 + $0x68] sm:$0xff]
    %v53 = vld [vmem:[%s0 + $0x70] sm:$0xff]
    %v54 = vld [vmem:[%s0 + $0x78] sm:$0xff]
    %v55 = vld [vmem:[%s0 + $0x80] sm:$0xff]
    %v56 = vld [vmem:[%s0 + $0x88] sm:$0xff]
    %v57 = vld [vmem:[%s0 + $0x90] sm:$0xff]
    %v58 = vld [vmem:[%s0 + $0x98] sm:$0xff]
    %v59 = vld [vmem:[%s0 + $0xa0] sm:$0xff]
    %v60 = vld [vmem:[%s0 + $0xa8] sm:$0xff]
    %v61 = vld [vmem:[%s0 + $0xb0] sm:$0xff]
    %v62 = vld [vmem:[%s0 + $0xb8] sm:$0xff]
    %v63 = vld [vmem:[%s0 + $0xc0] sm:$0xff]
    %v64 = vld [vmem:[%s0 + $0xc8] sm:$0xff]
    %v65 = vld [vmem:[%s0 + $0xd0] sm:$0xff]
    %v66 = vld [vmem:[%s0 + $0xd8] sm:$0xff]
    %v67 = vld [vmem:[%s0 + $0xe0] sm:$0xff]
    %v68 = vld [vmem:[%s0 + $0xe8] sm:$0xff]
    %v69 = vld [vmem:[%s0 + $0xf0] sm:$0xff]
    %v70 = vld [vmem:[%s0 + $0xf8] sm:$0xff]
    %v71 = vld [vmem:[%s0 + $0x100] sm:$0xff]
    %v72 = vld [vmem:[%s0 + $0x108] sm:$0xff]
    %v73 = vld [vmem:[%s0 + $0x110] sm:$0xff]
    %v74 = vld [vmem:[%s0 + $0x118] sm:$0xff]
    %v75 = vld [vmem:[%s0 + $0x120] sm:$0xff]
    %v76 = vld [vmem:[%s0 + $0x128] sm:$0xff]
    %v77 = vld [vmem:[%s0 + $0x130] sm:$0xff]
    %v78 = vld [vmem:[%s0 + $0x138] sm:$0xff]
    %v79 = vld [vmem:[%s0 + $0x140] sm:$0xff]
    %v80 = vld [vmem:[%s0 + $0x148] sm:$0xff]
    %v81 = vld [vmem:[%s0 + $0x150] sm:$0xff]
    %v82 = vld [vmem:[%s0 + $0x158] sm:$0xff]
    %v83 = vld [vmem:[%s0 + $0x160] sm:$0xff]
    %v84 = vld [vmem:[%s0 + $0x168] sm:$0xff]
    %v85 = vld [vmem:[%s0 + $0x170] sm:$0xff]
    %v86 = vld [vmem:[%s0 + $0x178] sm:$0xff]
    %v87 = vld [vmem:[%s0 + $0x180] sm:$0xff]
    %v88 = vld [vmem:[%s0 + $0x188] sm:$0xff]
    %v89 = vld [vmem:[%s0 + $0x190] sm:$0xff]
    %v90 = vld [vmem:[%s0 + $0x198] sm:$0xff]
    %v91 = vld [vmem:[%s0 + $0x1a0] sm:$0xff]
    %v92 = vld [vmem:[%s0 + $0x1a8] sm:$0xff]
    %v93 = vld [vmem:[%s0 + $0x1b0] sm:$0xff]
    %v94 = vld [vmem:[%s0 + $0x1b8] sm:$0xff]
    %v95 = vld [vmem:[%s0 + $0x1c0] sm:$0xff]
    %v96 = vld [vmem:[%s0 + $0x1c8] sm:$0xff]
    %v97 = vld [vmem:[%s0 + $0x1d0] sm:$0xff]
    %v98 = vld [vmem:[%s0 + $0x1d8] sm:$0xff]
    %v99 = vld [vmem:[%s0 + $0x1e0] sm:$0xff]
    %v100 = vld [vmem:[%s0 + $0x1e8] sm:$0xff]
    %v101 = vld [vmem:[%s0 + $0x1f0] sm:$0xff]
    %v102 = vld [vmem:[%s0 + $0x1f8] sm:$0xff]
    %v103 = vld [vmem:[%s0 + $0x200] sm:$0xff]
    %v104 = vld [vmem:[%s0 + $0x208] sm:$0xff]
    %v105 = vld [vmem:[%s0 + $0x210] sm:$0xff]
    %v106 = vld [vmem:[%s0 + $0x218] sm:$0xff]
    %v107 = vld [vmem:[%s0 + $0x220] sm:$0xff]
    %v108 = vld [vmem:[%s0 + $0x228] sm:$0xff]
    %v109 = vld [vmem:[%s0 + $0x230] sm:$0xff]
    %v110 = vld [vmem:[%s0 + $0x238] sm:$0xff]
    %v111 = vld [vmem:[%s0 + $0x240] sm:$0xff]
    %v112 = vld [vmem:[%s0 + $0x248] sm:$0xff]
    %v113 = vld [vmem:[%s0 + $0x250] sm:$0xff]
    %v114 = vld [vmem:[%s0 + $0x258] sm:$0xff]
    %v115 = vld [vmem:[%s0 + $0x260] sm:$0xff]
    %v116 = vld [vmem:[%s0 + $0x268] sm:$0xff]
    %v117 = vld [vmem:[%s0 + $0x270] sm:$0xff]
    %v118 = vld [vmem:[%s0 + $0x278] sm:$0xff]
    %v119 = vld [vmem:[%s0 + $0x280] sm:$0xff]
    %v120 = vld [vmem:[%s0 + $0x288] sm:$0xff]
    %v121 = vld [vmem:[%s0 + $0x290] sm:$0xff]
    %v122 = vld [vmem:[%s0 + $0x298] sm:$0xff]
    %v123 = vld [vmem:[%s0 + $0x2a0] sm:$0xff]
    %v124 = vld [vmem:[%s0 + $0x2a8] sm:$0xff]
    %v125 = vld [vmem:[%s0 + $0x2b0] sm:$0xff]
    %v126 = vld [vmem:[%s0 + $0x2b8] sm:$0xff]
    %v127 = vld [vmem:[%s0 + $0x2c0] sm:$0xff]
    %v128 = vld [vmem:[%s0 + $0x2c8] sm:$0xff]
    %v129 = vld [vmem:[%s0 + $0x2d0] sm:$0xff]
    %v130 = vld [vmem:[%s0 + $0x2d8] sm:$0xff]
    %v131 = vld [vmem:[%s0 + $0x2e0] sm:$0xff]
    %v132 = vld [vmem:[%s0 + $0x2e8] sm:$0xff]
    %v133 = vld [vmem:[%s0 + $0x2f0] sm:$0xff]
    %v134 = vld [vmem:[%s0 + $0x2f8] sm:$0xff]
    %v135 = vld [vmem:[%s0 + $0x300] sm:$0xff]
    %v136 = vld [vmem:[%s0 + $0x308] sm:$0xff]
    %v137 = vld [vmem:[%s0 + $0x310] sm:$0xff]
    %v138 = vld [vmem:[%s0 + $0x318] sm:$0xff]
    %v139 = vld [vmem:[%s0 + $0x320] sm:$0xff]
    %v140 = vld [vmem:[%s0 + $0x328] sm:$0xff]
    %v141 = vld [vmem:[%s0 + $0x330] sm:$0xff]
    %v142 = vld [vmem:[%s0 + $0x338] sm:$0xff]
    %v143 = vld [vmem:[%s0 + $0x340] sm:$0xff]
    %v144 = vld [vmem:[%s0 + $0x348] sm:$0xff]
    %v145 = vld [vmem:[%s0 + $0x350] sm:$0xff]
    %v146 = vld [vmem:[%s0 + $0x358] sm:$0xff]
    %v147 = vld [vmem:[%s0 + $0x360] sm:$0xff]
    %v148 = vld [vmem:[%s0 + $0x368] sm:$0xff]
    %v149 = vld [vmem:[%s0 + $0x370] sm:$0xff]
    %v150 = vld [vmem:[%s0 + $0x378] sm:$0xff]
    %v151 = vld [vmem:[%s0 + $0x380] sm:$0xff]
    %v152 = vld [vmem:[%s0 + $0x388] sm:$0xff]
    %v153 = vld [vmem:[%s0 + $0x390] sm:$0xff]
    %v154 = vld [vmem:[%s0 + $0x398] sm:$0xff]
    %v155 = vld [vmem:[%s0 + $0x3a0] sm:$0xff]
    %v156 = vld [vmem:[%s0 + $0x3a8] sm:$0xff]
    %v157 = vld [vmem:[%s0 + $0x3b0] sm:$0xff]
    %v158 = vld [vmem:[%s0 + $0x3b8] sm:$0xff]
    %v159 = vld [vmem:[%s0 + $0x3c0] sm:$0xff]
    %v160 = vld [vmem:[%s0 + $0x3c8] sm:$0xff]
    %v161 = vld [vmem:[%s0 + $0x3d0] sm:$0xff]
    %v162 = vld [vmem:[%s0 + $0x3d8] sm:$0xff]
    %v163 = vld [vmem:[%s0 + $0x3e0] sm:$0xff]
    %v164 = vld [vmem:[%s0 + $0x3e8] sm:$0xff]
    %v165 = vld [vmem:[%s0 + $0x3f0] sm:$0xff]
    %v166 = vld [vmem:[%s0 + $0x3f8] sm:$0xff]
    %v167 = vld [vmem:[%s0 + $0x400] sm:$0xff]
    %v168 = vld [vmem:[%s0 + $0x408] sm:$0xff]
    %v169 = vld [vmem:[%s0 + $0x410] sm:$0xff]
    %v170 = vld [vmem:[%s0 + $0x418] sm:$0xff]
    %v171 = vld [vmem:[%s0 + $0x420] sm:$0xff]
    %v172 = vld [vmem:[%s0 + $0x428] sm:$0xff]
    %v173 = vld [vmem:[%s0 + $0x430] sm:$0xff]
    %v174 = vld [vmem:[%s0 + $0x438] sm:$0xff]
    %v175 = vld [vmem:[%s0 + $0x440] sm:$0xff]
    %v176 = vld [vmem:[%s0 + $0x448] sm:$0xff]
    %v177 = vld [vmem:[%s0 + $0x450] sm:$0xff]
    %v178 = vld [vmem:[%s0 + $0x458] sm:$0xff]
    %v179 = vld [vmem:[%s0 + $0x460] sm:$0xff]
    %v180 = vld [vmem:[%s0 + $0x468] sm:$0xff]
    %v181 = vld [vmem:[%s0 + $0x470] sm:$0xff]
    %v182 = vld [vmem:[%s0 + $0x478] sm:$0xff]
    %v183 = vld [vmem:[%s0 + $0x480] sm:$0xff]
    %v184 = vld [vmem:[%s0 + $0x488] sm:$0xff]
    %v185 = vld [vmem:[%s0 + $0x490] sm:$0xff]
    %v186 = vld [vmem:[%s0 + $0x498] sm:$0xff]
    %v187 = vld [vmem:[%s0 + $0x4a0] sm:$0xff]
    %v188 = vld [vmem:[%s0 + $0x4a8] sm:$0xff]
    %v189 = vld [vmem:[%s0 + $0x4b0] sm:$0xff]
    %v190 = vld [vmem:[%s0 + $0x4b8] sm:$0xff]
    %v191 = vld [vmem:[%s0 + $0x4c0] sm:$0xff]
    %v192 = vld [vmem:[%s0 + $0x4c8] sm:$0xff]
    %v193 = vld [vmem:[%s0 + $0x4d0] sm:$0xff]
    %v194 = vld [vmem:[%s0 + $0x4d8] sm:$0xff]
    %v195 = vld [vmem:[%s0 + $0x4e0] sm:$0xff]
    %v196 = vld [vmem:[%s0 + $0x4e8] sm:$0xff]
    %v197 = vld [vmem:[%s0 + $0x4f0] sm:$0xff]
    %v198 = vld [vmem:[%s0 + $0x4f8] sm:$0xff]
    %v199 = vld [vmem:[%s0 + $0x500] sm:$0xff]
    %v200 = vld [vmem:[%s0 + $0x508] sm:$0xff]
    %v201 = vld [vmem:[%s0 + $0x510] sm:$0xff]
    %v202 = vld [vmem:[%s0 + $0x518] sm:$0xff]
    %v203 = vld [vmem:[%s0 + $0x520] sm:$0xff]
    %v204 = vld [vmem:[%s0 + $0x528] sm:$0xff]
    %v205 = vld [vmem:[%s0 + $0x530] sm:$0xff]
    %v206 = vld [vmem:[%s0 + $0x538] sm:$0xff]
    %v207 = vld [vmem:[%s0 + $0x540] sm:$0xff]
    %v208 = vld [vmem:[%s0 + $0x548] sm:$0xff]
    %v209 = vld [vmem:[%s0 + $0x550] sm:$0xff]
    %v210 = vld [vmem:[%s0 + $0x558] sm:$0xff]
    %v211 = vld [vmem:[%s0 + $0x560] sm:$0xff]
    %v212 = vld [vmem:[%s0 + $0x568] sm:$0xff]
    %v213 = vld [vmem:[%s0 + $0x570] sm:$0xff]
    %v214 = vld [vmem:[%s0 + $0x578] sm:$0xff]
    %v215 = vld [vmem:[%s0 + $0x580] sm:$0xff]
    %v216 = vld [vmem:[%s0 + $0x588] sm:$0xff]
    %v217 = vld [vmem:[%s0 + $0x590] sm:$0xff]
    %v218 = vld [vmem:[%s0 + $0x598] sm:$0xff]
    %v219 = vld [vmem:[%s0 + $0x5a0] sm:$0xff]
    %v220 = vld [vmem:[%s0 + $0x5a8] sm:$0xff]
    %v221 = vld [vmem:[%s0 + $0x5b0] sm:$0xff]
    %v222 = vld [vmem:[%s0 + $0x5b8] sm:$0xff]
    %v223 = vld [vmem:[%s0 + $0x5c0] sm:$0xff]
    %v224 = vld [vmem:[%s0 + $0x5c8] sm:$0xff]
    %v225 = vld [vmem:[%s0 + $0x5d0] sm:$0xff]
    %v226 = vld [vmem:[%s0 + $0x5d8] sm:$0xff]
    %v227 = vld [vmem:[%s0 + $0x5e0] sm:$0xff]
    %v228 = vld [vmem:[%s0 + $0x5e8] sm:$0xff]
    %v229 = vld [vmem:[%s0 + $0x5f0] sm:$0xff]
    %v230 = vld [vmem:[%s0 + $0x5f8] sm:$0xff]
    %v231 = vld [vmem:[%s0 + $0x600] sm:$0xff]
    %v232 = vld [vmem:[%s0 + $0x608] sm:$0xff]
    %v233 = vld [vmem:[%s0 + $0x610] sm:$0xff]
    %v234 = vld [vmem:[%s0 + $0x618] sm:$0xff]
    %v235 = vld [vmem:[%s0 + $0x620] sm:$0xff]
    %v236 = vld [vmem:[%s0 + $0x628] sm:$0xff]
    %v237 = vld [vmem:[%s0 + $0x630] sm:$0xff]
    %v238 = vld [vmem:[%s0 + $0x638] sm:$0xff]
    %v239 = vld [vmem:[%s0 + $0x640] sm:$0xff]
    %v240 = vld [vmem:[%s0 + $0x648] sm:$0xff]
    %v241 = vld [vmem:[%s0 + $0x650] sm:$0xff]
    %v242 = vld [vmem:[%s0 + $0x658] sm:$0xff]
    %v243 = vld [vmem:[%s0 + $0x660] sm:$0xff]
    %v244 = vld [vmem:[%s0 + $0x668] sm:$0xff]
    %v245 = vld [vmem:[%s0 + $0x670] sm:$0xff]
    %v246 = vld [vmem:[%s0 + $0x678] sm:$0xff]
    %v247 = vld [vmem:[%s0 + $0x680] sm:$0xff]
    %v248 = vld [vmem:[%s0 + $0x688] sm:$0xff]
    %v249 = vld [vmem:[%s0 + $0x690] sm:$0xff]
    %v250 = vld [vmem:[%s0 + $0x698] sm:$0xff]
    %v251 = vld [vmem:[%s0 + $0x6a0] sm:$0xff]
    %v252 = vld [vmem:[%s0 + $0x6a8] sm:$0xff]
    %v253 = vld [vmem:[%s0 + $0x6b0] sm:$0xff]
    %v254 = vld [vmem:[%s0 + $0x6b8] sm:$0xff]
    %v255 = vld [vmem:[%s0 + $0x6c0] sm:$0xff]
    %v256 = vld [vmem:[%s0 + $0x6c8] sm:$0xff]
    %v257 = vld [vmem:[%s0 + $0x6d0] sm:$0xff]
    %v258 = vld [vmem:[%s0 + $0x6d8] sm:$0xff]
    %v259 = vld [vmem:[%s0 + $0x6e0] sm:$0xff]
    %v260 = vld [vmem:[%s0 + $0x6e8] sm:$0xff]
    %v261 = vld [vmem:[%s0 + $0x6f0] sm:$0xff]
    %v262 = vld [vmem:[%s0 + $0x6f8] sm:$0xff]
    %v263 = vld [vmem:[%s0 + $0x700] sm:$0xff]
    %v264 = vld [vmem:[%s0 + $0x708] sm:$0xff]
    %v265 = vld [vmem:[%s0 + $0x710] sm:$0xff]
    %v266 = vld [vmem:[%s0 + $0x718] sm:$0xff]
    %v267 = vld [vmem:[%s0 + $0x720] sm:$0xff]
    %v268 = vld [vmem:[%s0 + $0x728] sm:$0xff]
    %v269 = vld [vmem:[%s0 + $0x730] sm:$0xff]
    %v270 = vld [vmem:[%s0 + $0x738] sm:$0xff]
    %v271 = vld [vmem:[%s0 + $0x740] sm:$0xff]
    %v272 = vld [vmem:[%s0 + $0x748] sm:$0xff]
    %v273 = vld [vmem:[%s0 + $0x750] sm:$0xff]
    %v274 = vld [vmem:[%s0 + $0x758] sm:$0xff]
    %v275 = vld [vmem:[%s0 + $0x760] sm:$0xff]
    %v276 = vld [vmem:[%s0 + $0x768] sm:$0xff]
    %v277 = vld [vmem:[%s0 + $0x770] sm:$0xff]
    %v278 = vld [vmem:[%s0 + $0x778] sm:$0xff]
    %v279 = vld [vmem:[%s0 + $0x780] sm:$0xff]
    %v280 = vld [vmem:[%s0 + $0x788] sm:$0xff]
    %v281 = vld [vmem:[%s0 + $0x790] sm:$0xff]
    %v282 = vld [vmem:[%s0 + $0x798] sm:$0xff]
    %v283 = vld [vmem:[%s0 + $0x7a0] sm:$0xff]
    %v284 = vld [vmem:[%s0 + $0x7a8] sm:$0xff]
    %v285 = vld [vmem:[%s0 + $0x7b0] sm:$0xff]
    %v286 = vld [vmem:[%s0 + $0x7b8] sm:$0xff]
    %v287 = vld [vmem:[%s0 + $0x7c0] sm:$0xff]
    %v288 = vld [vmem:[%s0 + $0x7c8] sm:$0xff]
    %v289 = vld [vmem:[%s0 + $0x7d0] sm:$0xff]
    %v290 = vld [vmem:[%s0 + $0x7d8] sm:$0xff]
    %v291 = vld [vmem:[%s0 + $0x7e0] sm:$0xff]
    %v292 = vld [vmem:[%s0 + $0x7e8] sm:$0xff]
    %v293 = vld [vmem:[%s0 + $0x7f0] sm:$0xff]
    %v294 = vld [vmem:[%s0 + $0x7f8] sm:$0xff]
    %v295 = vld [vmem:[%s1] sm:$0xff]
    %v296 = vld [vmem:[%s1 + $0x8] sm:$0xff]
    %v297 = vld [vmem:[%s1 + $0x10] sm:$0xff]
    %v298 = vld [vmem:[%s1 + $0x18] sm:$0x7]
    %v299 = vld [vmem:[%s2] sm:$0x1]
    %v301 = vlaneseq
    %v302 = vshrl.u32 %v301, 7
    %v303 = vsub.s32 0, %v302
    %v304 = vrot.slane %v299, %v303
    %vm306 = vcmask 220160
    %v308 = vsel %vm306, %v39, 0
    %v311 = vsel %vm306, %v40, 0
    %v314 = vsel %vm306, %v41, 0
    %v317 = vsel %vm306, %v42, 0
    %v320 = vsel %vm306, %v43, 0
    %v323 = vsel %vm306, %v44, 0
    %v326 = vsel %vm306, %v45, 0
    %v329 = vsel %vm306, %v46, 0
    %v332 = vsel %vm306, %v47, 0
    %v335 = vsel %vm306, %v48, 0
    %v338 = vsel %vm306, %v49, 0
    %v341 = vsel %vm306, %v50, 0
    %v344 = vsel %vm306, %v51, 0
    %v347 = vsel %vm306, %v52, 0
    %v350 = vsel %vm306, %v53, 0
    %v353 = vsel %vm306, %v54, 0
    %v356 = vsel %vm306, %v55, 0
    %v359 = vsel %vm306, %v56, 0
    %v362 = vsel %vm306, %v57, 0
    %v365 = vsel %vm306, %v58, 0
    %v368 = vsel %vm306, %v59, 0
    %v371 = vsel %vm306, %v60, 0
    %v374 = vsel %vm306, %v61, 0
    %v377 = vsel %vm306, %v62, 0
    %v380 = vsel %vm306, %v63, 0
    %v383 = vsel %vm306, %v64, 0
    %v386 = vsel %vm306, %v65, 0
    %v389 = vsel %vm306, %v66, 0
    %v392 = vsel %vm306, %v67, 0
    %v395 = vsel %vm306, %v68, 0
    %v398 = vsel %vm306, %v69, 0
    %v401 = vsel %vm306, %v70, 0
    %v404 = vsel %vm306, %v71, 0
    %v407 = vsel %vm306, %v72, 0
    %v410 = vsel %vm306, %v73, 0
    %v413 = vsel %vm306, %v74, 0
    %v416 = vsel %vm306, %v75, 0
    %v419 = vsel %vm306, %v76, 0
    %v422 = vsel %vm306, %v77, 0
    %v425 = vsel %vm306, %v78, 0
    %v428 = vsel %vm306, %v79, 0
    %v431 = vsel %vm306, %v80, 0
    %v434 = vsel %vm306, %v81, 0
    %v437 = vsel %vm306, %v82, 0
    %v440 = vsel %vm306, %v83, 0
    %v443 = vsel %vm306, %v84, 0
    %v446 = vsel %vm306, %v85, 0
    %v449 = vsel %vm306, %v86, 0
    %v452 = vsel %vm306, %v87, 0
    %v455 = vsel %vm306, %v88, 0
    %v458 = vsel %vm306, %v89, 0
    %v461 = vsel %vm306, %v90, 0
    %v464 = vsel %vm306, %v91, 0
    %v467 = vsel %vm306, %v92, 0
    %v470 = vsel %vm306, %v93, 0
    %v473 = vsel %vm306, %v94, 0
    %v476 = vsel %vm306, %v95, 0
    %v479 = vsel %vm306, %v96, 0
    %v482 = vsel %vm306, %v97, 0
    %v485 = vsel %vm306, %v98, 0
    %v488 = vsel %vm306, %v99, 0
    %v491 = vsel %vm306, %v100, 0
    %v494 = vsel %vm306, %v101, 0
    %v497 = vsel %vm306, %v102, 0
    %v500 = vsel %vm306, %v103, 0
    %v503 = vsel %vm306, %v104, 0
    %v506 = vsel %vm306, %v105, 0
    %v509 = vsel %vm306, %v106, 0
    %v512 = vsel %vm306, %v107, 0
    %v515 = vsel %vm306, %v108, 0
    %v518 = vsel %vm306, %v109, 0
    %v521 = vsel %vm306, %v110, 0
    %v524 = vsel %vm306, %v111, 0
    %v527 = vsel %vm306, %v112, 0
    %v530 = vsel %vm306, %v113, 0
    %v533 = vsel %vm306, %v114, 0
    %v536 = vsel %vm306, %v115, 0
    %v539 = vsel %vm306, %v116, 0
    %v542 = vsel %vm306, %v117, 0
    %v545 = vsel %vm306, %v118, 0
    %v548 = vsel %vm306, %v119, 0
    %v551 = vsel %vm306, %v120, 0
    %v554 = vsel %vm306, %v121, 0
    %v557 = vsel %vm306, %v122, 0
    %v560 = vsel %vm306, %v123, 0
    %v563 = vsel %vm306, %v124, 0
    %v566 = vsel %vm306, %v125, 0
    %v569 = vsel %vm306, %v126, 0
    %v572 = vsel %vm306, %v127, 0
    %v575 = vsel %vm306, %v128, 0
    %v578 = vsel %vm306, %v129, 0
    %v581 = vsel %vm306, %v130, 0
    %v584 = vsel %vm306, %v131, 0
    %v587 = vsel %vm306, %v132, 0
    %v590 = vsel %vm306, %v133, 0
    %v593 = vsel %vm306, %v134, 0
    %v596 = vsel %vm306, %v135, 0
    %v599 = vsel %vm306, %v136, 0
    %v602 = vsel %vm306, %v137, 0
    %v605 = vsel %vm306, %v138, 0
    %v608 = vsel %vm306, %v139, 0
    %v611 = vsel %vm306, %v140, 0
    %v614 = vsel %vm306, %v141, 0
    %v617 = vsel %vm306, %v142, 0
    %v620 = vsel %vm306, %v143, 0
    %v623 = vsel %vm306, %v144, 0
    %v626 = vsel %vm306, %v145, 0
    %v629 = vsel %vm306, %v146, 0
    %v632 = vsel %vm306, %v147, 0
    %v635 = vsel %vm306, %v148, 0
    %v638 = vsel %vm306, %v149, 0
    %v641 = vsel %vm306, %v150, 0
    %v644 = vsel %vm306, %v151, 0
    %v647 = vsel %vm306, %v152, 0
    %v650 = vsel %vm306, %v153, 0
    %v653 = vsel %vm306, %v154, 0
    %v656 = vsel %vm306, %v155, 0
    %v659 = vsel %vm306, %v156, 0
    %v662 = vsel %vm306, %v157, 0
    %v665 = vsel %vm306, %v158, 0
    %v668 = vsel %vm306, %v159, 0
    %v671 = vsel %vm306, %v160, 0
    %v674 = vsel %vm306, %v161, 0
    %v677 = vsel %vm306, %v162, 0
    %v680 = vsel %vm306, %v163, 0
    %v683 = vsel %vm306, %v164, 0
    %v686 = vsel %vm306, %v165, 0
    %v689 = vsel %vm306, %v166, 0
    %v692 = vsel %vm306, %v167, 0
    %v695 = vsel %vm306, %v168, 0
    %v698 = vsel %vm306, %v169, 0
    %v701 = vsel %vm306, %v170, 0
    %v704 = vsel %vm306, %v171, 0
    %v707 = vsel %vm306, %v172, 0
    %v710 = vsel %vm306, %v173, 0
    %v713 = vsel %vm306, %v174, 0
    %v716 = vsel %vm306, %v175, 0
    %v719 = vsel %vm306, %v176, 0
    %v722 = vsel %vm306, %v177, 0
    %v725 = vsel %vm306, %v178, 0
    %v728 = vsel %vm306, %v179, 0
    %v731 = vsel %vm306, %v180, 0
    %v734 = vsel %vm306, %v181, 0
    %v737 = vsel %vm306, %v182, 0
    %v740 = vsel %vm306, %v183, 0
    %v743 = vsel %vm306, %v184, 0
    %v746 = vsel %vm306, %v185, 0
    %v749 = vsel %vm306, %v186, 0
    %v752 = vsel %vm306, %v187, 0
    %v755 = vsel %vm306, %v188, 0
    %v758 = vsel %vm306, %v189, 0
    %v761 = vsel %vm306, %v190, 0
    %v764 = vsel %vm306, %v191, 0
    %v767 = vsel %vm306, %v192, 0
    %v770 = vsel %vm306, %v193, 0
    %v773 = vsel %vm306, %v194, 0
    %v776 = vsel %vm306, %v195, 0
    %v779 = vsel %vm306, %v196, 0
    %v782 = vsel %vm306, %v197, 0
    %v785 = vsel %vm306, %v198, 0
    %v788 = vsel %vm306, %v199, 0
    %v791 = vsel %vm306, %v200, 0
    %v794 = vsel %vm306, %v201, 0
    %v797 = vsel %vm306, %v202, 0
    %v800 = vsel %vm306, %v203, 0
    %v803 = vsel %vm306, %v204, 0
    %v806 = vsel %vm306, %v205, 0
    %v809 = vsel %vm306, %v206, 0
    %v812 = vsel %vm306, %v207, 0
    %v815 = vsel %vm306, %v208, 0
    %v818 = vsel %vm306, %v209, 0
    %v821 = vsel %vm306, %v210, 0
    %v824 = vsel %vm306, %v211, 0
    %v827 = vsel %vm306, %v212, 0
    %v830 = vsel %vm306, %v213, 0
    %v833 = vsel %vm306, %v214, 0
    %v836 = vsel %vm306, %v215, 0
    %v839 = vsel %vm306, %v216, 0
    %v842 = vsel %vm306, %v217, 0
    %v845 = vsel %vm306, %v218, 0
    %v848 = vsel %vm306, %v219, 0
    %v851 = vsel %vm306, %v220, 0
    %v854 = vsel %vm306, %v221, 0
    %v857 = vsel %vm306, %v222, 0
    %v860 = vsel %vm306, %v223, 0
    %v863 = vsel %vm306, %v224, 0
    %v866 = vsel %vm306, %v225, 0
    %v869 = vsel %vm306, %v226, 0
    %v872 = vsel %vm306, %v227, 0
    %v875 = vsel %vm306, %v228, 0
    %v878 = vsel %vm306, %v229, 0
    %v881 = vsel %vm306, %v230, 0
    %v884 = vsel %vm306, %v231, 0
    %v887 = vsel %vm306, %v232, 0
    %v890 = vsel %vm306, %v233, 0
    %v893 = vsel %vm306, %v234, 0
    %v896 = vsel %vm306, %v235, 0
    %v899 = vsel %vm306, %v236, 0
    %v902 = vsel %vm306, %v237, 0
    %v905 = vsel %vm306, %v238, 0
    %v908 = vsel %vm306, %v239, 0
    %v911 = vsel %vm306, %v240, 0
    %v914 = vsel %vm306, %v241, 0
    %v917 = vsel %vm306, %v242, 0
    %v920 = vsel %vm306, %v243, 0
    %v923 = vsel %vm306, %v244, 0
    %v926 = vsel %vm306, %v245, 0
    %v929 = vsel %vm306, %v246, 0
    %v932 = vsel %vm306, %v247, 0
    %v935 = vsel %vm306, %v248, 0
    %v938 = vsel %vm306, %v249, 0
    %v941 = vsel %vm306, %v250, 0
    %v944 = vsel %vm306, %v251, 0
    %v947 = vsel %vm306, %v252, 0
    %v950 = vsel %vm306, %v253, 0
    %v953 = vsel %vm306, %v254, 0
    %v956 = vsel %vm306, %v255, 0
    %v959 = vsel %vm306, %v256, 0
    %v962 = vsel %vm306, %v257, 0
    %v965 = vsel %vm306, %v258, 0
    %v968 = vsel %vm306, %v259, 0
    %v971 = vsel %vm306, %v260, 0
    %v974 = vsel %vm306, %v261, 0
    %v977 = vsel %vm306, %v262, 0
    %v980 = vsel %vm306, %v263, 0
    %v983 = vsel %vm306, %v264, 0
    %v986 = vsel %vm306, %v265, 0
    %v989 = vsel %vm306, %v266, 0
    %v992 = vsel %vm306, %v267, 0
    %v995 = vsel %vm306, %v268, 0
    %v998 = vsel %vm306, %v269, 0
    %v1001 = vsel %vm306, %v270, 0
    %v1004 = vsel %vm306, %v271, 0
    %v1007 = vsel %vm306, %v272, 0
    %v1010 = vsel %vm306, %v273, 0
    %v1013 = vsel %vm306, %v274, 0
    %v1016 = vsel %vm306, %v275, 0
    %v1019 = vsel %vm306, %v276, 0
    %v1022 = vsel %vm306, %v277, 0
    %v1025 = vsel %vm306, %v278, 0
    %v1028 = vsel %vm306, %v279, 0
    %v1031 = vsel %vm306, %v280, 0
    %v1034 = vsel %vm306, %v281, 0
    %v1037 = vsel %vm306, %v282, 0
    %v1040 = vsel %vm306, %v283, 0
    %v1043 = vsel %vm306, %v284, 0
    %v1046 = vsel %vm306, %v285, 0
    %v1049 = vsel %vm306, %v286, 0
    %v1052 = vsel %vm306, %v287, 0
    %v1055 = vsel %vm306, %v288, 0
    %v1058 = vsel %vm306, %v289, 0
    %v1061 = vsel %vm306, %v290, 0
    %v1064 = vsel %vm306, %v291, 0
    %v1067 = vsel %vm306, %v292, 0
    %v1070 = vsel %vm306, %v293, 0
    %v1073 = vsel %vm306, %v294, 0
    %vm1075 = vcmask 1042432
    %v1077 = vsel %vm1075, %v298, 0
    %1079 = vmatprep.subr.mxu0 0.0
    %1080 = vmatpush1.msra.mxu0 %v295
    %1081 = vmatprep.subr.mxu0 0.0
    %1082 = vmatpush1.msra.mxu0 %v296
    %1083 = vmatprep.subr.mxu0 0.0
    %1084 = vmatpush1.msra.mxu0 %v297
    %1085 = vmatprep.subr.mxu0 0.0
    %1086 = vmatpush1.msra.mxu0 %v1077
    %1087 = vmatprep.subr.mxu0 0.0
    %1088 = vmatpush1.msra.mxu0 0.0
    %1089 = vmatprep.subr.mxu0 0.0
    %1090 = vmatpush1.msra.mxu0 0.0
    %1091 = vmatprep.subr.mxu0 0.0
    %1092 = vmatpush1.msra.mxu0 0.0
    %1093 = vmatprep.subr.mxu0 0.0
    %1094 = vmatpush1.msra.mxu0 0.0
    %1095 = vmatprep.subr.mxu0 0.0
    %1096 = vmatpush1.msra.mxu0 0.0
    %1097 = vmatprep.subr.mxu0 0.0
    %1098 = vmatpush1.msra.mxu0 0.0
    %1099 = vmatprep.subr.mxu0 0.0
    %1100 = vmatpush1.msra.mxu0 0.0
    %1101 = vmatprep.subr.mxu0 0.0
    %1102 = vmatpush1.msra.mxu0 0.0
    %1103 = vmatprep.subr.mxu0 0.0
    %1104 = vmatpush1.msra.mxu0 0.0
    %1105 = vmatprep.subr.mxu0 0.0
    %1106 = vmatpush1.msra.mxu0 0.0
    %1107 = vmatprep.subr.mxu0 0.0
    %1108 = vmatpush1.msra.mxu0 0.0
    %1109 = vmatprep.subr.mxu0 0.0
    %1110 = vmatpush1.msra.mxu0 0.0
    %1111 = vmatprep.subr.mxu0 0.0
    %1112 = vmatpush1.msra.mxu0 0.0
    %1113 = vmatprep.subr.mxu0 0.0
    %1114 = vmatpush1.msra.mxu0 0.0
    %1115 = vmatprep.subr.mxu0 0.0
    %1116 = vmatpush1.msra.mxu0 0.0
    %1117 = vmatprep.subr.mxu0 0.0
    %1118 = vmatpush1.msra.mxu0 0.0
    %1119 = vmatprep.subr.mxu0 0.0
    %1120 = vmatpush1.msra.mxu0 0.0
    %1121 = vmatprep.subr.mxu0 0.0
    %1122 = vmatpush1.msra.mxu0 0.0
    %1123 = vmatprep.subr.mxu0 0.0
    %1124 = vmatpush1.msra.mxu0 0.0
    %1125 = vmatprep.subr.mxu0 0.0
    %1126 = vmatpush1.msra.mxu0 0.0
    %1127 = vmatprep.subr.mxu0 0.0
    %1128 = vmatpush1.msra.mxu0 0.0
    %1129 = vmatprep.subr.mxu0 0.0
    %1130 = vmatpush1.msra.mxu0 0.0
    %1131 = vmatprep.subr.mxu0 0.0
    %1132 = vmatpush1.msra.mxu0 0.0
    %1133 = vmatprep.subr.mxu0 0.0
    %1134 = vmatpush1.msra.mxu0 0.0
    %1135 = vmatprep.subr.mxu0 0.0
    %1136 = vmatpush1.msra.mxu0 0.0
    %1137 = vmatprep.subr.mxu0 0.0
    %1138 = vmatpush1.msra.mxu0 0.0
    %1139 = vmatprep.subr.mxu0 0.0
    %1140 = vmatpush1.msra.mxu0 0.0
    %1141 = vmatprep.subr.mxu0 0.0
    %1142 = vmatpush1.msra.mxu0 0.0
    %1143 = vmatprep.mubr.f32.mxu0 0.0
    %1144 = vmatmul.mubr.f32.gmra.mrb[0].mxu0 %v308
    %v1145 = vpop.f32.mrb[0].mxu0
    %v1146 = vadd.f32 %v304, %v1145
    %v1147 = vpop.f32.mrb[0].mxu0
    %1148 = vmatprep.mubr.f32.mxu0 0.0
    %1149 = vmatmul.mubr.f32.gmra.mrb[0].mxu0 %v311
    %v1150 = vpop.f32.mrb[0].mxu0
    %v1151 = vadd.f32 %v304, %v1150
    %v1152 = vpop.f32.mrb[0].mxu0
    %1153 = vmatprep.mubr.f32.mxu0 0.0
    %1154 = vmatmul.mubr.f32.gmra.mrb[0].mxu0 %v314
    %v1155 = vpop.f32.mrb[0].mxu0
    %v1156 = vadd.f32 %v304, %v1155
    %v1157 = vpop.f32.mrb[0].mxu0
    %1158 = vmatprep.mubr.f32.mxu0 0.0
    %1159 = vmatmul.mubr.f32.gmra.mrb[0].mxu0 %v317
    %v1160 = vpop.f32.mrb[0].mxu0
    %v1161 = vadd.f32 %v304, %v1160
    %v1162 = vpop.f32.mrb[0].mxu0
    %1163 = vmatprep.mubr.f32.mxu0 0.0
    %1164 = vmatmul.mubr.f32.gmra.mrb[0].mxu0 %v320
    %v1165 = vpop.f32.mrb[0].mxu0
    %v1166 = vadd.f32 %v304, %v1165
    %v1167 = vpop.f32.mrb[0].mxu0
    %1168 = vmatprep.mubr.f32.mxu0 0.0
    %1169 = vmatmul.mubr.f32.gmra.mrb[0].mxu0 %v323
    %v1170 = vpop.f32.mrb[0].mxu0
    %v1171 = vadd.f32 %v304, %v1170
    %v1172 = vpop.f32.mrb[0].mxu0
    %1173 = vmatprep.mubr.f32.mxu0 0.0
    %1174 = vmatmul.mubr.f32.gmra.mrb[0].mxu0 %v326
    %v1175 = vpop.f32.mrb[0].mxu0
    %v1176 = vadd.f32 %v304, %v1175
    %v1177 = vpop.f32.mrb[0].mxu0
    %1178 = vmatprep.mubr.f32.mxu0 0.0
    %1179 = vmatmul.mubr.f32.gmra.mrb[0].mxu0 %v329
    %v1180 = vpop.f32.mrb[0].mxu0
    %v1181 = vadd.f32 %v304, %v1180
    %v1182 = vpop.f32.mrb[0].mxu0
    %1183 = vmatprep.mubr.f32.mxu0 0.0
    %1184 = vmatmul.mubr.f32.gmra.mrb[0].mxu0 %v332
    %v1185 = vpop.f32.mrb[0].mxu0
    %v1186 = vadd.f32 %v304, %v1185
    %v1187 = vpop.f32.mrb[0].mxu0
    %1188 = vmatprep.mubr.f32.mxu0 0.0
    %1189 = vmatmul.mubr.f32.gmra.mrb[0].mxu0 %v335
    %v1190 = vpop.f32.mrb[0].mxu0
    %v1191 = vadd.f32 %v304, %v1190
    %v1192 = vpop.f32.mrb[0].mxu0
    %1193 = vmatprep.mubr.f32.mxu0 0.0
    %1194 = vmatmul.mubr.f32.gmra.mrb[0].mxu0 %v338
    %v1195 = vpop.f32.mrb[0].mxu0
    %v1196 = vadd.f32 %v304, %v1195
    %v1197 = vpop.f32.mrb[0].mxu0
    %1198 = vmatprep.mubr.f32.mxu0 0.0
    %1199 = vmatmul.mubr.f32.gmra.mrb[0].mxu0 %v341
    %v1200 = vpop.f32.mrb[0].mxu0
    %v1201 = vadd.f32 %v304, %v1200
    %v1202 = vpop.f32.mrb[0].mxu0
    %1203 = vmatprep.mubr.f32.mxu0 0.0
    %1204 = vmatmul.mubr.f32.gmra.mrb[0].mxu0 %v344
    %v1205 = vpop.f32.mrb[0].mxu0
    %v1206 = vadd.f32 %v304, %v1205
    %v1207 = vpop.f32.mrb[0].mxu0
    %1208 = vmatprep.mubr.f32.mxu0 0.0
    %1209 = vmatmul.mubr.f32.gmra.mrb[0].mxu0 %v347
    %v1210 = vpop.f32.mrb[0].mxu0
    %v1211 = vadd.f32 %v304, %v1210
    %v1212 = vpop.f32.mrb[0].mxu0
    %1213 = vmatprep.mubr.f32.mxu0 0.0
    %1214 = vmatmul.mubr.f32.gmra.mrb[0].mxu0 %v350
    %v1215 = vpop.f32.mrb[0].mxu0
    %v1216 = vadd.f32 %v304, %v1215
    %v1217 = vpop.f32.mrb[0].mxu0
    %1218 = vmatprep.mubr.f32.mxu0 0.0
    %1219 = vmatmul.mubr.f32.gmra.mrb[0].mxu0 %v353
    %v1220 = vpop.f32.mrb[0].mxu0
    %v1221 = vadd.f32 %v304, %v1220
    %v1222 = vpop.f32.mrb[0].mxu0
    %1223 = vmatprep.mubr.f32.mxu0 0.0
    %1224 = vmatmul.mubr.f32.gmra.mrb[0].mxu0 %v356
    %v1225 = vpop.f32.mrb[0].mxu0
    %v1226 = vadd.f32 %v304, %v1225
    %v1227 = vpop.f32.mrb[0].mxu0
    %1228 = vmatprep.mubr.f32.mxu0 0.0
    %1229 = vmatmul.mubr.f32.gmra.mrb[0].mxu0 %v359
    %v1230 = vpop.f32.mrb[0].mxu0
    %v1231 = vadd.f32 %v304, %v1230
    %v1232 = vpop.f32.mrb[0].mxu0
    %1233 = vmatprep.mubr.f32.mxu0 0.0
    %1234 = vmatmul.mubr.f32.gmra.mrb[0].mxu0 %v362
    %v1235 = vpop.f32.mrb[0].mxu0
    %v1236 = vadd.f32 %v304, %v1235
    %v1237 = vpop.f32.mrb[0].mxu0
    %1238 = vmatprep.mubr.f32.mxu0 0.0
    %1239 = vmatmul.mubr.f32.gmra.mrb[0].mxu0 %v365
    %v1240 = vpop.f32.mrb[0].mxu0
    %v1241 = vadd.f32 %v304, %v1240
    %v1242 = vpop.f32.mrb[0].mxu0
    %1243 = vmatprep.mubr.f32.mxu0 0.0
    %1244 = vmatmul.mubr.f32.gmra.mrb[0].mxu0 %v368
    %v1245 = vpop.f32.mrb[0].mxu0
    %v1246 = vadd.f32 %v304, %v1245
    %v1247 = vpop.f32.mrb[0].mxu0
    %1248 = vmatprep.mubr.f32.mxu0 0.0
    %1249 = vmatmul.mubr.f32.gmra.mrb[0].mxu0 %v371
    %v1250 = vpop.f32.mrb[0].mxu0
    %v1251 = vadd.f32 %v304, %v1250
    %v1252 = vpop.f32.mrb[0].mxu0
    %1253 = vmatprep.mubr.f32.mxu0 0.0
    %1254 = vmatmul.mubr.f32.gmra.mrb[0].mxu0 %v374
    %v1255 = vpop.f32.mrb[0].mxu0
    %v1256 = vadd.f32 %v304, %v1255
    %v1257 = vpop.f32.mrb[0].mxu0
    %1258 = vmatprep.mubr.f32.mxu0 0.0
    %1259 = vmatmul.mubr.f32.gmra.mrb[0].mxu0 %v377
    %v1260 = vpop.f32.mrb[0].mxu0
    %v1261 = vadd.f32 %v304, %v1260
    %v1262 = vpop.f32.mrb[0].mxu0
    %1263 = vmatprep.mubr.f32.mxu0 0.0
    %1264 = vmatmul.mubr.f32.gmra.mrb[0].mxu0 %v380
    %v1265 = vpop.f32.mrb[0].mxu0
    %v1266 = vadd.f32 %v304, %v1265
    %v1267 = vpop.f32.mrb[0].mxu0
    %1268 = vmatprep.mubr.f32.mxu0 0.0
    %1269 = vmatmul.mubr.f32.gmra.mrb[0].mxu0 %v383
    %v1270 = vpop.f32.mrb[0].mxu0
    %v1271 = vadd.f32 %v304, %v1270
    %v1272 = vpop.f32.mrb[0].mxu0
    %1273 = vmatprep.mubr.f32.mxu0 0.0
    %1274 = vmatmul.mubr.f32.gmra.mrb[0].mxu0 %v386
    %v1275 = vpop.f32.mrb[0].mxu0
    %v1276 = vadd.f32 %v304, %v1275
    %v1277 = vpop.f32.mrb[0].mxu0
    %1278 = vmatprep.mubr.f32.mxu0 0.0
    %1279 = vmatmul.mubr.f32.gmra.mrb[0].mxu0 %v389
    %v1280 = vpop.f32.mrb[0].mxu0
    %v1281 = vadd.f32 %v304, %v1280
    %v1282 = vpop.f32.mrb[0].mxu0
    %1283 = vmatprep.mubr.f32.mxu0 0.0
    %1284 = vmatmul.mubr.f32.gmra.mrb[0].mxu0 %v392
    %v1285 = vpop.f32.mrb[0].mxu0
    %v1286 = vadd.f32 %v304, %v1285
    %v1287 = vpop.f32.mrb[0].mxu0
    %1288 = vmatprep.mubr.f32.mxu0 0.0
    %1289 = vmatmul.mubr.f32.gmra.mrb[0].mxu0 %v395
    %v1290 = vpop.f32.mrb[0].mxu0
    %v1291 = vadd.f32 %v304, %v1290
    %v1292 = vpop.f32.mrb[0].mxu0
    %1293 = vmatprep.mubr.f32.mxu0 0.0
    %1294 = vmatmul.mubr.f32.gmra.mrb[0].mxu0 %v398
    %v1295 = vpop.f32.mrb[0].mxu0
    %v1296 = vadd.f32 %v304, %v1295
    %v1297 = vpop.f32.mrb[0].mxu0
    %1298 = vmatprep.mubr.f32.mxu0 0.0
    %1299 = vmatmul.mubr.f32.gmra.mrb[0].mxu0 %v401
    %v1300 = vpop.f32.mrb[0].mxu0
    %v1301 = vadd.f32 %v304, %v1300
    %v1302 = vpop.f32.mrb[0].mxu0
    %1303 = vmatprep.mubr.f32.mxu0 0.0
    %1304 = vmatmul.mubr.f32.gmra.mrb[0].mxu0 %v404
    %v1305 = vpop.f32.mrb[0].mxu0
    %v1306 = vadd.f32 %v304, %v1305
    %v1307 = vpop.f32.mrb[0].mxu0
    %1308 = vmatprep.mubr.f32.mxu0 0.0
    %1309 = vmatmul.mubr.f32.gmra.mrb[0].mxu0 %v407
    %v1310 = vpop.f32.mrb[0].mxu0
    %v1311 = vadd.f32 %v304, %v1310
    %v1312 = vpop.f32.mrb[0].mxu0
    %1313 = vmatprep.mubr.f32.mxu0 0.0
    %1314 = vmatmul.mubr.f32.gmra.mrb[0].mxu0 %v410
    %v1315 = vpop.f32.mrb[0].mxu0
    %v1316 = vadd.f32 %v304, %v1315
    %v1317 = vpop.f32.mrb[0].mxu0
    %1318 = vmatprep.mubr.f32.mxu0 0.0
    %1319 = vmatmul.mubr.f32.gmra.mrb[0].mxu0 %v413
    %v1320 = vpop.f32.mrb[0].mxu0
    %v1321 = vadd.f32 %v304, %v1320
    %v1322 = vpop.f32.mrb[0].mxu0
    %1323 = vmatprep.mubr.f32.mxu0 0.0
    %1324 = vmatmul.mubr.f32.gmra.mrb[0].mxu0 %v416
    %v1325 = vpop.f32.mrb[0].mxu0
    %v1326 = vadd.f32 %v304, %v1325
    %v1327 = vpop.f32.mrb[0].mxu0
    %1328 = vmatprep.mubr.f32.mxu0 0.0
    %1329 = vmatmul.mubr.f32.gmra.mrb[0].mxu0 %v419
    %v1330 = vpop.f32.mrb[0].mxu0
    %v1331 = vadd.f32 %v304, %v1330
    %v1332 = vpop.f32.mrb[0].mxu0
    %1333 = vmatprep.mubr.f32.mxu0 0.0
    %1334 = vmatmul.mubr.f32.gmra.mrb[0].mxu0 %v422
    %v1335 = vpop.f32.mrb[0].mxu0
    %v1336 = vadd.f32 %v304, %v1335
    %v1337 = vpop.f32.mrb[0].mxu0
    %1338 = vmatprep.mubr.f32.mxu0 0.0
    %1339 = vmatmul.mubr.f32.gmra.mrb[0].mxu0 %v425
    %v1340 = vpop.f32.mrb[0].mxu0
    %v1341 = vadd.f32 %v304, %v1340
    %v1342 = vpop.f32.mrb[0].mxu0
    %1343 = vmatprep.mubr.f32.mxu0 0.0
    %1344 = vmatmul.mubr.f32.gmra.mrb[0].mxu0 %v428
    %v1345 = vpop.f32.mrb[0].mxu0
    %v1346 = vadd.f32 %v304, %v1345
    %v1347 = vpop.f32.mrb[0].mxu0
    %1348 = vmatprep.mubr.f32.mxu0 0.0
    %1349 = vmatmul.mubr.f32.gmra.mrb[0].mxu0 %v431
    %v1350 = vpop.f32.mrb[0].mxu0
    %v1351 = vadd.f32 %v304, %v1350
    %v1352 = vpop.f32.mrb[0].mxu0
    %1353 = vmatprep.mubr.f32.mxu0 0.0
    %1354 = vmatmul.mubr.f32.gmra.mrb[0].mxu0 %v434
    %v1355 = vpop.f32.mrb[0].mxu0
    %v1356 = vadd.f32 %v304, %v1355
    %v1357 = vpop.f32.mrb[0].mxu0
    %1358 = vmatprep.mubr.f32.mxu0 0.0
    %1359 = vmatmul.mubr.f32.gmra.mrb[0].mxu0 %v437
    %v1360 = vpop.f32.mrb[0].mxu0
    %v1361 = vadd.f32 %v304, %v1360
    %v1362 = vpop.f32.mrb[0].mxu0
    %1363 = vmatprep.mubr.f32.mxu0 0.0
    %1364 = vmatmul.mubr.f32.gmra.mrb[0].mxu0 %v440
    %v1365 = vpop.f32.mrb[0].mxu0
    %v1366 = vadd.f32 %v304, %v1365
    %v1367 = vpop.f32.mrb[0].mxu0
    %1368 = vmatprep.mubr.f32.mxu0 0.0
    %1369 = vmatmul.mubr.f32.gmra.mrb[0].mxu0 %v443
    %v1370 = vpop.f32.mrb[0].mxu0
    %v1371 = vadd.f32 %v304, %v1370
    %v1372 = vpop.f32.mrb[0].mxu0
    %1373 = vmatprep.mubr.f32.mxu0 0.0
    %1374 = vmatmul.mubr.f32.gmra.mrb[0].mxu0 %v446
    %v1375 = vpop.f32.mrb[0].mxu0
    %v1376 = vadd.f32 %v304, %v1375
    %v1377 = vpop.f32.mrb[0].mxu0
    %1378 = vmatprep.mubr.f32.mxu0 0.0
    %1379 = vmatmul.mubr.f32.gmra.mrb[0].mxu0 %v449
    %v1380 = vpop.f32.mrb[0].mxu0
    %v1381 = vadd.f32 %v304, %v1380
    %v1382 = vpop.f32.mrb[0].mxu0
    %1383 = vmatprep.mubr.f32.mxu0 0.0
    %1384 = vmatmul.mubr.f32.gmra.mrb[0].mxu0 %v452
    %v1385 = vpop.f32.mrb[0].mxu0
    %v1386 = vadd.f32 %v304, %v1385
    %v1387 = vpop.f32.mrb[0].mxu0
    %1388 = vmatprep.mubr.f32.mxu0 0.0
    %1389 = vmatmul.mubr.f32.gmra.mrb[0].mxu0 %v455
    %v1390 = vpop.f32.mrb[0].mxu0
    %v1391 = vadd.f32 %v304, %v1390
    %v1392 = vpop.f32.mrb[0].mxu0
    %1393 = vmatprep.mubr.f32.mxu0 0.0
    %1394 = vmatmul.mubr.f32.gmra.mrb[0].mxu0 %v458
    %v1395 = vpop.f32.mrb[0].mxu0
    %v1396 = vadd.f32 %v304, %v1395
    %v1397 = vpop.f32.mrb[0].mxu0
    %1398 = vmatprep.mubr.f32.mxu0 0.0
    %1399 = vmatmul.mubr.f32.gmra.mrb[0].mxu0 %v461
    %v1400 = vpop.f32.mrb[0].mxu0
    %v1401 = vadd.f32 %v304, %v1400
    %v1402 = vpop.f32.mrb[0].mxu0
    %1403 = vmatprep.mubr.f32.mxu0 0.0
    %1404 = vmatmul.mubr.f32.gmra.mrb[0].mxu0 %v464
    %v1405 = vpop.f32.mrb[0].mxu0
    %v1406 = vadd.f32 %v304, %v1405
    %v1407 = vpop.f32.mrb[0].mxu0
    %1408 = vmatprep.mubr.f32.mxu0 0.0
    %1409 = vmatmul.mubr.f32.gmra.mrb[0].mxu0 %v467
    %v1410 = vpop.f32.mrb[0].mxu0
    %v1411 = vadd.f32 %v304, %v1410
    %v1412 = vpop.f32.mrb[0].mxu0
    %1413 = vmatprep.mubr.f32.mxu0 0.0
    %1414 = vmatmul.mubr.f32.gmra.mrb[0].mxu0 %v470
    %v1415 = vpop.f32.mrb[0].mxu0
    %v1416 = vadd.f32 %v304, %v1415
    %v1417 = vpop.f32.mrb[0].mxu0
    %1418 = vmatprep.mubr.f32.mxu0 0.0
    %1419 = vmatmul.mubr.f32.gmra.mrb[0].mxu0 %v473
    %v1420 = vpop.f32.mrb[0].mxu0
    %v1421 = vadd.f32 %v304, %v1420
    %v1422 = vpop.f32.mrb[0].mxu0
    %1423 = vmatprep.mubr.f32.mxu0 0.0
    %1424 = vmatmul.mubr.f32.gmra.mrb[0].mxu0 %v476
    %v1425 = vpop.f32.mrb[0].mxu0
    %v1426 = vadd.f32 %v304, %v1425
    %v1427 = vpop.f32.mrb[0].mxu0
    %1428 = vmatprep.mubr.f32.mxu0 0.0
    %1429 = vmatmul.mubr.f32.gmra.mrb[0].mxu0 %v479
    %v1430 = vpop.f32.mrb[0].mxu0
    %v1431 = vadd.f32 %v304, %v1430
    %v1432 = vpop.f32.mrb[0].mxu0
    %1433 = vmatprep.mubr.f32.mxu0 0.0
    %1434 = vmatmul.mubr.f32.gmra.mrb[0].mxu0 %v482
    %v1435 = vpop.f32.mrb[0].mxu0
    %v1436 = vadd.f32 %v304, %v1435
    %v1437 = vpop.f32.mrb[0].mxu0
    %1438 = vmatprep.mubr.f32.mxu0 0.0
    %1439 = vmatmul.mubr.f32.gmra.mrb[0].mxu0 %v485
    %v1440 = vpop.f32.mrb[0].mxu0
    %v1441 = vadd.f32 %v304, %v1440
    %v1442 = vpop.f32.mrb[0].mxu0
    %1443 = vmatprep.mubr.f32.mxu0 0.0
    %1444 = vmatmul.mubr.f32.gmra.mrb[0].mxu0 %v488
    %v1445 = vpop.f32.mrb[0].mxu0
    %v1446 = vadd.f32 %v304, %v1445
    %v1447 = vpop.f32.mrb[0].mxu0
    %1448 = vmatprep.mubr.f32.mxu0 0.0
    %1449 = vmatmul.mubr.f32.gmra.mrb[0].mxu0 %v491
    %v1450 = vpop.f32.mrb[0].mxu0
    %v1451 = vadd.f32 %v304, %v1450
    %v1452 = vpop.f32.mrb[0].mxu0
    %1453 = vmatprep.mubr.f32.mxu0 0.0
    %1454 = vmatmul.mubr.f32.gmra.mrb[0].mxu0 %v494
    %v1455 = vpop.f32.mrb[0].mxu0
    %v1456 = vadd.f32 %v304, %v1455
    %v1457 = vpop.f32.mrb[0].mxu0
    %1458 = vmatprep.mubr.f32.mxu0 0.0
    %1459 = vmatmul.mubr.f32.gmra.mrb[0].mxu0 %v497
    %v1460 = vpop.f32.mrb[0].mxu0
    %v1461 = vadd.f32 %v304, %v1460
    %v1462 = vpop.f32.mrb[0].mxu0
    %1463 = vmatprep.mubr.f32.mxu0 0.0
    %1464 = vmatmul.mubr.f32.gmra.mrb[0].mxu0 %v500
    %v1465 = vpop.f32.mrb[0].mxu0
    %v1466 = vadd.f32 %v304, %v1465
    %v1467 = vpop.f32.mrb[0].mxu0
    %1468 = vmatprep.mubr.f32.mxu0 0.0
    %1469 = vmatmul.mubr.f32.gmra.mrb[0].mxu0 %v503
    %v1470 = vpop.f32.mrb[0].mxu0
    %v1471 = vadd.f32 %v304, %v1470
    %v1472 = vpop.f32.mrb[0].mxu0
    %1473 = vmatprep.mubr.f32.mxu0 0.0
    %1474 = vmatmul.mubr.f32.gmra.mrb[0].mxu0 %v506
    %v1475 = vpop.f32.mrb[0].mxu0
    %v1476 = vadd.f32 %v304, %v1475
    %v1477 = vpop.f32.mrb[0].mxu0
    %1478 = vmatprep.mubr.f32.mxu0 0.0
    %1479 = vmatmul.mubr.f32.gmra.mrb[0].mxu0 %v509
    %v1480 = vpop.f32.mrb[0].mxu0
    %v1481 = vadd.f32 %v304, %v1480
    %v1482 = vpop.f32.mrb[0].mxu0
    %1483 = vmatprep.mubr.f32.mxu0 0.0
    %1484 = vmatmul.mubr.f32.gmra.mrb[0].mxu0 %v512
    %v1485 = vpop.f32.mrb[0].mxu0
    %v1486 = vadd.f32 %v304, %v1485
    %v1487 = vpop.f32.mrb[0].mxu0
    %1488 = vmatprep.mubr.f32.mxu0 0.0
    %1489 = vmatmul.mubr.f32.gmra.mrb[0].mxu0 %v515
    %v1490 = vpop.f32.mrb[0].mxu0
    %v1491 = vadd.f32 %v304, %v1490
    %v1492 = vpop.f32.mrb[0].mxu0
    %1493 = vmatprep.mubr.f32.mxu0 0.0
    %1494 = vmatmul.mubr.f32.gmra.mrb[0].mxu0 %v518
    %v1495 = vpop.f32.mrb[0].mxu0
    %v1496 = vadd.f32 %v304, %v1495
    %v1497 = vpop.f32.mrb[0].mxu0
    %1498 = vmatprep.mubr.f32.mxu0 0.0
    %1499 = vmatmul.mubr.f32.gmra.mrb[0].mxu0 %v521
    %v1500 = vpop.f32.mrb[0].mxu0
    %v1501 = vadd.f32 %v304, %v1500
    %v1502 = vpop.f32.mrb[0].mxu0
    %1503 = vmatprep.mubr.f32.mxu0 0.0
    %1504 = vmatmul.mubr.f32.gmra.mrb[0].mxu0 %v524
    %v1505 = vpop.f32.mrb[0].mxu0
    %v1506 = vadd.f32 %v304, %v1505
    %v1507 = vpop.f32.mrb[0].mxu0
    %1508 = vmatprep.mubr.f32.mxu0 0.0
    %1509 = vmatmul.mubr.f32.gmra.mrb[0].mxu0 %v527
    %v1510 = vpop.f32.mrb[0].mxu0
    %v1511 = vadd.f32 %v304, %v1510
    %v1512 = vpop.f32.mrb[0].mxu0
    %1513 = vmatprep.mubr.f32.mxu0 0.0
    %1514 = vmatmul.mubr.f32.gmra.mrb[0].mxu0 %v530
    %v1515 = vpop.f32.mrb[0].mxu0
    %v1516 = vadd.f32 %v304, %v1515
    %v1517 = vpop.f32.mrb[0].mxu0
    %1518 = vmatprep.mubr.f32.mxu0 0.0
    %1519 = vmatmul.mubr.f32.gmra.mrb[0].mxu0 %v533
    %v1520 = vpop.f32.mrb[0].mxu0
    %v1521 = vadd.f32 %v304, %v1520
    %v1522 = vpop.f32.mrb[0].mxu0
    %1523 = vmatprep.mubr.f32.mxu0 0.0
    %1524 = vmatmul.mubr.f32.gmra.mrb[0].mxu0 %v536
    %v1525 = vpop.f32.mrb[0].mxu0
    %v1526 = vadd.f32 %v304, %v1525
    %v1527 = vpop.f32.mrb[0].mxu0
    %1528 = vmatprep.mubr.f32.mxu0 0.0
    %1529 = vmatmul.mubr.f32.gmra.mrb[0].mxu0 %v539
    %v1530 = vpop.f32.mrb[0].mxu0
    %v1531 = vadd.f32 %v304, %v1530
    %v1532 = vpop.f32.mrb[0].mxu0
    %1533 = vmatprep.mubr.f32.mxu0 0.0
    %1534 = vmatmul.mubr.f32.gmra.mrb[0].mxu0 %v542
    %v1535 = vpop.f32.mrb[0].mxu0
    %v1536 = vadd.f32 %v304, %v1535
    %v1537 = vpop.f32.mrb[0].mxu0
    %1538 = vmatprep.mubr.f32.mxu0 0.0
    %1539 = vmatmul.mubr.f32.gmra.mrb[0].mxu0 %v545
    %v1540 = vpop.f32.mrb[0].mxu0
    %v1541 = vadd.f32 %v304, %v1540
    %v1542 = vpop.f32.mrb[0].mxu0
    %1543 = vmatprep.mubr.f32.mxu0 0.0
    %1544 = vmatmul.mubr.f32.gmra.mrb[0].mxu0 %v548
    %v1545 = vpop.f32.mrb[0].mxu0
    %v1546 = vadd.f32 %v304, %v1545
    %v1547 = vpop.f32.mrb[0].mxu0
    %1548 = vmatprep.mubr.f32.mxu0 0.0
    %1549 = vmatmul.mubr.f32.gmra.mrb[0].mxu0 %v551
    %v1550 = vpop.f32.mrb[0].mxu0
    %v1551 = vadd.f32 %v304, %v1550
    %v1552 = vpop.f32.mrb[0].mxu0
    %1553 = vmatprep.mubr.f32.mxu0 0.0
    %1554 = vmatmul.mubr.f32.gmra.mrb[0].mxu0 %v554
    %v1555 = vpop.f32.mrb[0].mxu0
    %v1556 = vadd.f32 %v304, %v1555
    %v1557 = vpop.f32.mrb[0].mxu0
    %1558 = vmatprep.mubr.f32.mxu0 0.0
    %1559 = vmatmul.mubr.f32.gmra.mrb[0].mxu0 %v557
    %v1560 = vpop.f32.mrb[0].mxu0
    %v1561 = vadd.f32 %v304, %v1560
    %v1562 = vpop.f32.mrb[0].mxu0
    %1563 = vmatprep.mubr.f32.mxu0 0.0
    %1564 = vmatmul.mubr.f32.gmra.mrb[0].mxu0 %v560
    %v1565 = vpop.f32.mrb[0].mxu0
    %v1566 = vadd.f32 %v304, %v1565
    %v1567 = vpop.f32.mrb[0].mxu0
    %1568 = vmatprep.mubr.f32.mxu0 0.0
    %1569 = vmatmul.mubr.f32.gmra.mrb[0].mxu0 %v563
    %v1570 = vpop.f32.mrb[0].mxu0
    %v1571 = vadd.f32 %v304, %v1570
    %v1572 = vpop.f32.mrb[0].mxu0
    %1573 = vmatprep.mubr.f32.mxu0 0.0
    %1574 = vmatmul.mubr.f32.gmra.mrb[0].mxu0 %v566
    %v1575 = vpop.f32.mrb[0].mxu0
    %v1576 = vadd.f32 %v304, %v1575
    %v1577 = vpop.f32.mrb[0].mxu0
    %1578 = vmatprep.mubr.f32.mxu0 0.0
    %1579 = vmatmul.mubr.f32.gmra.mrb[0].mxu0 %v569
    %v1580 = vpop.f32.mrb[0].mxu0
    %v1581 = vadd.f32 %v304, %v1580
    %v1582 = vpop.f32.mrb[0].mxu0
    %1583 = vmatprep.mubr.f32.mxu0 0.0
    %1584 = vmatmul.mubr.f32.gmra.mrb[0].mxu0 %v572
    %v1585 = vpop.f32.mrb[0].mxu0
    %v1586 = vadd.f32 %v304, %v1585
    %v1587 = vpop.f32.mrb[0].mxu0
    %1588 = vmatprep.mubr.f32.mxu0 0.0
    %1589 = vmatmul.mubr.f32.gmra.mrb[0].mxu0 %v575
    %v1590 = vpop.f32.mrb[0].mxu0
    %v1591 = vadd.f32 %v304, %v1590
    %v1592 = vpop.f32.mrb[0].mxu0
    %1593 = vmatprep.mubr.f32.mxu0 0.0
    %1594 = vmatmul.mubr.f32.gmra.mrb[0].mxu0 %v578
    %v1595 = vpop.f32.mrb[0].mxu0
    %v1596 = vadd.f32 %v304, %v1595
    %v1597 = vpop.f32.mrb[0].mxu0
    %1598 = vmatprep.mubr.f32.mxu0 0.0
    %1599 = vmatmul.mubr.f32.gmra.mrb[0].mxu0 %v581
    %v1600 = vpop.f32.mrb[0].mxu0
    %v1601 = vadd.f32 %v304, %v1600
    %v1602 = vpop.f32.mrb[0].mxu0
    %1603 = vmatprep.mubr.f32.mxu0 0.0
    %1604 = vmatmul.mubr.f32.gmra.mrb[0].mxu0 %v584
    %v1605 = vpop.f32.mrb[0].mxu0
    %v1606 = vadd.f32 %v304, %v1605
    %v1607 = vpop.f32.mrb[0].mxu0
    %1608 = vmatprep.mubr.f32.mxu0 0.0
    %1609 = vmatmul.mubr.f32.gmra.mrb[0].mxu0 %v587
    %v1610 = vpop.f32.mrb[0].mxu0
    %v1611 = vadd.f32 %v304, %v1610
    %v1612 = vpop.f32.mrb[0].mxu0
    %1613 = vmatprep.mubr.f32.mxu0 0.0
    %1614 = vmatmul.mubr.f32.gmra.mrb[0].mxu0 %v590
    %v1615 = vpop.f32.mrb[0].mxu0
    %v1616 = vadd.f32 %v304, %v1615
    %v1617 = vpop.f32.mrb[0].mxu0
    %1618 = vmatprep.mubr.f32.mxu0 0.0
    %1619 = vmatmul.mubr.f32.gmra.mrb[0].mxu0 %v593
    %v1620 = vpop.f32.mrb[0].mxu0
    %v1621 = vadd.f32 %v304, %v1620
    %v1622 = vpop.f32.mrb[0].mxu0
    %1623 = vmatprep.mubr.f32.mxu0 0.0
    %1624 = vmatmul.mubr.f32.gmra.mrb[0].mxu0 %v596
    %v1625 = vpop.f32.mrb[0].mxu0
    %v1626 = vadd.f32 %v304, %v1625
    %v1627 = vpop.f32.mrb[0].mxu0
    %1628 = vmatprep.mubr.f32.mxu0 0.0
    %1629 = vmatmul.mubr.f32.gmra.mrb[0].mxu0 %v599
    %v1630 = vpop.f32.mrb[0].mxu0
    %v1631 = vadd.f32 %v304, %v1630
    %v1632 = vpop.f32.mrb[0].mxu0
    %1633 = vmatprep.mubr.f32.mxu0 0.0
    %1634 = vmatmul.mubr.f32.gmra.mrb[0].mxu0 %v602
    %v1635 = vpop.f32.mrb[0].mxu0
    %v1636 = vadd.f32 %v304, %v1635
    %v1637 = vpop.f32.mrb[0].mxu0
    %1638 = vmatprep.mubr.f32.mxu0 0.0
    %1639 = vmatmul.mubr.f32.gmra.mrb[0].mxu0 %v605
    %v1640 = vpop.f32.mrb[0].mxu0
    %v1641 = vadd.f32 %v304, %v1640
    %v1642 = vpop.f32.mrb[0].mxu0
    %1643 = vmatprep.mubr.f32.mxu0 0.0
    %1644 = vmatmul.mubr.f32.gmra.mrb[0].mxu0 %v608
    %v1645 = vpop.f32.mrb[0].mxu0
    %v1646 = vadd.f32 %v304, %v1645
    %v1647 = vpop.f32.mrb[0].mxu0
    %1648 = vmatprep.mubr.f32.mxu0 0.0
    %1649 = vmatmul.mubr.f32.gmra.mrb[0].mxu0 %v611
    %v1650 = vpop.f32.mrb[0].mxu0
    %v1651 = vadd.f32 %v304, %v1650
    %v1652 = vpop.f32.mrb[0].mxu0
    %1653 = vmatprep.mubr.f32.mxu0 0.0
    %1654 = vmatmul.mubr.f32.gmra.mrb[0].mxu0 %v614
    %v1655 = vpop.f32.mrb[0].mxu0
    %v1656 = vadd.f32 %v304, %v1655
    %v1657 = vpop.f32.mrb[0].mxu0
    %1658 = vmatprep.mubr.f32.mxu0 0.0
    %1659 = vmatmul.mubr.f32.gmra.mrb[0].mxu0 %v617
    %v1660 = vpop.f32.mrb[0].mxu0
    %v1661 = vadd.f32 %v304, %v1660
    %v1662 = vpop.f32.mrb[0].mxu0
    %1663 = vmatprep.mubr.f32.mxu0 0.0
    %1664 = vmatmul.mubr.f32.gmra.mrb[0].mxu0 %v620
    %v1665 = vpop.f32.mrb[0].mxu0
    %v1666 = vadd.f32 %v304, %v1665
    %v1667 = vpop.f32.mrb[0].mxu0
    %1668 = vmatprep.mubr.f32.mxu0 0.0
    %1669 = vmatmul.mubr.f32.gmra.mrb[0].mxu0 %v623
    %v1670 = vpop.f32.mrb[0].mxu0
    %v1671 = vadd.f32 %v304, %v1670
    %v1672 = vpop.f32.mrb[0].mxu0
    %1673 = vmatprep.mubr.f32.mxu0 0.0
    %1674 = vmatmul.mubr.f32.gmra.mrb[0].mxu0 %v626
    %v1675 = vpop.f32.mrb[0].mxu0
    %v1676 = vadd.f32 %v304, %v1675
    %v1677 = vpop.f32.mrb[0].mxu0
    %1678 = vmatprep.mubr.f32.mxu0 0.0
    %1679 = vmatmul.mubr.f32.gmra.mrb[0].mxu0 %v629
    %v1680 = vpop.f32.mrb[0].mxu0
    %v1681 = vadd.f32 %v304, %v1680
    %v1682 = vpop.f32.mrb[0].mxu0
    %1683 = vmatprep.mubr.f32.mxu0 0.0
    %1684 = vmatmul.mubr.f32.gmra.mrb[0].mxu0 %v632
    %v1685 = vpop.f32.mrb[0].mxu0
    %v1686 = vadd.f32 %v304, %v1685
    %v1687 = vpop.f32.mrb[0].mxu0
    %1688 = vmatprep.mubr.f32.mxu0 0.0
    %1689 = vmatmul.mubr.f32.gmra.mrb[0].mxu0 %v635
    %v1690 = vpop.f32.mrb[0].mxu0
    %v1691 = vadd.f32 %v304, %v1690
    %v1692 = vpop.f32.mrb[0].mxu0
    %1693 = vmatprep.mubr.f32.mxu0 0.0
    %1694 = vmatmul.mubr.f32.gmra.mrb[0].mxu0 %v638
    %v1695 = vpop.f32.mrb[0].mxu0
    %v1696 = vadd.f32 %v304, %v1695
    %v1697 = vpop.f32.mrb[0].mxu0
    %1698 = vmatprep.mubr.f32.mxu0 0.0
    %1699 = vmatmul.mubr.f32.gmra.mrb[0].mxu0 %v641
    %v1700 = vpop.f32.mrb[0].mxu0
    %v1701 = vadd.f32 %v304, %v1700
    %v1702 = vpop.f32.mrb[0].mxu0
    %1703 = vmatprep.mubr.f32.mxu0 0.0
    %1704 = vmatmul.mubr.f32.gmra.mrb[0].mxu0 %v644
    %v1705 = vpop.f32.mrb[0].mxu0
    %v1706 = vadd.f32 %v304, %v1705
    %v1707 = vpop.f32.mrb[0].mxu0
    %1708 = vmatprep.mubr.f32.mxu0 0.0
    %1709 = vmatmul.mubr.f32.gmra.mrb[0].mxu0 %v647
    %v1710 = vpop.f32.mrb[0].mxu0
    %v1711 = vadd.f32 %v304, %v1710
    %v1712 = vpop.f32.mrb[0].mxu0
    %1713 = vmatprep.mubr.f32.mxu0 0.0
    %1714 = vmatmul.mubr.f32.gmra.mrb[0].mxu0 %v650
    %v1715 = vpop.f32.mrb[0].mxu0
    %v1716 = vadd.f32 %v304, %v1715
    %v1717 = vpop.f32.mrb[0].mxu0
    %1718 = vmatprep.mubr.f32.mxu0 0.0
    %1719 = vmatmul.mubr.f32.gmra.mrb[0].mxu0 %v653
    %v1720 = vpop.f32.mrb[0].mxu0
    %v1721 = vadd.f32 %v304, %v1720
    %v1722 = vpop.f32.mrb[0].mxu0
    %1723 = vmatprep.mubr.f32.mxu0 0.0
    %1724 = vmatmul.mubr.f32.gmra.mrb[0].mxu0 %v656
    %v1725 = vpop.f32.mrb[0].mxu0
    %v1726 = vadd.f32 %v304, %v1725
    %v1727 = vpop.f32.mrb[0].mxu0
    %1728 = vmatprep.mubr.f32.mxu0 0.0
    %1729 = vmatmul.mubr.f32.gmra.mrb[0].mxu0 %v659
    %v1730 = vpop.f32.mrb[0].mxu0
    %v1731 = vadd.f32 %v304, %v1730
    %v1732 = vpop.f32.mrb[0].mxu0
    %1733 = vmatprep.mubr.f32.mxu0 0.0
    %1734 = vmatmul.mubr.f32.gmra.mrb[0].mxu0 %v662
    %v1735 = vpop.f32.mrb[0].mxu0
    %v1736 = vadd.f32 %v304, %v1735
    %v1737 = vpop.f32.mrb[0].mxu0
    %1738 = vmatprep.mubr.f32.mxu0 0.0
    %1739 = vmatmul.mubr.f32.gmra.mrb[0].mxu0 %v665
    %v1740 = vpop.f32.mrb[0].mxu0
    %v1741 = vadd.f32 %v304, %v1740
    %v1742 = vpop.f32.mrb[0].mxu0
    %1743 = vmatprep.mubr.f32.mxu0 0.0
    %1744 = vmatmul.mubr.f32.gmra.mrb[0].mxu0 %v668
    %v1745 = vpop.f32.mrb[0].mxu0
    %v1746 = vadd.f32 %v304, %v1745
    %v1747 = vpop.f32.mrb[0].mxu0
    %1748 = vmatprep.mubr.f32.mxu0 0.0
    %1749 = vmatmul.mubr.f32.gmra.mrb[0].mxu0 %v671
    %v1750 = vpop.f32.mrb[0].mxu0
    %v1751 = vadd.f32 %v304, %v1750
    %v1752 = vpop.f32.mrb[0].mxu0
    %1753 = vmatprep.mubr.f32.mxu0 0.0
    %1754 = vmatmul.mubr.f32.gmra.mrb[0].mxu0 %v674
    %v1755 = vpop.f32.mrb[0].mxu0
    %v1756 = vadd.f32 %v304, %v1755
    %v1757 = vpop.f32.mrb[0].mxu0
    %1758 = vmatprep.mubr.f32.mxu0 0.0
    %1759 = vmatmul.mubr.f32.gmra.mrb[0].mxu0 %v677
    %v1760 = vpop.f32.mrb[0].mxu0
    %v1761 = vadd.f32 %v304, %v1760
    %v1762 = vpop.f32.mrb[0].mxu0
    %1763 = vmatprep.mubr.f32.mxu0 0.0
    %1764 = vmatmul.mubr.f32.gmra.mrb[0].mxu0 %v680
    %v1765 = vpop.f32.mrb[0].mxu0
    %v1766 = vadd.f32 %v304, %v1765
    %v1767 = vpop.f32.mrb[0].mxu0
    %1768 = vmatprep.mubr.f32.mxu0 0.0
    %1769 = vmatmul.mubr.f32.gmra.mrb[0].mxu0 %v683
    %v1770 = vpop.f32.mrb[0].mxu0
    %v1771 = vadd.f32 %v304, %v1770
    %v1772 = vpop.f32.mrb[0].mxu0
    %1773 = vmatprep.mubr.f32.mxu0 0.0
    %1774 = vmatmul.mubr.f32.gmra.mrb[0].mxu0 %v686
    %v1775 = vpop.f32.mrb[0].mxu0
    %v1776 = vadd.f32 %v304, %v1775
    %v1777 = vpop.f32.mrb[0].mxu0
    %1778 = vmatprep.mubr.f32.mxu0 0.0
    %1779 = vmatmul.mubr.f32.gmra.mrb[0].mxu0 %v689
    %v1780 = vpop.f32.mrb[0].mxu0
    %v1781 = vadd.f32 %v304, %v1780
    %v1782 = vpop.f32.mrb[0].mxu0
    %1783 = vmatprep.mubr.f32.mxu0 0.0
    %1784 = vmatmul.mubr.f32.gmra.mrb[0].mxu0 %v692
    %v1785 = vpop.f32.mrb[0].mxu0
    %v1786 = vadd.f32 %v304, %v1785
    %v1787 = vpop.f32.mrb[0].mxu0
    %1788 = vmatprep.mubr.f32.mxu0 0.0
    %1789 = vmatmul.mubr.f32.gmra.mrb[0].mxu0 %v695
    %v1790 = vpop.f32.mrb[0].mxu0
    %v1791 = vadd.f32 %v304, %v1790
    %v1792 = vpop.f32.mrb[0].mxu0
    %1793 = vmatprep.mubr.f32.mxu0 0.0
    %1794 = vmatmul.mubr.f32.gmra.mrb[0].mxu0 %v698
    %v1795 = vpop.f32.mrb[0].mxu0
    %v1796 = vadd.f32 %v304, %v1795
    %v1797 = vpop.f32.mrb[0].mxu0
    %1798 = vmatprep.mubr.f32.mxu0 0.0
    %1799 = vmatmul.mubr.f32.gmra.mrb[0].mxu0 %v701
    %v1800 = vpop.f32.mrb[0].mxu0
    %v1801 = vadd.f32 %v304, %v1800
    %v1802 = vpop.f32.mrb[0].mxu0
    %1803 = vmatprep.mubr.f32.mxu0 0.0
    %1804 = vmatmul.mubr.f32.gmra.mrb[0].mxu0 %v704
    %v1805 = vpop.f32.mrb[0].mxu0
    %v1806 = vadd.f32 %v304, %v1805
    %v1807 = vpop.f32.mrb[0].mxu0
    %1808 = vmatprep.mubr.f32.mxu0 0.0
    %1809 = vmatmul.mubr.f32.gmra.mrb[0].mxu0 %v707
    %v1810 = vpop.f32.mrb[0].mxu0
    %v1811 = vadd.f32 %v304, %v1810
    %v1812 = vpop.f32.mrb[0].mxu0
    %1813 = vmatprep.mubr.f32.mxu0 0.0
    %1814 = vmatmul.mubr.f32.gmra.mrb[0].mxu0 %v710
    %v1815 = vpop.f32.mrb[0].mxu0
    %v1816 = vadd.f32 %v304, %v1815
    %v1817 = vpop.f32.mrb[0].mxu0
    %1818 = vmatprep.mubr.f32.mxu0 0.0
    %1819 = vmatmul.mubr.f32.gmra.mrb[0].mxu0 %v713
    %v1820 = vpop.f32.mrb[0].mxu0
    %v1821 = vadd.f32 %v304, %v1820
    %v1822 = vpop.f32.mrb[0].mxu0
    %1823 = vmatprep.mubr.f32.mxu0 0.0
    %1824 = vmatmul.mubr.f32.gmra.mrb[0].mxu0 %v716
    %v1825 = vpop.f32.mrb[0].mxu0
    %v1826 = vadd.f32 %v304, %v1825
    %v1827 = vpop.f32.mrb[0].mxu0
    %1828 = vmatprep.mubr.f32.mxu0 0.0
    %1829 = vmatmul.mubr.f32.gmra.mrb[0].mxu0 %v719
    %v1830 = vpop.f32.mrb[0].mxu0
    %v1831 = vadd.f32 %v304, %v1830
    %v1832 = vpop.f32.mrb[0].mxu0
    %1833 = vmatprep.mubr.f32.mxu0 0.0
    %1834 = vmatmul.mubr.f32.gmra.mrb[0].mxu0 %v722
    %v1835 = vpop.f32.mrb[0].mxu0
    %v1836 = vadd.f32 %v304, %v1835
    %v1837 = vpop.f32.mrb[0].mxu0
    %1838 = vmatprep.mubr.f32.mxu0 0.0
    %1839 = vmatmul.mubr.f32.gmra.mrb[0].mxu0 %v725
    %v1840 = vpop.f32.mrb[0].mxu0
    %v1841 = vadd.f32 %v304, %v1840
    %v1842 = vpop.f32.mrb[0].mxu0
    %1843 = vmatprep.mubr.f32.mxu0 0.0
    %1844 = vmatmul.mubr.f32.gmra.mrb[0].mxu0 %v728
    %v1845 = vpop.f32.mrb[0].mxu0
    %v1846 = vadd.f32 %v304, %v1845
    %v1847 = vpop.f32.mrb[0].mxu0
    %1848 = vmatprep.mubr.f32.mxu0 0.0
    %1849 = vmatmul.mubr.f32.gmra.mrb[0].mxu0 %v731
    %v1850 = vpop.f32.mrb[0].mxu0
    %v1851 = vadd.f32 %v304, %v1850
    %v1852 = vpop.f32.mrb[0].mxu0
    %1853 = vmatprep.mubr.f32.mxu0 0.0
    %1854 = vmatmul.mubr.f32.gmra.mrb[0].mxu0 %v734
    %v1855 = vpop.f32.mrb[0].mxu0
    %v1856 = vadd.f32 %v304, %v1855
    %v1857 = vpop.f32.mrb[0].mxu0
    %1858 = vmatprep.mubr.f32.mxu0 0.0
    %1859 = vmatmul.mubr.f32.gmra.mrb[0].mxu0 %v737
    %v1860 = vpop.f32.mrb[0].mxu0
    %v1861 = vadd.f32 %v304, %v1860
    %v1862 = vpop.f32.mrb[0].mxu0
    %1863 = vmatprep.mubr.f32.mxu0 0.0
    %1864 = vmatmul.mubr.f32.gmra.mrb[0].mxu0 %v740
    %v1865 = vpop.f32.mrb[0].mxu0
    %v1866 = vadd.f32 %v304, %v1865
    %v1867 = vpop.f32.mrb[0].mxu0
    %1868 = vmatprep.mubr.f32.mxu0 0.0
    %1869 = vmatmul.mubr.f32.gmra.mrb[0].mxu0 %v743
    %v1870 = vpop.f32.mrb[0].mxu0
    %v1871 = vadd.f32 %v304, %v1870
    %v1872 = vpop.f32.mrb[0].mxu0
    %1873 = vmatprep.mubr.f32.mxu0 0.0
    %1874 = vmatmul.mubr.f32.gmra.mrb[0].mxu0 %v746
    %v1875 = vpop.f32.mrb[0].mxu0
    %v1876 = vadd.f32 %v304, %v1875
    %v1877 = vpop.f32.mrb[0].mxu0
    %1878 = vmatprep.mubr.f32.mxu0 0.0
    %1879 = vmatmul.mubr.f32.gmra.mrb[0].mxu0 %v749
    %v1880 = vpop.f32.mrb[0].mxu0
    %v1881 = vadd.f32 %v304, %v1880
    %v1882 = vpop.f32.mrb[0].mxu0
    %1883 = vmatprep.mubr.f32.mxu0 0.0
    %1884 = vmatmul.mubr.f32.gmra.mrb[0].mxu0 %v752
    %v1885 = vpop.f32.mrb[0].mxu0
    %v1886 = vadd.f32 %v304, %v1885
    %v1887 = vpop.f32.mrb[0].mxu0
    %1888 = vmatprep.mubr.f32.mxu0 0.0
    %1889 = vmatmul.mubr.f32.gmra.mrb[0].mxu0 %v755
    %v1890 = vpop.f32.mrb[0].mxu0
    %v1891 = vadd.f32 %v304, %v1890
    %v1892 = vpop.f32.mrb[0].mxu0
    %1893 = vmatprep.mubr.f32.mxu0 0.0
    %1894 = vmatmul.mubr.f32.gmra.mrb[0].mxu0 %v758
    %v1895 = vpop.f32.mrb[0].mxu0
    %v1896 = vadd.f32 %v304, %v1895
    %v1897 = vpop.f32.mrb[0].mxu0
    %1898 = vmatprep.mubr.f32.mxu0 0.0
    %1899 = vmatmul.mubr.f32.gmra.mrb[0].mxu0 %v761
    %v1900 = vpop.f32.mrb[0].mxu0
    %v1901 = vadd.f32 %v304, %v1900
    %v1902 = vpop.f32.mrb[0].mxu0
    %1903 = vmatprep.mubr.f32.mxu0 0.0
    %1904 = vmatmul.mubr.f32.gmra.mrb[0].mxu0 %v764
    %v1905 = vpop.f32.mrb[0].mxu0
    %v1906 = vadd.f32 %v304, %v1905
    %v1907 = vpop.f32.mrb[0].mxu0
    %1908 = vmatprep.mubr.f32.mxu0 0.0
    %1909 = vmatmul.mubr.f32.gmra.mrb[0].mxu0 %v767
    %v1910 = vpop.f32.mrb[0].mxu0
    %v1911 = vadd.f32 %v304, %v1910
    %v1912 = vpop.f32.mrb[0].mxu0
    %1913 = vmatprep.mubr.f32.mxu0 0.0
    %1914 = vmatmul.mubr.f32.gmra.mrb[0].mxu0 %v770
    %v1915 = vpop.f32.mrb[0].mxu0
    %v1916 = vadd.f32 %v304, %v1915
    %v1917 = vpop.f32.mrb[0].mxu0
    %1918 = vmatprep.mubr.f32.mxu0 0.0
    %1919 = vmatmul.mubr.f32.gmra.mrb[0].mxu0 %v773
    %v1920 = vpop.f32.mrb[0].mxu0
    %v1921 = vadd.f32 %v304, %v1920
    %v1922 = vpop.f32.mrb[0].mxu0
    %1923 = vmatprep.mubr.f32.mxu0 0.0
    %1924 = vmatmul.mubr.f32.gmra.mrb[0].mxu0 %v776
    %v1925 = vpop.f32.mrb[0].mxu0
    %v1926 = vadd.f32 %v304, %v1925
    %v1927 = vpop.f32.mrb[0].mxu0
    %1928 = vmatprep.mubr.f32.mxu0 0.0
    %1929 = vmatmul.mubr.f32.gmra.mrb[0].mxu0 %v779
    %v1930 = vpop.f32.mrb[0].mxu0
    %v1931 = vadd.f32 %v304, %v1930
    %v1932 = vpop.f32.mrb[0].mxu0
    %1933 = vmatprep.mubr.f32.mxu0 0.0
    %1934 = vmatmul.mubr.f32.gmra.mrb[0].mxu0 %v782
    %v1935 = vpop.f32.mrb[0].mxu0
    %v1936 = vadd.f32 %v304, %v1935
    %v1937 = vpop.f32.mrb[0].mxu0
    %1938 = vmatprep.mubr.f32.mxu0 0.0
    %1939 = vmatmul.mubr.f32.gmra.mrb[0].mxu0 %v785
    %v1940 = vpop.f32.mrb[0].mxu0
    %v1941 = vadd.f32 %v304, %v1940
    %v1942 = vpop.f32.mrb[0].mxu0
    %1943 = vmatprep.mubr.f32.mxu0 0.0
    %1944 = vmatmul.mubr.f32.gmra.mrb[0].mxu0 %v788
    %v1945 = vpop.f32.mrb[0].mxu0
    %v1946 = vadd.f32 %v304, %v1945
    %v1947 = vpop.f32.mrb[0].mxu0
    %1948 = vmatprep.mubr.f32.mxu0 0.0
    %1949 = vmatmul.mubr.f32.gmra.mrb[0].mxu0 %v791
    %v1950 = vpop.f32.mrb[0].mxu0
    %v1951 = vadd.f32 %v304, %v1950
    %v1952 = vpop.f32.mrb[0].mxu0
    %1953 = vmatprep.mubr.f32.mxu0 0.0
    %1954 = vmatmul.mubr.f32.gmra.mrb[0].mxu0 %v794
    %v1955 = vpop.f32.mrb[0].mxu0
    %v1956 = vadd.f32 %v304, %v1955
    %v1957 = vpop.f32.mrb[0].mxu0
    %1958 = vmatprep.mubr.f32.mxu0 0.0
    %1959 = vmatmul.mubr.f32.gmra.mrb[0].mxu0 %v797
    %v1960 = vpop.f32.mrb[0].mxu0
    %v1961 = vadd.f32 %v304, %v1960
    %v1962 = vpop.f32.mrb[0].mxu0
    %1963 = vmatprep.mubr.f32.mxu0 0.0
    %1964 = vmatmul.mubr.f32.gmra.mrb[0].mxu0 %v800
    %v1965 = vpop.f32.mrb[0].mxu0
    %v1966 = vadd.f32 %v304, %v1965
    %v1967 = vpop.f32.mrb[0].mxu0
    %1968 = vmatprep.mubr.f32.mxu0 0.0
    %1969 = vmatmul.mubr.f32.gmra.mrb[0].mxu0 %v803
    %v1970 = vpop.f32.mrb[0].mxu0
    %v1971 = vadd.f32 %v304, %v1970
    %v1972 = vpop.f32.mrb[0].mxu0
    %1973 = vmatprep.mubr.f32.mxu0 0.0
    %1974 = vmatmul.mubr.f32.gmra.mrb[0].mxu0 %v806
    %v1975 = vpop.f32.mrb[0].mxu0
    %v1976 = vadd.f32 %v304, %v1975
    %v1977 = vpop.f32.mrb[0].mxu0
    %1978 = vmatprep.mubr.f32.mxu0 0.0
    %1979 = vmatmul.mubr.f32.gmra.mrb[0].mxu0 %v809
    %v1980 = vpop.f32.mrb[0].mxu0
    %v1981 = vadd.f32 %v304, %v1980
    %v1982 = vpop.f32.mrb[0].mxu0
    %1983 = vmatprep.mubr.f32.mxu0 0.0
    %1984 = vmatmul.mubr.f32.gmra.mrb[0].mxu0 %v812
    %v1985 = vpop.f32.mrb[0].mxu0
    %v1986 = vadd.f32 %v304, %v1985
    %v1987 = vpop.f32.mrb[0].mxu0
    %1988 = vmatprep.mubr.f32.mxu0 0.0
    %1989 = vmatmul.mubr.f32.gmra.mrb[0].mxu0 %v815
    %v1990 = vpop.f32.mrb[0].mxu0
    %v1991 = vadd.f32 %v304, %v1990
    %v1992 = vpop.f32.mrb[0].mxu0
    %1993 = vmatprep.mubr.f32.mxu0 0.0
    %1994 = vmatmul.mubr.f32.gmra.mrb[0].mxu0 %v818
    %v1995 = vpop.f32.mrb[0].mxu0
    %v1996 = vadd.f32 %v304, %v1995
    %v1997 = vpop.f32.mrb[0].mxu0
    %1998 = vmatprep.mubr.f32.mxu0 0.0
    %1999 = vmatmul.mubr.f32.gmra.mrb[0].mxu0 %v821
    %v2000 = vpop.f32.mrb[0].mxu0
    %v2001 = vadd.f32 %v304, %v2000
    %v2002 = vpop.f32.mrb[0].mxu0
    %2003 = vmatprep.mubr.f32.mxu0 0.0
    %2004 = vmatmul.mubr.f32.gmra.mrb[0].mxu0 %v824
    %v2005 = vpop.f32.mrb[0].mxu0
    %v2006 = vadd.f32 %v304, %v2005
    %v2007 = vpop.f32.mrb[0].mxu0
    %2008 = vmatprep.mubr.f32.mxu0 0.0
    %2009 = vmatmul.mubr.f32.gmra.mrb[0].mxu0 %v827
    %v2010 = vpop.f32.mrb[0].mxu0
    %v2011 = vadd.f32 %v304, %v2010
    %v2012 = vpop.f32.mrb[0].mxu0
    %2013 = vmatprep.mubr.f32.mxu0 0.0
    %2014 = vmatmul.mubr.f32.gmra.mrb[0].mxu0 %v830
    %v2015 = vpop.f32.mrb[0].mxu0
    %v2016 = vadd.f32 %v304, %v2015
    %v2017 = vpop.f32.mrb[0].mxu0
    %2018 = vmatprep.mubr.f32.mxu0 0.0
    %2019 = vmatmul.mubr.f32.gmra.mrb[0].mxu0 %v833
    %v2020 = vpop.f32.mrb[0].mxu0
    %v2021 = vadd.f32 %v304, %v2020
    %v2022 = vpop.f32.mrb[0].mxu0
    %2023 = vmatprep.mubr.f32.mxu0 0.0
    %2024 = vmatmul.mubr.f32.gmra.mrb[0].mxu0 %v836
    %v2025 = vpop.f32.mrb[0].mxu0
    %v2026 = vadd.f32 %v304, %v2025
    %v2027 = vpop.f32.mrb[0].mxu0
    %2028 = vmatprep.mubr.f32.mxu0 0.0
    %2029 = vmatmul.mubr.f32.gmra.mrb[0].mxu0 %v839
    %v2030 = vpop.f32.mrb[0].mxu0
    %v2031 = vadd.f32 %v304, %v2030
    %v2032 = vpop.f32.mrb[0].mxu0
    %2033 = vmatprep.mubr.f32.mxu0 0.0
    %2034 = vmatmul.mubr.f32.gmra.mrb[0].mxu0 %v842
    %v2035 = vpop.f32.mrb[0].mxu0
    %v2036 = vadd.f32 %v304, %v2035
    %v2037 = vpop.f32.mrb[0].mxu0
    %2038 = vmatprep.mubr.f32.mxu0 0.0
    %2039 = vmatmul.mubr.f32.gmra.mrb[0].mxu0 %v845
    %v2040 = vpop.f32.mrb[0].mxu0
    %v2041 = vadd.f32 %v304, %v2040
    %v2042 = vpop.f32.mrb[0].mxu0
    %2043 = vmatprep.mubr.f32.mxu0 0.0
    %2044 = vmatmul.mubr.f32.gmra.mrb[0].mxu0 %v848
    %v2045 = vpop.f32.mrb[0].mxu0
    %v2046 = vadd.f32 %v304, %v2045
    %v2047 = vpop.f32.mrb[0].mxu0
    %2048 = vmatprep.mubr.f32.mxu0 0.0
    %2049 = vmatmul.mubr.f32.gmra.mrb[0].mxu0 %v851
    %v2050 = vpop.f32.mrb[0].mxu0
    %v2051 = vadd.f32 %v304, %v2050
    %v2052 = vpop.f32.mrb[0].mxu0
    %2053 = vmatprep.mubr.f32.mxu0 0.0
    %2054 = vmatmul.mubr.f32.gmra.mrb[0].mxu0 %v854
    %v2055 = vpop.f32.mrb[0].mxu0
    %v2056 = vadd.f32 %v304, %v2055
    %v2057 = vpop.f32.mrb[0].mxu0
    %2058 = vmatprep.mubr.f32.mxu0 0.0
    %2059 = vmatmul.mubr.f32.gmra.mrb[0].mxu0 %v857
    %v2060 = vpop.f32.mrb[0].mxu0
    %v2061 = vadd.f32 %v304, %v2060
    %v2062 = vpop.f32.mrb[0].mxu0
    %2063 = vmatprep.mubr.f32.mxu0 0.0
    %2064 = vmatmul.mubr.f32.gmra.mrb[0].mxu0 %v860
    %v2065 = vpop.f32.mrb[0].mxu0
    %v2066 = vadd.f32 %v304, %v2065
    %v2067 = vpop.f32.mrb[0].mxu0
    %2068 = vmatprep.mubr.f32.mxu0 0.0
    %2069 = vmatmul.mubr.f32.gmra.mrb[0].mxu0 %v863
    %v2070 = vpop.f32.mrb[0].mxu0
    %v2071 = vadd.f32 %v304, %v2070
    %v2072 = vpop.f32.mrb[0].mxu0
    %2073 = vmatprep.mubr.f32.mxu0 0.0
    %2074 = vmatmul.mubr.f32.gmra.mrb[0].mxu0 %v866
    %v2075 = vpop.f32.mrb[0].mxu0
    %v2076 = vadd.f32 %v304, %v2075
    %v2077 = vpop.f32.mrb[0].mxu0
    %2078 = vmatprep.mubr.f32.mxu0 0.0
    %2079 = vmatmul.mubr.f32.gmra.mrb[0].mxu0 %v869
    %v2080 = vpop.f32.mrb[0].mxu0
    %v2081 = vadd.f32 %v304, %v2080
    %v2082 = vpop.f32.mrb[0].mxu0
    %2083 = vmatprep.mubr.f32.mxu0 0.0
    %2084 = vmatmul.mubr.f32.gmra.mrb[0].mxu0 %v872
    %v2085 = vpop.f32.mrb[0].mxu0
    %v2086 = vadd.f32 %v304, %v2085
    %v2087 = vpop.f32.mrb[0].mxu0
    %2088 = vmatprep.mubr.f32.mxu0 0.0
    %2089 = vmatmul.mubr.f32.gmra.mrb[0].mxu0 %v875
    %v2090 = vpop.f32.mrb[0].mxu0
    %v2091 = vadd.f32 %v304, %v2090
    %v2092 = vpop.f32.mrb[0].mxu0
    %2093 = vmatprep.mubr.f32.mxu0 0.0
    %2094 = vmatmul.mubr.f32.gmra.mrb[0].mxu0 %v878
    %v2095 = vpop.f32.mrb[0].mxu0
    %v2096 = vadd.f32 %v304, %v2095
    %v2097 = vpop.f32.mrb[0].mxu0
    %2098 = vmatprep.mubr.f32.mxu0 0.0
    %2099 = vmatmul.mubr.f32.gmra.mrb[0].mxu0 %v881
    %v2100 = vpop.f32.mrb[0].mxu0
    %v2101 = vadd.f32 %v304, %v2100
    %v2102 = vpop.f32.mrb[0].mxu0
    %2103 = vmatprep.mubr.f32.mxu0 0.0
    %2104 = vmatmul.mubr.f32.gmra.mrb[0].mxu0 %v884
    %v2105 = vpop.f32.mrb[0].mxu0
    %v2106 = vadd.f32 %v304, %v2105
    %v2107 = vpop.f32.mrb[0].mxu0
    %2108 = vmatprep.mubr.f32.mxu0 0.0
    %2109 = vmatmul.mubr.f32.gmra.mrb[0].mxu0 %v887
    %v2110 = vpop.f32.mrb[0].mxu0
    %v2111 = vadd.f32 %v304, %v2110
    %v2112 = vpop.f32.mrb[0].mxu0
    %2113 = vmatprep.mubr.f32.mxu0 0.0
    %2114 = vmatmul.mubr.f32.gmra.mrb[0].mxu0 %v890
    %v2115 = vpop.f32.mrb[0].mxu0
    %v2116 = vadd.f32 %v304, %v2115
    %v2117 = vpop.f32.mrb[0].mxu0
    %2118 = vmatprep.mubr.f32.mxu0 0.0
    %2119 = vmatmul.mubr.f32.gmra.mrb[0].mxu0 %v893
    %v2120 = vpop.f32.mrb[0].mxu0
    %v2121 = vadd.f32 %v304, %v2120
    %v2122 = vpop.f32.mrb[0].mxu0
    %2123 = vmatprep.mubr.f32.mxu0 0.0
    %2124 = vmatmul.mubr.f32.gmra.mrb[0].mxu0 %v896
    %v2125 = vpop.f32.mrb[0].mxu0
    %v2126 = vadd.f32 %v304, %v2125
    %v2127 = vpop.f32.mrb[0].mxu0
    %2128 = vmatprep.mubr.f32.mxu0 0.0
    %2129 = vmatmul.mubr.f32.gmra.mrb[0].mxu0 %v899
    %v2130 = vpop.f32.mrb[0].mxu0
    %v2131 = vadd.f32 %v304, %v2130
    %v2132 = vpop.f32.mrb[0].mxu0
    %2133 = vmatprep.mubr.f32.mxu0 0.0
    %2134 = vmatmul.mubr.f32.gmra.mrb[0].mxu0 %v902
    %v2135 = vpop.f32.mrb[0].mxu0
    %v2136 = vadd.f32 %v304, %v2135
    %v2137 = vpop.f32.mrb[0].mxu0
    %2138 = vmatprep.mubr.f32.mxu0 0.0
    %2139 = vmatmul.mubr.f32.gmra.mrb[0].mxu0 %v905
    %v2140 = vpop.f32.mrb[0].mxu0
    %v2141 = vadd.f32 %v304, %v2140
    %v2142 = vpop.f32.mrb[0].mxu0
    %2143 = vmatprep.mubr.f32.mxu0 0.0
    %2144 = vmatmul.mubr.f32.gmra.mrb[0].mxu0 %v908
    %v2145 = vpop.f32.mrb[0].mxu0
    %v2146 = vadd.f32 %v304, %v2145
    %v2147 = vpop.f32.mrb[0].mxu0
    %2148 = vmatprep.mubr.f32.mxu0 0.0
    %2149 = vmatmul.mubr.f32.gmra.mrb[0].mxu0 %v911
    %v2150 = vpop.f32.mrb[0].mxu0
    %v2151 = vadd.f32 %v304, %v2150
    %v2152 = vpop.f32.mrb[0].mxu0
    %2153 = vmatprep.mubr.f32.mxu0 0.0
    %2154 = vmatmul.mubr.f32.gmra.mrb[0].mxu0 %v914
    %v2155 = vpop.f32.mrb[0].mxu0
    %v2156 = vadd.f32 %v304, %v2155
    %v2157 = vpop.f32.mrb[0].mxu0
    %2158 = vmatprep.mubr.f32.mxu0 0.0
    %2159 = vmatmul.mubr.f32.gmra.mrb[0].mxu0 %v917
    %v2160 = vpop.f32.mrb[0].mxu0
    %v2161 = vadd.f32 %v304, %v2160
    %v2162 = vpop.f32.mrb[0].mxu0
    %2163 = vmatprep.mubr.f32.mxu0 0.0
    %2164 = vmatmul.mubr.f32.gmra.mrb[0].mxu0 %v920
    %v2165 = vpop.f32.mrb[0].mxu0
    %v2166 = vadd.f32 %v304, %v2165
    %v2167 = vpop.f32.mrb[0].mxu0
    %2168 = vmatprep.mubr.f32.mxu0 0.0
    %2169 = vmatmul.mubr.f32.gmra.mrb[0].mxu0 %v923
    %v2170 = vpop.f32.mrb[0].mxu0
    %v2171 = vadd.f32 %v304, %v2170
    %v2172 = vpop.f32.mrb[0].mxu0
    %2173 = vmatprep.mubr.f32.mxu0 0.0
    %2174 = vmatmul.mubr.f32.gmra.mrb[0].mxu0 %v926
    %v2175 = vpop.f32.mrb[0].mxu0
    %v2176 = vadd.f32 %v304, %v2175
    %v2177 = vpop.f32.mrb[0].mxu0
    %2178 = vmatprep.mubr.f32.mxu0 0.0
    %2179 = vmatmul.mubr.f32.gmra.mrb[0].mxu0 %v929
    %v2180 = vpop.f32.mrb[0].mxu0
    %v2181 = vadd.f32 %v304, %v2180
    %v2182 = vpop.f32.mrb[0].mxu0
    %2183 = vmatprep.mubr.f32.mxu0 0.0
    %2184 = vmatmul.mubr.f32.gmra.mrb[0].mxu0 %v932
    %v2185 = vpop.f32.mrb[0].mxu0
    %v2186 = vadd.f32 %v304, %v2185
    %v2187 = vpop.f32.mrb[0].mxu0
    %2188 = vmatprep.mubr.f32.mxu0 0.0
    %2189 = vmatmul.mubr.f32.gmra.mrb[0].mxu0 %v935
    %v2190 = vpop.f32.mrb[0].mxu0
    %v2191 = vadd.f32 %v304, %v2190
    %v2192 = vpop.f32.mrb[0].mxu0
    %2193 = vmatprep.mubr.f32.mxu0 0.0
    %2194 = vmatmul.mubr.f32.gmra.mrb[0].mxu0 %v938
    %v2195 = vpop.f32.mrb[0].mxu0
    %v2196 = vadd.f32 %v304, %v2195
    %v2197 = vpop.f32.mrb[0].mxu0
    %2198 = vmatprep.mubr.f32.mxu0 0.0
    %2199 = vmatmul.mubr.f32.gmra.mrb[0].mxu0 %v941
    %v2200 = vpop.f32.mrb[0].mxu0
    %v2201 = vadd.f32 %v304, %v2200
    %v2202 = vpop.f32.mrb[0].mxu0
    %2203 = vmatprep.mubr.f32.mxu0 0.0
    %2204 = vmatmul.mubr.f32.gmra.mrb[0].mxu0 %v944
    %v2205 = vpop.f32.mrb[0].mxu0
    %v2206 = vadd.f32 %v304, %v2205
    %v2207 = vpop.f32.mrb[0].mxu0
    %2208 = vmatprep.mubr.f32.mxu0 0.0
    %2209 = vmatmul.mubr.f32.gmra.mrb[0].mxu0 %v947
    %v2210 = vpop.f32.mrb[0].mxu0
    %v2211 = vadd.f32 %v304, %v2210
    %v2212 = vpop.f32.mrb[0].mxu0
    %2213 = vmatprep.mubr.f32.mxu0 0.0
    %2214 = vmatmul.mubr.f32.gmra.mrb[0].mxu0 %v950
    %v2215 = vpop.f32.mrb[0].mxu0
    %v2216 = vadd.f32 %v304, %v2215
    %v2217 = vpop.f32.mrb[0].mxu0
    %2218 = vmatprep.mubr.f32.mxu0 0.0
    %2219 = vmatmul.mubr.f32.gmra.mrb[0].mxu0 %v953
    %v2220 = vpop.f32.mrb[0].mxu0
    %v2221 = vadd.f32 %v304, %v2220
    %v2222 = vpop.f32.mrb[0].mxu0
    %2223 = vmatprep.mubr.f32.mxu0 0.0
    %2224 = vmatmul.mubr.f32.gmra.mrb[0].mxu0 %v956
    %v2225 = vpop.f32.mrb[0].mxu0
    %v2226 = vadd.f32 %v304, %v2225
    %v2227 = vpop.f32.mrb[0].mxu0
    %2228 = vmatprep.mubr.f32.mxu0 0.0
    %2229 = vmatmul.mubr.f32.gmra.mrb[0].mxu0 %v959
    %v2230 = vpop.f32.mrb[0].mxu0
    %v2231 = vadd.f32 %v304, %v2230
    %v2232 = vpop.f32.mrb[0].mxu0
    %2233 = vmatprep.mubr.f32.mxu0 0.0
    %2234 = vmatmul.mubr.f32.gmra.mrb[0].mxu0 %v962
    %v2235 = vpop.f32.mrb[0].mxu0
    %v2236 = vadd.f32 %v304, %v2235
    %v2237 = vpop.f32.mrb[0].mxu0
    %2238 = vmatprep.mubr.f32.mxu0 0.0
    %2239 = vmatmul.mubr.f32.gmra.mrb[0].mxu0 %v965
    %v2240 = vpop.f32.mrb[0].mxu0
    %v2241 = vadd.f32 %v304, %v2240
    %v2242 = vpop.f32.mrb[0].mxu0
    %2243 = vmatprep.mubr.f32.mxu0 0.0
    %2244 = vmatmul.mubr.f32.gmra.mrb[0].mxu0 %v968
    %v2245 = vpop.f32.mrb[0].mxu0
    %v2246 = vadd.f32 %v304, %v2245
    %v2247 = vpop.f32.mrb[0].mxu0
    %2248 = vmatprep.mubr.f32.mxu0 0.0
    %2249 = vmatmul.mubr.f32.gmra.mrb[0].mxu0 %v971
    %v2250 = vpop.f32.mrb[0].mxu0
    %v2251 = vadd.f32 %v304, %v2250
    %v2252 = vpop.f32.mrb[0].mxu0
    %2253 = vmatprep.mubr.f32.mxu0 0.0
    %2254 = vmatmul.mubr.f32.gmra.mrb[0].mxu0 %v974
    %v2255 = vpop.f32.mrb[0].mxu0
    %v2256 = vadd.f32 %v304, %v2255
    %v2257 = vpop.f32.mrb[0].mxu0
    %2258 = vmatprep.mubr.f32.mxu0 0.0
    %2259 = vmatmul.mubr.f32.gmra.mrb[0].mxu0 %v977
    %v2260 = vpop.f32.mrb[0].mxu0
    %v2261 = vadd.f32 %v304, %v2260
    %v2262 = vpop.f32.mrb[0].mxu0
    %2263 = vmatprep.mubr.f32.mxu0 0.0
    %2264 = vmatmul.mubr.f32.gmra.mrb[0].mxu0 %v980
    %v2265 = vpop.f32.mrb[0].mxu0
    %v2266 = vadd.f32 %v304, %v2265
    %v2267 = vpop.f32.mrb[0].mxu0
    %2268 = vmatprep.mubr.f32.mxu0 0.0
    %2269 = vmatmul.mubr.f32.gmra.mrb[0].mxu0 %v983
    %v2270 = vpop.f32.mrb[0].mxu0
    %v2271 = vadd.f32 %v304, %v2270
    %v2272 = vpop.f32.mrb[0].mxu0
    %2273 = vmatprep.mubr.f32.mxu0 0.0
    %2274 = vmatmul.mubr.f32.gmra.mrb[0].mxu0 %v986
    %v2275 = vpop.f32.mrb[0].mxu0
    %v2276 = vadd.f32 %v304, %v2275
    %v2277 = vpop.f32.mrb[0].mxu0
    %2278 = vmatprep.mubr.f32.mxu0 0.0
    %2279 = vmatmul.mubr.f32.gmra.mrb[0].mxu0 %v989
    %v2280 = vpop.f32.mrb[0].mxu0
    %v2281 = vadd.f32 %v304, %v2280
    %v2282 = vpop.f32.mrb[0].mxu0
    %2283 = vmatprep.mubr.f32.mxu0 0.0
    %2284 = vmatmul.mubr.f32.gmra.mrb[0].mxu0 %v992
    %v2285 = vpop.f32.mrb[0].mxu0
    %v2286 = vadd.f32 %v304, %v2285
    %v2287 = vpop.f32.mrb[0].mxu0
    %2288 = vmatprep.mubr.f32.mxu0 0.0
    %2289 = vmatmul.mubr.f32.gmra.mrb[0].mxu0 %v995
    %v2290 = vpop.f32.mrb[0].mxu0
    %v2291 = vadd.f32 %v304, %v2290
    %v2292 = vpop.f32.mrb[0].mxu0
    %2293 = vmatprep.mubr.f32.mxu0 0.0
    %2294 = vmatmul.mubr.f32.gmra.mrb[0].mxu0 %v998
    %v2295 = vpop.f32.mrb[0].mxu0
    %v2296 = vadd.f32 %v304, %v2295
    %v2297 = vpop.f32.mrb[0].mxu0
    %2298 = vmatprep.mubr.f32.mxu0 0.0
    %2299 = vmatmul.mubr.f32.gmra.mrb[0].mxu0 %v1001
    %v2300 = vpop.f32.mrb[0].mxu0
    %v2301 = vadd.f32 %v304, %v2300
    %v2302 = vpop.f32.mrb[0].mxu0
    %2303 = vmatprep.mubr.f32.mxu0 0.0
    %2304 = vmatmul.mubr.f32.gmra.mrb[0].mxu0 %v1004
    %v2305 = vpop.f32.mrb[0].mxu0
    %v2306 = vadd.f32 %v304, %v2305
    %v2307 = vpop.f32.mrb[0].mxu0
    %2308 = vmatprep.mubr.f32.mxu0 0.0
    %2309 = vmatmul.mubr.f32.gmra.mrb[0].mxu0 %v1007
    %v2310 = vpop.f32.mrb[0].mxu0
    %v2311 = vadd.f32 %v304, %v2310
    %v2312 = vpop.f32.mrb[0].mxu0
    %2313 = vmatprep.mubr.f32.mxu0 0.0
    %2314 = vmatmul.mubr.f32.gmra.mrb[0].mxu0 %v1010
    %v2315 = vpop.f32.mrb[0].mxu0
    %v2316 = vadd.f32 %v304, %v2315
    %v2317 = vpop.f32.mrb[0].mxu0
    %2318 = vmatprep.mubr.f32.mxu0 0.0
    %2319 = vmatmul.mubr.f32.gmra.mrb[0].mxu0 %v1013
    %v2320 = vpop.f32.mrb[0].mxu0
    %v2321 = vadd.f32 %v304, %v2320
    %v2322 = vpop.f32.mrb[0].mxu0
    %2323 = vmatprep.mubr.f32.mxu0 0.0
    %2324 = vmatmul.mubr.f32.gmra.mrb[0].mxu0 %v1016
    %v2325 = vpop.f32.mrb[0].mxu0
    %v2326 = vadd.f32 %v304, %v2325
    %v2327 = vpop.f32.mrb[0].mxu0
    %2328 = vmatprep.mubr.f32.mxu0 0.0
    %2329 = vmatmul.mubr.f32.gmra.mrb[0].mxu0 %v1019
    %v2330 = vpop.f32.mrb[0].mxu0
    %v2331 = vadd.f32 %v304, %v2330
    %v2332 = vpop.f32.mrb[0].mxu0
    %2333 = vmatprep.mubr.f32.mxu0 0.0
    %2334 = vmatmul.mubr.f32.gmra.mrb[0].mxu0 %v1022
    %v2335 = vpop.f32.mrb[0].mxu0
    %v2336 = vadd.f32 %v304, %v2335
    %v2337 = vpop.f32.mrb[0].mxu0
    %2338 = vmatprep.mubr.f32.mxu0 0.0
    %2339 = vmatmul.mubr.f32.gmra.mrb[0].mxu0 %v1025
    %v2340 = vpop.f32.mrb[0].mxu0
    %v2341 = vadd.f32 %v304, %v2340
    %v2342 = vpop.f32.mrb[0].mxu0
    %2343 = vmatprep.mubr.f32.mxu0 0.0
    %2344 = vmatmul.mubr.f32.gmra.mrb[0].mxu0 %v1028
    %v2345 = vpop.f32.mrb[0].mxu0
    %v2346 = vadd.f32 %v304, %v2345
    %v2347 = vpop.f32.mrb[0].mxu0
    %2348 = vmatprep.mubr.f32.mxu0 0.0
    %2349 = vmatmul.mubr.f32.gmra.mrb[0].mxu0 %v1031
    %v2350 = vpop.f32.mrb[0].mxu0
    %v2351 = vadd.f32 %v304, %v2350
    %v2352 = vpop.f32.mrb[0].mxu0
    %2353 = vmatprep.mubr.f32.mxu0 0.0
    %2354 = vmatmul.mubr.f32.gmra.mrb[0].mxu0 %v1034
    %v2355 = vpop.f32.mrb[0].mxu0
    %v2356 = vadd.f32 %v304, %v2355
    %v2357 = vpop.f32.mrb[0].mxu0
    %2358 = vmatprep.mubr.f32.mxu0 0.0
    %2359 = vmatmul.mubr.f32.gmra.mrb[0].mxu0 %v1037
    %v2360 = vpop.f32.mrb[0].mxu0
    %v2361 = vadd.f32 %v304, %v2360
    %v2362 = vpop.f32.mrb[0].mxu0
    %2363 = vmatprep.mubr.f32.mxu0 0.0
    %2364 = vmatmul.mubr.f32.gmra.mrb[0].mxu0 %v1040
    %v2365 = vpop.f32.mrb[0].mxu0
    %v2366 = vadd.f32 %v304, %v2365
    %v2367 = vpop.f32.mrb[0].mxu0
    %2368 = vmatprep.mubr.f32.mxu0 0.0
    %2369 = vmatmul.mubr.f32.gmra.mrb[0].mxu0 %v1043
    %v2370 = vpop.f32.mrb[0].mxu0
    %v2371 = vadd.f32 %v304, %v2370
    %v2372 = vpop.f32.mrb[0].mxu0
    %2373 = vmatprep.mubr.f32.mxu0 0.0
    %2374 = vmatmul.mubr.f32.gmra.mrb[0].mxu0 %v1046
    %v2375 = vpop.f32.mrb[0].mxu0
    %v2376 = vadd.f32 %v304, %v2375
    %v2377 = vpop.f32.mrb[0].mxu0
    %2378 = vmatprep.mubr.f32.mxu0 0.0
    %2379 = vmatmul.mubr.f32.gmra.mrb[0].mxu0 %v1049
    %v2380 = vpop.f32.mrb[0].mxu0
    %v2381 = vadd.f32 %v304, %v2380
    %v2382 = vpop.f32.mrb[0].mxu0
    %2383 = vmatprep.mubr.f32.mxu0 0.0
    %2384 = vmatmul.mubr.f32.gmra.mrb[0].mxu0 %v1052
    %v2385 = vpop.f32.mrb[0].mxu0
    %v2386 = vadd.f32 %v304, %v2385
    %v2387 = vpop.f32.mrb[0].mxu0
    %2388 = vmatprep.mubr.f32.mxu0 0.0
    %2389 = vmatmul.mubr.f32.gmra.mrb[0].mxu0 %v1055
    %v2390 = vpop.f32.mrb[0].mxu0
    %v2391 = vadd.f32 %v304, %v2390
    %v2392 = vpop.f32.mrb[0].mxu0
    %2393 = vmatprep.mubr.f32.mxu0 0.0
    %2394 = vmatmul.mubr.f32.gmra.mrb[0].mxu0 %v1058
    %v2395 = vpop.f32.mrb[0].mxu0
    %v2396 = vadd.f32 %v304, %v2395
    %v2397 = vpop.f32.mrb[0].mxu0
    %2398 = vmatprep.mubr.f32.mxu0 0.0
    %2399 = vmatmul.mubr.f32.gmra.mrb[0].mxu0 %v1061
    %v2400 = vpop.f32.mrb[0].mxu0
    %v2401 = vadd.f32 %v304, %v2400
    %v2402 = vpop.f32.mrb[0].mxu0
    %2403 = vmatprep.mubr.f32.mxu0 0.0
    %2404 = vmatmul.mubr.f32.gmra.mrb[0].mxu0 %v1064
    %v2405 = vpop.f32.mrb[0].mxu0
    %v2406 = vadd.f32 %v304, %v2405
    %v2407 = vpop.f32.mrb[0].mxu0
    %2408 = vmatprep.mubr.f32.mxu0 0.0
    %2409 = vmatmul.mubr.f32.gmra.mrb[0].mxu0 %v1067
    %v2410 = vpop.f32.mrb[0].mxu0
    %v2411 = vadd.f32 %v304, %v2410
    %v2412 = vpop.f32.mrb[0].mxu0
    %2413 = vmatprep.mubr.f32.mxu0 0.0
    %2414 = vmatmul.mubr.f32.gmra.mrb[0].mxu0 %v1070
    %v2415 = vpop.f32.mrb[0].mxu0
    %v2416 = vadd.f32 %v304, %v2415
    %v2417 = vpop.f32.mrb[0].mxu0
    %2418 = vmatprep.mubr.f32.mxu0 0.0
    %2419 = vmatmul.mubr.f32.gmra.mrb[0].mxu0 %v1073
    %v2420 = vpop.f32.mrb[0].mxu0
    %v2421 = vadd.f32 %v304, %v2420
    %v2422 = vpop.f32.mrb[0].mxu0
    %2423 = vdwg.mxu0
    %v2424 = vmax.f32 %v1146, 0.0
    %v2425 = vmax.f32 %v1151, 0.0
    %v2426 = vmax.f32 %v1156, 0.0
    %v2427 = vmax.f32 %v1161, 0.0
    %v2428 = vmax.f32 %v1166, 0.0
    %v2429 = vmax.f32 %v1171, 0.0
    %v2430 = vmax.f32 %v1176, 0.0
    %v2431 = vmax.f32 %v1181, 0.0
    %v2432 = vmax.f32 %v1186, 0.0
    %v2433 = vmax.f32 %v1191, 0.0
    %v2434 = vmax.f32 %v1196, 0.0
    %v2435 = vmax.f32 %v1201, 0.0
    %v2436 = vmax.f32 %v1206, 0.0
    %v2437 = vmax.f32 %v1211, 0.0
    %v2438 = vmax.f32 %v1216, 0.0
    %v2439 = vmax.f32 %v1221, 0.0
    %v2440 = vmax.f32 %v1226, 0.0
    %v2441 = vmax.f32 %v1231, 0.0
    %v2442 = vmax.f32 %v1236, 0.0
    %v2443 = vmax.f32 %v1241, 0.0
    %v2444 = vmax.f32 %v1246, 0.0
    %v2445 = vmax.f32 %v1251, 0.0
    %v2446 = vmax.f32 %v1256, 0.0
    %v2447 = vmax.f32 %v1261, 0.0
    %v2448 = vmax.f32 %v1266, 0.0
    %v2449 = vmax.f32 %v1271, 0.0
    %v2450 = vmax.f32 %v1276, 0.0
    %v2451 = vmax.f32 %v1281, 0.0
    %v2452 = vmax.f32 %v1286, 0.0
    %v2453 = vmax.f32 %v1291, 0.0
    %v2454 = vmax.f32 %v1296, 0.0
    %v2455 = vmax.f32 %v1301, 0.0
    %v2456 = vmax.f32 %v1306, 0.0
    %v2457 = vmax.f32 %v1311, 0.0
    %v2458 = vmax.f32 %v1316, 0.0
    %v2459 = vmax.f32 %v1321, 0.0
    %v2460 = vmax.f32 %v1326, 0.0
    %v2461 = vmax.f32 %v1331, 0.0
    %v2462 = vmax.f32 %v1336, 0.0
    %v2463 = vmax.f32 %v1341, 0.0
    %v2464 = vmax.f32 %v1346, 0.0
    %v2465 = vmax.f32 %v1351, 0.0
    %v2466 = vmax.f32 %v1356, 0.0
    %v2467 = vmax.f32 %v1361, 0.0
    %v2468 = vmax.f32 %v1366, 0.0
    %v2469 = vmax.f32 %v1371, 0.0
    %v2470 = vmax.f32 %v1376, 0.0
    %v2471 = vmax.f32 %v1381, 0.0
    %v2472 = vmax.f32 %v1386, 0.0
    %v2473 = vmax.f32 %v1391, 0.0
    %v2474 = vmax.f32 %v1396, 0.0
    %v2475 = vmax.f32 %v1401, 0.0
    %v2476 = vmax.f32 %v1406, 0.0
    %v2477 = vmax.f32 %v1411, 0.0
    %v2478 = vmax.f32 %v1416, 0.0
    %v2479 = vmax.f32 %v1421, 0.0
    %v2480 = vmax.f32 %v1426, 0.0
    %v2481 = vmax.f32 %v1431, 0.0
    %v2482 = vmax.f32 %v1436, 0.0
    %v2483 = vmax.f32 %v1441, 0.0
    %v2484 = vmax.f32 %v1446, 0.0
    %v2485 = vmax.f32 %v1451, 0.0
    %v2486 = vmax.f32 %v1456, 0.0
    %v2487 = vmax.f32 %v1461, 0.0
    %v2488 = vmax.f32 %v1466, 0.0
    %v2489 = vmax.f32 %v1471, 0.0
    %v2490 = vmax.f32 %v1476, 0.0
    %v2491 = vmax.f32 %v1481, 0.0
    %v2492 = vmax.f32 %v1486, 0.0
    %v2493 = vmax.f32 %v1491, 0.0
    %v2494 = vmax.f32 %v1496, 0.0
    %v2495 = vmax.f32 %v1501, 0.0
    %v2496 = vmax.f32 %v1506, 0.0
    %v2497 = vmax.f32 %v1511, 0.0
    %v2498 = vmax.f32 %v1516, 0.0
    %v2499 = vmax.f32 %v1521, 0.0
    %v2500 = vmax.f32 %v1526, 0.0
    %v2501 = vmax.f32 %v1531, 0.0
    %v2502 = vmax.f32 %v1536, 0.0
    %v2503 = vmax.f32 %v1541, 0.0
    %v2504 = vmax.f32 %v1546, 0.0
    %v2505 = vmax.f32 %v1551, 0.0
    %v2506 = vmax.f32 %v1556, 0.0
    %v2507 = vmax.f32 %v1561, 0.0
    %v2508 = vmax.f32 %v1566, 0.0
    %v2509 = vmax.f32 %v1571, 0.0
    %v2510 = vmax.f32 %v1576, 0.0
    %v2511 = vmax.f32 %v1581, 0.0
    %v2512 = vmax.f32 %v1586, 0.0
    %v2513 = vmax.f32 %v1591, 0.0
    %v2514 = vmax.f32 %v1596, 0.0
    %v2515 = vmax.f32 %v1601, 0.0
    %v2516 = vmax.f32 %v1606, 0.0
    %v2517 = vmax.f32 %v1611, 0.0
    %v2518 = vmax.f32 %v1616, 0.0
    %v2519 = vmax.f32 %v1621, 0.0
    %v2520 = vmax.f32 %v1626, 0.0
    %v2521 = vmax.f32 %v1631, 0.0
    %v2522 = vmax.f32 %v1636, 0.0
    %v2523 = vmax.f32 %v1641, 0.0
    %v2524 = vmax.f32 %v1646, 0.0
    %v2525 = vmax.f32 %v1651, 0.0
    %v2526 = vmax.f32 %v1656, 0.0
    %v2527 = vmax.f32 %v1661, 0.0
    %v2528 = vmax.f32 %v1666, 0.0
    %v2529 = vmax.f32 %v1671, 0.0
    %v2530 = vmax.f32 %v1676, 0.0
    %v2531 = vmax.f32 %v1681, 0.0
    %v2532 = vmax.f32 %v1686, 0.0
    %v2533 = vmax.f32 %v1691, 0.0
    %v2534 = vmax.f32 %v1696, 0.0
    %v2535 = vmax.f32 %v1701, 0.0
    %v2536 = vmax.f32 %v1706, 0.0
    %v2537 = vmax.f32 %v1711, 0.0
    %v2538 = vmax.f32 %v1716, 0.0
    %v2539 = vmax.f32 %v1721, 0.0
    %v2540 = vmax.f32 %v1726, 0.0
    %v2541 = vmax.f32 %v1731, 0.0
    %v2542 = vmax.f32 %v1736, 0.0
    %v2543 = vmax.f32 %v1741, 0.0
    %v2544 = vmax.f32 %v1746, 0.0
    %v2545 = vmax.f32 %v1751, 0.0
    %v2546 = vmax.f32 %v1756, 0.0
    %v2547 = vmax.f32 %v1761, 0.0
    %v2548 = vmax.f32 %v1766, 0.0
    %v2549 = vmax.f32 %v1771, 0.0
    %v2550 = vmax.f32 %v1776, 0.0
    %v2551 = vmax.f32 %v1781, 0.0
    %v2552 = vmax.f32 %v1786, 0.0
    %v2553 = vmax.f32 %v1791, 0.0
    %v2554 = vmax.f32 %v1796, 0.0
    %v2555 = vmax.f32 %v1801, 0.0
    %v2556 = vmax.f32 %v1806, 0.0
    %v2557 = vmax.f32 %v1811, 0.0
    %v2558 = vmax.f32 %v1816, 0.0
    %v2559 = vmax.f32 %v1821, 0.0
    %v2560 = vmax.f32 %v1826, 0.0
    %v2561 = vmax.f32 %v1831, 0.0
    %v2562 = vmax.f32 %v1836, 0.0
    %v2563 = vmax.f32 %v1841, 0.0
    %v2564 = vmax.f32 %v1846, 0.0
    %v2565 = vmax.f32 %v1851, 0.0
    %v2566 = vmax.f32 %v1856, 0.0
    %v2567 = vmax.f32 %v1861, 0.0
    %v2568 = vmax.f32 %v1866, 0.0
    %v2569 = vmax.f32 %v1871, 0.0
    %v2570 = vmax.f32 %v1876, 0.0
    %v2571 = vmax.f32 %v1881, 0.0
    %v2572 = vmax.f32 %v1886, 0.0
    %v2573 = vmax.f32 %v1891, 0.0
    %v2574 = vmax.f32 %v1896, 0.0
    %v2575 = vmax.f32 %v1901, 0.0
    %v2576 = vmax.f32 %v1906, 0.0
    %v2577 = vmax.f32 %v1911, 0.0
    %v2578 = vmax.f32 %v1916, 0.0
    %v2579 = vmax.f32 %v1921, 0.0
    %v2580 = vmax.f32 %v1926, 0.0
    %v2581 = vmax.f32 %v1931, 0.0
    %v2582 = vmax.f32 %v1936, 0.0
    %v2583 = vmax.f32 %v1941, 0.0
    %v2584 = vmax.f32 %v1946, 0.0
    %v2585 = vmax.f32 %v1951, 0.0
    %v2586 = vmax.f32 %v1956, 0.0
    %v2587 = vmax.f32 %v1961, 0.0
    %v2588 = vmax.f32 %v1966, 0.0
    %v2589 = vmax.f32 %v1971, 0.0
    %v2590 = vmax.f32 %v1976, 0.0
    %v2591 = vmax.f32 %v1981, 0.0
    %v2592 = vmax.f32 %v1986, 0.0
    %v2593 = vmax.f32 %v1991, 0.0
    %v2594 = vmax.f32 %v1996, 0.0
    %v2595 = vmax.f32 %v2001, 0.0
    %v2596 = vmax.f32 %v2006, 0.0
    %v2597 = vmax.f32 %v2011, 0.0
    %v2598 = vmax.f32 %v2016, 0.0
    %v2599 = vmax.f32 %v2021, 0.0
    %v2600 = vmax.f32 %v2026, 0.0
    %v2601 = vmax.f32 %v2031, 0.0
    %v2602 = vmax.f32 %v2036, 0.0
    %v2603 = vmax.f32 %v2041, 0.0
    %v2604 = vmax.f32 %v2046, 0.0
    %v2605 = vmax.f32 %v2051, 0.0
    %v2606 = vmax.f32 %v2056, 0.0
    %v2607 = vmax.f32 %v2061, 0.0
    %v2608 = vmax.f32 %v2066, 0.0
    %v2609 = vmax.f32 %v2071, 0.0
    %v2610 = vmax.f32 %v2076, 0.0
    %v2611 = vmax.f32 %v2081, 0.0
    %v2612 = vmax.f32 %v2086, 0.0
    %v2613 = vmax.f32 %v2091, 0.0
    %v2614 = vmax.f32 %v2096, 0.0
    %v2615 = vmax.f32 %v2101, 0.0
    %v2616 = vmax.f32 %v2106, 0.0
    %v2617 = vmax.f32 %v2111, 0.0
    %v2618 = vmax.f32 %v2116, 0.0
    %v2619 = vmax.f32 %v2121, 0.0
    %v2620 = vmax.f32 %v2126, 0.0
    %v2621 = vmax.f32 %v2131, 0.0
    %v2622 = vmax.f32 %v2136, 0.0
    %v2623 = vmax.f32 %v2141, 0.0
    %v2624 = vmax.f32 %v2146, 0.0
    %v2625 = vmax.f32 %v2151, 0.0
    %v2626 = vmax.f32 %v2156, 0.0
    %v2627 = vmax.f32 %v2161, 0.0
    %v2628 = vmax.f32 %v2166, 0.0
    %v2629 = vmax.f32 %v2171, 0.0
    %v2630 = vmax.f32 %v2176, 0.0
    %v2631 = vmax.f32 %v2181, 0.0
    %v2632 = vmax.f32 %v2186, 0.0
    %v2633 = vmax.f32 %v2191, 0.0
    %v2634 = vmax.f32 %v2196, 0.0
    %v2635 = vmax.f32 %v2201, 0.0
    %v2636 = vmax.f32 %v2206, 0.0
    %v2637 = vmax.f32 %v2211, 0.0
    %v2638 = vmax.f32 %v2216, 0.0
    %v2639 = vmax.f32 %v2221, 0.0
    %v2640 = vmax.f32 %v2226, 0.0
    %v2641 = vmax.f32 %v2231, 0.0
    %v2642 = vmax.f32 %v2236, 0.0
    %v2643 = vmax.f32 %v2241, 0.0
    %v2644 = vmax.f32 %v2246, 0.0
    %v2645 = vmax.f32 %v2251, 0.0
    %v2646 = vmax.f32 %v2256, 0.0
    %v2647 = vmax.f32 %v2261, 0.0
    %v2648 = vmax.f32 %v2266, 0.0
    %v2649 = vmax.f32 %v2271, 0.0
    %v2650 = vmax.f32 %v2276, 0.0
    %v2651 = vmax.f32 %v2281, 0.0
    %v2652 = vmax.f32 %v2286, 0.0
    %v2653 = vmax.f32 %v2291, 0.0
    %v2654 = vmax.f32 %v2296, 0.0
    %v2655 = vmax.f32 %v2301, 0.0
    %v2656 = vmax.f32 %v2306, 0.0
    %v2657 = vmax.f32 %v2311, 0.0
    %v2658 = vmax.f32 %v2316, 0.0
    %v2659 = vmax.f32 %v2321, 0.0
    %v2660 = vmax.f32 %v2326, 0.0
    %v2661 = vmax.f32 %v2331, 0.0
    %v2662 = vmax.f32 %v2336, 0.0
    %v2663 = vmax.f32 %v2341, 0.0
    %v2664 = vmax.f32 %v2346, 0.0
    %v2665 = vmax.f32 %v2351, 0.0
    %v2666 = vmax.f32 %v2356, 0.0
    %v2667 = vmax.f32 %v2361, 0.0
    %v2668 = vmax.f32 %v2366, 0.0
    %v2669 = vmax.f32 %v2371, 0.0
    %v2670 = vmax.f32 %v2376, 0.0
    %v2671 = vmax.f32 %v2381, 0.0
    %v2672 = vmax.f32 %v2386, 0.0
    %v2673 = vmax.f32 %v2391, 0.0
    %v2674 = vmax.f32 %v2396, 0.0
    %v2675 = vmax.f32 %v2401, 0.0
    %v2676 = vmax.f32 %v2406, 0.0
    %v2677 = vmax.f32 %v2411, 0.0
    %v2678 = vmax.f32 %v2416, 0.0
    %v2679 = vmax.f32 %v2421, 0.0
    %vm2680 = vcmask 130048
    %2681 = vst.msk [vmem:[#allocation2] sm:$0xff] %vm2680, %v2424
    %2682 = vst.msk [vmem:[#allocation2 + $0x8] sm:$0xff] %vm2680, %v2425
    %2683 = vst.msk [vmem:[#allocation2 + $0x10] sm:$0xff] %vm2680, %v2426
    %2684 = vst.msk [vmem:[#allocation2 + $0x18] sm:$0xff] %vm2680, %v2427
    %2685 = vst.msk [vmem:[#allocation2 + $0x20] sm:$0xff] %vm2680, %v2428
    %2686 = vst.msk [vmem:[#allocation2 + $0x28] sm:$0xff] %vm2680, %v2429
    %2687 = vst.msk [vmem:[#allocation2 + $0x30] sm:$0xff] %vm2680, %v2430
    %2688 = vst.msk [vmem:[#allocation2 + $0x38] sm:$0xff] %vm2680, %v2431
    %2689 = vst.msk [vmem:[#allocation2 + $0x40] sm:$0xff] %vm2680, %v2432
    %2690 = vst.msk [vmem:[#allocation2 + $0x48] sm:$0xff] %vm2680, %v2433
    %2691 = vst.msk [vmem:[#allocation2 + $0x50] sm:$0xff] %vm2680, %v2434
    %2692 = vst.msk [vmem:[#allocation2 + $0x58] sm:$0xff] %vm2680, %v2435
    %2693 = vst.msk [vmem:[#allocation2 + $0x60] sm:$0xff] %vm2680, %v2436
    %2694 = vst.msk [vmem:[#allocation2 + $0x68] sm:$0xff] %vm2680, %v2437
    %2695 = vst.msk [vmem:[#allocation2 + $0x70] sm:$0xff] %vm2680, %v2438
    %2696 = vst.msk [vmem:[#allocation2 + $0x78] sm:$0xff] %vm2680, %v2439
    %2697 = vst.msk [vmem:[#allocation2 + $0x80] sm:$0xff] %vm2680, %v2440
    %2698 = vst.msk [vmem:[#allocation2 + $0x88] sm:$0xff] %vm2680, %v2441
    %2699 = vst.msk [vmem:[#allocation2 + $0x90] sm:$0xff] %vm2680, %v2442
    %2700 = vst.msk [vmem:[#allocation2 + $0x98] sm:$0xff] %vm2680, %v2443
    %2701 = vst.msk [vmem:[#allocation2 + $0xa0] sm:$0xff] %vm2680, %v2444
    %2702 = vst.msk [vmem:[#allocation2 + $0xa8] sm:$0xff] %vm2680, %v2445
    %2703 = vst.msk [vmem:[#allocation2 + $0xb0] sm:$0xff] %vm2680, %v2446
    %2704 = vst.msk [vmem:[#allocation2 + $0xb8] sm:$0xff] %vm2680, %v2447
    %2705 = vst.msk [vmem:[#allocation2 + $0xc0] sm:$0xff] %vm2680, %v2448
    %2706 = vst.msk [vmem:[#allocation2 + $0xc8] sm:$0xff] %vm2680, %v2449
    %2707 = vst.msk [vmem:[#allocation2 + $0xd0] sm:$0xff] %vm2680, %v2450
    %2708 = vst.msk [vmem:[#allocation2 + $0xd8] sm:$0xff] %vm2680, %v2451
    %2709 = vst.msk [vmem:[#allocation2 + $0xe0] sm:$0xff] %vm2680, %v2452
    %2710 = vst.msk [vmem:[#allocation2 + $0xe8] sm:$0xff] %vm2680, %v2453
    %2711 = vst.msk [vmem:[#allocation2 + $0xf0] sm:$0xff] %vm2680, %v2454
    %2712 = vst.msk [vmem:[#allocation2 + $0xf8] sm:$0xff] %vm2680, %v2455
    %2713 = vst.msk [vmem:[#allocation2 + $0x100] sm:$0xff] %vm2680, %v2456
    %2714 = vst.msk [vmem:[#allocation2 + $0x108] sm:$0xff] %vm2680, %v2457
    %2715 = vst.msk [vmem:[#allocation2 + $0x110] sm:$0xff] %vm2680, %v2458
    %2716 = vst.msk [vmem:[#allocation2 + $0x118] sm:$0xff] %vm2680, %v2459
    %2717 = vst.msk [vmem:[#allocation2 + $0x120] sm:$0xff] %vm2680, %v2460
    %2718 = vst.msk [vmem:[#allocation2 + $0x128] sm:$0xff] %vm2680, %v2461
    %2719 = vst.msk [vmem:[#allocation2 + $0x130] sm:$0xff] %vm2680, %v2462
    %2720 = vst.msk [vmem:[#allocation2 + $0x138] sm:$0xff] %vm2680, %v2463
    %2721 = vst.msk [vmem:[#allocation2 + $0x140] sm:$0xff] %vm2680, %v2464
    %2722 = vst.msk [vmem:[#allocation2 + $0x148] sm:$0xff] %vm2680, %v2465
    %2723 = vst.msk [vmem:[#allocation2 + $0x150] sm:$0xff] %vm2680, %v2466
    %2724 = vst.msk [vmem:[#allocation2 + $0x158] sm:$0xff] %vm2680, %v2467
    %2725 = vst.msk [vmem:[#allocation2 + $0x160] sm:$0xff] %vm2680, %v2468
    %2726 = vst.msk [vmem:[#allocation2 + $0x168] sm:$0xff] %vm2680, %v2469
    %2727 = vst.msk [vmem:[#allocation2 + $0x170] sm:$0xff] %vm2680, %v2470
    %2728 = vst.msk [vmem:[#allocation2 + $0x178] sm:$0xff] %vm2680, %v2471
    %2729 = vst.msk [vmem:[#allocation2 + $0x180] sm:$0xff] %vm2680, %v2472
    %2730 = vst.msk [vmem:[#allocation2 + $0x188] sm:$0xff] %vm2680, %v2473
    %2731 = vst.msk [vmem:[#allocation2 + $0x190] sm:$0xff] %vm2680, %v2474
    %2732 = vst.msk [vmem:[#allocation2 + $0x198] sm:$0xff] %vm2680, %v2475
    %2733 = vst.msk [vmem:[#allocation2 + $0x1a0] sm:$0xff] %vm2680, %v2476
    %2734 = vst.msk [vmem:[#allocation2 + $0x1a8] sm:$0xff] %vm2680, %v2477
    %2735 = vst.msk [vmem:[#allocation2 + $0x1b0] sm:$0xff] %vm2680, %v2478
    %2736 = vst.msk [vmem:[#allocation2 + $0x1b8] sm:$0xff] %vm2680, %v2479
    %2737 = vst.msk [vmem:[#allocation2 + $0x1c0] sm:$0xff] %vm2680, %v2480
    %2738 = vst.msk [vmem:[#allocation2 + $0x1c8] sm:$0xff] %vm2680, %v2481
    %2739 = vst.msk [vmem:[#allocation2 + $0x1d0] sm:$0xff] %vm2680, %v2482
    %2740 = vst.msk [vmem:[#allocation2 + $0x1d8] sm:$0xff] %vm2680, %v2483
    %2741 = vst.msk [vmem:[#allocation2 + $0x1e0] sm:$0xff] %vm2680, %v2484
    %2742 = vst.msk [vmem:[#allocation2 + $0x1e8] sm:$0xff] %vm2680, %v2485
    %2743 = vst.msk [vmem:[#allocation2 + $0x1f0] sm:$0xff] %vm2680, %v2486
    %2744 = vst.msk [vmem:[#allocation2 + $0x1f8] sm:$0xff] %vm2680, %v2487
    %2745 = vst.msk [vmem:[#allocation2 + $0x200] sm:$0xff] %vm2680, %v2488
    %2746 = vst.msk [vmem:[#allocation2 + $0x208] sm:$0xff] %vm2680, %v2489
    %2747 = vst.msk [vmem:[#allocation2 + $0x210] sm:$0xff] %vm2680, %v2490
    %2748 = vst.msk [vmem:[#allocation2 + $0x218] sm:$0xff] %vm2680, %v2491
    %2749 = vst.msk [vmem:[#allocation2 + $0x220] sm:$0xff] %vm2680, %v2492
    %2750 = vst.msk [vmem:[#allocation2 + $0x228] sm:$0xff] %vm2680, %v2493
    %2751 = vst.msk [vmem:[#allocation2 + $0x230] sm:$0xff] %vm2680, %v2494
    %2752 = vst.msk [vmem:[#allocation2 + $0x238] sm:$0xff] %vm2680, %v2495
    %2753 = vst.msk [vmem:[#allocation2 + $0x240] sm:$0xff] %vm2680, %v2496
    %2754 = vst.msk [vmem:[#allocation2 + $0x248] sm:$0xff] %vm2680, %v2497
    %2755 = vst.msk [vmem:[#allocation2 + $0x250] sm:$0xff] %vm2680, %v2498
    %2756 = vst.msk [vmem:[#allocation2 + $0x258] sm:$0xff] %vm2680, %v2499
    %2757 = vst.msk [vmem:[#allocation2 + $0x260] sm:$0xff] %vm2680, %v2500
    %2758 = vst.msk [vmem:[#allocation2 + $0x268] sm:$0xff] %vm2680, %v2501
    %2759 = vst.msk [vmem:[#allocation2 + $0x270] sm:$0xff] %vm2680, %v2502
    %2760 = vst.msk [vmem:[#allocation2 + $0x278] sm:$0xff] %vm2680, %v2503
    %2761 = vst.msk [vmem:[#allocation2 + $0x280] sm:$0xff] %vm2680, %v2504
    %2762 = vst.msk [vmem:[#allocation2 + $0x288] sm:$0xff] %vm2680, %v2505
    %2763 = vst.msk [vmem:[#allocation2 + $0x290] sm:$0xff] %vm2680, %v2506
    %2764 = vst.msk [vmem:[#allocation2 + $0x298] sm:$0xff] %vm2680, %v2507
    %2765 = vst.msk [vmem:[#allocation2 + $0x2a0] sm:$0xff] %vm2680, %v2508
    %2766 = vst.msk [vmem:[#allocation2 + $0x2a8] sm:$0xff] %vm2680, %v2509
    %2767 = vst.msk [vmem:[#allocation2 + $0x2b0] sm:$0xff] %vm2680, %v2510
    %2768 = vst.msk [vmem:[#allocation2 + $0x2b8] sm:$0xff] %vm2680, %v2511
    %2769 = vst.msk [vmem:[#allocation2 + $0x2c0] sm:$0xff] %vm2680, %v2512
    %2770 = vst.msk [vmem:[#allocation2 + $0x2c8] sm:$0xff] %vm2680, %v2513
    %2771 = vst.msk [vmem:[#allocation2 + $0x2d0] sm:$0xff] %vm2680, %v2514
    %2772 = vst.msk [vmem:[#allocation2 + $0x2d8] sm:$0xff] %vm2680, %v2515
    %2773 = vst.msk [vmem:[#allocation2 + $0x2e0] sm:$0xff] %vm2680, %v2516
    %2774 = vst.msk [vmem:[#allocation2 + $0x2e8] sm:$0xff] %vm2680, %v2517
    %2775 = vst.msk [vmem:[#allocation2 + $0x2f0] sm:$0xff] %vm2680, %v2518
    %2776 = vst.msk [vmem:[#allocation2 + $0x2f8] sm:$0xff] %vm2680, %v2519
    %2777 = vst.msk [vmem:[#allocation2 + $0x300] sm:$0xff] %vm2680, %v2520
    %2778 = vst.msk [vmem:[#allocation2 + $0x308] sm:$0xff] %vm2680, %v2521
    %2779 = vst.msk [vmem:[#allocation2 + $0x310] sm:$0xff] %vm2680, %v2522
    %2780 = vst.msk [vmem:[#allocation2 + $0x318] sm:$0xff] %vm2680, %v2523
    %2781 = vst.msk [vmem:[#allocation2 + $0x320] sm:$0xff] %vm2680, %v2524
    %2782 = vst.msk [vmem:[#allocation2 + $0x328] sm:$0xff] %vm2680, %v2525
    %2783 = vst.msk [vmem:[#allocation2 + $0x330] sm:$0xff] %vm2680, %v2526
    %2784 = vst.msk [vmem:[#allocation2 + $0x338] sm:$0xff] %vm2680, %v2527
    %2785 = vst.msk [vmem:[#allocation2 + $0x340] sm:$0xff] %vm2680, %v2528
    %2786 = vst.msk [vmem:[#allocation2 + $0x348] sm:$0xff] %vm2680, %v2529
    %2787 = vst.msk [vmem:[#allocation2 + $0x350] sm:$0xff] %vm2680, %v2530
    %2788 = vst.msk [vmem:[#allocation2 + $0x358] sm:$0xff] %vm2680, %v2531
    %2789 = vst.msk [vmem:[#allocation2 + $0x360] sm:$0xff] %vm2680, %v2532
    %2790 = vst.msk [vmem:[#allocation2 + $0x368] sm:$0xff] %vm2680, %v2533
    %2791 = vst.msk [vmem:[#allocation2 + $0x370] sm:$0xff] %vm2680, %v2534
    %2792 = vst.msk [vmem:[#allocation2 + $0x378] sm:$0xff] %vm2680, %v2535
    %2793 = vst.msk [vmem:[#allocation2 + $0x380] sm:$0xff] %vm2680, %v2536
    %2794 = vst.msk [vmem:[#allocation2 + $0x388] sm:$0xff] %vm2680, %v2537
    %2795 = vst.msk [vmem:[#allocation2 + $0x390] sm:$0xff] %vm2680, %v2538
    %2796 = vst.msk [vmem:[#allocation2 + $0x398] sm:$0xff] %vm2680, %v2539
    %2797 = vst.msk [vmem:[#allocation2 + $0x3a0] sm:$0xff] %vm2680, %v2540
    %2798 = vst.msk [vmem:[#allocation2 + $0x3a8] sm:$0xff] %vm2680, %v2541
    %2799 = vst.msk [vmem:[#allocation2 + $0x3b0] sm:$0xff] %vm2680, %v2542
    %2800 = vst.msk [vmem:[#allocation2 + $0x3b8] sm:$0xff] %vm2680, %v2543
    %2801 = vst.msk [vmem:[#allocation2 + $0x3c0] sm:$0xff] %vm2680, %v2544
    %2802 = vst.msk [vmem:[#allocation2 + $0x3c8] sm:$0xff] %vm2680, %v2545
    %2803 = vst.msk [vmem:[#allocation2 + $0x3d0] sm:$0xff] %vm2680, %v2546
    %2804 = vst.msk [vmem:[#allocation2 + $0x3d8] sm:$0xff] %vm2680, %v2547
    %2805 = vst.msk [vmem:[#allocation2 + $0x3e0] sm:$0xff] %vm2680, %v2548
    %2806 = vst.msk [vmem:[#allocation2 + $0x3e8] sm:$0xff] %vm2680, %v2549
    %2807 = vst.msk [vmem:[#allocation2 + $0x3f0] sm:$0xff] %vm2680, %v2550
    %2808 = vst.msk [vmem:[#allocation2 + $0x3f8] sm:$0xff] %vm2680, %v2551
    %2809 = vst.msk [vmem:[#allocation2 + $0x400] sm:$0xff] %vm2680, %v2552
    %2810 = vst.msk [vmem:[#allocation2 + $0x408] sm:$0xff] %vm2680, %v2553
    %2811 = vst.msk [vmem:[#allocation2 + $0x410] sm:$0xff] %vm2680, %v2554
    %2812 = vst.msk [vmem:[#allocation2 + $0x418] sm:$0xff] %vm2680, %v2555
    %2813 = vst.msk [vmem:[#allocation2 + $0x420] sm:$0xff] %vm2680, %v2556
    %2814 = vst.msk [vmem:[#allocation2 + $0x428] sm:$0xff] %vm2680, %v2557
    %2815 = vst.msk [vmem:[#allocation2 + $0x430] sm:$0xff] %vm2680, %v2558
    %2816 = vst.msk [vmem:[#allocation2 + $0x438] sm:$0xff] %vm2680, %v2559
    %2817 = vst.msk [vmem:[#allocation2 + $0x440] sm:$0xff] %vm2680, %v2560
    %2818 = vst.msk [vmem:[#allocation2 + $0x448] sm:$0xff] %vm2680, %v2561
    %2819 = vst.msk [vmem:[#allocation2 + $0x450] sm:$0xff] %vm2680, %v2562
    %2820 = vst.msk [vmem:[#allocation2 + $0x458] sm:$0xff] %vm2680, %v2563
    %2821 = vst.msk [vmem:[#allocation2 + $0x460] sm:$0xff] %vm2680, %v2564
    %2822 = vst.msk [vmem:[#allocation2 + $0x468] sm:$0xff] %vm2680, %v2565
    %2823 = vst.msk [vmem:[#allocation2 + $0x470] sm:$0xff] %vm2680, %v2566
    %2824 = vst.msk [vmem:[#allocation2 + $0x478] sm:$0xff] %vm2680, %v2567
    %2825 = vst.msk [vmem:[#allocation2 + $0x480] sm:$0xff] %vm2680, %v2568
    %2826 = vst.msk [vmem:[#allocation2 + $0x488] sm:$0xff] %vm2680, %v2569
    %2827 = vst.msk [vmem:[#allocation2 + $0x490] sm:$0xff] %vm2680, %v2570
    %2828 = vst.msk [vmem:[#allocation2 + $0x498] sm:$0xff] %vm2680, %v2571
    %2829 = vst.msk [vmem:[#allocation2 + $0x4a0] sm:$0xff] %vm2680, %v2572
    %2830 = vst.msk [vmem:[#allocation2 + $0x4a8] sm:$0xff] %vm2680, %v2573
    %2831 = vst.msk [vmem:[#allocation2 + $0x4b0] sm:$0xff] %vm2680, %v2574
    %2832 = vst.msk [vmem:[#allocation2 + $0x4b8] sm:$0xff] %vm2680, %v2575
    %2833 = vst.msk [vmem:[#allocation2 + $0x4c0] sm:$0xff] %vm2680, %v2576
    %2834 = vst.msk [vmem:[#allocation2 + $0x4c8] sm:$0xff] %vm2680, %v2577
    %2835 = vst.msk [vmem:[#allocation2 + $0x4d0] sm:$0xff] %vm2680, %v2578
    %2836 = vst.msk [vmem:[#allocation2 + $0x4d8] sm:$0xff] %vm2680, %v2579
    %2837 = vst.msk [vmem:[#allocation2 + $0x4e0] sm:$0xff] %vm2680, %v2580
    %2838 = vst.msk [vmem:[#allocation2 + $0x4e8] sm:$0xff] %vm2680, %v2581
    %2839 = vst.msk [vmem:[#allocation2 + $0x4f0] sm:$0xff] %vm2680, %v2582
    %2840 = vst.msk [vmem:[#allocation2 + $0x4f8] sm:$0xff] %vm2680, %v2583
    %2841 = vst.msk [vmem:[#allocation2 + $0x500] sm:$0xff] %vm2680, %v2584
    %2842 = vst.msk [vmem:[#allocation2 + $0x508] sm:$0xff] %vm2680, %v2585
    %2843 = vst.msk [vmem:[#allocation2 + $0x510] sm:$0xff] %vm2680, %v2586
    %2844 = vst.msk [vmem:[#allocation2 + $0x518] sm:$0xff] %vm2680, %v2587
    %2845 = vst.msk [vmem:[#allocation2 + $0x520] sm:$0xff] %vm2680, %v2588
    %2846 = vst.msk [vmem:[#allocation2 + $0x528] sm:$0xff] %vm2680, %v2589
    %2847 = vst.msk [vmem:[#allocation2 + $0x530] sm:$0xff] %vm2680, %v2590
    %2848 = vst.msk [vmem:[#allocation2 + $0x538] sm:$0xff] %vm2680, %v2591
    %2849 = vst.msk [vmem:[#allocation2 + $0x540] sm:$0xff] %vm2680, %v2592
    %2850 = vst.msk [vmem:[#allocation2 + $0x548] sm:$0xff] %vm2680, %v2593
    %2851 = vst.msk [vmem:[#allocation2 + $0x550] sm:$0xff] %vm2680, %v2594
    %2852 = vst.msk [vmem:[#allocation2 + $0x558] sm:$0xff] %vm2680, %v2595
    %2853 = vst.msk [vmem:[#allocation2 + $0x560] sm:$0xff] %vm2680, %v2596
    %2854 = vst.msk [vmem:[#allocation2 + $0x568] sm:$0xff] %vm2680, %v2597
    %2855 = vst.msk [vmem:[#allocation2 + $0x570] sm:$0xff] %vm2680, %v2598
    %2856 = vst.msk [vmem:[#allocation2 + $0x578] sm:$0xff] %vm2680, %v2599
    %2857 = vst.msk [vmem:[#allocation2 + $0x580] sm:$0xff] %vm2680, %v2600
    %2858 = vst.msk [vmem:[#allocation2 + $0x588] sm:$0xff] %vm2680, %v2601
    %2859 = vst.msk [vmem:[#allocation2 + $0x590] sm:$0xff] %vm2680, %v2602
    %2860 = vst.msk [vmem:[#allocation2 + $0x598] sm:$0xff] %vm2680, %v2603
    %2861 = vst.msk [vmem:[#allocation2 + $0x5a0] sm:$0xff] %vm2680, %v2604
    %2862 = vst.msk [vmem:[#allocation2 + $0x5a8] sm:$0xff] %vm2680, %v2605
    %2863 = vst.msk [vmem:[#allocation2 + $0x5b0] sm:$0xff] %vm2680, %v2606
    %2864 = vst.msk [vmem:[#allocation2 + $0x5b8] sm:$0xff] %vm2680, %v2607
    %2865 = vst.msk [vmem:[#allocation2 + $0x5c0] sm:$0xff] %vm2680, %v2608
    %2866 = vst.msk [vmem:[#allocation2 + $0x5c8] sm:$0xff] %vm2680, %v2609
    %2867 = vst.msk [vmem:[#allocation2 + $0x5d0] sm:$0xff] %vm2680, %v2610
    %2868 = vst.msk [vmem:[#allocation2 + $0x5d8] sm:$0xff] %vm2680, %v2611
    %2869 = vst.msk [vmem:[#allocation2 + $0x5e0] sm:$0xff] %vm2680, %v2612
    %2870 = vst.msk [vmem:[#allocation2 + $0x5e8] sm:$0xff] %vm2680, %v2613
    %2871 = vst.msk [vmem:[#allocation2 + $0x5f0] sm:$0xff] %vm2680, %v2614
    %2872 = vst.msk [vmem:[#allocation2 + $0x5f8] sm:$0xff] %vm2680, %v2615
    %2873 = vst.msk [vmem:[#allocation2 + $0x600] sm:$0xff] %vm2680, %v2616
    %2874 = vst.msk [vmem:[#allocation2 + $0x608] sm:$0xff] %vm2680, %v2617
    %2875 = vst.msk [vmem:[#allocation2 + $0x610] sm:$0xff] %vm2680, %v2618
    %2876 = vst.msk [vmem:[#allocation2 + $0x618] sm:$0xff] %vm2680, %v2619
    %2877 = vst.msk [vmem:[#allocation2 + $0x620] sm:$0xff] %vm2680, %v2620
    %2878 = vst.msk [vmem:[#allocation2 + $0x628] sm:$0xff] %vm2680, %v2621
    %2879 = vst.msk [vmem:[#allocation2 + $0x630] sm:$0xff] %vm2680, %v2622
    %2880 = vst.msk [vmem:[#allocation2 + $0x638] sm:$0xff] %vm2680, %v2623
    %2881 = vst.msk [vmem:[#allocation2 + $0x640] sm:$0xff] %vm2680, %v2624
    %2882 = vst.msk [vmem:[#allocation2 + $0x648] sm:$0xff] %vm2680, %v2625
    %2883 = vst.msk [vmem:[#allocation2 + $0x650] sm:$0xff] %vm2680, %v2626
    %2884 = vst.msk [vmem:[#allocation2 + $0x658] sm:$0xff] %vm2680, %v2627
    %2885 = vst.msk [vmem:[#allocation2 + $0x660] sm:$0xff] %vm2680, %v2628
    %2886 = vst.msk [vmem:[#allocation2 + $0x668] sm:$0xff] %vm2680, %v2629
    %2887 = vst.msk [vmem:[#allocation2 + $0x670] sm:$0xff] %vm2680, %v2630
    %2888 = vst.msk [vmem:[#allocation2 + $0x678] sm:$0xff] %vm2680, %v2631
    %2889 = vst.msk [vmem:[#allocation2 + $0x680] sm:$0xff] %vm2680, %v2632
    %2890 = vst.msk [vmem:[#allocation2 + $0x688] sm:$0xff] %vm2680, %v2633
    %2891 = vst.msk [vmem:[#allocation2 + $0x690] sm:$0xff] %vm2680, %v2634
    %2892 = vst.msk [vmem:[#allocation2 + $0x698] sm:$0xff] %vm2680, %v2635
    %2893 = vst.msk [vmem:[#allocation2 + $0x6a0] sm:$0xff] %vm2680, %v2636
    %2894 = vst.msk [vmem:[#allocation2 + $0x6a8] sm:$0xff] %vm2680, %v2637
    %2895 = vst.msk [vmem:[#allocation2 + $0x6b0] sm:$0xff] %vm2680, %v2638
    %2896 = vst.msk [vmem:[#allocation2 + $0x6b8] sm:$0xff] %vm2680, %v2639
    %2897 = vst.msk [vmem:[#allocation2 + $0x6c0] sm:$0xff] %vm2680, %v2640
    %2898 = vst.msk [vmem:[#allocation2 + $0x6c8] sm:$0xff] %vm2680, %v2641
    %2899 = vst.msk [vmem:[#allocation2 + $0x6d0] sm:$0xff] %vm2680, %v2642
    %2900 = vst.msk [vmem:[#allocation2 + $0x6d8] sm:$0xff] %vm2680, %v2643
    %2901 = vst.msk [vmem:[#allocation2 + $0x6e0] sm:$0xff] %vm2680, %v2644
    %2902 = vst.msk [vmem:[#allocation2 + $0x6e8] sm:$0xff] %vm2680, %v2645
    %2903 = vst.msk [vmem:[#allocation2 + $0x6f0] sm:$0xff] %vm2680, %v2646
    %2904 = vst.msk [vmem:[#allocation2 + $0x6f8] sm:$0xff] %vm2680, %v2647
    %2905 = vst.msk [vmem:[#allocation2 + $0x700] sm:$0xff] %vm2680, %v2648
    %2906 = vst.msk [vmem:[#allocation2 + $0x708] sm:$0xff] %vm2680, %v2649
    %2907 = vst.msk [vmem:[#allocation2 + $0x710] sm:$0xff] %vm2680, %v2650
    %2908 = vst.msk [vmem:[#allocation2 + $0x718] sm:$0xff] %vm2680, %v2651
    %2909 = vst.msk [vmem:[#allocation2 + $0x720] sm:$0xff] %vm2680, %v2652
    %2910 = vst.msk [vmem:[#allocation2 + $0x728] sm:$0xff] %vm2680, %v2653
    %2911 = vst.msk [vmem:[#allocation2 + $0x730] sm:$0xff] %vm2680, %v2654
    %2912 = vst.msk [vmem:[#allocation2 + $0x738] sm:$0xff] %vm2680, %v2655
    %2913 = vst.msk [vmem:[#allocation2 + $0x740] sm:$0xff] %vm2680, %v2656
    %2914 = vst.msk [vmem:[#allocation2 + $0x748] sm:$0xff] %vm2680, %v2657
    %2915 = vst.msk [vmem:[#allocation2 + $0x750] sm:$0xff] %vm2680, %v2658
    %2916 = vst.msk [vmem:[#allocation2 + $0x758] sm:$0xff] %vm2680, %v2659
    %2917 = vst.msk [vmem:[#allocation2 + $0x760] sm:$0xff] %vm2680, %v2660
    %2918 = vst.msk [vmem:[#allocation2 + $0x768] sm:$0xff] %vm2680, %v2661
    %2919 = vst.msk [vmem:[#allocation2 + $0x770] sm:$0xff] %vm2680, %v2662
    %2920 = vst.msk [vmem:[#allocation2 + $0x778] sm:$0xff] %vm2680, %v2663
    %2921 = vst.msk [vmem:[#allocation2 + $0x780] sm:$0xff] %vm2680, %v2664
    %2922 = vst.msk [vmem:[#allocation2 + $0x788] sm:$0xff] %vm2680, %v2665
    %2923 = vst.msk [vmem:[#allocation2 + $0x790] sm:$0xff] %vm2680, %v2666
    %2924 = vst.msk [vmem:[#allocation2 + $0x798] sm:$0xff] %vm2680, %v2667
    %2925 = vst.msk [vmem:[#allocation2 + $0x7a0] sm:$0xff] %vm2680, %v2668
    %2926 = vst.msk [vmem:[#allocation2 + $0x7a8] sm:$0xff] %vm2680, %v2669
    %2927 = vst.msk [vmem:[#allocation2 + $0x7b0] sm:$0xff] %vm2680, %v2670
    %2928 = vst.msk [vmem:[#allocation2 + $0x7b8] sm:$0xff] %vm2680, %v2671
    %2929 = vst.msk [vmem:[#allocation2 + $0x7c0] sm:$0xff] %vm2680, %v2672
    %2930 = vst.msk [vmem:[#allocation2 + $0x7c8] sm:$0xff] %vm2680, %v2673
    %2931 = vst.msk [vmem:[#allocation2 + $0x7d0] sm:$0xff] %vm2680, %v2674
    %2932 = vst.msk [vmem:[#allocation2 + $0x7d8] sm:$0xff] %vm2680, %v2675
    %2933 = vst.msk [vmem:[#allocation2 + $0x7e0] sm:$0xff] %vm2680, %v2676
    %2934 = vst.msk [vmem:[#allocation2 + $0x7e8] sm:$0xff] %vm2680, %v2677
    %2935 = vst.msk [vmem:[#allocation2 + $0x7f0] sm:$0xff] %vm2680, %v2678
    %2936 = vst.msk [vmem:[#allocation2 + $0x7f8] sm:$0xff] %vm2680, %v2679
    %2937 = vst.msk [vmem:[#allocation3] sm:$0xff] %vm2680, 0.0
    %2938 = vst.msk [vmem:[#allocation3 + $0x8] sm:$0xff] %vm2680, 0.0
    %vm2939 = vcmask 123904
    %2940 = vst.msk [vmem:[#allocation3 + $0x10] sm:$0x3] %vm2939, 0.0
    %2941 = vst.msk [vmem:[#allocation3 + $0x1b0] sm:$0xff] %vm2680, 0.0
    %2942 = vst.msk [vmem:[#allocation3 + $0x1b8] sm:$0xff] %vm2680, 0.0
    %2943 = vst.msk [vmem:[#allocation3 + $0x1c0] sm:$0x3] %vm2939, 0.0
    %s2944 = scalar_lea.vmem [#allocation3], 408
    %2945 = vst.msk [vmem:[%s2944] sm:$0xff] %vm2680, 0.0
    %2946 = vst.msk [vmem:[%s2944 + $0x8] sm:$0xff] %vm2680, 0.0
    %2947 = vst.msk [vmem:[%s2944 + $0x10] sm:$0x3] %vm2939, 0.0
    %2948 = vst.msk [vmem:[%s2944 + $0x1b0] sm:$0xff] %vm2680, 0.0
    %2949 = vst.msk [vmem:[%s2944 + $0x1b8] sm:$0xff] %vm2680, 0.0
    %2950 = vst.msk [vmem:[%s2944 + $0x1c0] sm:$0x3] %vm2939, 0.0
    %vm2951 = vcmask 122880
    %2952 = vst.msk [vmem:[#allocation3] sm:$0x1] %vm2951, 0.0
    %2953 = vst.msk [vmem:[#allocation3 + $0x18] sm:$0x1] %vm2951, 0.0
    %2954 = vst.msk [vmem:[#allocation3 + $0x30] sm:$0x1] %vm2951, 0.0
    %2955 = vst.msk [vmem:[#allocation3 + $0x48] sm:$0x1] %vm2951, 0.0
    %2956 = vst.msk [vmem:[#allocation3 + $0x60] sm:$0x1] %vm2951, 0.0
    %2957 = vst.msk [vmem:[#allocation3 + $0x78] sm:$0x1] %vm2951, 0.0
    %2958 = vst.msk [vmem:[#allocation3 + $0x90] sm:$0x1] %vm2951, 0.0
    %2959 = vst.msk [vmem:[#allocation3 + $0xa8] sm:$0x1] %vm2951, 0.0
    %2960 = vst.msk [vmem:[#allocation3 + $0xc0] sm:$0x1] %vm2951, 0.0
    %2961 = vst.msk [vmem:[#allocation3 + $0xd8] sm:$0x1] %vm2951, 0.0
    %2962 = vst.msk [vmem:[#allocation3 + $0xf0] sm:$0x1] %vm2951, 0.0
    %2963 = vst.msk [vmem:[#allocation3 + $0x108] sm:$0x1] %vm2951, 0.0
    %2964 = vst.msk [vmem:[#allocation3 + $0x120] sm:$0x1] %vm2951, 0.0
    %2965 = vst.msk [vmem:[#allocation3 + $0x138] sm:$0x1] %vm2951, 0.0
    %2966 = vst.msk [vmem:[#allocation3 + $0x150] sm:$0x1] %vm2951, 0.0
    %2967 = vst.msk [vmem:[#allocation3 + $0x168] sm:$0x1] %vm2951, 0.0
    %2968 = vst.msk [vmem:[#allocation3 + $0x180] sm:$0x1] %vm2951, 0.0
    %2969 = vst.msk [vmem:[#allocation3 + $0x198] sm:$0x1] %vm2951, 0.0
    %2970 = vst.msk [vmem:[#allocation3 + $0x1b0] sm:$0x1] %vm2951, 0.0
    %2971 = vst.msk [vmem:[#allocation3 + $0x1c8] sm:$0x1] %vm2951, 0.0
    %2972 = vst.msk [vmem:[#allocation3 + $0x1e0] sm:$0x1] %vm2951, 0.0
    %2973 = vst.msk [vmem:[#allocation3 + $0x1f8] sm:$0x1] %vm2951, 0.0
    %2974 = vst.msk [vmem:[#allocation3 + $0x210] sm:$0x1] %vm2951, 0.0
    %2975 = vst.msk [vmem:[#allocation3 + $0x228] sm:$0x1] %vm2951, 0.0
    %2976 = vst.msk [vmem:[#allocation3 + $0x240] sm:$0x1] %vm2951, 0.0
    %2977 = vst.msk [vmem:[#allocation3 + $0x258] sm:$0x1] %vm2951, 0.0
    %2978 = vst.msk [vmem:[#allocation3 + $0x270] sm:$0x1] %vm2951, 0.0
    %2979 = vst.msk [vmem:[#allocation3 + $0x288] sm:$0x1] %vm2951, 0.0
    %2980 = vst.msk [vmem:[#allocation3 + $0x2a0] sm:$0x1] %vm2951, 0.0
    %2981 = vst.msk [vmem:[#allocation3 + $0x2b8] sm:$0x1] %vm2951, 0.0
    %2982 = vst.msk [vmem:[#allocation3 + $0x2d0] sm:$0x1] %vm2951, 0.0
    %2983 = vst.msk [vmem:[#allocation3 + $0x2e8] sm:$0x1] %vm2951, 0.0
    %2984 = vst.msk [vmem:[#allocation3 + $0x300] sm:$0x1] %vm2951, 0.0
    %2985 = vst.msk [vmem:[#allocation3 + $0x318] sm:$0x1] %vm2951, 0.0
    %2986 = vst.msk [vmem:[#allocation3 + $0x330] sm:$0x1] %vm2951, 0.0
    %2987 = vst.msk [vmem:[#allocation3 + $0x348] sm:$0x1] %vm2951, 0.0
    %2988 = vst.msk [vmem:[#allocation3 + $0x11] sm:$0x1] %vm2951, 0.0
    %2989 = vst.msk [vmem:[#allocation3 + $0x29] sm:$0x1] %vm2951, 0.0
    %2990 = vst.msk [vmem:[#allocation3 + $0x41] sm:$0x1] %vm2951, 0.0
    %2991 = vst.msk [vmem:[#allocation3 + $0x59] sm:$0x1] %vm2951, 0.0
    %2992 = vst.msk [vmem:[#allocation3 + $0x71] sm:$0x1] %vm2951, 0.0
    %2993 = vst.msk [vmem:[#allocation3 + $0x89] sm:$0x1] %vm2951, 0.0
    %2994 = vst.msk [vmem:[#allocation3 + $0xa1] sm:$0x1] %vm2951, 0.0
    %2995 = vst.msk [vmem:[#allocation3 + $0xb9] sm:$0x1] %vm2951, 0.0
    %2996 = vst.msk [vmem:[#allocation3 + $0xd1] sm:$0x1] %vm2951, 0.0
    %2997 = vst.msk [vmem:[#allocation3 + $0xe9] sm:$0x1] %vm2951, 0.0
    %2998 = vst.msk [vmem:[#allocation3 + $0x101] sm:$0x1] %vm2951, 0.0
    %2999 = vst.msk [vmem:[#allocation3 + $0x119] sm:$0x1] %vm2951, 0.0
    %3000 = vst.msk [vmem:[#allocation3 + $0x131] sm:$0x1] %vm2951, 0.0
    %3001 = vst.msk [vmem:[#allocation3 + $0x149] sm:$0x1] %vm2951, 0.0
    %3002 = vst.msk [vmem:[#allocation3 + $0x161] sm:$0x1] %vm2951, 0.0
    %3003 = vst.msk [vmem:[#allocation3 + $0x179] sm:$0x1] %vm2951, 0.0
    %3004 = vst.msk [vmem:[#allocation3 + $0x191] sm:$0x1] %vm2951, 0.0
    %3005 = vst.msk [vmem:[#allocation3 + $0x1a9] sm:$0x1] %vm2951, 0.0
    %3006 = vst.msk [vmem:[#allocation3 + $0x1c1] sm:$0x1] %vm2951, 0.0
    %3007 = vst.msk [vmem:[#allocation3 + $0x1d9] sm:$0x1] %vm2951, 0.0
    %3008 = vst.msk [vmem:[#allocation3 + $0x1f1] sm:$0x1] %vm2951, 0.0
    %3009 = vst.msk [vmem:[#allocation3 + $0x209] sm:$0x1] %vm2951, 0.0
    %3010 = vst.msk [vmem:[#allocation3 + $0x221] sm:$0x1] %vm2951, 0.0
    %3011 = vst.msk [vmem:[#allocation3 + $0x239] sm:$0x1] %vm2951, 0.0
    %3012 = vst.msk [vmem:[#allocation3 + $0x251] sm:$0x1] %vm2951, 0.0
    %3013 = vst.msk [vmem:[#allocation3 + $0x269] sm:$0x1] %vm2951, 0.0
    %3014 = vst.msk [vmem:[#allocation3 + $0x281] sm:$0x1] %vm2951, 0.0
    %3015 = vst.msk [vmem:[#allocation3 + $0x299] sm:$0x1] %vm2951, 0.0
    %3016 = vst.msk [vmem:[#allocation3 + $0x2b1] sm:$0x1] %vm2951, 0.0
    %3017 = vst.msk [vmem:[#allocation3 + $0x2c9] sm:$0x1] %vm2951, 0.0
    %3018 = vst.msk [vmem:[#allocation3 + $0x2e1] sm:$0x1] %vm2951, 0.0
    %3019 = vst.msk [vmem:[#allocation3 + $0x2f9] sm:$0x1] %vm2951, 0.0
    %3020 = vst.msk [vmem:[#allocation3 + $0x311] sm:$0x1] %vm2951, 0.0
    %3021 = vst.msk [vmem:[#allocation3 + $0x329] sm:$0x1] %vm2951, 0.0
    %3022 = vst.msk [vmem:[#allocation3 + $0x341] sm:$0x1] %vm2951, 0.0
    %3023 = vst.msk [vmem:[#allocation3 + $0x359] sm:$0x1] %vm2951, 0.0
    %v3024 = vld [vmem:[#allocation2] ss:$2 sm:$0xff]
    %s3025 = scalar_lea.vmem [#allocation2], 16
    %v3026 = vld [vmem:[%s3025] ss:$2 sm:$0xff]
    %s3027 = scalar_lea.vmem [#allocation2], 32
    %v3028 = vld [vmem:[%s3027] ss:$2 sm:$0xff]
    %s3029 = scalar_lea.vmem [#allocation2], 48
    %v3030 = vld [vmem:[%s3029] ss:$2 sm:$0xff]
    %s3031 = scalar_lea.vmem [#allocation2], 64
    %v3032 = vld [vmem:[%s3031] ss:$2 sm:$0xff]
    %s3033 = scalar_lea.vmem [#allocation2], 80
    %v3034 = vld [vmem:[%s3033] ss:$2 sm:$0xff]
    %s3035 = scalar_lea.vmem [#allocation2], 96
    %v3036 = vld [vmem:[%s3035] ss:$2 sm:$0xff]
    %s3037 = scalar_lea.vmem [#allocation2], 112
    %v3038 = vld [vmem:[%s3037] ss:$2 sm:$0xff]
    %s3039 = scalar_lea.vmem [#allocation2], 128
    %v3040 = vld [vmem:[%s3039] ss:$2 sm:$0xff]
    %s3041 = scalar_lea.vmem [#allocation2], 144
    %v3042 = vld [vmem:[%s3041] ss:$2 sm:$0xff]
    %s3043 = scalar_lea.vmem [#allocation2], 160
    %v3044 = vld [vmem:[%s3043] ss:$2 sm:$0xff]
    %s3045 = scalar_lea.vmem [#allocation2], 176
    %v3046 = vld [vmem:[%s3045] ss:$2 sm:$0xff]
    %s3047 = scalar_lea.vmem [#allocation2], 192
    %v3048 = vld [vmem:[%s3047] ss:$2 sm:$0xff]
    %s3049 = scalar_lea.vmem [#allocation2], 208
    %v3050 = vld [vmem:[%s3049] ss:$2 sm:$0xff]
    %s3051 = scalar_lea.vmem [#allocation2], 224
    %v3052 = vld [vmem:[%s3051] ss:$2 sm:$0xff]
    %s3053 = scalar_lea.vmem [#allocation2], 240
    %v3054 = vld [vmem:[%s3053] ss:$2 sm:$0xff]
    %s3055 = scalar_lea.vmem [#allocation2], 256
    %v3056 = vld [vmem:[%s3055] ss:$2 sm:$0xff]
    %s3057 = scalar_lea.vmem [#allocation2], 272
    %v3058 = vld [vmem:[%s3057] ss:$2 sm:$0xff]
    %s3059 = scalar_lea.vmem [#allocation2], 288
    %v3060 = vld [vmem:[%s3059] ss:$2 sm:$0xff]
    %s3061 = scalar_lea.vmem [#allocation2], 304
    %v3062 = vld [vmem:[%s3061] ss:$2 sm:$0xff]
    %s3063 = scalar_lea.vmem [#allocation2], 320
    %v3064 = vld [vmem:[%s3063] ss:$2 sm:$0xff]
    %s3065 = scalar_lea.vmem [#allocation2], 336
    %v3066 = vld [vmem:[%s3065] ss:$2 sm:$0xff]
    %s3067 = scalar_lea.vmem [#allocation2], 352
    %v3068 = vld [vmem:[%s3067] ss:$2 sm:$0xff]
    %s3069 = scalar_lea.vmem [#allocation2], 368
    %v3070 = vld [vmem:[%s3069] ss:$2 sm:$0xff]
    %s3071 = scalar_lea.vmem [#allocation2], 384
    %v3072 = vld [vmem:[%s3071] ss:$2 sm:$0xff]
    %s3073 = scalar_lea.vmem [#allocation2], 400
    %v3074 = vld [vmem:[%s3073] ss:$2 sm:$0xff]
    %s3075 = scalar_lea.vmem [#allocation2], 416
    %v3076 = vld [vmem:[%s3075] ss:$2 sm:$0xff]
    %s3077 = scalar_lea.vmem [#allocation2], 432
    %v3078 = vld [vmem:[%s3077] ss:$2 sm:$0xff]
    %s3079 = scalar_lea.vmem [#allocation2], 448
    %v3080 = vld [vmem:[%s3079] ss:$2 sm:$0xff]
    %s3081 = scalar_lea.vmem [#allocation2], 464
    %v3082 = vld [vmem:[%s3081] ss:$2 sm:$0xff]
    %s3083 = scalar_lea.vmem [#allocation2], 480
    %v3084 = vld [vmem:[%s3083] ss:$2 sm:$0xff]
    %s3085 = scalar_lea.vmem [#allocation2], 496
    %v3086 = vld [vmem:[%s3085] ss:$2 sm:$0xff]
    %s3087 = scalar_lea.vmem [#allocation2], 512
    %v3088 = vld [vmem:[%s3087] ss:$2 sm:$0xff]
    %s3089 = scalar_lea.vmem [#allocation2], 528
    %v3090 = vld [vmem:[%s3089] ss:$2 sm:$0xff]
    %s3091 = scalar_lea.vmem [#allocation2], 544
    %v3092 = vld [vmem:[%s3091] ss:$2 sm:$0xff]
    %s3093 = scalar_lea.vmem [#allocation2], 560
    %v3094 = vld [vmem:[%s3093] ss:$2 sm:$0xff]
    %s3095 = scalar_lea.vmem [#allocation2], 576
    %v3096 = vld [vmem:[%s3095] ss:$2 sm:$0xff]
    %s3097 = scalar_lea.vmem [#allocation2], 592
    %v3098 = vld [vmem:[%s3097] ss:$2 sm:$0xff]
    %s3099 = scalar_lea.vmem [#allocation2], 608
    %v3100 = vld [vmem:[%s3099] ss:$2 sm:$0xff]
    %s3101 = scalar_lea.vmem [#allocation2], 624
    %v3102 = vld [vmem:[%s3101] ss:$2 sm:$0xff]
    %s3103 = scalar_lea.vmem [#allocation2], 640
    %v3104 = vld [vmem:[%s3103] ss:$2 sm:$0xff]
    %s3105 = scalar_lea.vmem [#allocation2], 656
    %v3106 = vld [vmem:[%s3105] ss:$2 sm:$0xff]
    %s3107 = scalar_lea.vmem [#allocation2], 672
    %v3108 = vld [vmem:[%s3107] ss:$2 sm:$0xff]
    %s3109 = scalar_lea.vmem [#allocation2], 688
    %v3110 = vld [vmem:[%s3109] ss:$2 sm:$0xff]
    %s3111 = scalar_lea.vmem [#allocation2], 704
    %v3112 = vld [vmem:[%s3111] ss:$2 sm:$0xff]
    %s3113 = scalar_lea.vmem [#allocation2], 720
    %v3114 = vld [vmem:[%s3113] ss:$2 sm:$0xff]
    %s3115 = scalar_lea.vmem [#allocation2], 736
    %v3116 = vld [vmem:[%s3115] ss:$2 sm:$0xff]
    %s3117 = scalar_lea.vmem [#allocation2], 752
    %v3118 = vld [vmem:[%s3117] ss:$2 sm:$0xff]
    %s3119 = scalar_lea.vmem [#allocation2], 768
    %v3120 = vld [vmem:[%s3119] ss:$2 sm:$0xff]
    %s3121 = scalar_lea.vmem [#allocation2], 784
    %v3122 = vld [vmem:[%s3121] ss:$2 sm:$0xff]
    %s3123 = scalar_lea.vmem [#allocation2], 800
    %v3124 = vld [vmem:[%s3123] ss:$2 sm:$0xff]
    %s3125 = scalar_lea.vmem [#allocation2], 816
    %v3126 = vld [vmem:[%s3125] ss:$2 sm:$0xff]
    %s3127 = scalar_lea.vmem [#allocation2], 832
    %v3128 = vld [vmem:[%s3127] ss:$2 sm:$0xff]
    %s3129 = scalar_lea.vmem [#allocation2], 848
    %v3130 = vld [vmem:[%s3129] ss:$2 sm:$0xff]
    %s3131 = scalar_lea.vmem [#allocation2], 864
    %v3132 = vld [vmem:[%s3131] ss:$2 sm:$0xff]
    %s3133 = scalar_lea.vmem [#allocation2], 880
    %v3134 = vld [vmem:[%s3133] ss:$2 sm:$0xff]
    %s3135 = scalar_lea.vmem [#allocation2], 896
    %v3136 = vld [vmem:[%s3135] ss:$2 sm:$0xff]
    %s3137 = scalar_lea.vmem [#allocation2], 912
    %v3138 = vld [vmem:[%s3137] ss:$2 sm:$0xff]
    %s3139 = scalar_lea.vmem [#allocation2], 928
    %v3140 = vld [vmem:[%s3139] ss:$2 sm:$0xff]
    %s3141 = scalar_lea.vmem [#allocation2], 944
    %v3142 = vld [vmem:[%s3141] ss:$2 sm:$0xff]
    %s3143 = scalar_lea.vmem [#allocation2], 960
    %v3144 = vld [vmem:[%s3143] ss:$2 sm:$0xff]
    %s3145 = scalar_lea.vmem [#allocation2], 976
    %v3146 = vld [vmem:[%s3145] ss:$2 sm:$0xff]
    %s3147 = scalar_lea.vmem [#allocation2], 992
    %v3148 = vld [vmem:[%s3147] ss:$2 sm:$0xff]
    %s3149 = scalar_lea.vmem [#allocation2], 1008
    %v3150 = vld [vmem:[%s3149] ss:$2 sm:$0xff]
    %s3151 = scalar_lea.vmem [#allocation2], 1024
    %v3152 = vld [vmem:[%s3151] ss:$2 sm:$0xff]
    %s3153 = scalar_lea.vmem [#allocation2], 1040
    %v3154 = vld [vmem:[%s3153] ss:$2 sm:$0xff]
    %s3155 = scalar_lea.vmem [#allocation2], 1056
    %v3156 = vld [vmem:[%s3155] ss:$2 sm:$0xff]
    %s3157 = scalar_lea.vmem [#allocation2], 1072
    %v3158 = vld [vmem:[%s3157] ss:$2 sm:$0xff]
    %s3159 = scalar_lea.vmem [#allocation2], 1088
    %v3160 = vld [vmem:[%s3159] ss:$2 sm:$0xff]
    %s3161 = scalar_lea.vmem [#allocation2], 1104
    %v3162 = vld [vmem:[%s3161] ss:$2 sm:$0xff]
    %s3163 = scalar_lea.vmem [#allocation2], 1120
    %v3164 = vld [vmem:[%s3163] ss:$2 sm:$0xff]
    %s3165 = scalar_lea.vmem [#allocation2], 1136
    %v3166 = vld [vmem:[%s3165] ss:$2 sm:$0xff]
    %s3167 = scalar_lea.vmem [#allocation2], 1152
    %v3168 = vld [vmem:[%s3167] ss:$2 sm:$0xff]
    %s3169 = scalar_lea.vmem [#allocation2], 1168
    %v3170 = vld [vmem:[%s3169] ss:$2 sm:$0xff]
    %s3171 = scalar_lea.vmem [#allocation2], 1184
    %v3172 = vld [vmem:[%s3171] ss:$2 sm:$0xff]
    %s3173 = scalar_lea.vmem [#allocation2], 1200
    %v3174 = vld [vmem:[%s3173] ss:$2 sm:$0xff]
    %s3175 = scalar_lea.vmem [#allocation2], 1216
    %v3176 = vld [vmem:[%s3175] ss:$2 sm:$0xff]
    %s3177 = scalar_lea.vmem [#allocation2], 1232
    %v3178 = vld [vmem:[%s3177] ss:$2 sm:$0xff]
    %s3179 = scalar_lea.vmem [#allocation2], 1248
    %v3180 = vld [vmem:[%s3179] ss:$2 sm:$0xff]
    %s3181 = scalar_lea.vmem [#allocation2], 1264
    %v3182 = vld [vmem:[%s3181] ss:$2 sm:$0xff]
    %s3183 = scalar_lea.vmem [#allocation2], 1280
    %v3184 = vld [vmem:[%s3183] ss:$2 sm:$0xff]
    %s3185 = scalar_lea.vmem [#allocation2], 1296
    %v3186 = vld [vmem:[%s3185] ss:$2 sm:$0xff]
    %s3187 = scalar_lea.vmem [#allocation2], 1312
    %v3188 = vld [vmem:[%s3187] ss:$2 sm:$0xff]
    %s3189 = scalar_lea.vmem [#allocation2], 1328
    %v3190 = vld [vmem:[%s3189] ss:$2 sm:$0xff]
    %s3191 = scalar_lea.vmem [#allocation2], 1344
    %v3192 = vld [vmem:[%s3191] ss:$2 sm:$0xff]
    %s3193 = scalar_lea.vmem [#allocation2], 1360
    %v3194 = vld [vmem:[%s3193] ss:$2 sm:$0xff]
    %s3195 = scalar_lea.vmem [#allocation2], 1376
    %v3196 = vld [vmem:[%s3195] ss:$2 sm:$0xff]
    %s3197 = scalar_lea.vmem [#allocation2], 1392
    %v3198 = vld [vmem:[%s3197] ss:$2 sm:$0xff]
    %s3199 = scalar_lea.vmem [#allocation2], 1408
    %v3200 = vld [vmem:[%s3199] ss:$2 sm:$0xff]
    %s3201 = scalar_lea.vmem [#allocation2], 1424
    %v3202 = vld [vmem:[%s3201] ss:$2 sm:$0xff]
    %s3203 = scalar_lea.vmem [#allocation2], 1440
    %v3204 = vld [vmem:[%s3203] ss:$2 sm:$0xff]
    %s3205 = scalar_lea.vmem [#allocation2], 1456
    %v3206 = vld [vmem:[%s3205] ss:$2 sm:$0xff]
    %s3207 = scalar_lea.vmem [#allocation2], 1472
    %v3208 = vld [vmem:[%s3207] ss:$2 sm:$0xff]
    %s3209 = scalar_lea.vmem [#allocation2], 1488
    %v3210 = vld [vmem:[%s3209] ss:$2 sm:$0xff]
    %s3211 = scalar_lea.vmem [#allocation2], 1504
    %v3212 = vld [vmem:[%s3211] ss:$2 sm:$0xff]
    %s3213 = scalar_lea.vmem [#allocation2], 1520
    %v3214 = vld [vmem:[%s3213] ss:$2 sm:$0xff]
    %s3215 = scalar_lea.vmem [#allocation2], 1536
    %v3216 = vld [vmem:[%s3215] ss:$2 sm:$0xff]
    %s3217 = scalar_lea.vmem [#allocation2], 1552
    %v3218 = vld [vmem:[%s3217] ss:$2 sm:$0xff]
    %s3219 = scalar_lea.vmem [#allocation2], 1568
    %v3220 = vld [vmem:[%s3219] ss:$2 sm:$0xff]
    %s3221 = scalar_lea.vmem [#allocation2], 1584
    %v3222 = vld [vmem:[%s3221] ss:$2 sm:$0xff]
    %s3223 = scalar_lea.vmem [#allocation2], 1600
    %v3224 = vld [vmem:[%s3223] ss:$2 sm:$0xff]
    %s3225 = scalar_lea.vmem [#allocation2], 1616
    %v3226 = vld [vmem:[%s3225] ss:$2 sm:$0xff]
    %s3227 = scalar_lea.vmem [#allocation2], 1632
    %v3228 = vld [vmem:[%s3227] ss:$2 sm:$0xff]
    %s3229 = scalar_lea.vmem [#allocation2], 1648
    %v3230 = vld [vmem:[%s3229] ss:$2 sm:$0xff]
    %s3231 = scalar_lea.vmem [#allocation2], 1664
    %v3232 = vld [vmem:[%s3231] ss:$2 sm:$0xff]
    %s3233 = scalar_lea.vmem [#allocation2], 1680
    %v3234 = vld [vmem:[%s3233] ss:$2 sm:$0xff]
    %s3235 = scalar_lea.vmem [#allocation2], 1696
    %v3236 = vld [vmem:[%s3235] ss:$2 sm:$0xff]
    %s3237 = scalar_lea.vmem [#allocation2], 1712
    %v3238 = vld [vmem:[%s3237] ss:$2 sm:$0xff]
    %s3239 = scalar_lea.vmem [#allocation2], 1728
    %v3240 = vld [vmem:[%s3239] ss:$2 sm:$0xff]
    %s3241 = scalar_lea.vmem [#allocation2], 1744
    %v3242 = vld [vmem:[%s3241] ss:$2 sm:$0xff]
    %s3243 = scalar_lea.vmem [#allocation2], 1760
    %v3244 = vld [vmem:[%s3243] ss:$2 sm:$0xff]
    %s3245 = scalar_lea.vmem [#allocation2], 1776
    %v3246 = vld [vmem:[%s3245] ss:$2 sm:$0xff]
    %s3247 = scalar_lea.vmem [#allocation2], 1792
    %v3248 = vld [vmem:[%s3247] ss:$2 sm:$0xff]
    %s3249 = scalar_lea.vmem [#allocation2], 1808
    %v3250 = vld [vmem:[%s3249] ss:$2 sm:$0xff]
    %s3251 = scalar_lea.vmem [#allocation2], 1824
    %v3252 = vld [vmem:[%s3251] ss:$2 sm:$0xff]
    %s3253 = scalar_lea.vmem [#allocation2], 1840
    %v3254 = vld [vmem:[%s3253] ss:$2 sm:$0xff]
    %s3255 = scalar_lea.vmem [#allocation2], 1856
    %v3256 = vld [vmem:[%s3255] ss:$2 sm:$0xff]
    %s3257 = scalar_lea.vmem [#allocation2], 1872
    %v3258 = vld [vmem:[%s3257] ss:$2 sm:$0xff]
    %s3259 = scalar_lea.vmem [#allocation2], 1888
    %v3260 = vld [vmem:[%s3259] ss:$2 sm:$0xff]
    %s3261 = scalar_lea.vmem [#allocation2], 1904
    %v3262 = vld [vmem:[%s3261] ss:$2 sm:$0xff]
    %s3263 = scalar_lea.vmem [#allocation2], 1920
    %v3264 = vld [vmem:[%s3263] ss:$2 sm:$0xff]
    %s3265 = scalar_lea.vmem [#allocation2], 1936
    %v3266 = vld [vmem:[%s3265] ss:$2 sm:$0xff]
    %s3267 = scalar_lea.vmem [#allocation2], 1952
    %v3268 = vld [vmem:[%s3267] ss:$2 sm:$0xff]
    %s3269 = scalar_lea.vmem [#allocation2], 1968
    %v3270 = vld [vmem:[%s3269] ss:$2 sm:$0xff]
    %s3271 = scalar_lea.vmem [#allocation2], 1984
    %v3272 = vld [vmem:[%s3271] ss:$2 sm:$0xff]
    %s3273 = scalar_lea.vmem [#allocation2], 2000
    %v3274 = vld [vmem:[%s3273] ss:$2 sm:$0xff]
    %s3275 = scalar_lea.vmem [#allocation2], 2016
    %v3276 = vld [vmem:[%s3275] ss:$2 sm:$0xff]
    %s3277 = scalar_lea.vmem [#allocation2], 2032
    %v3278 = vld [vmem:[%s3277] ss:$2 sm:$0xff]
    %s3279 = scalar_lea.vmem [#allocation2], 1
    %v3280 = vld [vmem:[%s3279] ss:$2 sm:$0xff]
    %s3281 = scalar_lea.vmem [#allocation2], 17
    %v3282 = vld [vmem:[%s3281] ss:$2 sm:$0xff]
    %s3283 = scalar_lea.vmem [#allocation2], 33
    %v3284 = vld [vmem:[%s3283] ss:$2 sm:$0xff]
    %s3285 = scalar_lea.vmem [#allocation2], 49
    %v3286 = vld [vmem:[%s3285] ss:$2 sm:$0xff]
    %s3287 = scalar_lea.vmem [#allocation2], 65
    %v3288 = vld [vmem:[%s3287] ss:$2 sm:$0xff]
    %s3289 = scalar_lea.vmem [#allocation2], 81
    %v3290 = vld [vmem:[%s3289] ss:$2 sm:$0xff]
    %s3291 = scalar_lea.vmem [#allocation2], 97
    %v3292 = vld [vmem:[%s3291] ss:$2 sm:$0xff]
    %s3293 = scalar_lea.vmem [#allocation2], 113
    %v3294 = vld [vmem:[%s3293] ss:$2 sm:$0xff]
    %s3295 = scalar_lea.vmem [#allocation2], 129
    %v3296 = vld [vmem:[%s3295] ss:$2 sm:$0xff]
    %s3297 = scalar_lea.vmem [#allocation2], 145
    %v3298 = vld [vmem:[%s3297] ss:$2 sm:$0xff]
    %s3299 = scalar_lea.vmem [#allocation2], 161
    %v3300 = vld [vmem:[%s3299] ss:$2 sm:$0xff]
    %s3301 = scalar_lea.vmem [#allocation2], 177
    %v3302 = vld [vmem:[%s3301] ss:$2 sm:$0xff]
    %s3303 = scalar_lea.vmem [#allocation2], 193
    %v3304 = vld [vmem:[%s3303] ss:$2 sm:$0xff]
    %s3305 = scalar_lea.vmem [#allocation2], 209
    %v3306 = vld [vmem:[%s3305] ss:$2 sm:$0xff]
    %s3307 = scalar_lea.vmem [#allocation2], 225
    %v3308 = vld [vmem:[%s3307] ss:$2 sm:$0xff]
    %s3309 = scalar_lea.vmem [#allocation2], 241
    %v3310 = vld [vmem:[%s3309] ss:$2 sm:$0xff]
    %s3311 = scalar_lea.vmem [#allocation2], 257
    %v3312 = vld [vmem:[%s3311] ss:$2 sm:$0xff]
    %s3313 = scalar_lea.vmem [#allocation2], 273
    %v3314 = vld [vmem:[%s3313] ss:$2 sm:$0xff]
    %s3315 = scalar_lea.vmem [#allocation2], 289
    %v3316 = vld [vmem:[%s3315] ss:$2 sm:$0xff]
    %s3317 = scalar_lea.vmem [#allocation2], 305
    %v3318 = vld [vmem:[%s3317] ss:$2 sm:$0xff]
    %s3319 = scalar_lea.vmem [#allocation2], 321
    %v3320 = vld [vmem:[%s3319] ss:$2 sm:$0xff]
    %s3321 = scalar_lea.vmem [#allocation2], 337
    %v3322 = vld [vmem:[%s3321] ss:$2 sm:$0xff]
    %s3323 = scalar_lea.vmem [#allocation2], 353
    %v3324 = vld [vmem:[%s3323] ss:$2 sm:$0xff]
    %s3325 = scalar_lea.vmem [#allocation2], 369
    %v3326 = vld [vmem:[%s3325] ss:$2 sm:$0xff]
    %s3327 = scalar_lea.vmem [#allocation2], 385
    %v3328 = vld [vmem:[%s3327] ss:$2 sm:$0xff]
    %s3329 = scalar_lea.vmem [#allocation2], 401
    %v3330 = vld [vmem:[%s3329] ss:$2 sm:$0xff]
    %s3331 = scalar_lea.vmem [#allocation2], 417
    %v3332 = vld [vmem:[%s3331] ss:$2 sm:$0xff]
    %s3333 = scalar_lea.vmem [#allocation2], 433
    %v3334 = vld [vmem:[%s3333] ss:$2 sm:$0xff]
    %s3335 = scalar_lea.vmem [#allocation2], 449
    %v3336 = vld [vmem:[%s3335] ss:$2 sm:$0xff]
    %s3337 = scalar_lea.vmem [#allocation2], 465
    %v3338 = vld [vmem:[%s3337] ss:$2 sm:$0xff]
    %s3339 = scalar_lea.vmem [#allocation2], 481
    %v3340 = vld [vmem:[%s3339] ss:$2 sm:$0xff]
    %s3341 = scalar_lea.vmem [#allocation2], 497
    %v3342 = vld [vmem:[%s3341] ss:$2 sm:$0xff]
    %s3343 = scalar_lea.vmem [#allocation2], 513
    %v3344 = vld [vmem:[%s3343] ss:$2 sm:$0xff]
    %s3345 = scalar_lea.vmem [#allocation2], 529
    %v3346 = vld [vmem:[%s3345] ss:$2 sm:$0xff]
    %s3347 = scalar_lea.vmem [#allocation2], 545
    %v3348 = vld [vmem:[%s3347] ss:$2 sm:$0xff]
    %s3349 = scalar_lea.vmem [#allocation2], 561
    %v3350 = vld [vmem:[%s3349] ss:$2 sm:$0xff]
    %s3351 = scalar_lea.vmem [#allocation2], 577
    %v3352 = vld [vmem:[%s3351] ss:$2 sm:$0xff]
    %s3353 = scalar_lea.vmem [#allocation2], 593
    %v3354 = vld [vmem:[%s3353] ss:$2 sm:$0xff]
    %s3355 = scalar_lea.vmem [#allocation2], 609
    %v3356 = vld [vmem:[%s3355] ss:$2 sm:$0xff]
    %s3357 = scalar_lea.vmem [#allocation2], 625
    %v3358 = vld [vmem:[%s3357] ss:$2 sm:$0xff]
    %s3359 = scalar_lea.vmem [#allocation2], 641
    %v3360 = vld [vmem:[%s3359] ss:$2 sm:$0xff]
    %s3361 = scalar_lea.vmem [#allocation2], 657
    %v3362 = vld [vmem:[%s3361] ss:$2 sm:$0xff]
    %s3363 = scalar_lea.vmem [#allocation2], 673
    %v3364 = vld [vmem:[%s3363] ss:$2 sm:$0xff]
    %s3365 = scalar_lea.vmem [#allocation2], 689
    %v3366 = vld [vmem:[%s3365] ss:$2 sm:$0xff]
    %s3367 = scalar_lea.vmem [#allocation2], 705
    %v3368 = vld [vmem:[%s3367] ss:$2 sm:$0xff]
    %s3369 = scalar_lea.vmem [#allocation2], 721
    %v3370 = vld [vmem:[%s3369] ss:$2 sm:$0xff]
    %s3371 = scalar_lea.vmem [#allocation2], 737
    %v3372 = vld [vmem:[%s3371] ss:$2 sm:$0xff]
    %s3373 = scalar_lea.vmem [#allocation2], 753
    %v3374 = vld [vmem:[%s3373] ss:$2 sm:$0xff]
    %s3375 = scalar_lea.vmem [#allocation2], 769
    %v3376 = vld [vmem:[%s3375] ss:$2 sm:$0xff]
    %s3377 = scalar_lea.vmem [#allocation2], 785
    %v3378 = vld [vmem:[%s3377] ss:$2 sm:$0xff]
    %s3379 = scalar_lea.vmem [#allocation2], 801
    %v3380 = vld [vmem:[%s3379] ss:$2 sm:$0xff]
    %s3381 = scalar_lea.vmem [#allocation2], 817
    %v3382 = vld [vmem:[%s3381] ss:$2 sm:$0xff]
    %s3383 = scalar_lea.vmem [#allocation2], 833
    %v3384 = vld [vmem:[%s3383] ss:$2 sm:$0xff]
    %s3385 = scalar_lea.vmem [#allocation2], 849
    %v3386 = vld [vmem:[%s3385] ss:$2 sm:$0xff]
    %s3387 = scalar_lea.vmem [#allocation2], 865
    %v3388 = vld [vmem:[%s3387] ss:$2 sm:$0xff]
    %s3389 = scalar_lea.vmem [#allocation2], 881
    %v3390 = vld [vmem:[%s3389] ss:$2 sm:$0xff]
    %s3391 = scalar_lea.vmem [#allocation2], 897
    %v3392 = vld [vmem:[%s3391] ss:$2 sm:$0xff]
    %s3393 = scalar_lea.vmem [#allocation2], 913
    %v3394 = vld [vmem:[%s3393] ss:$2 sm:$0xff]
    %s3395 = scalar_lea.vmem [#allocation2], 929
    %v3396 = vld [vmem:[%s3395] ss:$2 sm:$0xff]
    %s3397 = scalar_lea.vmem [#allocation2], 945
    %v3398 = vld [vmem:[%s3397] ss:$2 sm:$0xff]
    %s3399 = scalar_lea.vmem [#allocation2], 961
    %v3400 = vld [vmem:[%s3399] ss:$2 sm:$0xff]
    %s3401 = scalar_lea.vmem [#allocation2], 977
    %v3402 = vld [vmem:[%s3401] ss:$2 sm:$0xff]
    %s3403 = scalar_lea.vmem [#allocation2], 993
    %v3404 = vld [vmem:[%s3403] ss:$2 sm:$0xff]
    %s3405 = scalar_lea.vmem [#allocation2], 1009
    %v3406 = vld [vmem:[%s3405] ss:$2 sm:$0xff]
    %s3407 = scalar_lea.vmem [#allocation2], 1025
    %v3408 = vld [vmem:[%s3407] ss:$2 sm:$0xff]
    %s3409 = scalar_lea.vmem [#allocation2], 1041
    %v3410 = vld [vmem:[%s3409] ss:$2 sm:$0xff]
    %s3411 = scalar_lea.vmem [#allocation2], 1057
    %v3412 = vld [vmem:[%s3411] ss:$2 sm:$0xff]
    %s3413 = scalar_lea.vmem [#allocation2], 1073
    %v3414 = vld [vmem:[%s3413] ss:$2 sm:$0xff]
    %s3415 = scalar_lea.vmem [#allocation2], 1089
    %v3416 = vld [vmem:[%s3415] ss:$2 sm:$0xff]
    %s3417 = scalar_lea.vmem [#allocation2], 1105
    %v3418 = vld [vmem:[%s3417] ss:$2 sm:$0xff]
    %s3419 = scalar_lea.vmem [#allocation2], 1121
    %v3420 = vld [vmem:[%s3419] ss:$2 sm:$0xff]
    %s3421 = scalar_lea.vmem [#allocation2], 1137
    %v3422 = vld [vmem:[%s3421] ss:$2 sm:$0xff]
    %s3423 = scalar_lea.vmem [#allocation2], 1153
    %v3424 = vld [vmem:[%s3423] ss:$2 sm:$0xff]
    %s3425 = scalar_lea.vmem [#allocation2], 1169
    %v3426 = vld [vmem:[%s3425] ss:$2 sm:$0xff]
    %s3427 = scalar_lea.vmem [#allocation2], 1185
    %v3428 = vld [vmem:[%s3427] ss:$2 sm:$0xff]
    %s3429 = scalar_lea.vmem [#allocation2], 1201
    %v3430 = vld [vmem:[%s3429] ss:$2 sm:$0xff]
    %s3431 = scalar_lea.vmem [#allocation2], 1217
    %v3432 = vld [vmem:[%s3431] ss:$2 sm:$0xff]
    %s3433 = scalar_lea.vmem [#allocation2], 1233
    %v3434 = vld [vmem:[%s3433] ss:$2 sm:$0xff]
    %s3435 = scalar_lea.vmem [#allocation2], 1249
    %v3436 = vld [vmem:[%s3435] ss:$2 sm:$0xff]
    %s3437 = scalar_lea.vmem [#allocation2], 1265
    %v3438 = vld [vmem:[%s3437] ss:$2 sm:$0xff]
    %s3439 = scalar_lea.vmem [#allocation2], 1281
    %v3440 = vld [vmem:[%s3439] ss:$2 sm:$0xff]
    %s3441 = scalar_lea.vmem [#allocation2], 1297
    %v3442 = vld [vmem:[%s3441] ss:$2 sm:$0xff]
    %s3443 = scalar_lea.vmem [#allocation2], 1313
    %v3444 = vld [vmem:[%s3443] ss:$2 sm:$0xff]
    %s3445 = scalar_lea.vmem [#allocation2], 1329
    %v3446 = vld [vmem:[%s3445] ss:$2 sm:$0xff]
    %s3447 = scalar_lea.vmem [#allocation2], 1345
    %v3448 = vld [vmem:[%s3447] ss:$2 sm:$0xff]
    %s3449 = scalar_lea.vmem [#allocation2], 1361
    %v3450 = vld [vmem:[%s3449] ss:$2 sm:$0xff]
    %s3451 = scalar_lea.vmem [#allocation2], 1377
    %v3452 = vld [vmem:[%s3451] ss:$2 sm:$0xff]
    %s3453 = scalar_lea.vmem [#allocation2], 1393
    %v3454 = vld [vmem:[%s3453] ss:$2 sm:$0xff]
    %s3455 = scalar_lea.vmem [#allocation2], 1409
    %v3456 = vld [vmem:[%s3455] ss:$2 sm:$0xff]
    %s3457 = scalar_lea.vmem [#allocation2], 1425
    %v3458 = vld [vmem:[%s3457] ss:$2 sm:$0xff]
    %s3459 = scalar_lea.vmem [#allocation2], 1441
    %v3460 = vld [vmem:[%s3459] ss:$2 sm:$0xff]
    %s3461 = scalar_lea.vmem [#allocation2], 1457
    %v3462 = vld [vmem:[%s3461] ss:$2 sm:$0xff]
    %s3463 = scalar_lea.vmem [#allocation2], 1473
    %v3464 = vld [vmem:[%s3463] ss:$2 sm:$0xff]
    %s3465 = scalar_lea.vmem [#allocation2], 1489
    %v3466 = vld [vmem:[%s3465] ss:$2 sm:$0xff]
    %s3467 = scalar_lea.vmem [#allocation2], 1505
    %v3468 = vld [vmem:[%s3467] ss:$2 sm:$0xff]
    %s3469 = scalar_lea.vmem [#allocation2], 1521
    %v3470 = vld [vmem:[%s3469] ss:$2 sm:$0xff]
    %s3471 = scalar_lea.vmem [#allocation2], 1537
    %v3472 = vld [vmem:[%s3471] ss:$2 sm:$0xff]
    %s3473 = scalar_lea.vmem [#allocation2], 1553
    %v3474 = vld [vmem:[%s3473] ss:$2 sm:$0xff]
    %s3475 = scalar_lea.vmem [#allocation2], 1569
    %v3476 = vld [vmem:[%s3475] ss:$2 sm:$0xff]
    %s3477 = scalar_lea.vmem [#allocation2], 1585
    %v3478 = vld [vmem:[%s3477] ss:$2 sm:$0xff]
    %s3479 = scalar_lea.vmem [#allocation2], 1601
    %v3480 = vld [vmem:[%s3479] ss:$2 sm:$0xff]
    %s3481 = scalar_lea.vmem [#allocation2], 1617
    %v3482 = vld [vmem:[%s3481] ss:$2 sm:$0xff]
    %s3483 = scalar_lea.vmem [#allocation2], 1633
    %v3484 = vld [vmem:[%s3483] ss:$2 sm:$0xff]
    %s3485 = scalar_lea.vmem [#allocation2], 1649
    %v3486 = vld [vmem:[%s3485] ss:$2 sm:$0xff]
    %s3487 = scalar_lea.vmem [#allocation2], 1665
    %v3488 = vld [vmem:[%s3487] ss:$2 sm:$0xff]
    %s3489 = scalar_lea.vmem [#allocation2], 1681
    %v3490 = vld [vmem:[%s3489] ss:$2 sm:$0xff]
    %s3491 = scalar_lea.vmem [#allocation2], 1697
    %v3492 = vld [vmem:[%s3491] ss:$2 sm:$0xff]
    %s3493 = scalar_lea.vmem [#allocation2], 1713
    %v3494 = vld [vmem:[%s3493] ss:$2 sm:$0xff]
    %s3495 = scalar_lea.vmem [#allocation2], 1729
    %v3496 = vld [vmem:[%s3495] ss:$2 sm:$0xff]
    %s3497 = scalar_lea.vmem [#allocation2], 1745
    %v3498 = vld [vmem:[%s3497] ss:$2 sm:$0xff]
    %s3499 = scalar_lea.vmem [#allocation2], 1761
    %v3500 = vld [vmem:[%s3499] ss:$2 sm:$0xff]
    %s3501 = scalar_lea.vmem [#allocation2], 1777
    %v3502 = vld [vmem:[%s3501] ss:$2 sm:$0xff]
    %s3503 = scalar_lea.vmem [#allocation2], 1793
    %v3504 = vld [vmem:[%s3503] ss:$2 sm:$0xff]
    %s3505 = scalar_lea.vmem [#allocation2], 1809
    %v3506 = vld [vmem:[%s3505] ss:$2 sm:$0xff]
    %s3507 = scalar_lea.vmem [#allocation2], 1825
    %v3508 = vld [vmem:[%s3507] ss:$2 sm:$0xff]
    %s3509 = scalar_lea.vmem [#allocation2], 1841
    %v3510 = vld [vmem:[%s3509] ss:$2 sm:$0xff]
    %s3511 = scalar_lea.vmem [#allocation2], 1857
    %v3512 = vld [vmem:[%s3511] ss:$2 sm:$0xff]
    %s3513 = scalar_lea.vmem [#allocation2], 1873
    %v3514 = vld [vmem:[%s3513] ss:$2 sm:$0xff]
    %s3515 = scalar_lea.vmem [#allocation2], 1889
    %v3516 = vld [vmem:[%s3515] ss:$2 sm:$0xff]
    %s3517 = scalar_lea.vmem [#allocation2], 1905
    %v3518 = vld [vmem:[%s3517] ss:$2 sm:$0xff]
    %s3519 = scalar_lea.vmem [#allocation2], 1921
    %v3520 = vld [vmem:[%s3519] ss:$2 sm:$0xff]
    %s3521 = scalar_lea.vmem [#allocation2], 1937
    %v3522 = vld [vmem:[%s3521] ss:$2 sm:$0xff]
    %s3523 = scalar_lea.vmem [#allocation2], 1953
    %v3524 = vld [vmem:[%s3523] ss:$2 sm:$0xff]
    %s3525 = scalar_lea.vmem [#allocation2], 1969
    %v3526 = vld [vmem:[%s3525] ss:$2 sm:$0xff]
    %s3527 = scalar_lea.vmem [#allocation2], 1985
    %v3528 = vld [vmem:[%s3527] ss:$2 sm:$0xff]
    %s3529 = scalar_lea.vmem [#allocation2], 2001
    %v3530 = vld [vmem:[%s3529] ss:$2 sm:$0xff]
    %s3531 = scalar_lea.vmem [#allocation2], 2017
    %v3532 = vld [vmem:[%s3531] ss:$2 sm:$0xff]
    %s3533 = scalar_lea.vmem [#allocation2], 2033
    %v3534 = vld [vmem:[%s3533] ss:$2 sm:$0xff]
    %v3535 = vmax.f32 %v3024, %v3280
    %v3536 = vmax.f32 %v3026, %v3282
    %v3537 = vmax.f32 %v3028, %v3284
    %v3538 = vmax.f32 %v3030, %v3286
    %v3539 = vmax.f32 %v3032, %v3288
    %v3540 = vmax.f32 %v3034, %v3290
    %v3541 = vmax.f32 %v3036, %v3292
    %v3542 = vmax.f32 %v3038, %v3294
    %v3543 = vmax.f32 %v3040, %v3296
    %v3544 = vmax.f32 %v3042, %v3298
    %v3545 = vmax.f32 %v3044, %v3300
    %v3546 = vmax.f32 %v3046, %v3302
    %v3547 = vmax.f32 %v3048, %v3304
    %v3548 = vmax.f32 %v3050, %v3306
    %v3549 = vmax.f32 %v3052, %v3308
    %v3550 = vmax.f32 %v3054, %v3310
    %v3551 = vmax.f32 %v3056, %v3312
    %v3552 = vmax.f32 %v3058, %v3314
    %v3553 = vmax.f32 %v3060, %v3316
    %v3554 = vmax.f32 %v3062, %v3318
    %v3555 = vmax.f32 %v3064, %v3320
    %v3556 = vmax.f32 %v3066, %v3322
    %v3557 = vmax.f32 %v3068, %v3324
    %v3558 = vmax.f32 %v3070, %v3326
    %v3559 = vmax.f32 %v3072, %v3328
    %v3560 = vmax.f32 %v3074, %v3330
    %v3561 = vmax.f32 %v3076, %v3332
    %v3562 = vmax.f32 %v3078, %v3334
    %v3563 = vmax.f32 %v3080, %v3336
    %v3564 = vmax.f32 %v3082, %v3338
    %v3565 = vmax.f32 %v3084, %v3340
    %v3566 = vmax.f32 %v3086, %v3342
    %v3567 = vmax.f32 %v3088, %v3344
    %v3568 = vmax.f32 %v3090, %v3346
    %v3569 = vmax.f32 %v3092, %v3348
    %v3570 = vmax.f32 %v3094, %v3350
    %v3571 = vmax.f32 %v3096, %v3352
    %v3572 = vmax.f32 %v3098, %v3354
    %v3573 = vmax.f32 %v3100, %v3356
    %v3574 = vmax.f32 %v3102, %v3358
    %v3575 = vmax.f32 %v3104, %v3360
    %v3576 = vmax.f32 %v3106, %v3362
    %v3577 = vmax.f32 %v3108, %v3364
    %v3578 = vmax.f32 %v3110, %v3366
    %v3579 = vmax.f32 %v3112, %v3368
    %v3580 = vmax.f32 %v3114, %v3370
    %v3581 = vmax.f32 %v3116, %v3372
    %v3582 = vmax.f32 %v3118, %v3374
    %v3583 = vmax.f32 %v3120, %v3376
    %v3584 = vmax.f32 %v3122, %v3378
    %v3585 = vmax.f32 %v3124, %v3380
    %v3586 = vmax.f32 %v3126, %v3382
    %v3587 = vmax.f32 %v3128, %v3384
    %v3588 = vmax.f32 %v3130, %v3386
    %v3589 = vmax.f32 %v3132, %v3388
    %v3590 = vmax.f32 %v3134, %v3390
    %v3591 = vmax.f32 %v3136, %v3392
    %v3592 = vmax.f32 %v3138, %v3394
    %v3593 = vmax.f32 %v3140, %v3396
    %v3594 = vmax.f32 %v3142, %v3398
    %v3595 = vmax.f32 %v3144, %v3400
    %v3596 = vmax.f32 %v3146, %v3402
    %v3597 = vmax.f32 %v3148, %v3404
    %v3598 = vmax.f32 %v3150, %v3406
    %v3599 = vmax.f32 %v3152, %v3408
    %v3600 = vmax.f32 %v3154, %v3410
    %v3601 = vmax.f32 %v3156, %v3412
    %v3602 = vmax.f32 %v3158, %v3414
    %v3603 = vmax.f32 %v3160, %v3416
    %v3604 = vmax.f32 %v3162, %v3418
    %v3605 = vmax.f32 %v3164, %v3420
    %v3606 = vmax.f32 %v3166, %v3422
    %v3607 = vmax.f32 %v3168, %v3424
    %v3608 = vmax.f32 %v3170, %v3426
    %v3609 = vmax.f32 %v3172, %v3428
    %v3610 = vmax.f32 %v3174, %v3430
    %v3611 = vmax.f32 %v3176, %v3432
    %v3612 = vmax.f32 %v3178, %v3434
    %v3613 = vmax.f32 %v3180, %v3436
    %v3614 = vmax.f32 %v3182, %v3438
    %v3615 = vmax.f32 %v3184, %v3440
    %v3616 = vmax.f32 %v3186, %v3442
    %v3617 = vmax.f32 %v3188, %v3444
    %v3618 = vmax.f32 %v3190, %v3446
    %v3619 = vmax.f32 %v3192, %v3448
    %v3620 = vmax.f32 %v3194, %v3450
    %v3621 = vmax.f32 %v3196, %v3452
    %v3622 = vmax.f32 %v3198, %v3454
    %v3623 = vmax.f32 %v3200, %v3456
    %v3624 = vmax.f32 %v3202, %v3458
    %v3625 = vmax.f32 %v3204, %v3460
    %v3626 = vmax.f32 %v3206, %v3462
    %v3627 = vmax.f32 %v3208, %v3464
    %v3628 = vmax.f32 %v3210, %v3466
    %v3629 = vmax.f32 %v3212, %v3468
    %v3630 = vmax.f32 %v3214, %v3470
    %v3631 = vmax.f32 %v3216, %v3472
    %v3632 = vmax.f32 %v3218, %v3474
    %v3633 = vmax.f32 %v3220, %v3476
    %v3634 = vmax.f32 %v3222, %v3478
    %v3635 = vmax.f32 %v3224, %v3480
    %v3636 = vmax.f32 %v3226, %v3482
    %v3637 = vmax.f32 %v3228, %v3484
    %v3638 = vmax.f32 %v3230, %v3486
    %v3639 = vmax.f32 %v3232, %v3488
    %v3640 = vmax.f32 %v3234, %v3490
    %v3641 = vmax.f32 %v3236, %v3492
    %v3642 = vmax.f32 %v3238, %v3494
    %v3643 = vmax.f32 %v3240, %v3496
    %v3644 = vmax.f32 %v3242, %v3498
    %v3645 = vmax.f32 %v3244, %v3500
    %v3646 = vmax.f32 %v3246, %v3502
    %v3647 = vmax.f32 %v3248, %v3504
    %v3648 = vmax.f32 %v3250, %v3506
    %v3649 = vmax.f32 %v3252, %v3508
    %v3650 = vmax.f32 %v3254, %v3510
    %v3651 = vmax.f32 %v3256, %v3512
    %v3652 = vmax.f32 %v3258, %v3514
    %v3653 = vmax.f32 %v3260, %v3516
    %v3654 = vmax.f32 %v3262, %v3518
    %v3655 = vmax.f32 %v3264, %v3520
    %v3656 = vmax.f32 %v3266, %v3522
    %v3657 = vmax.f32 %v3268, %v3524
    %v3658 = vmax.f32 %v3270, %v3526
    %v3659 = vmax.f32 %v3272, %v3528
    %v3660 = vmax.f32 %v3274, %v3530
    %v3661 = vmax.f32 %v3276, %v3532
    %v3662 = vmax.f32 %v3278, %v3534
    %v3663 = vsel %vm2680, %v3535, -inf
    %v3664 = vsel %vm2680, %v3537, -inf
    %v3665 = vmax.f32 %v3663, %v3664
    %v3666 = vsel %vm2680, %v3536, -inf
    %v3667 = vsel %vm2680, %v3538, -inf
    %v3668 = vmax.f32 %v3666, %v3667
    %v3669 = vsel %vm2680, %v3539, -inf
    %v3670 = vsel %vm2680, %v3541, -inf
    %v3671 = vmax.f32 %v3669, %v3670
    %v3672 = vsel %vm2680, %v3540, -inf
    %v3673 = vsel %vm2680, %v3542, -inf
    %v3674 = vmax.f32 %v3672, %v3673
    %v3675 = vsel %vm2680, %v3543, -inf
    %v3676 = vsel %vm2680, %v3545, -inf
    %v3677 = vmax.f32 %v3675, %v3676
    %v3678 = vsel %vm2680, %v3544, -inf
    %v3679 = vsel %vm2680, %v3546, -inf
    %v3680 = vmax.f32 %v3678, %v3679
    %v3681 = vsel %vm2680, %v3547, -inf
    %v3682 = vsel %vm2680, %v3549, -inf
    %v3683 = vmax.f32 %v3681, %v3682
    %v3684 = vsel %vm2680, %v3548, -inf
    %v3685 = vsel %vm2680, %v3550, -inf
    %v3686 = vmax.f32 %v3684, %v3685
    %v3687 = vsel %vm2680, %v3551, -inf
    %v3688 = vsel %vm2680, %v3553, -inf
    %v3689 = vmax.f32 %v3687, %v3688
    %v3690 = vsel %vm2680, %v3552, -inf
    %v3691 = vsel %vm2680, %v3554, -inf
    %v3692 = vmax.f32 %v3690, %v3691
    %v3693 = vsel %vm2680, %v3555, -inf
    %v3694 = vsel %vm2680, %v3557, -inf
    %v3695 = vmax.f32 %v3693, %v3694
    %v3696 = vsel %vm2680, %v3556, -inf
    %v3697 = vsel %vm2680, %v3558, -inf
    %v3698 = vmax.f32 %v3696, %v3697
    %v3699 = vsel %vm2680, %v3559, -inf
    %v3700 = vsel %vm2680, %v3561, -inf
    %v3701 = vmax.f32 %v3699, %v3700
    %v3702 = vsel %vm2680, %v3560, -inf
    %v3703 = vsel %vm2680, %v3562, -inf
    %v3704 = vmax.f32 %v3702, %v3703
    %v3705 = vsel %vm2680, %v3563, -inf
    %v3706 = vsel %vm2680, %v3565, -inf
    %v3707 = vmax.f32 %v3705, %v3706
    %v3708 = vsel %vm2680, %v3564, -inf
    %v3709 = vsel %vm2680, %v3566, -inf
    %v3710 = vmax.f32 %v3708, %v3709
    %v3711 = vsel %vm2680, %v3567, -inf
    %v3712 = vsel %vm2680, %v3569, -inf
    %v3713 = vmax.f32 %v3711, %v3712
    %v3714 = vsel %vm2680, %v3568, -inf
    %v3715 = vsel %vm2680, %v3570, -inf
    %v3716 = vmax.f32 %v3714, %v3715
    %v3717 = vsel %vm2680, %v3571, -inf
    %v3718 = vsel %vm2680, %v3573, -inf
    %v3719 = vmax.f32 %v3717, %v3718
    %v3720 = vsel %vm2680, %v3572, -inf
    %v3721 = vsel %vm2680, %v3574, -inf
    %v3722 = vmax.f32 %v3720, %v3721
    %v3723 = vsel %vm2680, %v3575, -inf
    %v3724 = vsel %vm2680, %v3577, -inf
    %v3725 = vmax.f32 %v3723, %v3724
    %v3726 = vsel %vm2680, %v3576, -inf
    %v3727 = vsel %vm2680, %v3578, -inf
    %v3728 = vmax.f32 %v3726, %v3727
    %v3729 = vsel %vm2680, %v3579, -inf
    %v3730 = vsel %vm2680, %v3581, -inf
    %v3731 = vmax.f32 %v3729, %v3730
    %v3732 = vsel %vm2680, %v3580, -inf
    %v3733 = vsel %vm2680, %v3582, -inf
    %v3734 = vmax.f32 %v3732, %v3733
    %v3735 = vsel %vm2680, %v3583, -inf
    %v3736 = vsel %vm2680, %v3585, -inf
    %v3737 = vmax.f32 %v3735, %v3736
    %v3738 = vsel %vm2680, %v3584, -inf
    %v3739 = vsel %vm2680, %v3586, -inf
    %v3740 = vmax.f32 %v3738, %v3739
    %v3741 = vsel %vm2680, %v3587, -inf
    %v3742 = vsel %vm2680, %v3589, -inf
    %v3743 = vmax.f32 %v3741, %v3742
    %v3744 = vsel %vm2680, %v3588, -inf
    %v3745 = vsel %vm2680, %v3590, -inf
    %v3746 = vmax.f32 %v3744, %v3745
    %v3747 = vsel %vm2680, %v3591, -inf
    %v3748 = vsel %vm2680, %v3593, -inf
    %v3749 = vmax.f32 %v3747, %v3748
    %v3750 = vsel %vm2680, %v3592, -inf
    %v3751 = vsel %vm2680, %v3594, -inf
    %v3752 = vmax.f32 %v3750, %v3751
    %v3753 = vsel %vm2680, %v3595, -inf
    %v3754 = vsel %vm2680, %v3597, -inf
    %v3755 = vmax.f32 %v3753, %v3754
    %v3756 = vsel %vm2680, %v3596, -inf
    %v3757 = vsel %vm2680, %v3598, -inf
    %v3758 = vmax.f32 %v3756, %v3757
    %v3759 = vsel %vm2680, %v3599, -inf
    %v3760 = vsel %vm2680, %v3601, -inf
    %v3761 = vmax.f32 %v3759, %v3760
    %v3762 = vsel %vm2680, %v3600, -inf
    %v3763 = vsel %vm2680, %v3602, -inf
    %v3764 = vmax.f32 %v3762, %v3763
    %v3765 = vsel %vm2680, %v3603, -inf
    %v3766 = vsel %vm2680, %v3605, -inf
    %v3767 = vmax.f32 %v3765, %v3766
    %v3768 = vsel %vm2680, %v3604, -inf
    %v3769 = vsel %vm2680, %v3606, -inf
    %v3770 = vmax.f32 %v3768, %v3769
    %v3771 = vsel %vm2680, %v3607, -inf
    %v3772 = vsel %vm2680, %v3609, -inf
    %v3773 = vmax.f32 %v3771, %v3772
    %v3774 = vsel %vm2680, %v3608, -inf
    %v3775 = vsel %vm2680, %v3610, -inf
    %v3776 = vmax.f32 %v3774, %v3775
    %v3777 = vsel %vm2680, %v3611, -inf
    %v3778 = vsel %vm2680, %v3613, -inf
    %v3779 = vmax.f32 %v3777, %v3778
    %v3780 = vsel %vm2680, %v3612, -inf
    %v3781 = vsel %vm2680, %v3614, -inf
    %v3782 = vmax.f32 %v3780, %v3781
    %v3783 = vsel %vm2680, %v3615, -inf
    %v3784 = vsel %vm2680, %v3617, -inf
    %v3785 = vmax.f32 %v3783, %v3784
    %v3786 = vsel %vm2680, %v3616, -inf
    %v3787 = vsel %vm2680, %v3618, -inf
    %v3788 = vmax.f32 %v3786, %v3787
    %v3789 = vsel %vm2680, %v3619, -inf
    %v3790 = vsel %vm2680, %v3621, -inf
    %v3791 = vmax.f32 %v3789, %v3790
    %v3792 = vsel %vm2680, %v3620, -inf
    %v3793 = vsel %vm2680, %v3622, -inf
    %v3794 = vmax.f32 %v3792, %v3793
    %v3795 = vsel %vm2680, %v3623, -inf
    %v3796 = vsel %vm2680, %v3625, -inf
    %v3797 = vmax.f32 %v3795, %v3796
    %v3798 = vsel %vm2680, %v3624, -inf
    %v3799 = vsel %vm2680, %v3626, -inf
    %v3800 = vmax.f32 %v3798, %v3799
    %v3801 = vsel %vm2680, %v3627, -inf
    %v3802 = vsel %vm2680, %v3629, -inf
    %v3803 = vmax.f32 %v3801, %v3802
    %v3804 = vsel %vm2680, %v3628, -inf
    %v3805 = vsel %vm2680, %v3630, -inf
    %v3806 = vmax.f32 %v3804, %v3805
    %v3807 = vsel %vm2680, %v3631, -inf
    %v3808 = vsel %vm2680, %v3633, -inf
    %v3809 = vmax.f32 %v3807, %v3808
    %v3810 = vsel %vm2680, %v3632, -inf
    %v3811 = vsel %vm2680, %v3634, -inf
    %v3812 = vmax.f32 %v3810, %v3811
    %v3813 = vsel %vm2680, %v3635, -inf
    %v3814 = vsel %vm2680, %v3637, -inf
    %v3815 = vmax.f32 %v3813, %v3814
    %v3816 = vsel %vm2680, %v3636, -inf
    %v3817 = vsel %vm2680, %v3638, -inf
    %v3818 = vmax.f32 %v3816, %v3817
    %v3819 = vsel %vm2680, %v3639, -inf
    %v3820 = vsel %vm2680, %v3641, -inf
    %v3821 = vmax.f32 %v3819, %v3820
    %v3822 = vsel %vm2680, %v3640, -inf
    %v3823 = vsel %vm2680, %v3642, -inf
    %v3824 = vmax.f32 %v3822, %v3823
    %v3825 = vsel %vm2680, %v3643, -inf
    %v3826 = vsel %vm2680, %v3645, -inf
    %v3827 = vmax.f32 %v3825, %v3826
    %v3828 = vsel %vm2680, %v3644, -inf
    %v3829 = vsel %vm2680, %v3646, -inf
    %v3830 = vmax.f32 %v3828, %v3829
    %v3831 = vsel %vm2680, %v3647, -inf
    %v3832 = vsel %vm2680, %v3649, -inf
    %v3833 = vmax.f32 %v3831, %v3832
    %v3834 = vsel %vm2680, %v3648, -inf
    %v3835 = vsel %vm2680, %v3650, -inf
    %v3836 = vmax.f32 %v3834, %v3835
    %v3837 = vsel %vm2680, %v3651, -inf
    %v3838 = vsel %vm2680, %v3653, -inf
    %v3839 = vmax.f32 %v3837, %v3838
    %v3840 = vsel %vm2680, %v3652, -inf
    %v3841 = vsel %vm2680, %v3654, -inf
    %v3842 = vmax.f32 %v3840, %v3841
    %v3843 = vsel %vm2680, %v3655, -inf
    %v3844 = vsel %vm2680, %v3657, -inf
    %v3845 = vmax.f32 %v3843, %v3844
    %v3846 = vsel %vm2680, %v3656, -inf
    %v3847 = vsel %vm2680, %v3658, -inf
    %v3848 = vmax.f32 %v3846, %v3847
    %v3849 = vsel %vm2680, %v3659, -inf
    %v3850 = vsel %vm2680, %v3661, -inf
    %v3851 = vmax.f32 %v3849, %v3850
    %v3852 = vsel %vm2680, %v3660, -inf
    %v3853 = vsel %vm2680, %v3662, -inf
    %v3854 = vmax.f32 %v3852, %v3853
    %s3855 = scalar_lea.vmem [#allocation3], 24
    %3856 = vst.msk [vmem:[%s3855 + $0x1] sm:$0xff] %vm2680, %v3665
    %3857 = vst.msk [vmem:[%s3855 + $0x9] sm:$0xff] %vm2680, %v3668
    %3858 = vst.msk [vmem:[%s3855 + $0x19] sm:$0xff] %vm2680, %v3671
    %3859 = vst.msk [vmem:[%s3855 + $0x21] sm:$0xff] %vm2680, %v3674
    %3860 = vst.msk [vmem:[%s3855 + $0x31] sm:$0xff] %vm2680, %v3677
    %3861 = vst.msk [vmem:[%s3855 + $0x39] sm:$0xff] %vm2680, %v3680
    %3862 = vst.msk [vmem:[%s3855 + $0x49] sm:$0xff] %vm2680, %v3683
    %3863 = vst.msk [vmem:[%s3855 + $0x51] sm:$0xff] %vm2680, %v3686
    %3864 = vst.msk [vmem:[%s3855 + $0x61] sm:$0xff] %vm2680, %v3689
    %3865 = vst.msk [vmem:[%s3855 + $0x69] sm:$0xff] %vm2680, %v3692
    %3866 = vst.msk [vmem:[%s3855 + $0x79] sm:$0xff] %vm2680, %v3695
    %3867 = vst.msk [vmem:[%s3855 + $0x81] sm:$0xff] %vm2680, %v3698
    %3868 = vst.msk [vmem:[%s3855 + $0x91] sm:$0xff] %vm2680, %v3701
    %3869 = vst.msk [vmem:[%s3855 + $0x99] sm:$0xff] %vm2680, %v3704
    %3870 = vst.msk [vmem:[%s3855 + $0xa9] sm:$0xff] %vm2680, %v3707
    %3871 = vst.msk [vmem:[%s3855 + $0xb1] sm:$0xff] %vm2680, %v3710
    %3872 = vst.msk [vmem:[%s3855 + $0xc1] sm:$0xff] %vm2680, %v3713
    %3873 = vst.msk [vmem:[%s3855 + $0xc9] sm:$0xff] %vm2680, %v3716
    %3874 = vst.msk [vmem:[%s3855 + $0xd9] sm:$0xff] %vm2680, %v3719
    %3875 = vst.msk [vmem:[%s3855 + $0xe1] sm:$0xff] %vm2680, %v3722
    %3876 = vst.msk [vmem:[%s3855 + $0xf1] sm:$0xff] %vm2680, %v3725
    %3877 = vst.msk [vmem:[%s3855 + $0xf9] sm:$0xff] %vm2680, %v3728
    %3878 = vst.msk [vmem:[%s3855 + $0x109] sm:$0xff] %vm2680, %v3731
    %3879 = vst.msk [vmem:[%s3855 + $0x111] sm:$0xff] %vm2680, %v3734
    %3880 = vst.msk [vmem:[%s3855 + $0x121] sm:$0xff] %vm2680, %v3737
    %3881 = vst.msk [vmem:[%s3855 + $0x129] sm:$0xff] %vm2680, %v3740
    %3882 = vst.msk [vmem:[%s3855 + $0x139] sm:$0xff] %vm2680, %v3743
    %3883 = vst.msk [vmem:[%s3855 + $0x141] sm:$0xff] %vm2680, %v3746
    %3884 = vst.msk [vmem:[%s3855 + $0x151] sm:$0xff] %vm2680, %v3749
    %3885 = vst.msk [vmem:[%s3855 + $0x159] sm:$0xff] %vm2680, %v3752
    %3886 = vst.msk [vmem:[%s3855 + $0x169] sm:$0xff] %vm2680, %v3755
    %3887 = vst.msk [vmem:[%s3855 + $0x171] sm:$0xff] %vm2680, %v3758
    %3888 = vst.msk [vmem:[%s3855 + $0x1b1] sm:$0xff] %vm2680, %v3761
    %3889 = vst.msk [vmem:[%s3855 + $0x1b9] sm:$0xff] %vm2680, %v3764
    %3890 = vst.msk [vmem:[%s3855 + $0x1c9] sm:$0xff] %vm2680, %v3767
    %3891 = vst.msk [vmem:[%s3855 + $0x1d1] sm:$0xff] %vm2680, %v3770
    %3892 = vst.msk [vmem:[%s3855 + $0x1e1] sm:$0xff] %vm2680, %v3773
    %3893 = vst.msk [vmem:[%s3855 + $0x1e9] sm:$0xff] %vm2680, %v3776
    %3894 = vst.msk [vmem:[%s3855 + $0x1f9] sm:$0xff] %vm2680, %v3779
    %3895 = vst.msk [vmem:[%s3855 + $0x201] sm:$0xff] %vm2680, %v3782
    %3896 = vst.msk [vmem:[%s3855 + $0x211] sm:$0xff] %vm2680, %v3785
    %3897 = vst.msk [vmem:[%s3855 + $0x219] sm:$0xff] %vm2680, %v3788
    %3898 = vst.msk [vmem:[%s3855 + $0x229] sm:$0xff] %vm2680, %v3791
    %3899 = vst.msk [vmem:[%s3855 + $0x231] sm:$0xff] %vm2680, %v3794
    %3900 = vst.msk [vmem:[%s3855 + $0x241] sm:$0xff] %vm2680, %v3797
    %3901 = vst.msk [vmem:[%s3855 + $0x249] sm:$0xff] %vm2680, %v3800
    %3902 = vst.msk [vmem:[%s3855 + $0x259] sm:$0xff] %vm2680, %v3803
    %3903 = vst.msk [vmem:[%s3855 + $0x261] sm:$0xff] %vm2680, %v3806
    %3904 = vst.msk [vmem:[%s3855 + $0x271] sm:$0xff] %vm2680, %v3809
    %3905 = vst.msk [vmem:[%s3855 + $0x279] sm:$0xff] %vm2680, %v3812
    %3906 = vst.msk [vmem:[%s3855 + $0x289] sm:$0xff] %vm2680, %v3815
    %3907 = vst.msk [vmem:[%s3855 + $0x291] sm:$0xff] %vm2680, %v3818
    %3908 = vst.msk [vmem:[%s3855 + $0x2a1] sm:$0xff] %vm2680, %v3821
    %3909 = vst.msk [vmem:[%s3855 + $0x2a9] sm:$0xff] %vm2680, %v3824
    %3910 = vst.msk [vmem:[%s3855 + $0x2b9] sm:$0xff] %vm2680, %v3827
    %3911 = vst.msk [vmem:[%s3855 + $0x2c1] sm:$0xff] %vm2680, %v3830
    %3912 = vst.msk [vmem:[%s3855 + $0x2d1] sm:$0xff] %vm2680, %v3833
    %3913 = vst.msk [vmem:[%s3855 + $0x2d9] sm:$0xff] %vm2680, %v3836
    %3914 = vst.msk [vmem:[%s3855 + $0x2e9] sm:$0xff] %vm2680, %v3839
    %3915 = vst.msk [vmem:[%s3855 + $0x2f1] sm:$0xff] %vm2680, %v3842
    %3916 = vst.msk [vmem:[%s3855 + $0x301] sm:$0xff] %vm2680, %v3845
    %3917 = vst.msk [vmem:[%s3855 + $0x309] sm:$0xff] %vm2680, %v3848
    %3918 = vst.msk [vmem:[%s3855 + $0x319] sm:$0xff] %vm2680, %v3851
    %3919 = vst.msk [vmem:[%s3855 + $0x321] sm:$0xff] %vm2680, %v3854
    %v3920 = vld [vmem:[#allocation3] sm:$0xff]
    %v3921 = vld [vmem:[#allocation3 + $0x8] sm:$0xff]
    %v3922 = vld [vmem:[#allocation3 + $0x18] sm:$0xff]
    %v3923 = vld [vmem:[#allocation3 + $0x20] sm:$0xff]
    %v3924 = vld [vmem:[#allocation3 + $0x30] sm:$0xff]
    %v3925 = vld [vmem:[#allocation3 + $0x38] sm:$0xff]
    %v3926 = vld [vmem:[#allocation3 + $0x48] sm:$0xff]
    %v3927 = vld [vmem:[#allocation3 + $0x50] sm:$0xff]
    %v3928 = vld [vmem:[#allocation3 + $0x60] sm:$0xff]
    %v3929 = vld [vmem:[#allocation3 + $0x68] sm:$0xff]
    %v3930 = vld [vmem:[#allocation3 + $0x78] sm:$0xff]
    %v3931 = vld [vmem:[#allocation3 + $0x80] sm:$0xff]
    %v3932 = vld [vmem:[#allocation3 + $0x90] sm:$0xff]
    %v3933 = vld [vmem:[#allocation3 + $0x98] sm:$0xff]
    %v3934 = vld [vmem:[#allocation3 + $0xa8] sm:$0xff]
    %v3935 = vld [vmem:[#allocation3 + $0xb0] sm:$0xff]
    %v3936 = vld [vmem:[#allocation3 + $0xc0] sm:$0xff]
    %v3937 = vld [vmem:[#allocation3 + $0xc8] sm:$0xff]
    %v3938 = vld [vmem:[#allocation3 + $0xd8] sm:$0xff]
    %v3939 = vld [vmem:[#allocation3 + $0xe0] sm:$0xff]
    %v3940 = vld [vmem:[#allocation3 + $0xf0] sm:$0xff]
    %v3941 = vld [vmem:[#allocation3 + $0xf8] sm:$0xff]
    %v3942 = vld [vmem:[#allocation3 + $0x108] sm:$0xff]
    %v3943 = vld [vmem:[#allocation3 + $0x110] sm:$0xff]
    %v3944 = vld [vmem:[#allocation3 + $0x120] sm:$0xff]
    %v3945 = vld [vmem:[#allocation3 + $0x128] sm:$0xff]
    %v3946 = vld [vmem:[#allocation3 + $0x138] sm:$0xff]
    %v3947 = vld [vmem:[#allocation3 + $0x140] sm:$0xff]
    %v3948 = vld [vmem:[#allocation3 + $0x150] sm:$0xff]
    %v3949 = vld [vmem:[#allocation3 + $0x158] sm:$0xff]
    %v3950 = vld [vmem:[#allocation3 + $0x168] sm:$0xff]
    %v3951 = vld [vmem:[#allocation3 + $0x170] sm:$0xff]
    %v3952 = vld [vmem:[#allocation3 + $0x1b0] sm:$0xff]
    %v3953 = vld [vmem:[#allocation3 + $0x1b8] sm:$0xff]
    %v3954 = vld [vmem:[#allocation3 + $0x1c8] sm:$0xff]
    %v3955 = vld [vmem:[#allocation3 + $0x1d0] sm:$0xff]
    %v3956 = vld [vmem:[#allocation3 + $0x1e0] sm:$0xff]
    %v3957 = vld [vmem:[#allocation3 + $0x1e8] sm:$0xff]
    %v3958 = vld [vmem:[#allocation3 + $0x1f8] sm:$0xff]
    %v3959 = vld [vmem:[#allocation3 + $0x200] sm:$0xff]
    %v3960 = vld [vmem:[#allocation3 + $0x210] sm:$0xff]
    %v3961 = vld [vmem:[#allocation3 + $0x218] sm:$0xff]
    %v3962 = vld [vmem:[#allocation3 + $0x228] sm:$0xff]
    %v3963 = vld [vmem:[#allocation3 + $0x230] sm:$0xff]
    %v3964 = vld [vmem:[#allocation3 + $0x240] sm:$0xff]
    %v3965 = vld [vmem:[#allocation3 + $0x248] sm:$0xff]
    %v3966 = vld [vmem:[#allocation3 + $0x258] sm:$0xff]
    %v3967 = vld [vmem:[#allocation3 + $0x260] sm:$0xff]
    %v3968 = vld [vmem:[#allocation3 + $0x270] sm:$0xff]
    %v3969 = vld [vmem:[#allocation3 + $0x278] sm:$0xff]
    %v3970 = vld [vmem:[#allocation3 + $0x288] sm:$0xff]
    %v3971 = vld [vmem:[#allocation3 + $0x290] sm:$0xff]
    %v3972 = vld [vmem:[#allocation3 + $0x2a0] sm:$0xff]
    %v3973 = vld [vmem:[#allocation3 + $0x2a8] sm:$0xff]
    %v3974 = vld [vmem:[#allocation3 + $0x2b8] sm:$0xff]
    %v3975 = vld [vmem:[#allocation3 + $0x2c0] sm:$0xff]
    %v3976 = vld [vmem:[#allocation3 + $0x2d0] sm:$0xff]
    %v3977 = vld [vmem:[#allocation3 + $0x2d8] sm:$0xff]
    %v3978 = vld [vmem:[#allocation3 + $0x2e8] sm:$0xff]
    %v3979 = vld [vmem:[#allocation3 + $0x2f0] sm:$0xff]
    %v3980 = vld [vmem:[#allocation3 + $0x300] sm:$0xff]
    %v3981 = vld [vmem:[#allocation3 + $0x308] sm:$0xff]
    %v3982 = vld [vmem:[#allocation3 + $0x318] sm:$0xff]
    %v3983 = vld [vmem:[#allocation3 + $0x320] sm:$0xff]
    %3984 = vst.msk [vmem:[#allocation4] sm:$0xff] %vm2680, %v3920
    %3985 = vst.msk [vmem:[#allocation4 + $0x10] sm:$0xff] %vm2680, %v3921
    %3986 = vst.msk [vmem:[#allocation4 + $0x20] sm:$0xff] %vm2680, %v3922
    %3987 = vst.msk [vmem:[#allocation4 + $0x30] sm:$0xff] %vm2680, %v3923
    %3988 = vst.msk [vmem:[#allocation4 + $0x40] sm:$0xff] %vm2680, %v3924
    %3989 = vst.msk [vmem:[#allocation4 + $0x50] sm:$0xff] %vm2680, %v3925
    %3990 = vst.msk [vmem:[#allocation4 + $0x60] sm:$0xff] %vm2680, %v3926
    %3991 = vst.msk [vmem:[#allocation4 + $0x70] sm:$0xff] %vm2680, %v3927
    %3992 = vst.msk [vmem:[#allocation4 + $0x80] sm:$0xff] %vm2680, %v3928
    %3993 = vst.msk [vmem:[#allocation4 + $0x90] sm:$0xff] %vm2680, %v3929
    %3994 = vst.msk [vmem:[#allocation4 + $0xa0] sm:$0xff] %vm2680, %v3930
    %3995 = vst.msk [vmem:[#allocation4 + $0xb0] sm:$0xff] %vm2680, %v3931
    %3996 = vst.msk [vmem:[#allocation4 + $0xc0] sm:$0xff] %vm2680, %v3932
    %3997 = vst.msk [vmem:[#allocation4 + $0xd0] sm:$0xff] %vm2680, %v3933
    %3998 = vst.msk [vmem:[#allocation4 + $0xe0] sm:$0xff] %vm2680, %v3934
    %3999 = vst.msk [vmem:[#allocation4 + $0xf0] sm:$0xff] %vm2680, %v3935
    %4000 = vst.msk [vmem:[#allocation4 + $0x100] sm:$0xff] %vm2680, %v3936
    %4001 = vst.msk [vmem:[#allocation4 + $0x110] sm:$0xff] %vm2680, %v3937
    %4002 = vst.msk [vmem:[#allocation4 + $0x120] sm:$0xff] %vm2680, %v3938
    %4003 = vst.msk [vmem:[#allocation4 + $0x130] sm:$0xff] %vm2680, %v3939
    %4004 = vst.msk [vmem:[#allocation4 + $0x140] sm:$0xff] %vm2680, %v3940
    %4005 = vst.msk [vmem:[#allocation4 + $0x150] sm:$0xff] %vm2680, %v3941
    %4006 = vst.msk [vmem:[#allocation4 + $0x160] sm:$0xff] %vm2680, %v3942
    %4007 = vst.msk [vmem:[#allocation4 + $0x170] sm:$0xff] %vm2680, %v3943
    %4008 = vst.msk [vmem:[#allocation4 + $0x180] sm:$0xff] %vm2680, %v3944
    %4009 = vst.msk [vmem:[#allocation4 + $0x190] sm:$0xff] %vm2680, %v3945
    %4010 = vst.msk [vmem:[#allocation4 + $0x1a0] sm:$0xff] %vm2680, %v3946
    %4011 = vst.msk [vmem:[#allocation4 + $0x1b0] sm:$0xff] %vm2680, %v3947
    %4012 = vst.msk [vmem:[#allocation4 + $0x1c0] sm:$0xff] %vm2680, %v3948
    %4013 = vst.msk [vmem:[#allocation4 + $0x1d0] sm:$0xff] %vm2680, %v3949
    %4014 = vst.msk [vmem:[#allocation4 + $0x1e0] sm:$0xff] %vm2680, %v3950
    %4015 = vst.msk [vmem:[#allocation4 + $0x1f0] sm:$0xff] %vm2680, %v3951
    %4016 = vst.msk [vmem:[#allocation4 + $0x200] sm:$0xff] %vm2680, %v3952
    %4017 = vst.msk [vmem:[#allocation4 + $0x210] sm:$0xff] %vm2680, %v3953
    %4018 = vst.msk [vmem:[#allocation4 + $0x220] sm:$0xff] %vm2680, %v3954
    %4019 = vst.msk [vmem:[#allocation4 + $0x230] sm:$0xff] %vm2680, %v3955
    %4020 = vst.msk [vmem:[#allocation4 + $0x240] sm:$0xff] %vm2680, %v3956
    %4021 = vst.msk [vmem:[#allocation4 + $0x250] sm:$0xff] %vm2680, %v3957
    %4022 = vst.msk [vmem:[#allocation4 + $0x260] sm:$0xff] %vm2680, %v3958
    %4023 = vst.msk [vmem:[#allocation4 + $0x270] sm:$0xff] %vm2680, %v3959
    %4024 = vst.msk [vmem:[#allocation4 + $0x280] sm:$0xff] %vm2680, %v3960
    %4025 = vst.msk [vmem:[#allocation4 + $0x290] sm:$0xff] %vm2680, %v3961
    %4026 = vst.msk [vmem:[#allocation4 + $0x2a0] sm:$0xff] %vm2680, %v3962
    %4027 = vst.msk [vmem:[#allocation4 + $0x2b0] sm:$0xff] %vm2680, %v3963
    %4028 = vst.msk [vmem:[#allocation4 + $0x2c0] sm:$0xff] %vm2680, %v3964
    %4029 = vst.msk [vmem:[#allocation4 + $0x2d0] sm:$0xff] %vm2680, %v3965
    %4030 = vst.msk [vmem:[#allocation4 + $0x2e0] sm:$0xff] %vm2680, %v3966
    %4031 = vst.msk [vmem:[#allocation4 + $0x2f0] sm:$0xff] %vm2680, %v3967
    %4032 = vst.msk [vmem:[#allocation4 + $0x300] sm:$0xff] %vm2680, %v3968
    %4033 = vst.msk [vmem:[#allocation4 + $0x310] sm:$0xff] %vm2680, %v3969
    %4034 = vst.msk [vmem:[#allocation4 + $0x320] sm:$0xff] %vm2680, %v3970
    %4035 = vst.msk [vmem:[#allocation4 + $0x330] sm:$0xff] %vm2680, %v3971
    %4036 = vst.msk [vmem:[#allocation4 + $0x340] sm:$0xff] %vm2680, %v3972
    %4037 = vst.msk [vmem:[#allocation4 + $0x350] sm:$0xff] %vm2680, %v3973
    %4038 = vst.msk [vmem:[#allocation4 + $0x360] sm:$0xff] %vm2680, %v3974
    %4039 = vst.msk [vmem:[#allocation4 + $0x370] sm:$0xff] %vm2680, %v3975
    %4040 = vst.msk [vmem:[#allocation4 + $0x380] sm:$0xff] %vm2680, %v3976
    %4041 = vst.msk [vmem:[#allocation4 + $0x390] sm:$0xff] %vm2680, %v3977
    %4042 = vst.msk [vmem:[#allocation4 + $0x3a0] sm:$0xff] %vm2680, %v3978
    %4043 = vst.msk [vmem:[#allocation4 + $0x3b0] sm:$0xff] %vm2680, %v3979
    %4044 = vst.msk [vmem:[#allocation4 + $0x3c0] sm:$0xff] %vm2680, %v3980
    %4045 = vst.msk [vmem:[#allocation4 + $0x3d0] sm:$0xff] %vm2680, %v3981
    %4046 = vst.msk [vmem:[#allocation4 + $0x3e0] sm:$0xff] %vm2680, %v3982
    %4047 = vst.msk [vmem:[#allocation4 + $0x3f0] sm:$0xff] %vm2680, %v3983
    %v4048 = vld [vmem:[#allocation3 + $0x1] sm:$0xff]
    %v4049 = vld [vmem:[#allocation3 + $0x9] sm:$0xff]
    %v4050 = vld [vmem:[#allocation3 + $0x19] sm:$0xff]
    %v4051 = vld [vmem:[#allocation3 + $0x21] sm:$0xff]
    %v4052 = vld [vmem:[#allocation3 + $0x31] sm:$0xff]
    %v4053 = vld [vmem:[#allocation3 + $0x39] sm:$0xff]
    %v4054 = vld [vmem:[#allocation3 + $0x49] sm:$0xff]
    %v4055 = vld [vmem:[#allocation3 + $0x51] sm:$0xff]
    %v4056 = vld [vmem:[#allocation3 + $0x61] sm:$0xff]
    %v4057 = vld [vmem:[#allocation3 + $0x69] sm:$0xff]
    %v4058 = vld [vmem:[#allocation3 + $0x79] sm:$0xff]
    %v4059 = vld [vmem:[#allocation3 + $0x81] sm:$0xff]
    %v4060 = vld [vmem:[#allocation3 + $0x91] sm:$0xff]
    %v4061 = vld [vmem:[#allocation3 + $0x99] sm:$0xff]
    %v4062 = vld [vmem:[#allocation3 + $0xa9] sm:$0xff]
    %v4063 = vld [vmem:[#allocation3 + $0xb1] sm:$0xff]
    %v4064 = vld [vmem:[#allocation3 + $0xc1] sm:$0xff]
    %v4065 = vld [vmem:[#allocation3 + $0xc9] sm:$0xff]
    %v4066 = vld [vmem:[#allocation3 + $0xd9] sm:$0xff]
    %v4067 = vld [vmem:[#allocation3 + $0xe1] sm:$0xff]
    %v4068 = vld [vmem:[#allocation3 + $0xf1] sm:$0xff]
    %v4069 = vld [vmem:[#allocation3 + $0xf9] sm:$0xff]
    %v4070 = vld [vmem:[#allocation3 + $0x109] sm:$0xff]
    %v4071 = vld [vmem:[#allocation3 + $0x111] sm:$0xff]
    %v4072 = vld [vmem:[#allocation3 + $0x121] sm:$0xff]
    %v4073 = vld [vmem:[#allocation3 + $0x129] sm:$0xff]
    %v4074 = vld [vmem:[#allocation3 + $0x139] sm:$0xff]
    %v4075 = vld [vmem:[#allocation3 + $0x141] sm:$0xff]
    %v4076 = vld [vmem:[#allocation3 + $0x151] sm:$0xff]
    %v4077 = vld [vmem:[#allocation3 + $0x159] sm:$0xff]
    %v4078 = vld [vmem:[#allocation3 + $0x169] sm:$0xff]
    %v4079 = vld [vmem:[#allocation3 + $0x171] sm:$0xff]
    %v4080 = vld [vmem:[#allocation3 + $0x1b1] sm:$0xff]
    %v4081 = vld [vmem:[#allocation3 + $0x1b9] sm:$0xff]
    %v4082 = vld [vmem:[#allocation3 + $0x1c9] sm:$0xff]
    %v4083 = vld [vmem:[#allocation3 + $0x1d1] sm:$0xff]
    %v4084 = vld [vmem:[#allocation3 + $0x1e1] sm:$0xff]
    %v4085 = vld [vmem:[#allocation3 + $0x1e9] sm:$0xff]
    %v4086 = vld [vmem:[#allocation3 + $0x1f9] sm:$0xff]
    %v4087 = vld [vmem:[#allocation3 + $0x201] sm:$0xff]
    %v4088 = vld [vmem:[#allocation3 + $0x211] sm:$0xff]
    %v4089 = vld [vmem:[#allocation3 + $0x219] sm:$0xff]
    %v4090 = vld [vmem:[#allocation3 + $0x229] sm:$0xff]
    %v4091 = vld [vmem:[#allocation3 + $0x231] sm:$0xff]
    %v4092 = vld [vmem:[#allocation3 + $0x241] sm:$0xff]
    %v4093 = vld [vmem:[#allocation3 + $0x249] sm:$0xff]
    %v4094 = vld [vmem:[#allocation3 + $0x259] sm:$0xff]
    %v4095 = vld [vmem:[#allocation3 + $0x261] sm:$0xff]
    %v4096 = vld [vmem:[#allocation3 + $0x271] sm:$0xff]
    %v4097 = vld [vmem:[#allocation3 + $0x279] sm:$0xff]
    %v4098 = vld [vmem:[#allocation3 + $0x289] sm:$0xff]
    %v4099 = vld [vmem:[#allocation3 + $0x291] sm:$0xff]
    %v4100 = vld [vmem:[#allocation3 + $0x2a1] sm:$0xff]
    %v4101 = vld [vmem:[#allocation3 + $0x2a9] sm:$0xff]
    %v4102 = vld [vmem:[#allocation3 + $0x2b9] sm:$0xff]
    %v4103 = vld [vmem:[#allocation3 + $0x2c1] sm:$0xff]
    %v4104 = vld [vmem:[#allocation3 + $0x2d1] sm:$0xff]
    %v4105 = vld [vmem:[#allocation3 + $0x2d9] sm:$0xff]
    %v4106 = vld [vmem:[#allocation3 + $0x2e9] sm:$0xff]
    %v4107 = vld [vmem:[#allocation3 + $0x2f1] sm:$0xff]
    %v4108 = vld [vmem:[#allocation3 + $0x301] sm:$0xff]
    %v4109 = vld [vmem:[#allocation3 + $0x309] sm:$0xff]
    %v4110 = vld [vmem:[#allocation3 + $0x319] sm:$0xff]
    %v4111 = vld [vmem:[#allocation3 + $0x321] sm:$0xff]
    %4176 = vrot.lane.b32.xlu0 %v4048, 16
    %v4177 = vpop.permute.xlu0 %4176
    %4178 = vrot.lane.b32.xlu0 %v4049, 16
    %v4179 = vpop.permute.xlu0 %4178
    %4180 = vrot.lane.b32.xlu0 %v4050, 16
    %v4181 = vpop.permute.xlu0 %4180
    %4182 = vrot.lane.b32.xlu0 %v4051, 16
    %v4183 = vpop.permute.xlu0 %4182
    %4184 = vrot.lane.b32.xlu0 %v4052, 16
    %v4185 = vpop.permute.xlu0 %4184
    %4186 = vrot.lane.b32.xlu0 %v4053, 16
    %v4187 = vpop.permute.xlu0 %4186
    %4188 = vrot.lane.b32.xlu0 %v4054, 16
    %v4189 = vpop.permute.xlu0 %4188
    %4190 = vrot.lane.b32.xlu0 %v4055, 16
    %v4191 = vpop.permute.xlu0 %4190
    %4192 = vrot.lane.b32.xlu0 %v4056, 16
    %v4193 = vpop.permute.xlu0 %4192
    %4194 = vrot.lane.b32.xlu0 %v4057, 16
    %v4195 = vpop.permute.xlu0 %4194
    %4196 = vrot.lane.b32.xlu0 %v4058, 16
    %v4197 = vpop.permute.xlu0 %4196
    %4198 = vrot.lane.b32.xlu0 %v4059, 16
    %v4199 = vpop.permute.xlu0 %4198
    %4200 = vrot.lane.b32.xlu0 %v4060, 16
    %v4201 = vpop.permute.xlu0 %4200
    %4202 = vrot.lane.b32.xlu0 %v4061, 16
    %v4203 = vpop.permute.xlu0 %4202
    %4204 = vrot.lane.b32.xlu0 %v4062, 16
    %v4205 = vpop.permute.xlu0 %4204
    %4206 = vrot.lane.b32.xlu0 %v4063, 16
    %v4207 = vpop.permute.xlu0 %4206
    %4208 = vrot.lane.b32.xlu0 %v4064, 16
    %v4209 = vpop.permute.xlu0 %4208
    %4210 = vrot.lane.b32.xlu0 %v4065, 16
    %v4211 = vpop.permute.xlu0 %4210
    %4212 = vrot.lane.b32.xlu0 %v4066, 16
    %v4213 = vpop.permute.xlu0 %4212
    %4214 = vrot.lane.b32.xlu0 %v4067, 16
    %v4215 = vpop.permute.xlu0 %4214
    %4216 = vrot.lane.b32.xlu0 %v4068, 16
    %v4217 = vpop.permute.xlu0 %4216
    %4218 = vrot.lane.b32.xlu0 %v4069, 16
    %v4219 = vpop.permute.xlu0 %4218
    %4220 = vrot.lane.b32.xlu0 %v4070, 16
    %v4221 = vpop.permute.xlu0 %4220
    %4222 = vrot.lane.b32.xlu0 %v4071, 16
    %v4223 = vpop.permute.xlu0 %4222
    %4224 = vrot.lane.b32.xlu0 %v4072, 16
    %v4225 = vpop.permute.xlu0 %4224
    %4226 = vrot.lane.b32.xlu0 %v4073, 16
    %v4227 = vpop.permute.xlu0 %4226
    %4228 = vrot.lane.b32.xlu0 %v4074, 16
    %v4229 = vpop.permute.xlu0 %4228
    %4230 = vrot.lane.b32.xlu0 %v4075, 16
    %v4231 = vpop.permute.xlu0 %4230
    %4232 = vrot.lane.b32.xlu0 %v4076, 16
    %v4233 = vpop.permute.xlu0 %4232
    %4234 = vrot.lane.b32.xlu0 %v4077, 16
    %v4235 = vpop.permute.xlu0 %4234
    %4236 = vrot.lane.b32.xlu0 %v4078, 16
    %v4237 = vpop.permute.xlu0 %4236
    %4238 = vrot.lane.b32.xlu0 %v4079, 16
    %v4239 = vpop.permute.xlu0 %4238
    %4240 = vrot.lane.b32.xlu0 %v4080, 16
    %v4241 = vpop.permute.xlu0 %4240
    %4242 = vrot.lane.b32.xlu0 %v4081, 16
    %v4243 = vpop.permute.xlu0 %4242
    %4244 = vrot.lane.b32.xlu0 %v4082, 16
    %v4245 = vpop.permute.xlu0 %4244
    %4246 = vrot.lane.b32.xlu0 %v4083, 16
    %v4247 = vpop.permute.xlu0 %4246
    %4248 = vrot.lane.b32.xlu0 %v4084, 16
    %v4249 = vpop.permute.xlu0 %4248
    %4250 = vrot.lane.b32.xlu0 %v4085, 16
    %v4251 = vpop.permute.xlu0 %4250
    %4252 = vrot.lane.b32.xlu0 %v4086, 16
    %v4253 = vpop.permute.xlu0 %4252
    %4254 = vrot.lane.b32.xlu0 %v4087, 16
    %v4255 = vpop.permute.xlu0 %4254
    %4256 = vrot.lane.b32.xlu0 %v4088, 16
    %v4257 = vpop.permute.xlu0 %4256
    %4258 = vrot.lane.b32.xlu0 %v4089, 16
    %v4259 = vpop.permute.xlu0 %4258
    %4260 = vrot.lane.b32.xlu0 %v4090, 16
    %v4261 = vpop.permute.xlu0 %4260
    %4262 = vrot.lane.b32.xlu0 %v4091, 16
    %v4263 = vpop.permute.xlu0 %4262
    %4264 = vrot.lane.b32.xlu0 %v4092, 16
    %v4265 = vpop.permute.xlu0 %4264
    %4266 = vrot.lane.b32.xlu0 %v4093, 16
    %v4267 = vpop.permute.xlu0 %4266
    %4268 = vrot.lane.b32.xlu0 %v4094, 16
    %v4269 = vpop.permute.xlu0 %4268
    %4270 = vrot.lane.b32.xlu0 %v4095, 16
    %v4271 = vpop.permute.xlu0 %4270
    %4272 = vrot.lane.b32.xlu0 %v4096, 16
    %v4273 = vpop.permute.xlu0 %4272
    %4274 = vrot.lane.b32.xlu0 %v4097, 16
    %v4275 = vpop.permute.xlu0 %4274
    %4276 = vrot.lane.b32.xlu0 %v4098, 16
    %v4277 = vpop.permute.xlu0 %4276
    %4278 = vrot.lane.b32.xlu0 %v4099, 16
    %v4279 = vpop.permute.xlu0 %4278
    %4280 = vrot.lane.b32.xlu0 %v4100, 16
    %v4281 = vpop.permute.xlu0 %4280
    %4282 = vrot.lane.b32.xlu0 %v4101, 16
    %v4283 = vpop.permute.xlu0 %4282
    %4284 = vrot.lane.b32.xlu0 %v4102, 16
    %v4285 = vpop.permute.xlu0 %4284
    %4286 = vrot.lane.b32.xlu0 %v4103, 16
    %v4287 = vpop.permute.xlu0 %4286
    %4288 = vrot.lane.b32.xlu0 %v4104, 16
    %v4289 = vpop.permute.xlu0 %4288
    %4290 = vrot.lane.b32.xlu0 %v4105, 16
    %v4291 = vpop.permute.xlu0 %4290
    %4292 = vrot.lane.b32.xlu0 %v4106, 16
    %v4293 = vpop.permute.xlu0 %4292
    %4294 = vrot.lane.b32.xlu0 %v4107, 16
    %v4295 = vpop.permute.xlu0 %4294
    %4296 = vrot.lane.b32.xlu0 %v4108, 16
    %v4297 = vpop.permute.xlu0 %4296
    %4298 = vrot.lane.b32.xlu0 %v4109, 16
    %v4299 = vpop.permute.xlu0 %4298
    %4300 = vrot.lane.b32.xlu0 %v4110, 16
    %v4301 = vpop.permute.xlu0 %4300
    %4302 = vrot.lane.b32.xlu0 %v4111, 16
    %v4303 = vpop.permute.xlu0 %4302
    %vm4368 = vcmask 261248
    %4369 = vst.msk [vmem:[#allocation4] sm:$0xff] %vm4368, %v4177
    %4370 = vst.msk [vmem:[#allocation4 + $0x10] sm:$0xff] %vm4368, %v4179
    %4371 = vst.msk [vmem:[#allocation4 + $0x20] sm:$0xff] %vm4368, %v4181
    %4372 = vst.msk [vmem:[#allocation4 + $0x30] sm:$0xff] %vm4368, %v4183
    %4373 = vst.msk [vmem:[#allocation4 + $0x40] sm:$0xff] %vm4368, %v4185
    %4374 = vst.msk [vmem:[#allocation4 + $0x50] sm:$0xff] %vm4368, %v4187
    %4375 = vst.msk [vmem:[#allocation4 + $0x60] sm:$0xff] %vm4368, %v4189
    %4376 = vst.msk [vmem:[#allocation4 + $0x70] sm:$0xff] %vm4368, %v4191
    %4377 = vst.msk [vmem:[#allocation4 + $0x80] sm:$0xff] %vm4368, %v4193
    %4378 = vst.msk [vmem:[#allocation4 + $0x90] sm:$0xff] %vm4368, %v4195
    %4379 = vst.msk [vmem:[#allocation4 + $0xa0] sm:$0xff] %vm4368, %v4197
    %4380 = vst.msk [vmem:[#allocation4 + $0xb0] sm:$0xff] %vm4368, %v4199
    %4381 = vst.msk [vmem:[#allocation4 + $0xc0] sm:$0xff] %vm4368, %v4201
    %4382 = vst.msk [vmem:[#allocation4 + $0xd0] sm:$0xff] %vm4368, %v4203
    %4383 = vst.msk [vmem:[#allocation4 + $0xe0] sm:$0xff] %vm4368, %v4205
    %4384 = vst.msk [vmem:[#allocation4 + $0xf0] sm:$0xff] %vm4368, %v4207
    %4385 = vst.msk [vmem:[#allocation4 + $0x100] sm:$0xff] %vm4368, %v4209
    %4386 = vst.msk [vmem:[#allocation4 + $0x110] sm:$0xff] %vm4368, %v4211
    %4387 = vst.msk [vmem:[#allocation4 + $0x120] sm:$0xff] %vm4368, %v4213
    %4388 = vst.msk [vmem:[#allocation4 + $0x130] sm:$0xff] %vm4368, %v4215
    %4389 = vst.msk [vmem:[#allocation4 + $0x140] sm:$0xff] %vm4368, %v4217
    %4390 = vst.msk [vmem:[#allocation4 + $0x150] sm:$0xff] %vm4368, %v4219
    %4391 = vst.msk [vmem:[#allocation4 + $0x160] sm:$0xff] %vm4368, %v4221
    %4392 = vst.msk [vmem:[#allocation4 + $0x170] sm:$0xff] %vm4368, %v4223
    %4393 = vst.msk [vmem:[#allocation4 + $0x180] sm:$0xff] %vm4368, %v4225
    %4394 = vst.msk [vmem:[#allocation4 + $0x190] sm:$0xff] %vm4368, %v4227
    %4395 = vst.msk [vmem:[#allocation4 + $0x1a0] sm:$0xff] %vm4368, %v4229
    %4396 = vst.msk [vmem:[#allocation4 + $0x1b0] sm:$0xff] %vm4368, %v4231
    %4397 = vst.msk [vmem:[#allocation4 + $0x1c0] sm:$0xff] %vm4368, %v4233
    %4398 = vst.msk [vmem:[#allocation4 + $0x1d0] sm:$0xff] %vm4368, %v4235
    %4399 = vst.msk [vmem:[#allocation4 + $0x1e0] sm:$0xff] %vm4368, %v4237
    %4400 = vst.msk [vmem:[#allocation4 + $0x1f0] sm:$0xff] %vm4368, %v4239
    %4401 = vst.msk [vmem:[#allocation4 + $0x200] sm:$0xff] %vm4368, %v4241
    %4402 = vst.msk [vmem:[#allocation4 + $0x210] sm:$0xff] %vm4368, %v4243
    %4403 = vst.msk [vmem:[#allocation4 + $0x220] sm:$0xff] %vm4368, %v4245
    %4404 = vst.msk [vmem:[#allocation4 + $0x230] sm:$0xff] %vm4368, %v4247
    %4405 = vst.msk [vmem:[#allocation4 + $0x240] sm:$0xff] %vm4368, %v4249
    %4406 = vst.msk [vmem:[#allocation4 + $0x250] sm:$0xff] %vm4368, %v4251
    %4407 = vst.msk [vmem:[#allocation4 + $0x260] sm:$0xff] %vm4368, %v4253
    %4408 = vst.msk [vmem:[#allocation4 + $0x270] sm:$0xff] %vm4368, %v4255
    %4409 = vst.msk [vmem:[#allocation4 + $0x280] sm:$0xff] %vm4368, %v4257
    %4410 = vst.msk [vmem:[#allocation4 + $0x290] sm:$0xff] %vm4368, %v4259
    %4411 = vst.msk [vmem:[#allocation4 + $0x2a0] sm:$0xff] %vm4368, %v4261
    %4412 = vst.msk [vmem:[#allocation4 + $0x2b0] sm:$0xff] %vm4368, %v4263
    %4413 = vst.msk [vmem:[#allocation4 + $0x2c0] sm:$0xff] %vm4368, %v4265
    %4414 = vst.msk [vmem:[#allocation4 + $0x2d0] sm:$0xff] %vm4368, %v4267
    %4415 = vst.msk [vmem:[#allocation4 + $0x2e0] sm:$0xff] %vm4368, %v4269
    %4416 = vst.msk [vmem:[#allocation4 + $0x2f0] sm:$0xff] %vm4368, %v4271
    %4417 = vst.msk [vmem:[#allocation4 + $0x300] sm:$0xff] %vm4368, %v4273
    %4418 = vst.msk [vmem:[#allocation4 + $0x310] sm:$0xff] %vm4368, %v4275
    %4419 = vst.msk [vmem:[#allocation4 + $0x320] sm:$0xff] %vm4368, %v4277
    %4420 = vst.msk [vmem:[#allocation4 + $0x330] sm:$0xff] %vm4368, %v4279
    %4421 = vst.msk [vmem:[#allocation4 + $0x340] sm:$0xff] %vm4368, %v4281
    %4422 = vst.msk [vmem:[#allocation4 + $0x350] sm:$0xff] %vm4368, %v4283
    %4423 = vst.msk [vmem:[#allocation4 + $0x360] sm:$0xff] %vm4368, %v4285
    %4424 = vst.msk [vmem:[#allocation4 + $0x370] sm:$0xff] %vm4368, %v4287
    %4425 = vst.msk [vmem:[#allocation4 + $0x380] sm:$0xff] %vm4368, %v4289
    %4426 = vst.msk [vmem:[#allocation4 + $0x390] sm:$0xff] %vm4368, %v4291
    %4427 = vst.msk [vmem:[#allocation4 + $0x3a0] sm:$0xff] %vm4368, %v4293
    %4428 = vst.msk [vmem:[#allocation4 + $0x3b0] sm:$0xff] %vm4368, %v4295
    %4429 = vst.msk [vmem:[#allocation4 + $0x3c0] sm:$0xff] %vm4368, %v4297
    %4430 = vst.msk [vmem:[#allocation4 + $0x3d0] sm:$0xff] %vm4368, %v4299
    %4431 = vst.msk [vmem:[#allocation4 + $0x3e0] sm:$0xff] %vm4368, %v4301
    %4432 = vst.msk [vmem:[#allocation4 + $0x3f0] sm:$0xff] %vm4368, %v4303
    %v4433 = vld [vmem:[#allocation3 + $0x2] sm:$0xff]
    %v4434 = vld [vmem:[#allocation3 + $0xa] sm:$0xff]
    %v4435 = vld [vmem:[#allocation3 + $0x1a] sm:$0xff]
    %v4436 = vld [vmem:[#allocation3 + $0x22] sm:$0xff]
    %v4437 = vld [vmem:[#allocation3 + $0x32] sm:$0xff]
    %v4438 = vld [vmem:[#allocation3 + $0x3a] sm:$0xff]
    %v4439 = vld [vmem:[#allocation3 + $0x4a] sm:$0xff]
    %v4440 = vld [vmem:[#allocation3 + $0x52] sm:$0xff]
    %v4441 = vld [vmem:[#allocation3 + $0x62] sm:$0xff]
    %v4442 = vld [vmem:[#allocation3 + $0x6a] sm:$0xff]
    %v4443 = vld [vmem:[#allocation3 + $0x7a] sm:$0xff]
    %v4444 = vld [vmem:[#allocation3 + $0x82] sm:$0xff]
    %v4445 = vld [vmem:[#allocation3 + $0x92] sm:$0xff]
    %v4446 = vld [vmem:[#allocation3 + $0x9a] sm:$0xff]
    %v4447 = vld [vmem:[#allocation3 + $0xaa] sm:$0xff]
    %v4448 = vld [vmem:[#allocation3 + $0xb2] sm:$0xff]
    %v4449 = vld [vmem:[#allocation3 + $0xc2] sm:$0xff]
    %v4450 = vld [vmem:[#allocation3 + $0xca] sm:$0xff]
    %v4451 = vld [vmem:[#allocation3 + $0xda] sm:$0xff]
    %v4452 = vld [vmem:[#allocation3 + $0xe2] sm:$0xff]
    %v4453 = vld [vmem:[#allocation3 + $0xf2] sm:$0xff]
    %v4454 = vld [vmem:[#allocation3 + $0xfa] sm:$0xff]
    %v4455 = vld [vmem:[#allocation3 + $0x10a] sm:$0xff]
    %v4456 = vld [vmem:[#allocation3 + $0x112] sm:$0xff]
    %v4457 = vld [vmem:[#allocation3 + $0x122] sm:$0xff]
    %v4458 = vld [vmem:[#allocation3 + $0x12a] sm:$0xff]
    %v4459 = vld [vmem:[#allocation3 + $0x13a] sm:$0xff]
    %v4460 = vld [vmem:[#allocation3 + $0x142] sm:$0xff]
    %v4461 = vld [vmem:[#allocation3 + $0x152] sm:$0xff]
    %v4462 = vld [vmem:[#allocation3 + $0x15a] sm:$0xff]
    %v4463 = vld [vmem:[#allocation3 + $0x16a] sm:$0xff]
    %v4464 = vld [vmem:[#allocation3 + $0x172] sm:$0xff]
    %v4465 = vld [vmem:[#allocation3 + $0x1b2] sm:$0xff]
    %v4466 = vld [vmem:[#allocation3 + $0x1ba] sm:$0xff]
    %v4467 = vld [vmem:[#allocation3 + $0x1ca] sm:$0xff]
    %v4468 = vld [vmem:[#allocation3 + $0x1d2] sm:$0xff]
    %v4469 = vld [vmem:[#allocation3 + $0x1e2] sm:$0xff]
    %v4470 = vld [vmem:[#allocation3 + $0x1ea] sm:$0xff]
    %v4471 = vld [vmem:[#allocation3 + $0x1fa] sm:$0xff]
    %v4472 = vld [vmem:[#allocation3 + $0x202] sm:$0xff]
    %v4473 = vld [vmem:[#allocation3 + $0x212] sm:$0xff]
    %v4474 = vld [vmem:[#allocation3 + $0x21a] sm:$0xff]
    %v4475 = vld [vmem:[#allocation3 + $0x22a] sm:$0xff]
    %v4476 = vld [vmem:[#allocation3 + $0x232] sm:$0xff]
    %v4477 = vld [vmem:[#allocation3 + $0x242] sm:$0xff]
    %v4478 = vld [vmem:[#allocation3 + $0x24a] sm:$0xff]
    %v4479 = vld [vmem:[#allocation3 + $0x25a] sm:$0xff]
    %v4480 = vld [vmem:[#allocation3 + $0x262] sm:$0xff]
    %v4481 = vld [vmem:[#allocation3 + $0x272] sm:$0xff]
    %v4482 = vld [vmem:[#allocation3 + $0x27a] sm:$0xff]
    %v4483 = vld [vmem:[#allocation3 + $0x28a] sm:$0xff]
    %v4484 = vld [vmem:[#allocation3 + $0x292] sm:$0xff]
    %v4485 = vld [vmem:[#allocation3 + $0x2a2] sm:$0xff]
    %v4486 = vld [vmem:[#allocation3 + $0x2aa] sm:$0xff]
    %v4487 = vld [vmem:[#allocation3 + $0x2ba] sm:$0xff]
    %v4488 = vld [vmem:[#allocation3 + $0x2c2] sm:$0xff]
    %v4489 = vld [vmem:[#allocation3 + $0x2d2] sm:$0xff]
    %v4490 = vld [vmem:[#allocation3 + $0x2da] sm:$0xff]
    %v4491 = vld [vmem:[#allocation3 + $0x2ea] sm:$0xff]
    %v4492 = vld [vmem:[#allocation3 + $0x2f2] sm:$0xff]
    %v4493 = vld [vmem:[#allocation3 + $0x302] sm:$0xff]
    %v4494 = vld [vmem:[#allocation3 + $0x30a] sm:$0xff]
    %v4495 = vld [vmem:[#allocation3 + $0x31a] sm:$0xff]
    %v4496 = vld [vmem:[#allocation3 + $0x322] sm:$0xff]
    %4561 = vrot.lane.b32.xlu0 %v4433, 32
    %v4562 = vpop.permute.xlu0 %4561
    %4563 = vrot.lane.b32.xlu0 %v4434, 32
    %v4564 = vpop.permute.xlu0 %4563
    %4565 = vrot.lane.b32.xlu0 %v4435, 32
    %v4566 = vpop.permute.xlu0 %4565
    %4567 = vrot.lane.b32.xlu0 %v4436, 32
    %v4568 = vpop.permute.xlu0 %4567
    %4569 = vrot.lane.b32.xlu0 %v4437, 32
    %v4570 = vpop.permute.xlu0 %4569
    %4571 = vrot.lane.b32.xlu0 %v4438, 32
    %v4572 = vpop.permute.xlu0 %4571
    %4573 = vrot.lane.b32.xlu0 %v4439, 32
    %v4574 = vpop.permute.xlu0 %4573
    %4575 = vrot.lane.b32.xlu0 %v4440, 32
    %v4576 = vpop.permute.xlu0 %4575
    %4577 = vrot.lane.b32.xlu0 %v4441, 32
    %v4578 = vpop.permute.xlu0 %4577
    %4579 = vrot.lane.b32.xlu0 %v4442, 32
    %v4580 = vpop.permute.xlu0 %4579
    %4581 = vrot.lane.b32.xlu0 %v4443, 32
    %v4582 = vpop.permute.xlu0 %4581
    %4583 = vrot.lane.b32.xlu0 %v4444, 32
    %v4584 = vpop.permute.xlu0 %4583
    %4585 = vrot.lane.b32.xlu0 %v4445, 32
    %v4586 = vpop.permute.xlu0 %4585
    %4587 = vrot.lane.b32.xlu0 %v4446, 32
    %v4588 = vpop.permute.xlu0 %4587
    %4589 = vrot.lane.b32.xlu0 %v4447, 32
    %v4590 = vpop.permute.xlu0 %4589
    %4591 = vrot.lane.b32.xlu0 %v4448, 32
    %v4592 = vpop.permute.xlu0 %4591
    %4593 = vrot.lane.b32.xlu0 %v4449, 32
    %v4594 = vpop.permute.xlu0 %4593
    %4595 = vrot.lane.b32.xlu0 %v4450, 32
    %v4596 = vpop.permute.xlu0 %4595
    %4597 = vrot.lane.b32.xlu0 %v4451, 32
    %v4598 = vpop.permute.xlu0 %4597
    %4599 = vrot.lane.b32.xlu0 %v4452, 32
    %v4600 = vpop.permute.xlu0 %4599
    %4601 = vrot.lane.b32.xlu0 %v4453, 32
    %v4602 = vpop.permute.xlu0 %4601
    %4603 = vrot.lane.b32.xlu0 %v4454, 32
    %v4604 = vpop.permute.xlu0 %4603
    %4605 = vrot.lane.b32.xlu0 %v4455, 32
    %v4606 = vpop.permute.xlu0 %4605
    %4607 = vrot.lane.b32.xlu0 %v4456, 32
    %v4608 = vpop.permute.xlu0 %4607
    %4609 = vrot.lane.b32.xlu0 %v4457, 32
    %v4610 = vpop.permute.xlu0 %4609
    %4611 = vrot.lane.b32.xlu0 %v4458, 32
    %v4612 = vpop.permute.xlu0 %4611
    %4613 = vrot.lane.b32.xlu0 %v4459, 32
    %v4614 = vpop.permute.xlu0 %4613
    %4615 = vrot.lane.b32.xlu0 %v4460, 32
    %v4616 = vpop.permute.xlu0 %4615
    %4617 = vrot.lane.b32.xlu0 %v4461, 32
    %v4618 = vpop.permute.xlu0 %4617
    %4619 = vrot.lane.b32.xlu0 %v4462, 32
    %v4620 = vpop.permute.xlu0 %4619
    %4621 = vrot.lane.b32.xlu0 %v4463, 32
    %v4622 = vpop.permute.xlu0 %4621
    %4623 = vrot.lane.b32.xlu0 %v4464, 32
    %v4624 = vpop.permute.xlu0 %4623
    %4625 = vrot.lane.b32.xlu0 %v4465, 32
    %v4626 = vpop.permute.xlu0 %4625
    %4627 = vrot.lane.b32.xlu0 %v4466, 32
    %v4628 = vpop.permute.xlu0 %4627
    %4629 = vrot.lane.b32.xlu0 %v4467, 32
    %v4630 = vpop.permute.xlu0 %4629
    %4631 = vrot.lane.b32.xlu0 %v4468, 32
    %v4632 = vpop.permute.xlu0 %4631
    %4633 = vrot.lane.b32.xlu0 %v4469, 32
    %v4634 = vpop.permute.xlu0 %4633
    %4635 = vrot.lane.b32.xlu0 %v4470, 32
    %v4636 = vpop.permute.xlu0 %4635
    %4637 = vrot.lane.b32.xlu0 %v4471, 32
    %v4638 = vpop.permute.xlu0 %4637
    %4639 = vrot.lane.b32.xlu0 %v4472, 32
    %v4640 = vpop.permute.xlu0 %4639
    %4641 = vrot.lane.b32.xlu0 %v4473, 32
    %v4642 = vpop.permute.xlu0 %4641
    %4643 = vrot.lane.b32.xlu0 %v4474, 32
    %v4644 = vpop.permute.xlu0 %4643
    %4645 = vrot.lane.b32.xlu0 %v4475, 32
    %v4646 = vpop.permute.xlu0 %4645
    %4647 = vrot.lane.b32.xlu0 %v4476, 32
    %v4648 = vpop.permute.xlu0 %4647
    %4649 = vrot.lane.b32.xlu0 %v4477, 32
    %v4650 = vpop.permute.xlu0 %4649
    %4651 = vrot.lane.b32.xlu0 %v4478, 32
    %v4652 = vpop.permute.xlu0 %4651
    %4653 = vrot.lane.b32.xlu0 %v4479, 32
    %v4654 = vpop.permute.xlu0 %4653
    %4655 = vrot.lane.b32.xlu0 %v4480, 32
    %v4656 = vpop.permute.xlu0 %4655
    %4657 = vrot.lane.b32.xlu0 %v4481, 32
    %v4658 = vpop.permute.xlu0 %4657
    %4659 = vrot.lane.b32.xlu0 %v4482, 32
    %v4660 = vpop.permute.xlu0 %4659
    %4661 = vrot.lane.b32.xlu0 %v4483, 32
    %v4662 = vpop.permute.xlu0 %4661
    %4663 = vrot.lane.b32.xlu0 %v4484, 32
    %v4664 = vpop.permute.xlu0 %4663
    %4665 = vrot.lane.b32.xlu0 %v4485, 32
    %v4666 = vpop.permute.xlu0 %4665
    %4667 = vrot.lane.b32.xlu0 %v4486, 32
    %v4668 = vpop.permute.xlu0 %4667
    %4669 = vrot.lane.b32.xlu0 %v4487, 32
    %v4670 = vpop.permute.xlu0 %4669
    %4671 = vrot.lane.b32.xlu0 %v4488, 32
    %v4672 = vpop.permute.xlu0 %4671
    %4673 = vrot.lane.b32.xlu0 %v4489, 32
    %v4674 = vpop.permute.xlu0 %4673
    %4675 = vrot.lane.b32.xlu0 %v4490, 32
    %v4676 = vpop.permute.xlu0 %4675
    %4677 = vrot.lane.b32.xlu0 %v4491, 32
    %v4678 = vpop.permute.xlu0 %4677
    %4679 = vrot.lane.b32.xlu0 %v4492, 32
    %v4680 = vpop.permute.xlu0 %4679
    %4681 = vrot.lane.b32.xlu0 %v4493, 32
    %v4682 = vpop.permute.xlu0 %4681
    %4683 = vrot.lane.b32.xlu0 %v4494, 32
    %v4684 = vpop.permute.xlu0 %4683
    %4685 = vrot.lane.b32.xlu0 %v4495, 32
    %v4686 = vpop.permute.xlu0 %4685
    %4687 = vrot.lane.b32.xlu0 %v4496, 32
    %v4688 = vpop.permute.xlu0 %4687
    %vm4753 = vcmask 392448
    %4754 = vst.msk [vmem:[#allocation4] sm:$0xff] %vm4753, %v4562
    %4755 = vst.msk [vmem:[#allocation4 + $0x10] sm:$0xff] %vm4753, %v4564
    %4756 = vst.msk [vmem:[#allocation4 + $0x20] sm:$0xff] %vm4753, %v4566
    %4757 = vst.msk [vmem:[#allocation4 + $0x30] sm:$0xff] %vm4753, %v4568
    %4758 = vst.msk [vmem:[#allocation4 + $0x40] sm:$0xff] %vm4753, %v4570
    %4759 = vst.msk [vmem:[#allocation4 + $0x50] sm:$0xff] %vm4753, %v4572
    %4760 = vst.msk [vmem:[#allocation4 + $0x60] sm:$0xff] %vm4753, %v4574
    %4761 = vst.msk [vmem:[#allocation4 + $0x70] sm:$0xff] %vm4753, %v4576
    %4762 = vst.msk [vmem:[#allocation4 + $0x80] sm:$0xff] %vm4753, %v4578
    %4763 = vst.msk [vmem:[#allocation4 + $0x90] sm:$0xff] %vm4753, %v4580
    %4764 = vst.msk [vmem:[#allocation4 + $0xa0] sm:$0xff] %vm4753, %v4582
    %4765 = vst.msk [vmem:[#allocation4 + $0xb0] sm:$0xff] %vm4753, %v4584
    %4766 = vst.msk [vmem:[#allocation4 + $0xc0] sm:$0xff] %vm4753, %v4586
    %4767 = vst.msk [vmem:[#allocation4 + $0xd0] sm:$0xff] %vm4753, %v4588
    %4768 = vst.msk [vmem:[#allocation4 + $0xe0] sm:$0xff] %vm4753, %v4590
    %4769 = vst.msk [vmem:[#allocation4 + $0xf0] sm:$0xff] %vm4753, %v4592
    %4770 = vst.msk [vmem:[#allocation4 + $0x100] sm:$0xff] %vm4753, %v4594
    %4771 = vst.msk [vmem:[#allocation4 + $0x110] sm:$0xff] %vm4753, %v4596
    %4772 = vst.msk [vmem:[#allocation4 + $0x120] sm:$0xff] %vm4753, %v4598
    %4773 = vst.msk [vmem:[#allocation4 + $0x130] sm:$0xff] %vm4753, %v4600
    %4774 = vst.msk [vmem:[#allocation4 + $0x140] sm:$0xff] %vm4753, %v4602
    %4775 = vst.msk [vmem:[#allocation4 + $0x150] sm:$0xff] %vm4753, %v4604
    %4776 = vst.msk [vmem:[#allocation4 + $0x160] sm:$0xff] %vm4753, %v4606
    %4777 = vst.msk [vmem:[#allocation4 + $0x170] sm:$0xff] %vm4753, %v4608
    %4778 = vst.msk [vmem:[#allocation4 + $0x180] sm:$0xff] %vm4753, %v4610
    %4779 = vst.msk [vmem:[#allocation4 + $0x190] sm:$0xff] %vm4753, %v4612
    %4780 = vst.msk [vmem:[#allocation4 + $0x1a0] sm:$0xff] %vm4753, %v4614
    %4781 = vst.msk [vmem:[#allocation4 + $0x1b0] sm:$0xff] %vm4753, %v4616
    %4782 = vst.msk [vmem:[#allocation4 + $0x1c0] sm:$0xff] %vm4753, %v4618
    %4783 = vst.msk [vmem:[#allocation4 + $0x1d0] sm:$0xff] %vm4753, %v4620
    %4784 = vst.msk [vmem:[#allocation4 + $0x1e0] sm:$0xff] %vm4753, %v4622
    %4785 = vst.msk [vmem:[#allocation4 + $0x1f0] sm:$0xff] %vm4753, %v4624
    %4786 = vst.msk [vmem:[#allocation4 + $0x200] sm:$0xff] %vm4753, %v4626
    %4787 = vst.msk [vmem:[#allocation4 + $0x210] sm:$0xff] %vm4753, %v4628
    %4788 = vst.msk [vmem:[#allocation4 + $0x220] sm:$0xff] %vm4753, %v4630
    %4789 = vst.msk [vmem:[#allocation4 + $0x230] sm:$0xff] %vm4753, %v4632
    %4790 = vst.msk [vmem:[#allocation4 + $0x240] sm:$0xff] %vm4753, %v4634
    %4791 = vst.msk [vmem:[#allocation4 + $0x250] sm:$0xff] %vm4753, %v4636
    %4792 = vst.msk [vmem:[#allocation4 + $0x260] sm:$0xff] %vm4753, %v4638
    %4793 = vst.msk [vmem:[#allocation4 + $0x270] sm:$0xff] %vm4753, %v4640
    %4794 = vst.msk [vmem:[#allocation4 + $0x280] sm:$0xff] %vm4753, %v4642
    %4795 = vst.msk [vmem:[#allocation4 + $0x290] sm:$0xff] %vm4753, %v4644
    %4796 = vst.msk [vmem:[#allocation4 + $0x2a0] sm:$0xff] %vm4753, %v4646
    %4797 = vst.msk [vmem:[#allocation4 + $0x2b0] sm:$0xff] %vm4753, %v4648
    %4798 = vst.msk [vmem:[#allocation4 + $0x2c0] sm:$0xff] %vm4753, %v4650
    %4799 = vst.msk [vmem:[#allocation4 + $0x2d0] sm:$0xff] %vm4753, %v4652
    %4800 = vst.msk [vmem:[#allocation4 + $0x2e0] sm:$0xff] %vm4753, %v4654
    %4801 = vst.msk [vmem:[#allocation4 + $0x2f0] sm:$0xff] %vm4753, %v4656
    %4802 = vst.msk [vmem:[#allocation4 + $0x300] sm:$0xff] %vm4753, %v4658
    %4803 = vst.msk [vmem:[#allocation4 + $0x310] sm:$0xff] %vm4753, %v4660
    %4804 = vst.msk [vmem:[#allocation4 + $0x320] sm:$0xff] %vm4753, %v4662
    %4805 = vst.msk [vmem:[#allocation4 + $0x330] sm:$0xff] %vm4753, %v4664
    %4806 = vst.msk [vmem:[#allocation4 + $0x340] sm:$0xff] %vm4753, %v4666
    %4807 = vst.msk [vmem:[#allocation4 + $0x350] sm:$0xff] %vm4753, %v4668
    %4808 = vst.msk [vmem:[#allocation4 + $0x360] sm:$0xff] %vm4753, %v4670
    %4809 = vst.msk [vmem:[#allocation4 + $0x370] sm:$0xff] %vm4753, %v4672
    %4810 = vst.msk [vmem:[#allocation4 + $0x380] sm:$0xff] %vm4753, %v4674
    %4811 = vst.msk [vmem:[#allocation4 + $0x390] sm:$0xff] %vm4753, %v4676
    %4812 = vst.msk [vmem:[#allocation4 + $0x3a0] sm:$0xff] %vm4753, %v4678
    %4813 = vst.msk [vmem:[#allocation4 + $0x3b0] sm:$0xff] %vm4753, %v4680
    %4814 = vst.msk [vmem:[#allocation4 + $0x3c0] sm:$0xff] %vm4753, %v4682
    %4815 = vst.msk [vmem:[#allocation4 + $0x3d0] sm:$0xff] %vm4753, %v4684
    %4816 = vst.msk [vmem:[#allocation4 + $0x3e0] sm:$0xff] %vm4753, %v4686
    %4817 = vst.msk [vmem:[#allocation4 + $0x3f0] sm:$0xff] %vm4753, %v4688
    %v4818 = vld [vmem:[%s3855] sm:$0xff]
    %v4819 = vld [vmem:[%s3855 + $0x8] sm:$0xff]
    %v4820 = vld [vmem:[%s3855 + $0x18] sm:$0xff]
    %v4821 = vld [vmem:[%s3855 + $0x20] sm:$0xff]
    %v4822 = vld [vmem:[%s3855 + $0x30] sm:$0xff]
    %v4823 = vld [vmem:[%s3855 + $0x38] sm:$0xff]
    %v4824 = vld [vmem:[%s3855 + $0x48] sm:$0xff]
    %v4825 = vld [vmem:[%s3855 + $0x50] sm:$0xff]
    %v4826 = vld [vmem:[%s3855 + $0x60] sm:$0xff]
    %v4827 = vld [vmem:[%s3855 + $0x68] sm:$0xff]
    %v4828 = vld [vmem:[%s3855 + $0x78] sm:$0xff]
    %v4829 = vld [vmem:[%s3855 + $0x80] sm:$0xff]
    %v4830 = vld [vmem:[%s3855 + $0x90] sm:$0xff]
    %v4831 = vld [vmem:[%s3855 + $0x98] sm:$0xff]
    %v4832 = vld [vmem:[%s3855 + $0xa8] sm:$0xff]
    %v4833 = vld [vmem:[%s3855 + $0xb0] sm:$0xff]
    %v4834 = vld [vmem:[%s3855 + $0xc0] sm:$0xff]
    %v4835 = vld [vmem:[%s3855 + $0xc8] sm:$0xff]
    %v4836 = vld [vmem:[%s3855 + $0xd8] sm:$0xff]
    %v4837 = vld [vmem:[%s3855 + $0xe0] sm:$0xff]
    %v4838 = vld [vmem:[%s3855 + $0xf0] sm:$0xff]
    %v4839 = vld [vmem:[%s3855 + $0xf8] sm:$0xff]
    %v4840 = vld [vmem:[%s3855 + $0x108] sm:$0xff]
    %v4841 = vld [vmem:[%s3855 + $0x110] sm:$0xff]
    %v4842 = vld [vmem:[%s3855 + $0x120] sm:$0xff]
    %v4843 = vld [vmem:[%s3855 + $0x128] sm:$0xff]
    %v4844 = vld [vmem:[%s3855 + $0x138] sm:$0xff]
    %v4845 = vld [vmem:[%s3855 + $0x140] sm:$0xff]
    %v4846 = vld [vmem:[%s3855 + $0x150] sm:$0xff]
    %v4847 = vld [vmem:[%s3855 + $0x158] sm:$0xff]
    %v4848 = vld [vmem:[%s3855 + $0x168] sm:$0xff]
    %v4849 = vld [vmem:[%s3855 + $0x170] sm:$0xff]
    %v4850 = vld [vmem:[%s3855 + $0x1b0] sm:$0xff]
    %v4851 = vld [vmem:[%s3855 + $0x1b8] sm:$0xff]
    %v4852 = vld [vmem:[%s3855 + $0x1c8] sm:$0xff]
    %v4853 = vld [vmem:[%s3855 + $0x1d0] sm:$0xff]
    %v4854 = vld [vmem:[%s3855 + $0x1e0] sm:$0xff]
    %v4855 = vld [vmem:[%s3855 + $0x1e8] sm:$0xff]
    %v4856 = vld [vmem:[%s3855 + $0x1f8] sm:$0xff]
    %v4857 = vld [vmem:[%s3855 + $0x200] sm:$0xff]
    %v4858 = vld [vmem:[%s3855 + $0x210] sm:$0xff]
    %v4859 = vld [vmem:[%s3855 + $0x218] sm:$0xff]
    %v4860 = vld [vmem:[%s3855 + $0x228] sm:$0xff]
    %v4861 = vld [vmem:[%s3855 + $0x230] sm:$0xff]
    %v4862 = vld [vmem:[%s3855 + $0x240] sm:$0xff]
    %v4863 = vld [vmem:[%s3855 + $0x248] sm:$0xff]
    %v4864 = vld [vmem:[%s3855 + $0x258] sm:$0xff]
    %v4865 = vld [vmem:[%s3855 + $0x260] sm:$0xff]
    %v4866 = vld [vmem:[%s3855 + $0x270] sm:$0xff]
    %v4867 = vld [vmem:[%s3855 + $0x278] sm:$0xff]
    %v4868 = vld [vmem:[%s3855 + $0x288] sm:$0xff]
    %v4869 = vld [vmem:[%s3855 + $0x290] sm:$0xff]
    %v4870 = vld [vmem:[%s3855 + $0x2a0] sm:$0xff]
    %v4871 = vld [vmem:[%s3855 + $0x2a8] sm:$0xff]
    %v4872 = vld [vmem:[%s3855 + $0x2b8] sm:$0xff]
    %v4873 = vld [vmem:[%s3855 + $0x2c0] sm:$0xff]
    %v4874 = vld [vmem:[%s3855 + $0x2d0] sm:$0xff]
    %v4875 = vld [vmem:[%s3855 + $0x2d8] sm:$0xff]
    %v4876 = vld [vmem:[%s3855 + $0x2e8] sm:$0xff]
    %v4877 = vld [vmem:[%s3855 + $0x2f0] sm:$0xff]
    %v4878 = vld [vmem:[%s3855 + $0x300] sm:$0xff]
    %v4879 = vld [vmem:[%s3855 + $0x308] sm:$0xff]
    %v4880 = vld [vmem:[%s3855 + $0x318] sm:$0xff]
    %v4881 = vld [vmem:[%s3855 + $0x320] sm:$0xff]
    %4946 = vrot.lane.b32.xlu0 %v4818, 48
    %v4947 = vpop.permute.xlu0 %4946
    %4948 = vrot.lane.b32.xlu0 %v4819, 48
    %v4949 = vpop.permute.xlu0 %4948
    %4950 = vrot.lane.b32.xlu0 %v4820, 48
    %v4951 = vpop.permute.xlu0 %4950
    %4952 = vrot.lane.b32.xlu0 %v4821, 48
    %v4953 = vpop.permute.xlu0 %4952
    %4954 = vrot.lane.b32.xlu0 %v4822, 48
    %v4955 = vpop.permute.xlu0 %4954
    %4956 = vrot.lane.b32.xlu0 %v4823, 48
    %v4957 = vpop.permute.xlu0 %4956
    %4958 = vrot.lane.b32.xlu0 %v4824, 48
    %v4959 = vpop.permute.xlu0 %4958
    %4960 = vrot.lane.b32.xlu0 %v4825, 48
    %v4961 = vpop.permute.xlu0 %4960
    %4962 = vrot.lane.b32.xlu0 %v4826, 48
    %v4963 = vpop.permute.xlu0 %4962
    %4964 = vrot.lane.b32.xlu0 %v4827, 48
    %v4965 = vpop.permute.xlu0 %4964
    %4966 = vrot.lane.b32.xlu0 %v4828, 48
    %v4967 = vpop.permute.xlu0 %4966
    %4968 = vrot.lane.b32.xlu0 %v4829, 48
    %v4969 = vpop.permute.xlu0 %4968
    %4970 = vrot.lane.b32.xlu0 %v4830, 48
    %v4971 = vpop.permute.xlu0 %4970
    %4972 = vrot.lane.b32.xlu0 %v4831, 48
    %v4973 = vpop.permute.xlu0 %4972
    %4974 = vrot.lane.b32.xlu0 %v4832, 48
    %v4975 = vpop.permute.xlu0 %4974
    %4976 = vrot.lane.b32.xlu0 %v4833, 48
    %v4977 = vpop.permute.xlu0 %4976
    %4978 = vrot.lane.b32.xlu0 %v4834, 48
    %v4979 = vpop.permute.xlu0 %4978
    %4980 = vrot.lane.b32.xlu0 %v4835, 48
    %v4981 = vpop.permute.xlu0 %4980
    %4982 = vrot.lane.b32.xlu0 %v4836, 48
    %v4983 = vpop.permute.xlu0 %4982
    %4984 = vrot.lane.b32.xlu0 %v4837, 48
    %v4985 = vpop.permute.xlu0 %4984
    %4986 = vrot.lane.b32.xlu0 %v4838, 48
    %v4987 = vpop.permute.xlu0 %4986
    %4988 = vrot.lane.b32.xlu0 %v4839, 48
    %v4989 = vpop.permute.xlu0 %4988
    %4990 = vrot.lane.b32.xlu0 %v4840, 48
    %v4991 = vpop.permute.xlu0 %4990
    %4992 = vrot.lane.b32.xlu0 %v4841, 48
    %v4993 = vpop.permute.xlu0 %4992
    %4994 = vrot.lane.b32.xlu0 %v4842, 48
    %v4995 = vpop.permute.xlu0 %4994
    %4996 = vrot.lane.b32.xlu0 %v4843, 48
    %v4997 = vpop.permute.xlu0 %4996
    %4998 = vrot.lane.b32.xlu0 %v4844, 48
    %v4999 = vpop.permute.xlu0 %4998
    %5000 = vrot.lane.b32.xlu0 %v4845, 48
    %v5001 = vpop.permute.xlu0 %5000
    %5002 = vrot.lane.b32.xlu0 %v4846, 48
    %v5003 = vpop.permute.xlu0 %5002
    %5004 = vrot.lane.b32.xlu0 %v4847, 48
    %v5005 = vpop.permute.xlu0 %5004
    %5006 = vrot.lane.b32.xlu0 %v4848, 48
    %v5007 = vpop.permute.xlu0 %5006
    %5008 = vrot.lane.b32.xlu0 %v4849, 48
    %v5009 = vpop.permute.xlu0 %5008
    %5010 = vrot.lane.b32.xlu0 %v4850, 48
    %v5011 = vpop.permute.xlu0 %5010
    %5012 = vrot.lane.b32.xlu0 %v4851, 48
    %v5013 = vpop.permute.xlu0 %5012
    %5014 = vrot.lane.b32.xlu0 %v4852, 48
    %v5015 = vpop.permute.xlu0 %5014
    %5016 = vrot.lane.b32.xlu0 %v4853, 48
    %v5017 = vpop.permute.xlu0 %5016
    %5018 = vrot.lane.b32.xlu0 %v4854, 48
    %v5019 = vpop.permute.xlu0 %5018
    %5020 = vrot.lane.b32.xlu0 %v4855, 48
    %v5021 = vpop.permute.xlu0 %5020
    %5022 = vrot.lane.b32.xlu0 %v4856, 48
    %v5023 = vpop.permute.xlu0 %5022
    %5024 = vrot.lane.b32.xlu0 %v4857, 48
    %v5025 = vpop.permute.xlu0 %5024
    %5026 = vrot.lane.b32.xlu0 %v4858, 48
    %v5027 = vpop.permute.xlu0 %5026
    %5028 = vrot.lane.b32.xlu0 %v4859, 48
    %v5029 = vpop.permute.xlu0 %5028
    %5030 = vrot.lane.b32.xlu0 %v4860, 48
    %v5031 = vpop.permute.xlu0 %5030
    %5032 = vrot.lane.b32.xlu0 %v4861, 48
    %v5033 = vpop.permute.xlu0 %5032
    %5034 = vrot.lane.b32.xlu0 %v4862, 48
    %v5035 = vpop.permute.xlu0 %5034
    %5036 = vrot.lane.b32.xlu0 %v4863, 48
    %v5037 = vpop.permute.xlu0 %5036
    %5038 = vrot.lane.b32.xlu0 %v4864, 48
    %v5039 = vpop.permute.xlu0 %5038
    %5040 = vrot.lane.b32.xlu0 %v4865, 48
    %v5041 = vpop.permute.xlu0 %5040
    %5042 = vrot.lane.b32.xlu0 %v4866, 48
    %v5043 = vpop.permute.xlu0 %5042
    %5044 = vrot.lane.b32.xlu0 %v4867, 48
    %v5045 = vpop.permute.xlu0 %5044
    %5046 = vrot.lane.b32.xlu0 %v4868, 48
    %v5047 = vpop.permute.xlu0 %5046
    %5048 = vrot.lane.b32.xlu0 %v4869, 48
    %v5049 = vpop.permute.xlu0 %5048
    %5050 = vrot.lane.b32.xlu0 %v4870, 48
    %v5051 = vpop.permute.xlu0 %5050
    %5052 = vrot.lane.b32.xlu0 %v4871, 48
    %v5053 = vpop.permute.xlu0 %5052
    %5054 = vrot.lane.b32.xlu0 %v4872, 48
    %v5055 = vpop.permute.xlu0 %5054
    %5056 = vrot.lane.b32.xlu0 %v4873, 48
    %v5057 = vpop.permute.xlu0 %5056
    %5058 = vrot.lane.b32.xlu0 %v4874, 48
    %v5059 = vpop.permute.xlu0 %5058
    %5060 = vrot.lane.b32.xlu0 %v4875, 48
    %v5061 = vpop.permute.xlu0 %5060
    %5062 = vrot.lane.b32.xlu0 %v4876, 48
    %v5063 = vpop.permute.xlu0 %5062
    %5064 = vrot.lane.b32.xlu0 %v4877, 48
    %v5065 = vpop.permute.xlu0 %5064
    %5066 = vrot.lane.b32.xlu0 %v4878, 48
    %v5067 = vpop.permute.xlu0 %5066
    %5068 = vrot.lane.b32.xlu0 %v4879, 48
    %v5069 = vpop.permute.xlu0 %5068
    %5070 = vrot.lane.b32.xlu0 %v4880, 48
    %v5071 = vpop.permute.xlu0 %5070
    %5072 = vrot.lane.b32.xlu0 %v4881, 48
    %v5073 = vpop.permute.xlu0 %5072
    %vm5138 = vcmask 523648
    %5139 = vst.msk [vmem:[#allocation4] sm:$0xff] %vm5138, %v4947
    %5140 = vst.msk [vmem:[#allocation4 + $0x10] sm:$0xff] %vm5138, %v4949
    %5141 = vst.msk [vmem:[#allocation4 + $0x20] sm:$0xff] %vm5138, %v4951
    %5142 = vst.msk [vmem:[#allocation4 + $0x30] sm:$0xff] %vm5138, %v4953
    %5143 = vst.msk [vmem:[#allocation4 + $0x40] sm:$0xff] %vm5138, %v4955
    %5144 = vst.msk [vmem:[#allocation4 + $0x50] sm:$0xff] %vm5138, %v4957
    %5145 = vst.msk [vmem:[#allocation4 + $0x60] sm:$0xff] %vm5138, %v4959
    %5146 = vst.msk [vmem:[#allocation4 + $0x70] sm:$0xff] %vm5138, %v4961
    %5147 = vst.msk [vmem:[#allocation4 + $0x80] sm:$0xff] %vm5138, %v4963
    %5148 = vst.msk [vmem:[#allocation4 + $0x90] sm:$0xff] %vm5138, %v4965
    %5149 = vst.msk [vmem:[#allocation4 + $0xa0] sm:$0xff] %vm5138, %v4967
    %5150 = vst.msk [vmem:[#allocation4 + $0xb0] sm:$0xff] %vm5138, %v4969
    %5151 = vst.msk [vmem:[#allocation4 + $0xc0] sm:$0xff] %vm5138, %v4971
    %5152 = vst.msk [vmem:[#allocation4 + $0xd0] sm:$0xff] %vm5138, %v4973
    %5153 = vst.msk [vmem:[#allocation4 + $0xe0] sm:$0xff] %vm5138, %v4975
    %5154 = vst.msk [vmem:[#allocation4 + $0xf0] sm:$0xff] %vm5138, %v4977
    %5155 = vst.msk [vmem:[#allocation4 + $0x100] sm:$0xff] %vm5138, %v4979
    %5156 = vst.msk [vmem:[#allocation4 + $0x110] sm:$0xff] %vm5138, %v4981
    %5157 = vst.msk [vmem:[#allocation4 + $0x120] sm:$0xff] %vm5138, %v4983
    %5158 = vst.msk [vmem:[#allocation4 + $0x130] sm:$0xff] %vm5138, %v4985
    %5159 = vst.msk [vmem:[#allocation4 + $0x140] sm:$0xff] %vm5138, %v4987
    %5160 = vst.msk [vmem:[#allocation4 + $0x150] sm:$0xff] %vm5138, %v4989
    %5161 = vst.msk [vmem:[#allocation4 + $0x160] sm:$0xff] %vm5138, %v4991
    %5162 = vst.msk [vmem:[#allocation4 + $0x170] sm:$0xff] %vm5138, %v4993
    %5163 = vst.msk [vmem:[#allocation4 + $0x180] sm:$0xff] %vm5138, %v4995
    %5164 = vst.msk [vmem:[#allocation4 + $0x190] sm:$0xff] %vm5138, %v4997
    %5165 = vst.msk [vmem:[#allocation4 + $0x1a0] sm:$0xff] %vm5138, %v4999
    %5166 = vst.msk [vmem:[#allocation4 + $0x1b0] sm:$0xff] %vm5138, %v5001
    %5167 = vst.msk [vmem:[#allocation4 + $0x1c0] sm:$0xff] %vm5138, %v5003
    %5168 = vst.msk [vmem:[#allocation4 + $0x1d0] sm:$0xff] %vm5138, %v5005
    %5169 = vst.msk [vmem:[#allocation4 + $0x1e0] sm:$0xff] %vm5138, %v5007
    %5170 = vst.msk [vmem:[#allocation4 + $0x1f0] sm:$0xff] %vm5138, %v5009
    %5171 = vst.msk [vmem:[#allocation4 + $0x200] sm:$0xff] %vm5138, %v5011
    %5172 = vst.msk [vmem:[#allocation4 + $0x210] sm:$0xff] %vm5138, %v5013
    %5173 = vst.msk [vmem:[#allocation4 + $0x220] sm:$0xff] %vm5138, %v5015
    %5174 = vst.msk [vmem:[#allocation4 + $0x230] sm:$0xff] %vm5138, %v5017
    %5175 = vst.msk [vmem:[#allocation4 + $0x240] sm:$0xff] %vm5138, %v5019
    %5176 = vst.msk [vmem:[#allocation4 + $0x250] sm:$0xff] %vm5138, %v5021
    %5177 = vst.msk [vmem:[#allocation4 + $0x260] sm:$0xff] %vm5138, %v5023
    %5178 = vst.msk [vmem:[#allocation4 + $0x270] sm:$0xff] %vm5138, %v5025
    %5179 = vst.msk [vmem:[#allocation4 + $0x280] sm:$0xff] %vm5138, %v5027
    %5180 = vst.msk [vmem:[#allocation4 + $0x290] sm:$0xff] %vm5138, %v5029
    %5181 = vst.msk [vmem:[#allocation4 + $0x2a0] sm:$0xff] %vm5138, %v5031
    %5182 = vst.msk [vmem:[#allocation4 + $0x2b0] sm:$0xff] %vm5138, %v5033
    %5183 = vst.msk [vmem:[#allocation4 + $0x2c0] sm:$0xff] %vm5138, %v5035
    %5184 = vst.msk [vmem:[#allocation4 + $0x2d0] sm:$0xff] %vm5138, %v5037
    %5185 = vst.msk [vmem:[#allocation4 + $0x2e0] sm:$0xff] %vm5138, %v5039
    %5186 = vst.msk [vmem:[#allocation4 + $0x2f0] sm:$0xff] %vm5138, %v5041
    %5187 = vst.msk [vmem:[#allocation4 + $0x300] sm:$0xff] %vm5138, %v5043
    %5188 = vst.msk [vmem:[#allocation4 + $0x310] sm:$0xff] %vm5138, %v5045
    %5189 = vst.msk [vmem:[#allocation4 + $0x320] sm:$0xff] %vm5138, %v5047
    %5190 = vst.msk [vmem:[#allocation4 + $0x330] sm:$0xff] %vm5138, %v5049
    %5191 = vst.msk [vmem:[#allocation4 + $0x340] sm:$0xff] %vm5138, %v5051
    %5192 = vst.msk [vmem:[#allocation4 + $0x350] sm:$0xff] %vm5138, %v5053
    %5193 = vst.msk [vmem:[#allocation4 + $0x360] sm:$0xff] %vm5138, %v5055
    %5194 = vst.msk [vmem:[#allocation4 + $0x370] sm:$0xff] %vm5138, %v5057
    %5195 = vst.msk [vmem:[#allocation4 + $0x380] sm:$0xff] %vm5138, %v5059
    %5196 = vst.msk [vmem:[#allocation4 + $0x390] sm:$0xff] %vm5138, %v5061
    %5197 = vst.msk [vmem:[#allocation4 + $0x3a0] sm:$0xff] %vm5138, %v5063
    %5198 = vst.msk [vmem:[#allocation4 + $0x3b0] sm:$0xff] %vm5138, %v5065
    %5199 = vst.msk [vmem:[#allocation4 + $0x3c0] sm:$0xff] %vm5138, %v5067
    %5200 = vst.msk [vmem:[#allocation4 + $0x3d0] sm:$0xff] %vm5138, %v5069
    %5201 = vst.msk [vmem:[#allocation4 + $0x3e0] sm:$0xff] %vm5138, %v5071
    %5202 = vst.msk [vmem:[#allocation4 + $0x3f0] sm:$0xff] %vm5138, %v5073
    %v5203 = vld [vmem:[%s3855 + $0x1] sm:$0xff]
    %v5204 = vld [vmem:[%s3855 + $0x9] sm:$0xff]
    %v5205 = vld [vmem:[%s3855 + $0x19] sm:$0xff]
    %v5206 = vld [vmem:[%s3855 + $0x21] sm:$0xff]
    %v5207 = vld [vmem:[%s3855 + $0x31] sm:$0xff]
    %v5208 = vld [vmem:[%s3855 + $0x39] sm:$0xff]
    %v5209 = vld [vmem:[%s3855 + $0x49] sm:$0xff]
    %v5210 = vld [vmem:[%s3855 + $0x51] sm:$0xff]
    %v5211 = vld [vmem:[%s3855 + $0x61] sm:$0xff]
    %v5212 = vld [vmem:[%s3855 + $0x69] sm:$0xff]
    %v5213 = vld [vmem:[%s3855 + $0x79] sm:$0xff]
    %v5214 = vld [vmem:[%s3855 + $0x81] sm:$0xff]
    %v5215 = vld [vmem:[%s3855 + $0x91] sm:$0xff]
    %v5216 = vld [vmem:[%s3855 + $0x99] sm:$0xff]
    %v5217 = vld [vmem:[%s3855 + $0xa9] sm:$0xff]
    %v5218 = vld [vmem:[%s3855 + $0xb1] sm:$0xff]
    %v5219 = vld [vmem:[%s3855 + $0xc1] sm:$0xff]
    %v5220 = vld [vmem:[%s3855 + $0xc9] sm:$0xff]
    %v5221 = vld [vmem:[%s3855 + $0xd9] sm:$0xff]
    %v5222 = vld [vmem:[%s3855 + $0xe1] sm:$0xff]
    %v5223 = vld [vmem:[%s3855 + $0xf1] sm:$0xff]
    %v5224 = vld [vmem:[%s3855 + $0xf9] sm:$0xff]
    %v5225 = vld [vmem:[%s3855 + $0x109] sm:$0xff]
    %v5226 = vld [vmem:[%s3855 + $0x111] sm:$0xff]
    %v5227 = vld [vmem:[%s3855 + $0x121] sm:$0xff]
    %v5228 = vld [vmem:[%s3855 + $0x129] sm:$0xff]
    %v5229 = vld [vmem:[%s3855 + $0x139] sm:$0xff]
    %v5230 = vld [vmem:[%s3855 + $0x141] sm:$0xff]
    %v5231 = vld [vmem:[%s3855 + $0x151] sm:$0xff]
    %v5232 = vld [vmem:[%s3855 + $0x159] sm:$0xff]
    %v5233 = vld [vmem:[%s3855 + $0x169] sm:$0xff]
    %v5234 = vld [vmem:[%s3855 + $0x171] sm:$0xff]
    %v5235 = vld [vmem:[%s3855 + $0x1b1] sm:$0xff]
    %v5236 = vld [vmem:[%s3855 + $0x1b9] sm:$0xff]
    %v5237 = vld [vmem:[%s3855 + $0x1c9] sm:$0xff]
    %v5238 = vld [vmem:[%s3855 + $0x1d1] sm:$0xff]
    %v5239 = vld [vmem:[%s3855 + $0x1e1] sm:$0xff]
    %v5240 = vld [vmem:[%s3855 + $0x1e9] sm:$0xff]
    %v5241 = vld [vmem:[%s3855 + $0x1f9] sm:$0xff]
    %v5242 = vld [vmem:[%s3855 + $0x201] sm:$0xff]
    %v5243 = vld [vmem:[%s3855 + $0x211] sm:$0xff]
    %v5244 = vld [vmem:[%s3855 + $0x219] sm:$0xff]
    %v5245 = vld [vmem:[%s3855 + $0x229] sm:$0xff]
    %v5246 = vld [vmem:[%s3855 + $0x231] sm:$0xff]
    %v5247 = vld [vmem:[%s3855 + $0x241] sm:$0xff]
    %v5248 = vld [vmem:[%s3855 + $0x249] sm:$0xff]
    %v5249 = vld [vmem:[%s3855 + $0x259] sm:$0xff]
    %v5250 = vld [vmem:[%s3855 + $0x261] sm:$0xff]
    %v5251 = vld [vmem:[%s3855 + $0x271] sm:$0xff]
    %v5252 = vld [vmem:[%s3855 + $0x279] sm:$0xff]
    %v5253 = vld [vmem:[%s3855 + $0x289] sm:$0xff]
    %v5254 = vld [vmem:[%s3855 + $0x291] sm:$0xff]
    %v5255 = vld [vmem:[%s3855 + $0x2a1] sm:$0xff]
    %v5256 = vld [vmem:[%s3855 + $0x2a9] sm:$0xff]
    %v5257 = vld [vmem:[%s3855 + $0x2b9] sm:$0xff]
    %v5258 = vld [vmem:[%s3855 + $0x2c1] sm:$0xff]
    %v5259 = vld [vmem:[%s3855 + $0x2d1] sm:$0xff]
    %v5260 = vld [vmem:[%s3855 + $0x2d9] sm:$0xff]
    %v5261 = vld [vmem:[%s3855 + $0x2e9] sm:$0xff]
    %v5262 = vld [vmem:[%s3855 + $0x2f1] sm:$0xff]
    %v5263 = vld [vmem:[%s3855 + $0x301] sm:$0xff]
    %v5264 = vld [vmem:[%s3855 + $0x309] sm:$0xff]
    %v5265 = vld [vmem:[%s3855 + $0x319] sm:$0xff]
    %v5266 = vld [vmem:[%s3855 + $0x321] sm:$0xff]
    %5331 = vrot.lane.b32.xlu0 %v5203, 64
    %v5332 = vpop.permute.xlu0 %5331
    %5333 = vrot.lane.b32.xlu0 %v5204, 64
    %v5334 = vpop.permute.xlu0 %5333
    %5335 = vrot.lane.b32.xlu0 %v5205, 64
    %v5336 = vpop.permute.xlu0 %5335
    %5337 = vrot.lane.b32.xlu0 %v5206, 64
    %v5338 = vpop.permute.xlu0 %5337
    %5339 = vrot.lane.b32.xlu0 %v5207, 64
    %v5340 = vpop.permute.xlu0 %5339
    %5341 = vrot.lane.b32.xlu0 %v5208, 64
    %v5342 = vpop.permute.xlu0 %5341
    %5343 = vrot.lane.b32.xlu0 %v5209, 64
    %v5344 = vpop.permute.xlu0 %5343
    %5345 = vrot.lane.b32.xlu0 %v5210, 64
    %v5346 = vpop.permute.xlu0 %5345
    %5347 = vrot.lane.b32.xlu0 %v5211, 64
    %v5348 = vpop.permute.xlu0 %5347
    %5349 = vrot.lane.b32.xlu0 %v5212, 64
    %v5350 = vpop.permute.xlu0 %5349
    %5351 = vrot.lane.b32.xlu0 %v5213, 64
    %v5352 = vpop.permute.xlu0 %5351
    %5353 = vrot.lane.b32.xlu0 %v5214, 64
    %v5354 = vpop.permute.xlu0 %5353
    %5355 = vrot.lane.b32.xlu0 %v5215, 64
    %v5356 = vpop.permute.xlu0 %5355
    %5357 = vrot.lane.b32.xlu0 %v5216, 64
    %v5358 = vpop.permute.xlu0 %5357
    %5359 = vrot.lane.b32.xlu0 %v5217, 64
    %v5360 = vpop.permute.xlu0 %5359
    %5361 = vrot.lane.b32.xlu0 %v5218, 64
    %v5362 = vpop.permute.xlu0 %5361
    %5363 = vrot.lane.b32.xlu0 %v5219, 64
    %v5364 = vpop.permute.xlu0 %5363
    %5365 = vrot.lane.b32.xlu0 %v5220, 64
    %v5366 = vpop.permute.xlu0 %5365
    %5367 = vrot.lane.b32.xlu0 %v5221, 64
    %v5368 = vpop.permute.xlu0 %5367
    %5369 = vrot.lane.b32.xlu0 %v5222, 64
    %v5370 = vpop.permute.xlu0 %5369
    %5371 = vrot.lane.b32.xlu0 %v5223, 64
    %v5372 = vpop.permute.xlu0 %5371
    %5373 = vrot.lane.b32.xlu0 %v5224, 64
    %v5374 = vpop.permute.xlu0 %5373
    %5375 = vrot.lane.b32.xlu0 %v5225, 64
    %v5376 = vpop.permute.xlu0 %5375
    %5377 = vrot.lane.b32.xlu0 %v5226, 64
    %v5378 = vpop.permute.xlu0 %5377
    %5379 = vrot.lane.b32.xlu0 %v5227, 64
    %v5380 = vpop.permute.xlu0 %5379
    %5381 = vrot.lane.b32.xlu0 %v5228, 64
    %v5382 = vpop.permute.xlu0 %5381
    %5383 = vrot.lane.b32.xlu0 %v5229, 64
    %v5384 = vpop.permute.xlu0 %5383
    %5385 = vrot.lane.b32.xlu0 %v5230, 64
    %v5386 = vpop.permute.xlu0 %5385
    %5387 = vrot.lane.b32.xlu0 %v5231, 64
    %v5388 = vpop.permute.xlu0 %5387
    %5389 = vrot.lane.b32.xlu0 %v5232, 64
    %v5390 = vpop.permute.xlu0 %5389
    %5391 = vrot.lane.b32.xlu0 %v5233, 64
    %v5392 = vpop.permute.xlu0 %5391
    %5393 = vrot.lane.b32.xlu0 %v5234, 64
    %v5394 = vpop.permute.xlu0 %5393
    %5395 = vrot.lane.b32.xlu0 %v5235, 64
    %v5396 = vpop.permute.xlu0 %5395
    %5397 = vrot.lane.b32.xlu0 %v5236, 64
    %v5398 = vpop.permute.xlu0 %5397
    %5399 = vrot.lane.b32.xlu0 %v5237, 64
    %v5400 = vpop.permute.xlu0 %5399
    %5401 = vrot.lane.b32.xlu0 %v5238, 64
    %v5402 = vpop.permute.xlu0 %5401
    %5403 = vrot.lane.b32.xlu0 %v5239, 64
    %v5404 = vpop.permute.xlu0 %5403
    %5405 = vrot.lane.b32.xlu0 %v5240, 64
    %v5406 = vpop.permute.xlu0 %5405
    %5407 = vrot.lane.b32.xlu0 %v5241, 64
    %v5408 = vpop.permute.xlu0 %5407
    %5409 = vrot.lane.b32.xlu0 %v5242, 64
    %v5410 = vpop.permute.xlu0 %5409
    %5411 = vrot.lane.b32.xlu0 %v5243, 64
    %v5412 = vpop.permute.xlu0 %5411
    %5413 = vrot.lane.b32.xlu0 %v5244, 64
    %v5414 = vpop.permute.xlu0 %5413
    %5415 = vrot.lane.b32.xlu0 %v5245, 64
    %v5416 = vpop.permute.xlu0 %5415
    %5417 = vrot.lane.b32.xlu0 %v5246, 64
    %v5418 = vpop.permute.xlu0 %5417
    %5419 = vrot.lane.b32.xlu0 %v5247, 64
    %v5420 = vpop.permute.xlu0 %5419
    %5421 = vrot.lane.b32.xlu0 %v5248, 64
    %v5422 = vpop.permute.xlu0 %5421
    %5423 = vrot.lane.b32.xlu0 %v5249, 64
    %v5424 = vpop.permute.xlu0 %5423
    %5425 = vrot.lane.b32.xlu0 %v5250, 64
    %v5426 = vpop.permute.xlu0 %5425
    %5427 = vrot.lane.b32.xlu0 %v5251, 64
    %v5428 = vpop.permute.xlu0 %5427
    %5429 = vrot.lane.b32.xlu0 %v5252, 64
    %v5430 = vpop.permute.xlu0 %5429
    %5431 = vrot.lane.b32.xlu0 %v5253, 64
    %v5432 = vpop.permute.xlu0 %5431
    %5433 = vrot.lane.b32.xlu0 %v5254, 64
    %v5434 = vpop.permute.xlu0 %5433
    %5435 = vrot.lane.b32.xlu0 %v5255, 64
    %v5436 = vpop.permute.xlu0 %5435
    %5437 = vrot.lane.b32.xlu0 %v5256, 64
    %v5438 = vpop.permute.xlu0 %5437
    %5439 = vrot.lane.b32.xlu0 %v5257, 64
    %v5440 = vpop.permute.xlu0 %5439
    %5441 = vrot.lane.b32.xlu0 %v5258, 64
    %v5442 = vpop.permute.xlu0 %5441
    %5443 = vrot.lane.b32.xlu0 %v5259, 64
    %v5444 = vpop.permute.xlu0 %5443
    %5445 = vrot.lane.b32.xlu0 %v5260, 64
    %v5446 = vpop.permute.xlu0 %5445
    %5447 = vrot.lane.b32.xlu0 %v5261, 64
    %v5448 = vpop.permute.xlu0 %5447
    %5449 = vrot.lane.b32.xlu0 %v5262, 64
    %v5450 = vpop.permute.xlu0 %5449
    %5451 = vrot.lane.b32.xlu0 %v5263, 64
    %v5452 = vpop.permute.xlu0 %5451
    %5453 = vrot.lane.b32.xlu0 %v5264, 64
    %v5454 = vpop.permute.xlu0 %5453
    %5455 = vrot.lane.b32.xlu0 %v5265, 64
    %v5456 = vpop.permute.xlu0 %5455
    %5457 = vrot.lane.b32.xlu0 %v5266, 64
    %v5458 = vpop.permute.xlu0 %5457
    %vm5523 = vcmask 654848
    %5524 = vst.msk [vmem:[#allocation4] sm:$0xff] %vm5523, %v5332
    %5525 = vst.msk [vmem:[#allocation4 + $0x10] sm:$0xff] %vm5523, %v5334
    %5526 = vst.msk [vmem:[#allocation4 + $0x20] sm:$0xff] %vm5523, %v5336
    %5527 = vst.msk [vmem:[#allocation4 + $0x30] sm:$0xff] %vm5523, %v5338
    %5528 = vst.msk [vmem:[#allocation4 + $0x40] sm:$0xff] %vm5523, %v5340
    %5529 = vst.msk [vmem:[#allocation4 + $0x50] sm:$0xff] %vm5523, %v5342
    %5530 = vst.msk [vmem:[#allocation4 + $0x60] sm:$0xff] %vm5523, %v5344
    %5531 = vst.msk [vmem:[#allocation4 + $0x70] sm:$0xff] %vm5523, %v5346
    %5532 = vst.msk [vmem:[#allocation4 + $0x80] sm:$0xff] %vm5523, %v5348
    %5533 = vst.msk [vmem:[#allocation4 + $0x90] sm:$0xff] %vm5523, %v5350
    %5534 = vst.msk [vmem:[#allocation4 + $0xa0] sm:$0xff] %vm5523, %v5352
    %5535 = vst.msk [vmem:[#allocation4 + $0xb0] sm:$0xff] %vm5523, %v5354
    %5536 = vst.msk [vmem:[#allocation4 + $0xc0] sm:$0xff] %vm5523, %v5356
    %5537 = vst.msk [vmem:[#allocation4 + $0xd0] sm:$0xff] %vm5523, %v5358
    %5538 = vst.msk [vmem:[#allocation4 + $0xe0] sm:$0xff] %vm5523, %v5360
    %5539 = vst.msk [vmem:[#allocation4 + $0xf0] sm:$0xff] %vm5523, %v5362
    %5540 = vst.msk [vmem:[#allocation4 + $0x100] sm:$0xff] %vm5523, %v5364
    %5541 = vst.msk [vmem:[#allocation4 + $0x110] sm:$0xff] %vm5523, %v5366
    %5542 = vst.msk [vmem:[#allocation4 + $0x120] sm:$0xff] %vm5523, %v5368
    %5543 = vst.msk [vmem:[#allocation4 + $0x130] sm:$0xff] %vm5523, %v5370
    %5544 = vst.msk [vmem:[#allocation4 + $0x140] sm:$0xff] %vm5523, %v5372
    %5545 = vst.msk [vmem:[#allocation4 + $0x150] sm:$0xff] %vm5523, %v5374
    %5546 = vst.msk [vmem:[#allocation4 + $0x160] sm:$0xff] %vm5523, %v5376
    %5547 = vst.msk [vmem:[#allocation4 + $0x170] sm:$0xff] %vm5523, %v5378
    %5548 = vst.msk [vmem:[#allocation4 + $0x180] sm:$0xff] %vm5523, %v5380
    %5549 = vst.msk [vmem:[#allocation4 + $0x190] sm:$0xff] %vm5523, %v5382
    %5550 = vst.msk [vmem:[#allocation4 + $0x1a0] sm:$0xff] %vm5523, %v5384
    %5551 = vst.msk [vmem:[#allocation4 + $0x1b0] sm:$0xff] %vm5523, %v5386
    %5552 = vst.msk [vmem:[#allocation4 + $0x1c0] sm:$0xff] %vm5523, %v5388
    %5553 = vst.msk [vmem:[#allocation4 + $0x1d0] sm:$0xff] %vm5523, %v5390
    %5554 = vst.msk [vmem:[#allocation4 + $0x1e0] sm:$0xff] %vm5523, %v5392
    %5555 = vst.msk [vmem:[#allocation4 + $0x1f0] sm:$0xff] %vm5523, %v5394
    %5556 = vst.msk [vmem:[#allocation4 + $0x200] sm:$0xff] %vm5523, %v5396
    %5557 = vst.msk [vmem:[#allocation4 + $0x210] sm:$0xff] %vm5523, %v5398
    %5558 = vst.msk [vmem:[#allocation4 + $0x220] sm:$0xff] %vm5523, %v5400
    %5559 = vst.msk [vmem:[#allocation4 + $0x230] sm:$0xff] %vm5523, %v5402
    %5560 = vst.msk [vmem:[#allocation4 + $0x240] sm:$0xff] %vm5523, %v5404
    %5561 = vst.msk [vmem:[#allocation4 + $0x250] sm:$0xff] %vm5523, %v5406
    %5562 = vst.msk [vmem:[#allocation4 + $0x260] sm:$0xff] %vm5523, %v5408
    %5563 = vst.msk [vmem:[#allocation4 + $0x270] sm:$0xff] %vm5523, %v5410
    %5564 = vst.msk [vmem:[#allocation4 + $0x280] sm:$0xff] %vm5523, %v5412
    %5565 = vst.msk [vmem:[#allocation4 + $0x290] sm:$0xff] %vm5523, %v5414
    %5566 = vst.msk [vmem:[#allocation4 + $0x2a0] sm:$0xff] %vm5523, %v5416
    %5567 = vst.msk [vmem:[#allocation4 + $0x2b0] sm:$0xff] %vm5523, %v5418
    %5568 = vst.msk [vmem:[#allocation4 + $0x2c0] sm:$0xff] %vm5523, %v5420
    %5569 = vst.msk [vmem:[#allocation4 + $0x2d0] sm:$0xff] %vm5523, %v5422
    %5570 = vst.msk [vmem:[#allocation4 + $0x2e0] sm:$0xff] %vm5523, %v5424
    %5571 = vst.msk [vmem:[#allocation4 + $0x2f0] sm:$0xff] %vm5523, %v5426
    %5572 = vst.msk [vmem:[#allocation4 + $0x300] sm:$0xff] %vm5523, %v5428
    %5573 = vst.msk [vmem:[#allocation4 + $0x310] sm:$0xff] %vm5523, %v5430
    %5574 = vst.msk [vmem:[#allocation4 + $0x320] sm:$0xff] %vm5523, %v5432
    %5575 = vst.msk [vmem:[#allocation4 + $0x330] sm:$0xff] %vm5523, %v5434
    %5576 = vst.msk [vmem:[#allocation4 + $0x340] sm:$0xff] %vm5523, %v5436
    %5577 = vst.msk [vmem:[#allocation4 + $0x350] sm:$0xff] %vm5523, %v5438
    %5578 = vst.msk [vmem:[#allocation4 + $0x360] sm:$0xff] %vm5523, %v5440
    %5579 = vst.msk [vmem:[#allocation4 + $0x370] sm:$0xff] %vm5523, %v5442
    %5580 = vst.msk [vmem:[#allocation4 + $0x380] sm:$0xff] %vm5523, %v5444
    %5581 = vst.msk [vmem:[#allocation4 + $0x390] sm:$0xff] %vm5523, %v5446
    %5582 = vst.msk [vmem:[#allocation4 + $0x3a0] sm:$0xff] %vm5523, %v5448
    %5583 = vst.msk [vmem:[#allocation4 + $0x3b0] sm:$0xff] %vm5523, %v5450
    %5584 = vst.msk [vmem:[#allocation4 + $0x3c0] sm:$0xff] %vm5523, %v5452
    %5585 = vst.msk [vmem:[#allocation4 + $0x3d0] sm:$0xff] %vm5523, %v5454
    %5586 = vst.msk [vmem:[#allocation4 + $0x3e0] sm:$0xff] %vm5523, %v5456
    %5587 = vst.msk [vmem:[#allocation4 + $0x3f0] sm:$0xff] %vm5523, %v5458
    %v5588 = vld [vmem:[%s3855 + $0x2] sm:$0xff]
    %v5589 = vld [vmem:[%s3855 + $0xa] sm:$0xff]
    %v5590 = vld [vmem:[%s3855 + $0x1a] sm:$0xff]
    %v5591 = vld [vmem:[%s3855 + $0x22] sm:$0xff]
    %v5592 = vld [vmem:[%s3855 + $0x32] sm:$0xff]
    %v5593 = vld [vmem:[%s3855 + $0x3a] sm:$0xff]
    %v5594 = vld [vmem:[%s3855 + $0x4a] sm:$0xff]
    %v5595 = vld [vmem:[%s3855 + $0x52] sm:$0xff]
    %v5596 = vld [vmem:[%s3855 + $0x62] sm:$0xff]
    %v5597 = vld [vmem:[%s3855 + $0x6a] sm:$0xff]
    %v5598 = vld [vmem:[%s3855 + $0x7a] sm:$0xff]
    %v5599 = vld [vmem:[%s3855 + $0x82] sm:$0xff]
    %v5600 = vld [vmem:[%s3855 + $0x92] sm:$0xff]
    %v5601 = vld [vmem:[%s3855 + $0x9a] sm:$0xff]
    %v5602 = vld [vmem:[%s3855 + $0xaa] sm:$0xff]
    %v5603 = vld [vmem:[%s3855 + $0xb2] sm:$0xff]
    %v5604 = vld [vmem:[%s3855 + $0xc2] sm:$0xff]
    %v5605 = vld [vmem:[%s3855 + $0xca] sm:$0xff]
    %v5606 = vld [vmem:[%s3855 + $0xda] sm:$0xff]
    %v5607 = vld [vmem:[%s3855 + $0xe2] sm:$0xff]
    %v5608 = vld [vmem:[%s3855 + $0xf2] sm:$0xff]
    %v5609 = vld [vmem:[%s3855 + $0xfa] sm:$0xff]
    %v5610 = vld [vmem:[%s3855 + $0x10a] sm:$0xff]
    %v5611 = vld [vmem:[%s3855 + $0x112] sm:$0xff]
    %v5612 = vld [vmem:[%s3855 + $0x122] sm:$0xff]
    %v5613 = vld [vmem:[%s3855 + $0x12a] sm:$0xff]
    %v5614 = vld [vmem:[%s3855 + $0x13a] sm:$0xff]
    %v5615 = vld [vmem:[%s3855 + $0x142] sm:$0xff]
    %v5616 = vld [vmem:[%s3855 + $0x152] sm:$0xff]
    %v5617 = vld [vmem:[%s3855 + $0x15a] sm:$0xff]
    %v5618 = vld [vmem:[%s3855 + $0x16a] sm:$0xff]
    %v5619 = vld [vmem:[%s3855 + $0x172] sm:$0xff]
    %v5620 = vld [vmem:[%s3855 + $0x1b2] sm:$0xff]
    %v5621 = vld [vmem:[%s3855 + $0x1ba] sm:$0xff]
    %v5622 = vld [vmem:[%s3855 + $0x1ca] sm:$0xff]
    %v5623 = vld [vmem:[%s3855 + $0x1d2] sm:$0xff]
    %v5624 = vld [vmem:[%s3855 + $0x1e2] sm:$0xff]
    %v5625 = vld [vmem:[%s3855 + $0x1ea] sm:$0xff]
    %v5626 = vld [vmem:[%s3855 + $0x1fa] sm:$0xff]
    %v5627 = vld [vmem:[%s3855 + $0x202] sm:$0xff]
    %v5628 = vld [vmem:[%s3855 + $0x212] sm:$0xff]
    %v5629 = vld [vmem:[%s3855 + $0x21a] sm:$0xff]
    %v5630 = vld [vmem:[%s3855 + $0x22a] sm:$0xff]
    %v5631 = vld [vmem:[%s3855 + $0x232] sm:$0xff]
    %v5632 = vld [vmem:[%s3855 + $0x242] sm:$0xff]
    %v5633 = vld [vmem:[%s3855 + $0x24a] sm:$0xff]
    %v5634 = vld [vmem:[%s3855 + $0x25a] sm:$0xff]
    %v5635 = vld [vmem:[%s3855 + $0x262] sm:$0xff]
    %v5636 = vld [vmem:[%s3855 + $0x272] sm:$0xff]
    %v5637 = vld [vmem:[%s3855 + $0x27a] sm:$0xff]
    %v5638 = vld [vmem:[%s3855 + $0x28a] sm:$0xff]
    %v5639 = vld [vmem:[%s3855 + $0x292] sm:$0xff]
    %v5640 = vld [vmem:[%s3855 + $0x2a2] sm:$0xff]
    %v5641 = vld [vmem:[%s3855 + $0x2aa] sm:$0xff]
    %v5642 = vld [vmem:[%s3855 + $0x2ba] sm:$0xff]
    %v5643 = vld [vmem:[%s3855 + $0x2c2] sm:$0xff]
    %v5644 = vld [vmem:[%s3855 + $0x2d2] sm:$0xff]
    %v5645 = vld [vmem:[%s3855 + $0x2da] sm:$0xff]
    %v5646 = vld [vmem:[%s3855 + $0x2ea] sm:$0xff]
    %v5647 = vld [vmem:[%s3855 + $0x2f2] sm:$0xff]
    %v5648 = vld [vmem:[%s3855 + $0x302] sm:$0xff]
    %v5649 = vld [vmem:[%s3855 + $0x30a] sm:$0xff]
    %v5650 = vld [vmem:[%s3855 + $0x31a] sm:$0xff]
    %v5651 = vld [vmem:[%s3855 + $0x322] sm:$0xff]
    %5716 = vrot.lane.b32.xlu0 %v5588, 80
    %v5717 = vpop.permute.xlu0 %5716
    %5718 = vrot.lane.b32.xlu0 %v5589, 80
    %v5719 = vpop.permute.xlu0 %5718
    %5720 = vrot.lane.b32.xlu0 %v5590, 80
    %v5721 = vpop.permute.xlu0 %5720
    %5722 = vrot.lane.b32.xlu0 %v5591, 80
    %v5723 = vpop.permute.xlu0 %5722
    %5724 = vrot.lane.b32.xlu0 %v5592, 80
    %v5725 = vpop.permute.xlu0 %5724
    %5726 = vrot.lane.b32.xlu0 %v5593, 80
    %v5727 = vpop.permute.xlu0 %5726
    %5728 = vrot.lane.b32.xlu0 %v5594, 80
    %v5729 = vpop.permute.xlu0 %5728
    %5730 = vrot.lane.b32.xlu0 %v5595, 80
    %v5731 = vpop.permute.xlu0 %5730
    %5732 = vrot.lane.b32.xlu0 %v5596, 80
    %v5733 = vpop.permute.xlu0 %5732
    %5734 = vrot.lane.b32.xlu0 %v5597, 80
    %v5735 = vpop.permute.xlu0 %5734
    %5736 = vrot.lane.b32.xlu0 %v5598, 80
    %v5737 = vpop.permute.xlu0 %5736
    %5738 = vrot.lane.b32.xlu0 %v5599, 80
    %v5739 = vpop.permute.xlu0 %5738
    %5740 = vrot.lane.b32.xlu0 %v5600, 80
    %v5741 = vpop.permute.xlu0 %5740
    %5742 = vrot.lane.b32.xlu0 %v5601, 80
    %v5743 = vpop.permute.xlu0 %5742
    %5744 = vrot.lane.b32.xlu0 %v5602, 80
    %v5745 = vpop.permute.xlu0 %5744
    %5746 = vrot.lane.b32.xlu0 %v5603, 80
    %v5747 = vpop.permute.xlu0 %5746
    %5748 = vrot.lane.b32.xlu0 %v5604, 80
    %v5749 = vpop.permute.xlu0 %5748
    %5750 = vrot.lane.b32.xlu0 %v5605, 80
    %v5751 = vpop.permute.xlu0 %5750
    %5752 = vrot.lane.b32.xlu0 %v5606, 80
    %v5753 = vpop.permute.xlu0 %5752
    %5754 = vrot.lane.b32.xlu0 %v5607, 80
    %v5755 = vpop.permute.xlu0 %5754
    %5756 = vrot.lane.b32.xlu0 %v5608, 80
    %v5757 = vpop.permute.xlu0 %5756
    %5758 = vrot.lane.b32.xlu0 %v5609, 80
    %v5759 = vpop.permute.xlu0 %5758
    %5760 = vrot.lane.b32.xlu0 %v5610, 80
    %v5761 = vpop.permute.xlu0 %5760
    %5762 = vrot.lane.b32.xlu0 %v5611, 80
    %v5763 = vpop.permute.xlu0 %5762
    %5764 = vrot.lane.b32.xlu0 %v5612, 80
    %v5765 = vpop.permute.xlu0 %5764
    %5766 = vrot.lane.b32.xlu0 %v5613, 80
    %v5767 = vpop.permute.xlu0 %5766
    %5768 = vrot.lane.b32.xlu0 %v5614, 80
    %v5769 = vpop.permute.xlu0 %5768
    %5770 = vrot.lane.b32.xlu0 %v5615, 80
    %v5771 = vpop.permute.xlu0 %5770
    %5772 = vrot.lane.b32.xlu0 %v5616, 80
    %v5773 = vpop.permute.xlu0 %5772
    %5774 = vrot.lane.b32.xlu0 %v5617, 80
    %v5775 = vpop.permute.xlu0 %5774
    %5776 = vrot.lane.b32.xlu0 %v5618, 80
    %v5777 = vpop.permute.xlu0 %5776
    %5778 = vrot.lane.b32.xlu0 %v5619, 80
    %v5779 = vpop.permute.xlu0 %5778
    %5780 = vrot.lane.b32.xlu0 %v5620, 80
    %v5781 = vpop.permute.xlu0 %5780
    %5782 = vrot.lane.b32.xlu0 %v5621, 80
    %v5783 = vpop.permute.xlu0 %5782
    %5784 = vrot.lane.b32.xlu0 %v5622, 80
    %v5785 = vpop.permute.xlu0 %5784
    %5786 = vrot.lane.b32.xlu0 %v5623, 80
    %v5787 = vpop.permute.xlu0 %5786
    %5788 = vrot.lane.b32.xlu0 %v5624, 80
    %v5789 = vpop.permute.xlu0 %5788
    %5790 = vrot.lane.b32.xlu0 %v5625, 80
    %v5791 = vpop.permute.xlu0 %5790
    %5792 = vrot.lane.b32.xlu0 %v5626, 80
    %v5793 = vpop.permute.xlu0 %5792
    %5794 = vrot.lane.b32.xlu0 %v5627, 80
    %v5795 = vpop.permute.xlu0 %5794
    %5796 = vrot.lane.b32.xlu0 %v5628, 80
    %v5797 = vpop.permute.xlu0 %5796
    %5798 = vrot.lane.b32.xlu0 %v5629, 80
    %v5799 = vpop.permute.xlu0 %5798
    %5800 = vrot.lane.b32.xlu0 %v5630, 80
    %v5801 = vpop.permute.xlu0 %5800
    %5802 = vrot.lane.b32.xlu0 %v5631, 80
    %v5803 = vpop.permute.xlu0 %5802
    %5804 = vrot.lane.b32.xlu0 %v5632, 80
    %v5805 = vpop.permute.xlu0 %5804
    %5806 = vrot.lane.b32.xlu0 %v5633, 80
    %v5807 = vpop.permute.xlu0 %5806
    %5808 = vrot.lane.b32.xlu0 %v5634, 80
    %v5809 = vpop.permute.xlu0 %5808
    %5810 = vrot.lane.b32.xlu0 %v5635, 80
    %v5811 = vpop.permute.xlu0 %5810
    %5812 = vrot.lane.b32.xlu0 %v5636, 80
    %v5813 = vpop.permute.xlu0 %5812
    %5814 = vrot.lane.b32.xlu0 %v5637, 80
    %v5815 = vpop.permute.xlu0 %5814
    %5816 = vrot.lane.b32.xlu0 %v5638, 80
    %v5817 = vpop.permute.xlu0 %5816
    %5818 = vrot.lane.b32.xlu0 %v5639, 80
    %v5819 = vpop.permute.xlu0 %5818
    %5820 = vrot.lane.b32.xlu0 %v5640, 80
    %v5821 = vpop.permute.xlu0 %5820
    %5822 = vrot.lane.b32.xlu0 %v5641, 80
    %v5823 = vpop.permute.xlu0 %5822
    %5824 = vrot.lane.b32.xlu0 %v5642, 80
    %v5825 = vpop.permute.xlu0 %5824
    %5826 = vrot.lane.b32.xlu0 %v5643, 80
    %v5827 = vpop.permute.xlu0 %5826
    %5828 = vrot.lane.b32.xlu0 %v5644, 80
    %v5829 = vpop.permute.xlu0 %5828
    %5830 = vrot.lane.b32.xlu0 %v5645, 80
    %v5831 = vpop.permute.xlu0 %5830
    %5832 = vrot.lane.b32.xlu0 %v5646, 80
    %v5833 = vpop.permute.xlu0 %5832
    %5834 = vrot.lane.b32.xlu0 %v5647, 80
    %v5835 = vpop.permute.xlu0 %5834
    %5836 = vrot.lane.b32.xlu0 %v5648, 80
    %v5837 = vpop.permute.xlu0 %5836
    %5838 = vrot.lane.b32.xlu0 %v5649, 80
    %v5839 = vpop.permute.xlu0 %5838
    %5840 = vrot.lane.b32.xlu0 %v5650, 80
    %v5841 = vpop.permute.xlu0 %5840
    %5842 = vrot.lane.b32.xlu0 %v5651, 80
    %v5843 = vpop.permute.xlu0 %5842
    %vm5908 = vcmask 786048
    %5909 = vst.msk [vmem:[#allocation4] sm:$0xff] %vm5908, %v5717
    %5910 = vst.msk [vmem:[#allocation4 + $0x10] sm:$0xff] %vm5908, %v5719
    %5911 = vst.msk [vmem:[#allocation4 + $0x20] sm:$0xff] %vm5908, %v5721
    %5912 = vst.msk [vmem:[#allocation4 + $0x30] sm:$0xff] %vm5908, %v5723
    %5913 = vst.msk [vmem:[#allocation4 + $0x40] sm:$0xff] %vm5908, %v5725
    %5914 = vst.msk [vmem:[#allocation4 + $0x50] sm:$0xff] %vm5908, %v5727
    %5915 = vst.msk [vmem:[#allocation4 + $0x60] sm:$0xff] %vm5908, %v5729
    %5916 = vst.msk [vmem:[#allocation4 + $0x70] sm:$0xff] %vm5908, %v5731
    %5917 = vst.msk [vmem:[#allocation4 + $0x80] sm:$0xff] %vm5908, %v5733
    %5918 = vst.msk [vmem:[#allocation4 + $0x90] sm:$0xff] %vm5908, %v5735
    %5919 = vst.msk [vmem:[#allocation4 + $0xa0] sm:$0xff] %vm5908, %v5737
    %5920 = vst.msk [vmem:[#allocation4 + $0xb0] sm:$0xff] %vm5908, %v5739
    %5921 = vst.msk [vmem:[#allocation4 + $0xc0] sm:$0xff] %vm5908, %v5741
    %5922 = vst.msk [vmem:[#allocation4 + $0xd0] sm:$0xff] %vm5908, %v5743
    %5923 = vst.msk [vmem:[#allocation4 + $0xe0] sm:$0xff] %vm5908, %v5745
    %5924 = vst.msk [vmem:[#allocation4 + $0xf0] sm:$0xff] %vm5908, %v5747
    %5925 = vst.msk [vmem:[#allocation4 + $0x100] sm:$0xff] %vm5908, %v5749
    %5926 = vst.msk [vmem:[#allocation4 + $0x110] sm:$0xff] %vm5908, %v5751
    %5927 = vst.msk [vmem:[#allocation4 + $0x120] sm:$0xff] %vm5908, %v5753
    %5928 = vst.msk [vmem:[#allocation4 + $0x130] sm:$0xff] %vm5908, %v5755
    %5929 = vst.msk [vmem:[#allocation4 + $0x140] sm:$0xff] %vm5908, %v5757
    %5930 = vst.msk [vmem:[#allocation4 + $0x150] sm:$0xff] %vm5908, %v5759
    %5931 = vst.msk [vmem:[#allocation4 + $0x160] sm:$0xff] %vm5908, %v5761
    %5932 = vst.msk [vmem:[#allocation4 + $0x170] sm:$0xff] %vm5908, %v5763
    %5933 = vst.msk [vmem:[#allocation4 + $0x180] sm:$0xff] %vm5908, %v5765
    %5934 = vst.msk [vmem:[#allocation4 + $0x190] sm:$0xff] %vm5908, %v5767
    %5935 = vst.msk [vmem:[#allocation4 + $0x1a0] sm:$0xff] %vm5908, %v5769
    %5936 = vst.msk [vmem:[#allocation4 + $0x1b0] sm:$0xff] %vm5908, %v5771
    %5937 = vst.msk [vmem:[#allocation4 + $0x1c0] sm:$0xff] %vm5908, %v5773
    %5938 = vst.msk [vmem:[#allocation4 + $0x1d0] sm:$0xff] %vm5908, %v5775
    %5939 = vst.msk [vmem:[#allocation4 + $0x1e0] sm:$0xff] %vm5908, %v5777
    %5940 = vst.msk [vmem:[#allocation4 + $0x1f0] sm:$0xff] %vm5908, %v5779
    %5941 = vst.msk [vmem:[#allocation4 + $0x200] sm:$0xff] %vm5908, %v5781
    %5942 = vst.msk [vmem:[#allocation4 + $0x210] sm:$0xff] %vm5908, %v5783
    %5943 = vst.msk [vmem:[#allocation4 + $0x220] sm:$0xff] %vm5908, %v5785
    %5944 = vst.msk [vmem:[#allocation4 + $0x230] sm:$0xff] %vm5908, %v5787
    %5945 = vst.msk [vmem:[#allocation4 + $0x240] sm:$0xff] %vm5908, %v5789
    %5946 = vst.msk [vmem:[#allocation4 + $0x250] sm:$0xff] %vm5908, %v5791
    %5947 = vst.msk [vmem:[#allocation4 + $0x260] sm:$0xff] %vm5908, %v5793
    %5948 = vst.msk [vmem:[#allocation4 + $0x270] sm:$0xff] %vm5908, %v5795
    %5949 = vst.msk [vmem:[#allocation4 + $0x280] sm:$0xff] %vm5908, %v5797
    %5950 = vst.msk [vmem:[#allocation4 + $0x290] sm:$0xff] %vm5908, %v5799
    %5951 = vst.msk [vmem:[#allocation4 + $0x2a0] sm:$0xff] %vm5908, %v5801
    %5952 = vst.msk [vmem:[#allocation4 + $0x2b0] sm:$0xff] %vm5908, %v5803
    %5953 = vst.msk [vmem:[#allocation4 + $0x2c0] sm:$0xff] %vm5908, %v5805
    %5954 = vst.msk [vmem:[#allocation4 + $0x2d0] sm:$0xff] %vm5908, %v5807
    %5955 = vst.msk [vmem:[#allocation4 + $0x2e0] sm:$0xff] %vm5908, %v5809
    %5956 = vst.msk [vmem:[#allocation4 + $0x2f0] sm:$0xff] %vm5908, %v5811
    %5957 = vst.msk [vmem:[#allocation4 + $0x300] sm:$0xff] %vm5908, %v5813
    %5958 = vst.msk [vmem:[#allocation4 + $0x310] sm:$0xff] %vm5908, %v5815
    %5959 = vst.msk [vmem:[#allocation4 + $0x320] sm:$0xff] %vm5908, %v5817
    %5960 = vst.msk [vmem:[#allocation4 + $0x330] sm:$0xff] %vm5908, %v5819
    %5961 = vst.msk [vmem:[#allocation4 + $0x340] sm:$0xff] %vm5908, %v5821
    %5962 = vst.msk [vmem:[#allocation4 + $0x350] sm:$0xff] %vm5908, %v5823
    %5963 = vst.msk [vmem:[#allocation4 + $0x360] sm:$0xff] %vm5908, %v5825
    %5964 = vst.msk [vmem:[#allocation4 + $0x370] sm:$0xff] %vm5908, %v5827
    %5965 = vst.msk [vmem:[#allocation4 + $0x380] sm:$0xff] %vm5908, %v5829
    %5966 = vst.msk [vmem:[#allocation4 + $0x390] sm:$0xff] %vm5908, %v5831
    %5967 = vst.msk [vmem:[#allocation4 + $0x3a0] sm:$0xff] %vm5908, %v5833
    %5968 = vst.msk [vmem:[#allocation4 + $0x3b0] sm:$0xff] %vm5908, %v5835
    %5969 = vst.msk [vmem:[#allocation4 + $0x3c0] sm:$0xff] %vm5908, %v5837
    %5970 = vst.msk [vmem:[#allocation4 + $0x3d0] sm:$0xff] %vm5908, %v5839
    %5971 = vst.msk [vmem:[#allocation4 + $0x3e0] sm:$0xff] %vm5908, %v5841
    %5972 = vst.msk [vmem:[#allocation4 + $0x3f0] sm:$0xff] %vm5908, %v5843
    %s5973 = scalar_lea.vmem [#allocation3], 48
    %v5974 = vld [vmem:[%s5973] sm:$0xff]
    %v5975 = vld [vmem:[%s5973 + $0x8] sm:$0xff]
    %v5976 = vld [vmem:[%s5973 + $0x18] sm:$0xff]
    %v5977 = vld [vmem:[%s5973 + $0x20] sm:$0xff]
    %v5978 = vld [vmem:[%s5973 + $0x30] sm:$0xff]
    %v5979 = vld [vmem:[%s5973 + $0x38] sm:$0xff]
    %v5980 = vld [vmem:[%s5973 + $0x48] sm:$0xff]
    %v5981 = vld [vmem:[%s5973 + $0x50] sm:$0xff]
    %v5982 = vld [vmem:[%s5973 + $0x60] sm:$0xff]
    %v5983 = vld [vmem:[%s5973 + $0x68] sm:$0xff]
    %v5984 = vld [vmem:[%s5973 + $0x78] sm:$0xff]
    %v5985 = vld [vmem:[%s5973 + $0x80] sm:$0xff]
    %v5986 = vld [vmem:[%s5973 + $0x90] sm:$0xff]
    %v5987 = vld [vmem:[%s5973 + $0x98] sm:$0xff]
    %v5988 = vld [vmem:[%s5973 + $0xa8] sm:$0xff]
    %v5989 = vld [vmem:[%s5973 + $0xb0] sm:$0xff]
    %v5990 = vld [vmem:[%s5973 + $0xc0] sm:$0xff]
    %v5991 = vld [vmem:[%s5973 + $0xc8] sm:$0xff]
    %v5992 = vld [vmem:[%s5973 + $0xd8] sm:$0xff]
    %v5993 = vld [vmem:[%s5973 + $0xe0] sm:$0xff]
    %v5994 = vld [vmem:[%s5973 + $0xf0] sm:$0xff]
    %v5995 = vld [vmem:[%s5973 + $0xf8] sm:$0xff]
    %v5996 = vld [vmem:[%s5973 + $0x108] sm:$0xff]
    %v5997 = vld [vmem:[%s5973 + $0x110] sm:$0xff]
    %v5998 = vld [vmem:[%s5973 + $0x120] sm:$0xff]
    %v5999 = vld [vmem:[%s5973 + $0x128] sm:$0xff]
    %v6000 = vld [vmem:[%s5973 + $0x138] sm:$0xff]
    %v6001 = vld [vmem:[%s5973 + $0x140] sm:$0xff]
    %v6002 = vld [vmem:[%s5973 + $0x150] sm:$0xff]
    %v6003 = vld [vmem:[%s5973 + $0x158] sm:$0xff]
    %v6004 = vld [vmem:[%s5973 + $0x168] sm:$0xff]
    %v6005 = vld [vmem:[%s5973 + $0x170] sm:$0xff]
    %v6006 = vld [vmem:[%s5973 + $0x1b0] sm:$0xff]
    %v6007 = vld [vmem:[%s5973 + $0x1b8] sm:$0xff]
    %v6008 = vld [vmem:[%s5973 + $0x1c8] sm:$0xff]
    %v6009 = vld [vmem:[%s5973 + $0x1d0] sm:$0xff]
    %v6010 = vld [vmem:[%s5973 + $0x1e0] sm:$0xff]
    %v6011 = vld [vmem:[%s5973 + $0x1e8] sm:$0xff]
    %v6012 = vld [vmem:[%s5973 + $0x1f8] sm:$0xff]
    %v6013 = vld [vmem:[%s5973 + $0x200] sm:$0xff]
    %v6014 = vld [vmem:[%s5973 + $0x210] sm:$0xff]
    %v6015 = vld [vmem:[%s5973 + $0x218] sm:$0xff]
    %v6016 = vld [vmem:[%s5973 + $0x228] sm:$0xff]
    %v6017 = vld [vmem:[%s5973 + $0x230] sm:$0xff]
    %v6018 = vld [vmem:[%s5973 + $0x240] sm:$0xff]
    %v6019 = vld [vmem:[%s5973 + $0x248] sm:$0xff]
    %v6020 = vld [vmem:[%s5973 + $0x258] sm:$0xff]
    %v6021 = vld [vmem:[%s5973 + $0x260] sm:$0xff]
    %v6022 = vld [vmem:[%s5973 + $0x270] sm:$0xff]
    %v6023 = vld [vmem:[%s5973 + $0x278] sm:$0xff]
    %v6024 = vld [vmem:[%s5973 + $0x288] sm:$0xff]
    %v6025 = vld [vmem:[%s5973 + $0x290] sm:$0xff]
    %v6026 = vld [vmem:[%s5973 + $0x2a0] sm:$0xff]
    %v6027 = vld [vmem:[%s5973 + $0x2a8] sm:$0xff]
    %v6028 = vld [vmem:[%s5973 + $0x2b8] sm:$0xff]
    %v6029 = vld [vmem:[%s5973 + $0x2c0] sm:$0xff]
    %v6030 = vld [vmem:[%s5973 + $0x2d0] sm:$0xff]
    %v6031 = vld [vmem:[%s5973 + $0x2d8] sm:$0xff]
    %v6032 = vld [vmem:[%s5973 + $0x2e8] sm:$0xff]
    %v6033 = vld [vmem:[%s5973 + $0x2f0] sm:$0xff]
    %v6034 = vld [vmem:[%s5973 + $0x300] sm:$0xff]
    %v6035 = vld [vmem:[%s5973 + $0x308] sm:$0xff]
    %v6036 = vld [vmem:[%s5973 + $0x318] sm:$0xff]
    %v6037 = vld [vmem:[%s5973 + $0x320] sm:$0xff]
    %6102 = vrot.lane.b32.xlu0 %v5974, 96
    %v6103 = vpop.permute.xlu0 %6102
    %6104 = vrot.lane.b32.xlu0 %v5975, 96
    %v6105 = vpop.permute.xlu0 %6104
    %6106 = vrot.lane.b32.xlu0 %v5976, 96
    %v6107 = vpop.permute.xlu0 %6106
    %6108 = vrot.lane.b32.xlu0 %v5977, 96
    %v6109 = vpop.permute.xlu0 %6108
    %6110 = vrot.lane.b32.xlu0 %v5978, 96
    %v6111 = vpop.permute.xlu0 %6110
    %6112 = vrot.lane.b32.xlu0 %v5979, 96
    %v6113 = vpop.permute.xlu0 %6112
    %6114 = vrot.lane.b32.xlu0 %v5980, 96
    %v6115 = vpop.permute.xlu0 %6114
    %6116 = vrot.lane.b32.xlu0 %v5981, 96
    %v6117 = vpop.permute.xlu0 %6116
    %6118 = vrot.lane.b32.xlu0 %v5982, 96
    %v6119 = vpop.permute.xlu0 %6118
    %6120 = vrot.lane.b32.xlu0 %v5983, 96
    %v6121 = vpop.permute.xlu0 %6120
    %6122 = vrot.lane.b32.xlu0 %v5984, 96
    %v6123 = vpop.permute.xlu0 %6122
    %6124 = vrot.lane.b32.xlu0 %v5985, 96
    %v6125 = vpop.permute.xlu0 %6124
    %6126 = vrot.lane.b32.xlu0 %v5986, 96
    %v6127 = vpop.permute.xlu0 %6126
    %6128 = vrot.lane.b32.xlu0 %v5987, 96
    %v6129 = vpop.permute.xlu0 %6128
    %6130 = vrot.lane.b32.xlu0 %v5988, 96
    %v6131 = vpop.permute.xlu0 %6130
    %6132 = vrot.lane.b32.xlu0 %v5989, 96
    %v6133 = vpop.permute.xlu0 %6132
    %6134 = vrot.lane.b32.xlu0 %v5990, 96
    %v6135 = vpop.permute.xlu0 %6134
    %6136 = vrot.lane.b32.xlu0 %v5991, 96
    %v6137 = vpop.permute.xlu0 %6136
    %6138 = vrot.lane.b32.xlu0 %v5992, 96
    %v6139 = vpop.permute.xlu0 %6138
    %6140 = vrot.lane.b32.xlu0 %v5993, 96
    %v6141 = vpop.permute.xlu0 %6140
    %6142 = vrot.lane.b32.xlu0 %v5994, 96
    %v6143 = vpop.permute.xlu0 %6142
    %6144 = vrot.lane.b32.xlu0 %v5995, 96
    %v6145 = vpop.permute.xlu0 %6144
    %6146 = vrot.lane.b32.xlu0 %v5996, 96
    %v6147 = vpop.permute.xlu0 %6146
    %6148 = vrot.lane.b32.xlu0 %v5997, 96
    %v6149 = vpop.permute.xlu0 %6148
    %6150 = vrot.lane.b32.xlu0 %v5998, 96
    %v6151 = vpop.permute.xlu0 %6150
    %6152 = vrot.lane.b32.xlu0 %v5999, 96
    %v6153 = vpop.permute.xlu0 %6152
    %6154 = vrot.lane.b32.xlu0 %v6000, 96
    %v6155 = vpop.permute.xlu0 %6154
    %6156 = vrot.lane.b32.xlu0 %v6001, 96
    %v6157 = vpop.permute.xlu0 %6156
    %6158 = vrot.lane.b32.xlu0 %v6002, 96
    %v6159 = vpop.permute.xlu0 %6158
    %6160 = vrot.lane.b32.xlu0 %v6003, 96
    %v6161 = vpop.permute.xlu0 %6160
    %6162 = vrot.lane.b32.xlu0 %v6004, 96
    %v6163 = vpop.permute.xlu0 %6162
    %6164 = vrot.lane.b32.xlu0 %v6005, 96
    %v6165 = vpop.permute.xlu0 %6164
    %6166 = vrot.lane.b32.xlu0 %v6006, 96
    %v6167 = vpop.permute.xlu0 %6166
    %6168 = vrot.lane.b32.xlu0 %v6007, 96
    %v6169 = vpop.permute.xlu0 %6168
    %6170 = vrot.lane.b32.xlu0 %v6008, 96
    %v6171 = vpop.permute.xlu0 %6170
    %6172 = vrot.lane.b32.xlu0 %v6009, 96
    %v6173 = vpop.permute.xlu0 %6172
    %6174 = vrot.lane.b32.xlu0 %v6010, 96
    %v6175 = vpop.permute.xlu0 %6174
    %6176 = vrot.lane.b32.xlu0 %v6011, 96
    %v6177 = vpop.permute.xlu0 %6176
    %6178 = vrot.lane.b32.xlu0 %v6012, 96
    %v6179 = vpop.permute.xlu0 %6178
    %6180 = vrot.lane.b32.xlu0 %v6013, 96
    %v6181 = vpop.permute.xlu0 %6180
    %6182 = vrot.lane.b32.xlu0 %v6014, 96
    %v6183 = vpop.permute.xlu0 %6182
    %6184 = vrot.lane.b32.xlu0 %v6015, 96
    %v6185 = vpop.permute.xlu0 %6184
    %6186 = vrot.lane.b32.xlu0 %v6016, 96
    %v6187 = vpop.permute.xlu0 %6186
    %6188 = vrot.lane.b32.xlu0 %v6017, 96
    %v6189 = vpop.permute.xlu0 %6188
    %6190 = vrot.lane.b32.xlu0 %v6018, 96
    %v6191 = vpop.permute.xlu0 %6190
    %6192 = vrot.lane.b32.xlu0 %v6019, 96
    %v6193 = vpop.permute.xlu0 %6192
    %6194 = vrot.lane.b32.xlu0 %v6020, 96
    %v6195 = vpop.permute.xlu0 %6194
    %6196 = vrot.lane.b32.xlu0 %v6021, 96
    %v6197 = vpop.permute.xlu0 %6196
    %6198 = vrot.lane.b32.xlu0 %v6022, 96
    %v6199 = vpop.permute.xlu0 %6198
    %6200 = vrot.lane.b32.xlu0 %v6023, 96
    %v6201 = vpop.permute.xlu0 %6200
    %6202 = vrot.lane.b32.xlu0 %v6024, 96
    %v6203 = vpop.permute.xlu0 %6202
    %6204 = vrot.lane.b32.xlu0 %v6025, 96
    %v6205 = vpop.permute.xlu0 %6204
    %6206 = vrot.lane.b32.xlu0 %v6026, 96
    %v6207 = vpop.permute.xlu0 %6206
    %6208 = vrot.lane.b32.xlu0 %v6027, 96
    %v6209 = vpop.permute.xlu0 %6208
    %6210 = vrot.lane.b32.xlu0 %v6028, 96
    %v6211 = vpop.permute.xlu0 %6210
    %6212 = vrot.lane.b32.xlu0 %v6029, 96
    %v6213 = vpop.permute.xlu0 %6212
    %6214 = vrot.lane.b32.xlu0 %v6030, 96
    %v6215 = vpop.permute.xlu0 %6214
    %6216 = vrot.lane.b32.xlu0 %v6031, 96
    %v6217 = vpop.permute.xlu0 %6216
    %6218 = vrot.lane.b32.xlu0 %v6032, 96
    %v6219 = vpop.permute.xlu0 %6218
    %6220 = vrot.lane.b32.xlu0 %v6033, 96
    %v6221 = vpop.permute.xlu0 %6220
    %6222 = vrot.lane.b32.xlu0 %v6034, 96
    %v6223 = vpop.permute.xlu0 %6222
    %6224 = vrot.lane.b32.xlu0 %v6035, 96
    %v6225 = vpop.permute.xlu0 %6224
    %6226 = vrot.lane.b32.xlu0 %v6036, 96
    %v6227 = vpop.permute.xlu0 %6226
    %6228 = vrot.lane.b32.xlu0 %v6037, 96
    %v6229 = vpop.permute.xlu0 %6228
    %vm6294 = vcmask 917248
    %6295 = vst.msk [vmem:[#allocation4] sm:$0xff] %vm6294, %v6103
    %6296 = vst.msk [vmem:[#allocation4 + $0x10] sm:$0xff] %vm6294, %v6105
    %6297 = vst.msk [vmem:[#allocation4 + $0x20] sm:$0xff] %vm6294, %v6107
    %6298 = vst.msk [vmem:[#allocation4 + $0x30] sm:$0xff] %vm6294, %v6109
    %6299 = vst.msk [vmem:[#allocation4 + $0x40] sm:$0xff] %vm6294, %v6111
    %6300 = vst.msk [vmem:[#allocation4 + $0x50] sm:$0xff] %vm6294, %v6113
    %6301 = vst.msk [vmem:[#allocation4 + $0x60] sm:$0xff] %vm6294, %v6115
    %6302 = vst.msk [vmem:[#allocation4 + $0x70] sm:$0xff] %vm6294, %v6117
    %6303 = vst.msk [vmem:[#allocation4 + $0x80] sm:$0xff] %vm6294, %v6119
    %6304 = vst.msk [vmem:[#allocation4 + $0x90] sm:$0xff] %vm6294, %v6121
    %6305 = vst.msk [vmem:[#allocation4 + $0xa0] sm:$0xff] %vm6294, %v6123
    %6306 = vst.msk [vmem:[#allocation4 + $0xb0] sm:$0xff] %vm6294, %v6125
    %6307 = vst.msk [vmem:[#allocation4 + $0xc0] sm:$0xff] %vm6294, %v6127
    %6308 = vst.msk [vmem:[#allocation4 + $0xd0] sm:$0xff] %vm6294, %v6129
    %6309 = vst.msk [vmem:[#allocation4 + $0xe0] sm:$0xff] %vm6294, %v6131
    %6310 = vst.msk [vmem:[#allocation4 + $0xf0] sm:$0xff] %vm6294, %v6133
    %6311 = vst.msk [vmem:[#allocation4 + $0x100] sm:$0xff] %vm6294, %v6135
    %6312 = vst.msk [vmem:[#allocation4 + $0x110] sm:$0xff] %vm6294, %v6137
    %6313 = vst.msk [vmem:[#allocation4 + $0x120] sm:$0xff] %vm6294, %v6139
    %6314 = vst.msk [vmem:[#allocation4 + $0x130] sm:$0xff] %vm6294, %v6141
    %6315 = vst.msk [vmem:[#allocation4 + $0x140] sm:$0xff] %vm6294, %v6143
    %6316 = vst.msk [vmem:[#allocation4 + $0x150] sm:$0xff] %vm6294, %v6145
    %6317 = vst.msk [vmem:[#allocation4 + $0x160] sm:$0xff] %vm6294, %v6147
    %6318 = vst.msk [vmem:[#allocation4 + $0x170] sm:$0xff] %vm6294, %v6149
    %6319 = vst.msk [vmem:[#allocation4 + $0x180] sm:$0xff] %vm6294, %v6151
    %6320 = vst.msk [vmem:[#allocation4 + $0x190] sm:$0xff] %vm6294, %v6153
    %6321 = vst.msk [vmem:[#allocation4 + $0x1a0] sm:$0xff] %vm6294, %v6155
    %6322 = vst.msk [vmem:[#allocation4 + $0x1b0] sm:$0xff] %vm6294, %v6157
    %6323 = vst.msk [vmem:[#allocation4 + $0x1c0] sm:$0xff] %vm6294, %v6159
    %6324 = vst.msk [vmem:[#allocation4 + $0x1d0] sm:$0xff] %vm6294, %v6161
    %6325 = vst.msk [vmem:[#allocation4 + $0x1e0] sm:$0xff] %vm6294, %v6163
    %6326 = vst.msk [vmem:[#allocation4 + $0x1f0] sm:$0xff] %vm6294, %v6165
    %6327 = vst.msk [vmem:[#allocation4 + $0x200] sm:$0xff] %vm6294, %v6167
    %6328 = vst.msk [vmem:[#allocation4 + $0x210] sm:$0xff] %vm6294, %v6169
    %6329 = vst.msk [vmem:[#allocation4 + $0x220] sm:$0xff] %vm6294, %v6171
    %6330 = vst.msk [vmem:[#allocation4 + $0x230] sm:$0xff] %vm6294, %v6173
    %6331 = vst.msk [vmem:[#allocation4 + $0x240] sm:$0xff] %vm6294, %v6175
    %6332 = vst.msk [vmem:[#allocation4 + $0x250] sm:$0xff] %vm6294, %v6177
    %6333 = vst.msk [vmem:[#allocation4 + $0x260] sm:$0xff] %vm6294, %v6179
    %6334 = vst.msk [vmem:[#allocation4 + $0x270] sm:$0xff] %vm6294, %v6181
    %6335 = vst.msk [vmem:[#allocation4 + $0x280] sm:$0xff] %vm6294, %v6183
    %6336 = vst.msk [vmem:[#allocation4 + $0x290] sm:$0xff] %vm6294, %v6185
    %6337 = vst.msk [vmem:[#allocation4 + $0x2a0] sm:$0xff] %vm6294, %v6187
    %6338 = vst.msk [vmem:[#allocation4 + $0x2b0] sm:$0xff] %vm6294, %v6189
    %6339 = vst.msk [vmem:[#allocation4 + $0x2c0] sm:$0xff] %vm6294, %v6191
    %6340 = vst.msk [vmem:[#allocation4 + $0x2d0] sm:$0xff] %vm6294, %v6193
    %6341 = vst.msk [vmem:[#allocation4 + $0x2e0] sm:$0xff] %vm6294, %v6195
    %6342 = vst.msk [vmem:[#allocation4 + $0x2f0] sm:$0xff] %vm6294, %v6197
    %6343 = vst.msk [vmem:[#allocation4 + $0x300] sm:$0xff] %vm6294, %v6199
    %6344 = vst.msk [vmem:[#allocation4 + $0x310] sm:$0xff] %vm6294, %v6201
    %6345 = vst.msk [vmem:[#allocation4 + $0x320] sm:$0xff] %vm6294, %v6203
    %6346 = vst.msk [vmem:[#allocation4 + $0x330] sm:$0xff] %vm6294, %v6205
    %6347 = vst.msk [vmem:[#allocation4 + $0x340] sm:$0xff] %vm6294, %v6207
    %6348 = vst.msk [vmem:[#allocation4 + $0x350] sm:$0xff] %vm6294, %v6209
    %6349 = vst.msk [vmem:[#allocation4 + $0x360] sm:$0xff] %vm6294, %v6211
    %6350 = vst.msk [vmem:[#allocation4 + $0x370] sm:$0xff] %vm6294, %v6213
    %6351 = vst.msk [vmem:[#allocation4 + $0x380] sm:$0xff] %vm6294, %v6215
    %6352 = vst.msk [vmem:[#allocation4 + $0x390] sm:$0xff] %vm6294, %v6217
    %6353 = vst.msk [vmem:[#allocation4 + $0x3a0] sm:$0xff] %vm6294, %v6219
    %6354 = vst.msk [vmem:[#allocation4 + $0x3b0] sm:$0xff] %vm6294, %v6221
    %6355 = vst.msk [vmem:[#allocation4 + $0x3c0] sm:$0xff] %vm6294, %v6223
    %6356 = vst.msk [vmem:[#allocation4 + $0x3d0] sm:$0xff] %vm6294, %v6225
    %6357 = vst.msk [vmem:[#allocation4 + $0x3e0] sm:$0xff] %vm6294, %v6227
    %6358 = vst.msk [vmem:[#allocation4 + $0x3f0] sm:$0xff] %vm6294, %v6229
    %v6359 = vld [vmem:[%s5973 + $0x1] sm:$0xff]
    %v6360 = vld [vmem:[%s5973 + $0x9] sm:$0xff]
    %v6361 = vld [vmem:[%s5973 + $0x19] sm:$0xff]
    %v6362 = vld [vmem:[%s5973 + $0x21] sm:$0xff]
    %v6363 = vld [vmem:[%s5973 + $0x31] sm:$0xff]
    %v6364 = vld [vmem:[%s5973 + $0x39] sm:$0xff]
    %v6365 = vld [vmem:[%s5973 + $0x49] sm:$0xff]
    %v6366 = vld [vmem:[%s5973 + $0x51] sm:$0xff]
    %v6367 = vld [vmem:[%s5973 + $0x61] sm:$0xff]
    %v6368 = vld [vmem:[%s5973 + $0x69] sm:$0xff]
    %v6369 = vld [vmem:[%s5973 + $0x79] sm:$0xff]
    %v6370 = vld [vmem:[%s5973 + $0x81] sm:$0xff]
    %v6371 = vld [vmem:[%s5973 + $0x91] sm:$0xff]
    %v6372 = vld [vmem:[%s5973 + $0x99] sm:$0xff]
    %v6373 = vld [vmem:[%s5973 + $0xa9] sm:$0xff]
    %v6374 = vld [vmem:[%s5973 + $0xb1] sm:$0xff]
    %v6375 = vld [vmem:[%s5973 + $0xc1] sm:$0xff]
    %v6376 = vld [vmem:[%s5973 + $0xc9] sm:$0xff]
    %v6377 = vld [vmem:[%s5973 + $0xd9] sm:$0xff]
    %v6378 = vld [vmem:[%s5973 + $0xe1] sm:$0xff]
    %v6379 = vld [vmem:[%s5973 + $0xf1] sm:$0xff]
    %v6380 = vld [vmem:[%s5973 + $0xf9] sm:$0xff]
    %v6381 = vld [vmem:[%s5973 + $0x109] sm:$0xff]
    %v6382 = vld [vmem:[%s5973 + $0x111] sm:$0xff]
    %v6383 = vld [vmem:[%s5973 + $0x121] sm:$0xff]
    %v6384 = vld [vmem:[%s5973 + $0x129] sm:$0xff]
    %v6385 = vld [vmem:[%s5973 + $0x139] sm:$0xff]
    %v6386 = vld [vmem:[%s5973 + $0x141] sm:$0xff]
    %v6387 = vld [vmem:[%s5973 + $0x151] sm:$0xff]
    %v6388 = vld [vmem:[%s5973 + $0x159] sm:$0xff]
    %v6389 = vld [vmem:[%s5973 + $0x169] sm:$0xff]
    %v6390 = vld [vmem:[%s5973 + $0x171] sm:$0xff]
    %v6391 = vld [vmem:[%s5973 + $0x1b1] sm:$0xff]
    %v6392 = vld [vmem:[%s5973 + $0x1b9] sm:$0xff]
    %v6393 = vld [vmem:[%s5973 + $0x1c9] sm:$0xff]
    %v6394 = vld [vmem:[%s5973 + $0x1d1] sm:$0xff]
    %v6395 = vld [vmem:[%s5973 + $0x1e1] sm:$0xff]
    %v6396 = vld [vmem:[%s5973 + $0x1e9] sm:$0xff]
    %v6397 = vld [vmem:[%s5973 + $0x1f9] sm:$0xff]
    %v6398 = vld [vmem:[%s5973 + $0x201] sm:$0xff]
    %v6399 = vld [vmem:[%s5973 + $0x211] sm:$0xff]
    %v6400 = vld [vmem:[%s5973 + $0x219] sm:$0xff]
    %v6401 = vld [vmem:[%s5973 + $0x229] sm:$0xff]
    %v6402 = vld [vmem:[%s5973 + $0x231] sm:$0xff]
    %v6403 = vld [vmem:[%s5973 + $0x241] sm:$0xff]
    %v6404 = vld [vmem:[%s5973 + $0x249] sm:$0xff]
    %v6405 = vld [vmem:[%s5973 + $0x259] sm:$0xff]
    %v6406 = vld [vmem:[%s5973 + $0x261] sm:$0xff]
    %v6407 = vld [vmem:[%s5973 + $0x271] sm:$0xff]
    %v6408 = vld [vmem:[%s5973 + $0x279] sm:$0xff]
    %v6409 = vld [vmem:[%s5973 + $0x289] sm:$0xff]
    %v6410 = vld [vmem:[%s5973 + $0x291] sm:$0xff]
    %v6411 = vld [vmem:[%s5973 + $0x2a1] sm:$0xff]
    %v6412 = vld [vmem:[%s5973 + $0x2a9] sm:$0xff]
    %v6413 = vld [vmem:[%s5973 + $0x2b9] sm:$0xff]
    %v6414 = vld [vmem:[%s5973 + $0x2c1] sm:$0xff]
    %v6415 = vld [vmem:[%s5973 + $0x2d1] sm:$0xff]
    %v6416 = vld [vmem:[%s5973 + $0x2d9] sm:$0xff]
    %v6417 = vld [vmem:[%s5973 + $0x2e9] sm:$0xff]
    %v6418 = vld [vmem:[%s5973 + $0x2f1] sm:$0xff]
    %v6419 = vld [vmem:[%s5973 + $0x301] sm:$0xff]
    %v6420 = vld [vmem:[%s5973 + $0x309] sm:$0xff]
    %v6421 = vld [vmem:[%s5973 + $0x319] sm:$0xff]
    %v6422 = vld [vmem:[%s5973 + $0x321] sm:$0xff]
    %6487 = vrot.lane.b32.xlu0 %v6359, 112
    %v6488 = vpop.permute.xlu0 %6487
    %6489 = vrot.lane.b32.xlu0 %v6360, 112
    %v6490 = vpop.permute.xlu0 %6489
    %6491 = vrot.lane.b32.xlu0 %v6361, 112
    %v6492 = vpop.permute.xlu0 %6491
    %6493 = vrot.lane.b32.xlu0 %v6362, 112
    %v6494 = vpop.permute.xlu0 %6493
    %6495 = vrot.lane.b32.xlu0 %v6363, 112
    %v6496 = vpop.permute.xlu0 %6495
    %6497 = vrot.lane.b32.xlu0 %v6364, 112
    %v6498 = vpop.permute.xlu0 %6497
    %6499 = vrot.lane.b32.xlu0 %v6365, 112
    %v6500 = vpop.permute.xlu0 %6499
    %6501 = vrot.lane.b32.xlu0 %v6366, 112
    %v6502 = vpop.permute.xlu0 %6501
    %6503 = vrot.lane.b32.xlu0 %v6367, 112
    %v6504 = vpop.permute.xlu0 %6503
    %6505 = vrot.lane.b32.xlu0 %v6368, 112
    %v6506 = vpop.permute.xlu0 %6505
    %6507 = vrot.lane.b32.xlu0 %v6369, 112
    %v6508 = vpop.permute.xlu0 %6507
    %6509 = vrot.lane.b32.xlu0 %v6370, 112
    %v6510 = vpop.permute.xlu0 %6509
    %6511 = vrot.lane.b32.xlu0 %v6371, 112
    %v6512 = vpop.permute.xlu0 %6511
    %6513 = vrot.lane.b32.xlu0 %v6372, 112
    %v6514 = vpop.permute.xlu0 %6513
    %6515 = vrot.lane.b32.xlu0 %v6373, 112
    %v6516 = vpop.permute.xlu0 %6515
    %6517 = vrot.lane.b32.xlu0 %v6374, 112
    %v6518 = vpop.permute.xlu0 %6517
    %6519 = vrot.lane.b32.xlu0 %v6375, 112
    %v6520 = vpop.permute.xlu0 %6519
    %6521 = vrot.lane.b32.xlu0 %v6376, 112
    %v6522 = vpop.permute.xlu0 %6521
    %6523 = vrot.lane.b32.xlu0 %v6377, 112
    %v6524 = vpop.permute.xlu0 %6523
    %6525 = vrot.lane.b32.xlu0 %v6378, 112
    %v6526 = vpop.permute.xlu0 %6525
    %6527 = vrot.lane.b32.xlu0 %v6379, 112
    %v6528 = vpop.permute.xlu0 %6527
    %6529 = vrot.lane.b32.xlu0 %v6380, 112
    %v6530 = vpop.permute.xlu0 %6529
    %6531 = vrot.lane.b32.xlu0 %v6381, 112
    %v6532 = vpop.permute.xlu0 %6531
    %6533 = vrot.lane.b32.xlu0 %v6382, 112
    %v6534 = vpop.permute.xlu0 %6533
    %6535 = vrot.lane.b32.xlu0 %v6383, 112
    %v6536 = vpop.permute.xlu0 %6535
    %6537 = vrot.lane.b32.xlu0 %v6384, 112
    %v6538 = vpop.permute.xlu0 %6537
    %6539 = vrot.lane.b32.xlu0 %v6385, 112
    %v6540 = vpop.permute.xlu0 %6539
    %6541 = vrot.lane.b32.xlu0 %v6386, 112
    %v6542 = vpop.permute.xlu0 %6541
    %6543 = vrot.lane.b32.xlu0 %v6387, 112
    %v6544 = vpop.permute.xlu0 %6543
    %6545 = vrot.lane.b32.xlu0 %v6388, 112
    %v6546 = vpop.permute.xlu0 %6545
    %6547 = vrot.lane.b32.xlu0 %v6389, 112
    %v6548 = vpop.permute.xlu0 %6547
    %6549 = vrot.lane.b32.xlu0 %v6390, 112
    %v6550 = vpop.permute.xlu0 %6549
    %6551 = vrot.lane.b32.xlu0 %v6391, 112
    %v6552 = vpop.permute.xlu0 %6551
    %6553 = vrot.lane.b32.xlu0 %v6392, 112
    %v6554 = vpop.permute.xlu0 %6553
    %6555 = vrot.lane.b32.xlu0 %v6393, 112
    %v6556 = vpop.permute.xlu0 %6555
    %6557 = vrot.lane.b32.xlu0 %v6394, 112
    %v6558 = vpop.permute.xlu0 %6557
    %6559 = vrot.lane.b32.xlu0 %v6395, 112
    %v6560 = vpop.permute.xlu0 %6559
    %6561 = vrot.lane.b32.xlu0 %v6396, 112
    %v6562 = vpop.permute.xlu0 %6561
    %6563 = vrot.lane.b32.xlu0 %v6397, 112
    %v6564 = vpop.permute.xlu0 %6563
    %6565 = vrot.lane.b32.xlu0 %v6398, 112
    %v6566 = vpop.permute.xlu0 %6565
    %6567 = vrot.lane.b32.xlu0 %v6399, 112
    %v6568 = vpop.permute.xlu0 %6567
    %6569 = vrot.lane.b32.xlu0 %v6400, 112
    %v6570 = vpop.permute.xlu0 %6569
    %6571 = vrot.lane.b32.xlu0 %v6401, 112
    %v6572 = vpop.permute.xlu0 %6571
    %6573 = vrot.lane.b32.xlu0 %v6402, 112
    %v6574 = vpop.permute.xlu0 %6573
    %6575 = vrot.lane.b32.xlu0 %v6403, 112
    %v6576 = vpop.permute.xlu0 %6575
    %6577 = vrot.lane.b32.xlu0 %v6404, 112
    %v6578 = vpop.permute.xlu0 %6577
    %6579 = vrot.lane.b32.xlu0 %v6405, 112
    %v6580 = vpop.permute.xlu0 %6579
    %6581 = vrot.lane.b32.xlu0 %v6406, 112
    %v6582 = vpop.permute.xlu0 %6581
    %6583 = vrot.lane.b32.xlu0 %v6407, 112
    %v6584 = vpop.permute.xlu0 %6583
    %6585 = vrot.lane.b32.xlu0 %v6408, 112
    %v6586 = vpop.permute.xlu0 %6585
    %6587 = vrot.lane.b32.xlu0 %v6409, 112
    %v6588 = vpop.permute.xlu0 %6587
    %6589 = vrot.lane.b32.xlu0 %v6410, 112
    %v6590 = vpop.permute.xlu0 %6589
    %6591 = vrot.lane.b32.xlu0 %v6411, 112
    %v6592 = vpop.permute.xlu0 %6591
    %6593 = vrot.lane.b32.xlu0 %v6412, 112
    %v6594 = vpop.permute.xlu0 %6593
    %6595 = vrot.lane.b32.xlu0 %v6413, 112
    %v6596 = vpop.permute.xlu0 %6595
    %6597 = vrot.lane.b32.xlu0 %v6414, 112
    %v6598 = vpop.permute.xlu0 %6597
    %6599 = vrot.lane.b32.xlu0 %v6415, 112
    %v6600 = vpop.permute.xlu0 %6599
    %6601 = vrot.lane.b32.xlu0 %v6416, 112
    %v6602 = vpop.permute.xlu0 %6601
    %6603 = vrot.lane.b32.xlu0 %v6417, 112
    %v6604 = vpop.permute.xlu0 %6603
    %6605 = vrot.lane.b32.xlu0 %v6418, 112
    %v6606 = vpop.permute.xlu0 %6605
    %6607 = vrot.lane.b32.xlu0 %v6419, 112
    %v6608 = vpop.permute.xlu0 %6607
    %6609 = vrot.lane.b32.xlu0 %v6420, 112
    %v6610 = vpop.permute.xlu0 %6609
    %6611 = vrot.lane.b32.xlu0 %v6421, 112
    %v6612 = vpop.permute.xlu0 %6611
    %6613 = vrot.lane.b32.xlu0 %v6422, 112
    %v6614 = vpop.permute.xlu0 %6613
    %vm6679 = vcmask 1048448
    %6680 = vst.msk [vmem:[#allocation4] sm:$0xff] %vm6679, %v6488
    %6681 = vst.msk [vmem:[#allocation4 + $0x10] sm:$0xff] %vm6679, %v6490
    %6682 = vst.msk [vmem:[#allocation4 + $0x20] sm:$0xff] %vm6679, %v6492
    %6683 = vst.msk [vmem:[#allocation4 + $0x30] sm:$0xff] %vm6679, %v6494
    %6684 = vst.msk [vmem:[#allocation4 + $0x40] sm:$0xff] %vm6679, %v6496
    %6685 = vst.msk [vmem:[#allocation4 + $0x50] sm:$0xff] %vm6679, %v6498
    %6686 = vst.msk [vmem:[#allocation4 + $0x60] sm:$0xff] %vm6679, %v6500
    %6687 = vst.msk [vmem:[#allocation4 + $0x70] sm:$0xff] %vm6679, %v6502
    %6688 = vst.msk [vmem:[#allocation4 + $0x80] sm:$0xff] %vm6679, %v6504
    %6689 = vst.msk [vmem:[#allocation4 + $0x90] sm:$0xff] %vm6679, %v6506
    %6690 = vst.msk [vmem:[#allocation4 + $0xa0] sm:$0xff] %vm6679, %v6508
    %6691 = vst.msk [vmem:[#allocation4 + $0xb0] sm:$0xff] %vm6679, %v6510
    %6692 = vst.msk [vmem:[#allocation4 + $0xc0] sm:$0xff] %vm6679, %v6512
    %6693 = vst.msk [vmem:[#allocation4 + $0xd0] sm:$0xff] %vm6679, %v6514
    %6694 = vst.msk [vmem:[#allocation4 + $0xe0] sm:$0xff] %vm6679, %v6516
    %6695 = vst.msk [vmem:[#allocation4 + $0xf0] sm:$0xff] %vm6679, %v6518
    %6696 = vst.msk [vmem:[#allocation4 + $0x100] sm:$0xff] %vm6679, %v6520
    %6697 = vst.msk [vmem:[#allocation4 + $0x110] sm:$0xff] %vm6679, %v6522
    %6698 = vst.msk [vmem:[#allocation4 + $0x120] sm:$0xff] %vm6679, %v6524
    %6699 = vst.msk [vmem:[#allocation4 + $0x130] sm:$0xff] %vm6679, %v6526
    %6700 = vst.msk [vmem:[#allocation4 + $0x140] sm:$0xff] %vm6679, %v6528
    %6701 = vst.msk [vmem:[#allocation4 + $0x150] sm:$0xff] %vm6679, %v6530
    %6702 = vst.msk [vmem:[#allocation4 + $0x160] sm:$0xff] %vm6679, %v6532
    %6703 = vst.msk [vmem:[#allocation4 + $0x170] sm:$0xff] %vm6679, %v6534
    %6704 = vst.msk [vmem:[#allocation4 + $0x180] sm:$0xff] %vm6679, %v6536
    %6705 = vst.msk [vmem:[#allocation4 + $0x190] sm:$0xff] %vm6679, %v6538
    %6706 = vst.msk [vmem:[#allocation4 + $0x1a0] sm:$0xff] %vm6679, %v6540
    %6707 = vst.msk [vmem:[#allocation4 + $0x1b0] sm:$0xff] %vm6679, %v6542
    %6708 = vst.msk [vmem:[#allocation4 + $0x1c0] sm:$0xff] %vm6679, %v6544
    %6709 = vst.msk [vmem:[#allocation4 + $0x1d0] sm:$0xff] %vm6679, %v6546
    %6710 = vst.msk [vmem:[#allocation4 + $0x1e0] sm:$0xff] %vm6679, %v6548
    %6711 = vst.msk [vmem:[#allocation4 + $0x1f0] sm:$0xff] %vm6679, %v6550
    %6712 = vst.msk [vmem:[#allocation4 + $0x200] sm:$0xff] %vm6679, %v6552
    %6713 = vst.msk [vmem:[#allocation4 + $0x210] sm:$0xff] %vm6679, %v6554
    %6714 = vst.msk [vmem:[#allocation4 + $0x220] sm:$0xff] %vm6679, %v6556
    %6715 = vst.msk [vmem:[#allocation4 + $0x230] sm:$0xff] %vm6679, %v6558
    %6716 = vst.msk [vmem:[#allocation4 + $0x240] sm:$0xff] %vm6679, %v6560
    %6717 = vst.msk [vmem:[#allocation4 + $0x250] sm:$0xff] %vm6679, %v6562
    %6718 = vst.msk [vmem:[#allocation4 + $0x260] sm:$0xff] %vm6679, %v6564
    %6719 = vst.msk [vmem:[#allocation4 + $0x270] sm:$0xff] %vm6679, %v6566
    %6720 = vst.msk [vmem:[#allocation4 + $0x280] sm:$0xff] %vm6679, %v6568
    %6721 = vst.msk [vmem:[#allocation4 + $0x290] sm:$0xff] %vm6679, %v6570
    %6722 = vst.msk [vmem:[#allocation4 + $0x2a0] sm:$0xff] %vm6679, %v6572
    %6723 = vst.msk [vmem:[#allocation4 + $0x2b0] sm:$0xff] %vm6679, %v6574
    %6724 = vst.msk [vmem:[#allocation4 + $0x2c0] sm:$0xff] %vm6679, %v6576
    %6725 = vst.msk [vmem:[#allocation4 + $0x2d0] sm:$0xff] %vm6679, %v6578
    %6726 = vst.msk [vmem:[#allocation4 + $0x2e0] sm:$0xff] %vm6679, %v6580
    %6727 = vst.msk [vmem:[#allocation4 + $0x2f0] sm:$0xff] %vm6679, %v6582
    %6728 = vst.msk [vmem:[#allocation4 + $0x300] sm:$0xff] %vm6679, %v6584
    %6729 = vst.msk [vmem:[#allocation4 + $0x310] sm:$0xff] %vm6679, %v6586
    %6730 = vst.msk [vmem:[#allocation4 + $0x320] sm:$0xff] %vm6679, %v6588
    %6731 = vst.msk [vmem:[#allocation4 + $0x330] sm:$0xff] %vm6679, %v6590
    %6732 = vst.msk [vmem:[#allocation4 + $0x340] sm:$0xff] %vm6679, %v6592
    %6733 = vst.msk [vmem:[#allocation4 + $0x350] sm:$0xff] %vm6679, %v6594
    %6734 = vst.msk [vmem:[#allocation4 + $0x360] sm:$0xff] %vm6679, %v6596
    %6735 = vst.msk [vmem:[#allocation4 + $0x370] sm:$0xff] %vm6679, %v6598
    %6736 = vst.msk [vmem:[#allocation4 + $0x380] sm:$0xff] %vm6679, %v6600
    %6737 = vst.msk [vmem:[#allocation4 + $0x390] sm:$0xff] %vm6679, %v6602
    %6738 = vst.msk [vmem:[#allocation4 + $0x3a0] sm:$0xff] %vm6679, %v6604
    %6739 = vst.msk [vmem:[#allocation4 + $0x3b0] sm:$0xff] %vm6679, %v6606
    %6740 = vst.msk [vmem:[#allocation4 + $0x3c0] sm:$0xff] %vm6679, %v6608
    %6741 = vst.msk [vmem:[#allocation4 + $0x3d0] sm:$0xff] %vm6679, %v6610
    %6742 = vst.msk [vmem:[#allocation4 + $0x3e0] sm:$0xff] %vm6679, %v6612
    %6743 = vst.msk [vmem:[#allocation4 + $0x3f0] sm:$0xff] %vm6679, %v6614
    %v6744 = vld [vmem:[%s5973 + $0x2] sm:$0xff]
    %v6745 = vld [vmem:[%s5973 + $0xa] sm:$0xff]
    %v6746 = vld [vmem:[%s5973 + $0x1a] sm:$0xff]
    %v6747 = vld [vmem:[%s5973 + $0x22] sm:$0xff]
    %v6748 = vld [vmem:[%s5973 + $0x32] sm:$0xff]
    %v6749 = vld [vmem:[%s5973 + $0x3a] sm:$0xff]
    %v6750 = vld [vmem:[%s5973 + $0x4a] sm:$0xff]
    %v6751 = vld [vmem:[%s5973 + $0x52] sm:$0xff]
    %v6752 = vld [vmem:[%s5973 + $0x62] sm:$0xff]
    %v6753 = vld [vmem:[%s5973 + $0x6a] sm:$0xff]
    %v6754 = vld [vmem:[%s5973 + $0x7a] sm:$0xff]
    %v6755 = vld [vmem:[%s5973 + $0x82] sm:$0xff]
    %v6756 = vld [vmem:[%s5973 + $0x92] sm:$0xff]
    %v6757 = vld [vmem:[%s5973 + $0x9a] sm:$0xff]
    %v6758 = vld [vmem:[%s5973 + $0xaa] sm:$0xff]
    %v6759 = vld [vmem:[%s5973 + $0xb2] sm:$0xff]
    %v6760 = vld [vmem:[%s5973 + $0xc2] sm:$0xff]
    %v6761 = vld [vmem:[%s5973 + $0xca] sm:$0xff]
    %v6762 = vld [vmem:[%s5973 + $0xda] sm:$0xff]
    %v6763 = vld [vmem:[%s5973 + $0xe2] sm:$0xff]
    %v6764 = vld [vmem:[%s5973 + $0xf2] sm:$0xff]
    %v6765 = vld [vmem:[%s5973 + $0xfa] sm:$0xff]
    %v6766 = vld [vmem:[%s5973 + $0x10a] sm:$0xff]
    %v6767 = vld [vmem:[%s5973 + $0x112] sm:$0xff]
    %v6768 = vld [vmem:[%s5973 + $0x122] sm:$0xff]
    %v6769 = vld [vmem:[%s5973 + $0x12a] sm:$0xff]
    %v6770 = vld [vmem:[%s5973 + $0x13a] sm:$0xff]
    %v6771 = vld [vmem:[%s5973 + $0x142] sm:$0xff]
    %v6772 = vld [vmem:[%s5973 + $0x152] sm:$0xff]
    %v6773 = vld [vmem:[%s5973 + $0x15a] sm:$0xff]
    %v6774 = vld [vmem:[%s5973 + $0x16a] sm:$0xff]
    %v6775 = vld [vmem:[%s5973 + $0x172] sm:$0xff]
    %v6776 = vld [vmem:[%s5973 + $0x1b2] sm:$0xff]
    %v6777 = vld [vmem:[%s5973 + $0x1ba] sm:$0xff]
    %v6778 = vld [vmem:[%s5973 + $0x1ca] sm:$0xff]
    %v6779 = vld [vmem:[%s5973 + $0x1d2] sm:$0xff]
    %v6780 = vld [vmem:[%s5973 + $0x1e2] sm:$0xff]
    %v6781 = vld [vmem:[%s5973 + $0x1ea] sm:$0xff]
    %v6782 = vld [vmem:[%s5973 + $0x1fa] sm:$0xff]
    %v6783 = vld [vmem:[%s5973 + $0x202] sm:$0xff]
    %v6784 = vld [vmem:[%s5973 + $0x212] sm:$0xff]
    %v6785 = vld [vmem:[%s5973 + $0x21a] sm:$0xff]
    %v6786 = vld [vmem:[%s5973 + $0x22a] sm:$0xff]
    %v6787 = vld [vmem:[%s5973 + $0x232] sm:$0xff]
    %v6788 = vld [vmem:[%s5973 + $0x242] sm:$0xff]
    %v6789 = vld [vmem:[%s5973 + $0x24a] sm:$0xff]
    %v6790 = vld [vmem:[%s5973 + $0x25a] sm:$0xff]
    %v6791 = vld [vmem:[%s5973 + $0x262] sm:$0xff]
    %v6792 = vld [vmem:[%s5973 + $0x272] sm:$0xff]
    %v6793 = vld [vmem:[%s5973 + $0x27a] sm:$0xff]
    %v6794 = vld [vmem:[%s5973 + $0x28a] sm:$0xff]
    %v6795 = vld [vmem:[%s5973 + $0x292] sm:$0xff]
    %v6796 = vld [vmem:[%s5973 + $0x2a2] sm:$0xff]
    %v6797 = vld [vmem:[%s5973 + $0x2aa] sm:$0xff]
    %v6798 = vld [vmem:[%s5973 + $0x2ba] sm:$0xff]
    %v6799 = vld [vmem:[%s5973 + $0x2c2] sm:$0xff]
    %v6800 = vld [vmem:[%s5973 + $0x2d2] sm:$0xff]
    %v6801 = vld [vmem:[%s5973 + $0x2da] sm:$0xff]
    %v6802 = vld [vmem:[%s5973 + $0x2ea] sm:$0xff]
    %v6803 = vld [vmem:[%s5973 + $0x2f2] sm:$0xff]
    %v6804 = vld [vmem:[%s5973 + $0x302] sm:$0xff]
    %v6805 = vld [vmem:[%s5973 + $0x30a] sm:$0xff]
    %v6806 = vld [vmem:[%s5973 + $0x31a] sm:$0xff]
    %v6807 = vld [vmem:[%s5973 + $0x322] sm:$0xff]
    %6808 = vst.msk [vmem:[#allocation4 + $0x8] sm:$0xff] %vm2680, %v6744
    %6809 = vst.msk [vmem:[#allocation4 + $0x18] sm:$0xff] %vm2680, %v6745
    %6810 = vst.msk [vmem:[#allocation4 + $0x28] sm:$0xff] %vm2680, %v6746
    %6811 = vst.msk [vmem:[#allocation4 + $0x38] sm:$0xff] %vm2680, %v6747
    %6812 = vst.msk [vmem:[#allocation4 + $0x48] sm:$0xff] %vm2680, %v6748
    %6813 = vst.msk [vmem:[#allocation4 + $0x58] sm:$0xff] %vm2680, %v6749
    %6814 = vst.msk [vmem:[#allocation4 + $0x68] sm:$0xff] %vm2680, %v6750
    %6815 = vst.msk [vmem:[#allocation4 + $0x78] sm:$0xff] %vm2680, %v6751
    %6816 = vst.msk [vmem:[#allocation4 + $0x88] sm:$0xff] %vm2680, %v6752
    %6817 = vst.msk [vmem:[#allocation4 + $0x98] sm:$0xff] %vm2680, %v6753
    %6818 = vst.msk [vmem:[#allocation4 + $0xa8] sm:$0xff] %vm2680, %v6754
    %6819 = vst.msk [vmem:[#allocation4 + $0xb8] sm:$0xff] %vm2680, %v6755
    %6820 = vst.msk [vmem:[#allocation4 + $0xc8] sm:$0xff] %vm2680, %v6756
    %6821 = vst.msk [vmem:[#allocation4 + $0xd8] sm:$0xff] %vm2680, %v6757
    %6822 = vst.msk [vmem:[#allocation4 + $0xe8] sm:$0xff] %vm2680, %v6758
    %6823 = vst.msk [vmem:[#allocation4 + $0xf8] sm:$0xff] %vm2680, %v6759
    %6824 = vst.msk [vmem:[#allocation4 + $0x108] sm:$0xff] %vm2680, %v6760
    %6825 = vst.msk [vmem:[#allocation4 + $0x118] sm:$0xff] %vm2680, %v6761
    %6826 = vst.msk [vmem:[#allocation4 + $0x128] sm:$0xff] %vm2680, %v6762
    %6827 = vst.msk [vmem:[#allocation4 + $0x138] sm:$0xff] %vm2680, %v6763
    %6828 = vst.msk [vmem:[#allocation4 + $0x148] sm:$0xff] %vm2680, %v6764
    %6829 = vst.msk [vmem:[#allocation4 + $0x158] sm:$0xff] %vm2680, %v6765
    %6830 = vst.msk [vmem:[#allocation4 + $0x168] sm:$0xff] %vm2680, %v6766
    %6831 = vst.msk [vmem:[#allocation4 + $0x178] sm:$0xff] %vm2680, %v6767
    %6832 = vst.msk [vmem:[#allocation4 + $0x188] sm:$0xff] %vm2680, %v6768
    %6833 = vst.msk [vmem:[#allocation4 + $0x198] sm:$0xff] %vm2680, %v6769
    %6834 = vst.msk [vmem:[#allocation4 + $0x1a8] sm:$0xff] %vm2680, %v6770
    %6835 = vst.msk [vmem:[#allocation4 + $0x1b8] sm:$0xff] %vm2680, %v6771
    %6836 = vst.msk [vmem:[#allocation4 + $0x1c8] sm:$0xff] %vm2680, %v6772
    %6837 = vst.msk [vmem:[#allocation4 + $0x1d8] sm:$0xff] %vm2680, %v6773
    %6838 = vst.msk [vmem:[#allocation4 + $0x1e8] sm:$0xff] %vm2680, %v6774
    %6839 = vst.msk [vmem:[#allocation4 + $0x1f8] sm:$0xff] %vm2680, %v6775
    %6840 = vst.msk [vmem:[#allocation4 + $0x208] sm:$0xff] %vm2680, %v6776
    %6841 = vst.msk [vmem:[#allocation4 + $0x218] sm:$0xff] %vm2680, %v6777
    %6842 = vst.msk [vmem:[#allocation4 + $0x228] sm:$0xff] %vm2680, %v6778
    %6843 = vst.msk [vmem:[#allocation4 + $0x238] sm:$0xff] %vm2680, %v6779
    %6844 = vst.msk [vmem:[#allocation4 + $0x248] sm:$0xff] %vm2680, %v6780
    %6845 = vst.msk [vmem:[#allocation4 + $0x258] sm:$0xff] %vm2680, %v6781
    %6846 = vst.msk [vmem:[#allocation4 + $0x268] sm:$0xff] %vm2680, %v6782
    %6847 = vst.msk [vmem:[#allocation4 + $0x278] sm:$0xff] %vm2680, %v6783
    %6848 = vst.msk [vmem:[#allocation4 + $0x288] sm:$0xff] %vm2680, %v6784
    %6849 = vst.msk [vmem:[#allocation4 + $0x298] sm:$0xff] %vm2680, %v6785
    %6850 = vst.msk [vmem:[#allocation4 + $0x2a8] sm:$0xff] %vm2680, %v6786
    %6851 = vst.msk [vmem:[#allocation4 + $0x2b8] sm:$0xff] %vm2680, %v6787
    %6852 = vst.msk [vmem:[#allocation4 + $0x2c8] sm:$0xff] %vm2680, %v6788
    %6853 = vst.msk [vmem:[#allocation4 + $0x2d8] sm:$0xff] %vm2680, %v6789
    %6854 = vst.msk [vmem:[#allocation4 + $0x2e8] sm:$0xff] %vm2680, %v6790
    %6855 = vst.msk [vmem:[#allocation4 + $0x2f8] sm:$0xff] %vm2680, %v6791
    %6856 = vst.msk [vmem:[#allocation4 + $0x308] sm:$0xff] %vm2680, %v6792
    %6857 = vst.msk [vmem:[#allocation4 + $0x318] sm:$0xff] %vm2680, %v6793
    %6858 = vst.msk [vmem:[#allocation4 + $0x328] sm:$0xff] %vm2680, %v6794
    %6859 = vst.msk [vmem:[#allocation4 + $0x338] sm:$0xff] %vm2680, %v6795
    %6860 = vst.msk [vmem:[#allocation4 + $0x348] sm:$0xff] %vm2680, %v6796
    %6861 = vst.msk [vmem:[#allocation4 + $0x358] sm:$0xff] %vm2680, %v6797
    %6862 = vst.msk [vmem:[#allocation4 + $0x368] sm:$0xff] %vm2680, %v6798
    %6863 = vst.msk [vmem:[#allocation4 + $0x378] sm:$0xff] %vm2680, %v6799
    %6864 = vst.msk [vmem:[#allocation4 + $0x388] sm:$0xff] %vm2680, %v6800
    %6865 = vst.msk [vmem:[#allocation4 + $0x398] sm:$0xff] %vm2680, %v6801
    %6866 = vst.msk [vmem:[#allocation4 + $0x3a8] sm:$0xff] %vm2680, %v6802
    %6867 = vst.msk [vmem:[#allocation4 + $0x3b8] sm:$0xff] %vm2680, %v6803
    %6868 = vst.msk [vmem:[#allocation4 + $0x3c8] sm:$0xff] %vm2680, %v6804
    %6869 = vst.msk [vmem:[#allocation4 + $0x3d8] sm:$0xff] %vm2680, %v6805
    %6870 = vst.msk [vmem:[#allocation4 + $0x3e8] sm:$0xff] %vm2680, %v6806
    %6871 = vst.msk [vmem:[#allocation4 + $0x3f8] sm:$0xff] %vm2680, %v6807
    %v6872 = vld [vmem:[#allocation4] sm:$0xff]
    %v6873 = vld [vmem:[#allocation4 + $0x8] sm:$0xff]
    %v6874 = vld [vmem:[#allocation4 + $0x10] sm:$0xff]
    %v6875 = vld [vmem:[#allocation4 + $0x18] sm:$0xff]
    %v6876 = vld [vmem:[#allocation4 + $0x20] sm:$0xff]
    %v6877 = vld [vmem:[#allocation4 + $0x28] sm:$0xff]
    %v6878 = vld [vmem:[#allocation4 + $0x30] sm:$0xff]
    %v6879 = vld [vmem:[#allocation4 + $0x38] sm:$0xff]
    %v6880 = vld [vmem:[#allocation4 + $0x40] sm:$0xff]
    %v6881 = vld [vmem:[#allocation4 + $0x48] sm:$0xff]
    %v6882 = vld [vmem:[#allocation4 + $0x50] sm:$0xff]
    %v6883 = vld [vmem:[#allocation4 + $0x58] sm:$0xff]
    %v6884 = vld [vmem:[#allocation4 + $0x60] sm:$0xff]
    %v6885 = vld [vmem:[#allocation4 + $0x68] sm:$0xff]
    %v6886 = vld [vmem:[#allocation4 + $0x70] sm:$0xff]
    %v6887 = vld [vmem:[#allocation4 + $0x78] sm:$0xff]
    %v6888 = vld [vmem:[#allocation4 + $0x80] sm:$0xff]
    %v6889 = vld [vmem:[#allocation4 + $0x88] sm:$0xff]
    %v6890 = vld [vmem:[#allocation4 + $0x90] sm:$0xff]
    %v6891 = vld [vmem:[#allocation4 + $0x98] sm:$0xff]
    %v6892 = vld [vmem:[#allocation4 + $0xa0] sm:$0xff]
    %v6893 = vld [vmem:[#allocation4 + $0xa8] sm:$0xff]
    %v6894 = vld [vmem:[#allocation4 + $0xb0] sm:$0xff]
    %v6895 = vld [vmem:[#allocation4 + $0xb8] sm:$0xff]
    %v6896 = vld [vmem:[#allocation4 + $0xc0] sm:$0xff]
    %v6897 = vld [vmem:[#allocation4 + $0xc8] sm:$0xff]
    %v6898 = vld [vmem:[#allocation4 + $0xd0] sm:$0xff]
    %v6899 = vld [vmem:[#allocation4 + $0xd8] sm:$0xff]
    %v6900 = vld [vmem:[#allocation4 + $0xe0] sm:$0xff]
    %v6901 = vld [vmem:[#allocation4 + $0xe8] sm:$0xff]
    %v6902 = vld [vmem:[#allocation4 + $0xf0] sm:$0xff]
    %v6903 = vld [vmem:[#allocation4 + $0xf8] sm:$0xff]
    %v6904 = vld [vmem:[#allocation4 + $0x100] sm:$0xff]
    %v6905 = vld [vmem:[#allocation4 + $0x108] sm:$0xff]
    %v6906 = vld [vmem:[#allocation4 + $0x110] sm:$0xff]
    %v6907 = vld [vmem:[#allocation4 + $0x118] sm:$0xff]
    %v6908 = vld [vmem:[#allocation4 + $0x120] sm:$0xff]
    %v6909 = vld [vmem:[#allocation4 + $0x128] sm:$0xff]
    %v6910 = vld [vmem:[#allocation4 + $0x130] sm:$0xff]
    %v6911 = vld [vmem:[#allocation4 + $0x138] sm:$0xff]
    %v6912 = vld [vmem:[#allocation4 + $0x140] sm:$0xff]
    %v6913 = vld [vmem:[#allocation4 + $0x148] sm:$0xff]
    %v6914 = vld [vmem:[#allocation4 + $0x150] sm:$0xff]
    %v6915 = vld [vmem:[#allocation4 + $0x158] sm:$0xff]
    %v6916 = vld [vmem:[#allocation4 + $0x160] sm:$0xff]
    %v6917 = vld [vmem:[#allocation4 + $0x168] sm:$0xff]
    %v6918 = vld [vmem:[#allocation4 + $0x170] sm:$0xff]
    %v6919 = vld [vmem:[#allocation4 + $0x178] sm:$0xff]
    %v6920 = vld [vmem:[#allocation4 + $0x180] sm:$0xff]
    %v6921 = vld [vmem:[#allocation4 + $0x188] sm:$0xff]
    %v6922 = vld [vmem:[#allocation4 + $0x190] sm:$0xff]
    %v6923 = vld [vmem:[#allocation4 + $0x198] sm:$0xff]
    %v6924 = vld [vmem:[#allocation4 + $0x1a0] sm:$0xff]
    %v6925 = vld [vmem:[#allocation4 + $0x1a8] sm:$0xff]
    %v6926 = vld [vmem:[#allocation4 + $0x1b0] sm:$0xff]
    %v6927 = vld [vmem:[#allocation4 + $0x1b8] sm:$0xff]
    %v6928 = vld [vmem:[#allocation4 + $0x1c0] sm:$0xff]
    %v6929 = vld [vmem:[#allocation4 + $0x1c8] sm:$0xff]
    %v6930 = vld [vmem:[#allocation4 + $0x1d0] sm:$0xff]
    %v6931 = vld [vmem:[#allocation4 + $0x1d8] sm:$0xff]
    %v6932 = vld [vmem:[#allocation4 + $0x1e0] sm:$0xff]
    %v6933 = vld [vmem:[#allocation4 + $0x1e8] sm:$0xff]
    %v6934 = vld [vmem:[#allocation4 + $0x1f0] sm:$0xff]
    %v6935 = vld [vmem:[#allocation4 + $0x1f8] sm:$0xff]
    %v6936 = vld [vmem:[#allocation4 + $0x200] sm:$0xff]
    %v6937 = vld [vmem:[#allocation4 + $0x208] sm:$0xff]
    %v6938 = vld [vmem:[#allocation4 + $0x210] sm:$0xff]
    %v6939 = vld [vmem:[#allocation4 + $0x218] sm:$0xff]
    %v6940 = vld [vmem:[#allocation4 + $0x220] sm:$0xff]
    %v6941 = vld [vmem:[#allocation4 + $0x228] sm:$0xff]
    %v6942 = vld [vmem:[#allocation4 + $0x230] sm:$0xff]
    %v6943 = vld [vmem:[#allocation4 + $0x238] sm:$0xff]
    %v6944 = vld [vmem:[#allocation4 + $0x240] sm:$0xff]
    %v6945 = vld [vmem:[#allocation4 + $0x248] sm:$0xff]
    %v6946 = vld [vmem:[#allocation4 + $0x250] sm:$0xff]
    %v6947 = vld [vmem:[#allocation4 + $0x258] sm:$0xff]
    %v6948 = vld [vmem:[#allocation4 + $0x260] sm:$0xff]
    %v6949 = vld [vmem:[#allocation4 + $0x268] sm:$0xff]
    %v6950 = vld [vmem:[#allocation4 + $0x270] sm:$0xff]
    %v6951 = vld [vmem:[#allocation4 + $0x278] sm:$0xff]
    %v6952 = vld [vmem:[#allocation4 + $0x280] sm:$0xff]
    %v6953 = vld [vmem:[#allocation4 + $0x288] sm:$0xff]
    %v6954 = vld [vmem:[#allocation4 + $0x290] sm:$0xff]
    %v6955 = vld [vmem:[#allocation4 + $0x298] sm:$0xff]
    %v6956 = vld [vmem:[#allocation4 + $0x2a0] sm:$0xff]
    %v6957 = vld [vmem:[#allocation4 + $0x2a8] sm:$0xff]
    %v6958 = vld [vmem:[#allocation4 + $0x2b0] sm:$0xff]
    %v6959 = vld [vmem:[#allocation4 + $0x2b8] sm:$0xff]
    %v6960 = vld [vmem:[#allocation4 + $0x2c0] sm:$0xff]
    %v6961 = vld [vmem:[#allocation4 + $0x2c8] sm:$0xff]
    %v6962 = vld [vmem:[#allocation4 + $0x2d0] sm:$0xff]
    %v6963 = vld [vmem:[#allocation4 + $0x2d8] sm:$0xff]
    %v6964 = vld [vmem:[#allocation4 + $0x2e0] sm:$0xff]
    %v6965 = vld [vmem:[#allocation4 + $0x2e8] sm:$0xff]
    %v6966 = vld [vmem:[#allocation4 + $0x2f0] sm:$0xff]
    %v6967 = vld [vmem:[#allocation4 + $0x2f8] sm:$0xff]
    %v6968 = vld [vmem:[#allocation4 + $0x300] sm:$0xff]
    %v6969 = vld [vmem:[#allocation4 + $0x308] sm:$0xff]
    %v6970 = vld [vmem:[#allocation4 + $0x310] sm:$0xff]
    %v6971 = vld [vmem:[#allocation4 + $0x318] sm:$0xff]
    %v6972 = vld [vmem:[#allocation4 + $0x320] sm:$0xff]
    %v6973 = vld [vmem:[#allocation4 + $0x328] sm:$0xff]
    %v6974 = vld [vmem:[#allocation4 + $0x330] sm:$0xff]
    %v6975 = vld [vmem:[#allocation4 + $0x338] sm:$0xff]
    %v6976 = vld [vmem:[#allocation4 + $0x340] sm:$0xff]
    %v6977 = vld [vmem:[#allocation4 + $0x348] sm:$0xff]
    %v6978 = vld [vmem:[#allocation4 + $0x350] sm:$0xff]
    %v6979 = vld [vmem:[#allocation4 + $0x358] sm:$0xff]
    %v6980 = vld [vmem:[#allocation4 + $0x360] sm:$0xff]
    %v6981 = vld [vmem:[#allocation4 + $0x368] sm:$0xff]
    %v6982 = vld [vmem:[#allocation4 + $0x370] sm:$0xff]
    %v6983 = vld [vmem:[#allocation4 + $0x378] sm:$0xff]
    %v6984 = vld [vmem:[#allocation4 + $0x380] sm:$0xff]
    %v6985 = vld [vmem:[#allocation4 + $0x388] sm:$0xff]
    %v6986 = vld [vmem:[#allocation4 + $0x390] sm:$0xff]
    %v6987 = vld [vmem:[#allocation4 + $0x398] sm:$0xff]
    %v6988 = vld [vmem:[#allocation4 + $0x3a0] sm:$0xff]
    %v6989 = vld [vmem:[#allocation4 + $0x3a8] sm:$0xff]
    %v6990 = vld [vmem:[#allocation4 + $0x3b0] sm:$0xff]
    %v6991 = vld [vmem:[#allocation4 + $0x3b8] sm:$0xff]
    %v6992 = vld [vmem:[#allocation4 + $0x3c0] sm:$0xff]
    %v6993 = vld [vmem:[#allocation4 + $0x3c8] sm:$0xff]
    %v6994 = vld [vmem:[#allocation4 + $0x3d0] sm:$0xff]
    %v6995 = vld [vmem:[#allocation4 + $0x3d8] sm:$0xff]
    %v6996 = vld [vmem:[#allocation4 + $0x3e0] sm:$0xff]
    %v6997 = vld [vmem:[#allocation4 + $0x3e8] sm:$0xff]
    %v6998 = vld [vmem:[#allocation4 + $0x3f0] sm:$0xff]
    %v6999 = vld [vmem:[#allocation4 + $0x3f8] sm:$0xff]
    %v7000 = vld [vmem:[%s3] sm:$0xff]
    %v7001 = vld [vmem:[%s3 + $0x8] sm:$0xff]
    %v7002 = vld [vmem:[%s3 + $0x10] sm:$0xff]
    %v7003 = vld [vmem:[%s3 + $0x18] sm:$0xff]
    %v7004 = vld [vmem:[%s3 + $0x20] sm:$0xff]
    %v7005 = vld [vmem:[%s3 + $0x28] sm:$0xff]
    %v7006 = vld [vmem:[%s3 + $0x30] sm:$0xff]
    %v7007 = vld [vmem:[%s3 + $0x38] sm:$0xff]
    %v7008 = vld [vmem:[%s3 + $0x40] sm:$0xff]
    %v7009 = vld [vmem:[%s3 + $0x48] sm:$0xff]
    %v7010 = vld [vmem:[%s3 + $0x50] sm:$0xff]
    %v7011 = vld [vmem:[%s3 + $0x58] sm:$0xff]
    %v7012 = vld [vmem:[%s3 + $0x60] sm:$0xff]
    %v7013 = vld [vmem:[%s3 + $0x68] sm:$0xff]
    %v7014 = vld [vmem:[%s3 + $0x70] sm:$0xff]
    %v7015 = vld [vmem:[%s3 + $0x78] sm:$0xff]
    %v7016 = vld [vmem:[%s3 + $0x80] sm:$0xff]
    %v7017 = vld [vmem:[%s3 + $0x88] sm:$0xff]
    %v7018 = vld [vmem:[%s4] sm:$0x1]
    %v7020 = vlaneseq
    %v7021 = vshrl.u32 %v7020, 7
    %v7022 = vsub.s32 0, %v7021
    %v7023 = vrot.slane %v7018, %v7022
    %v7026 = vsel %vm2680, %v6873, 0
    %v7029 = vsel %vm2680, %v6875, 0
    %v7032 = vsel %vm2680, %v6877, 0
    %v7035 = vsel %vm2680, %v6879, 0
    %v7038 = vsel %vm2680, %v6881, 0
    %v7041 = vsel %vm2680, %v6883, 0
    %v7044 = vsel %vm2680, %v6885, 0
    %v7047 = vsel %vm2680, %v6887, 0
    %v7050 = vsel %vm2680, %v6889, 0
    %v7053 = vsel %vm2680, %v6891, 0
    %v7056 = vsel %vm2680, %v6893, 0
    %v7059 = vsel %vm2680, %v6895, 0
    %v7062 = vsel %vm2680, %v6897, 0
    %v7065 = vsel %vm2680, %v6899, 0
    %v7068 = vsel %vm2680, %v6901, 0
    %v7071 = vsel %vm2680, %v6903, 0
    %v7074 = vsel %vm2680, %v6905, 0
    %v7077 = vsel %vm2680, %v6907, 0
    %v7080 = vsel %vm2680, %v6909, 0
    %v7083 = vsel %vm2680, %v6911, 0
    %v7086 = vsel %vm2680, %v6913, 0
    %v7089 = vsel %vm2680, %v6915, 0
    %v7092 = vsel %vm2680, %v6917, 0
    %v7095 = vsel %vm2680, %v6919, 0
    %v7098 = vsel %vm2680, %v6921, 0
    %v7101 = vsel %vm2680, %v6923, 0
    %v7104 = vsel %vm2680, %v6925, 0
    %v7107 = vsel %vm2680, %v6927, 0
    %v7110 = vsel %vm2680, %v6929, 0
    %v7113 = vsel %vm2680, %v6931, 0
    %v7116 = vsel %vm2680, %v6933, 0
    %v7119 = vsel %vm2680, %v6935, 0
    %v7122 = vsel %vm2680, %v6937, 0
    %v7125 = vsel %vm2680, %v6939, 0
    %v7128 = vsel %vm2680, %v6941, 0
    %v7131 = vsel %vm2680, %v6943, 0
    %v7134 = vsel %vm2680, %v6945, 0
    %v7137 = vsel %vm2680, %v6947, 0
    %v7140 = vsel %vm2680, %v6949, 0
    %v7143 = vsel %vm2680, %v6951, 0
    %v7146 = vsel %vm2680, %v6953, 0
    %v7149 = vsel %vm2680, %v6955, 0
    %v7152 = vsel %vm2680, %v6957, 0
    %v7155 = vsel %vm2680, %v6959, 0
    %v7158 = vsel %vm2680, %v6961, 0
    %v7161 = vsel %vm2680, %v6963, 0
    %v7164 = vsel %vm2680, %v6965, 0
    %v7167 = vsel %vm2680, %v6967, 0
    %v7170 = vsel %vm2680, %v6969, 0
    %v7173 = vsel %vm2680, %v6971, 0
    %v7176 = vsel %vm2680, %v6973, 0
    %v7179 = vsel %vm2680, %v6975, 0
    %v7182 = vsel %vm2680, %v6977, 0
    %v7185 = vsel %vm2680, %v6979, 0
    %v7188 = vsel %vm2680, %v6981, 0
    %v7191 = vsel %vm2680, %v6983, 0
    %v7194 = vsel %vm2680, %v6985, 0
    %v7197 = vsel %vm2680, %v6987, 0
    %v7200 = vsel %vm2680, %v6989, 0
    %v7203 = vsel %vm2680, %v6991, 0
    %v7206 = vsel %vm2680, %v6993, 0
    %v7209 = vsel %vm2680, %v6995, 0
    %v7212 = vsel %vm2680, %v6997, 0
    %v7215 = vsel %vm2680, %v6999, 0
    %7217 = vmatprep.subr.mxu0 0.0
    %7218 = vmatpush1.msra.mxu0 %v7000
    %7219 = vmatprep.subr.mxu0 0.0
    %7220 = vmatpush1.msra.mxu0 %v7001
    %7221 = vmatprep.subr.mxu0 0.0
    %7222 = vmatpush1.msra.mxu0 %v7002
    %7223 = vmatprep.subr.mxu0 0.0
    %7224 = vmatpush1.msra.mxu0 %v7003
    %7225 = vmatprep.subr.mxu0 0.0
    %7226 = vmatpush1.msra.mxu0 %v7004
    %7227 = vmatprep.subr.mxu0 0.0
    %7228 = vmatpush1.msra.mxu0 %v7005
    %7229 = vmatprep.subr.mxu0 0.0
    %7230 = vmatpush1.msra.mxu0 %v7006
    %7231 = vmatprep.subr.mxu0 0.0
    %7232 = vmatpush1.msra.mxu0 %v7007
    %7233 = vmatprep.subr.mxu0 0.0
    %7234 = vmatpush1.msra.mxu0 %v7008
    %7235 = vmatprep.subr.mxu0 0.0
    %7236 = vmatpush1.msra.mxu0 %v7009
    %7237 = vmatprep.subr.mxu0 0.0
    %7238 = vmatpush1.msra.mxu0 %v7010
    %7239 = vmatprep.subr.mxu0 0.0
    %7240 = vmatpush1.msra.mxu0 %v7011
    %7241 = vmatprep.subr.mxu0 0.0
    %7242 = vmatpush1.msra.mxu0 %v7012
    %7243 = vmatprep.subr.mxu0 0.0
    %7244 = vmatpush1.msra.mxu0 %v7013
    %7245 = vmatprep.subr.mxu0 0.0
    %7246 = vmatpush1.msra.mxu0 %v7014
    %7247 = vmatprep.subr.mxu0 0.0
    %7248 = vmatpush1.msra.mxu0 %v7015
    %7249 = vmatprep.subr.mxu0 0.0
    %7250 = vmatpush1.msra.mxu0 %v7016
    %7251 = vmatprep.subr.mxu0 0.0
    %7252 = vmatpush1.msra.mxu0 %v7017
    %7253 = vmatprep.subr.mxu0 0.0
    %7254 = vmatpush1.msra.mxu0 0.0
    %7255 = vmatprep.subr.mxu0 0.0
    %7256 = vmatpush1.msra.mxu0 0.0
    %7257 = vmatprep.subr.mxu0 0.0
    %7258 = vmatpush1.msra.mxu0 0.0
    %7259 = vmatprep.subr.mxu0 0.0
    %7260 = vmatpush1.msra.mxu0 0.0
    %7261 = vmatprep.subr.mxu0 0.0
    %7262 = vmatpush1.msra.mxu0 0.0
    %7263 = vmatprep.subr.mxu0 0.0
    %7264 = vmatpush1.msra.mxu0 0.0
    %7265 = vmatprep.subr.mxu0 0.0
    %7266 = vmatpush1.msra.mxu0 0.0
    %7267 = vmatprep.subr.mxu0 0.0
    %7268 = vmatpush1.msra.mxu0 0.0
    %7269 = vmatprep.subr.mxu0 0.0
    %7270 = vmatpush1.msra.mxu0 0.0
    %7271 = vmatprep.subr.mxu0 0.0
    %7272 = vmatpush1.msra.mxu0 0.0
    %7273 = vmatprep.subr.mxu0 0.0
    %7274 = vmatpush1.msra.mxu0 0.0
    %7275 = vmatprep.subr.mxu0 0.0
    %7276 = vmatpush1.msra.mxu0 0.0
    %7277 = vmatprep.subr.mxu0 0.0
    %7278 = vmatpush1.msra.mxu0 0.0
    %7279 = vmatprep.subr.mxu0 0.0
    %7280 = vmatpush1.msra.mxu0 0.0
    %7281 = vmatprep.mubr.f32.mxu0 %v7026
    %7282 = vmatmul.mubr.f32.gmra.mrb[0].mxu0 %v6872
    %v7283 = vpop.f32.mrb[0].mxu0
    %v7284 = vadd.f32 %v7023, %v7283
    %v7285 = vpop.f32.mrb[0].mxu0
    %7286 = vmatprep.mubr.f32.mxu0 %v7029
    %7287 = vmatmul.mubr.f32.gmra.mrb[0].mxu0 %v6874
    %v7288 = vpop.f32.mrb[0].mxu0
    %v7289 = vadd.f32 %v7023, %v7288
    %v7290 = vpop.f32.mrb[0].mxu0
    %7291 = vmatprep.mubr.f32.mxu0 %v7032
    %7292 = vmatmul.mubr.f32.gmra.mrb[0].mxu0 %v6876
    %v7293 = vpop.f32.mrb[0].mxu0
    %v7294 = vadd.f32 %v7023, %v7293
    %v7295 = vpop.f32.mrb[0].mxu0
    %7296 = vmatprep.mubr.f32.mxu0 %v7035
    %7297 = vmatmul.mubr.f32.gmra.mrb[0].mxu0 %v6878
    %v7298 = vpop.f32.mrb[0].mxu0
    %v7299 = vadd.f32 %v7023, %v7298
    %v7300 = vpop.f32.mrb[0].mxu0
    %7301 = vmatprep.mubr.f32.mxu0 %v7038
    %7302 = vmatmul.mubr.f32.gmra.mrb[0].mxu0 %v6880
    %v7303 = vpop.f32.mrb[0].mxu0
    %v7304 = vadd.f32 %v7023, %v7303
    %v7305 = vpop.f32.mrb[0].mxu0
    %7306 = vmatprep.mubr.f32.mxu0 %v7041
    %7307 = vmatmul.mubr.f32.gmra.mrb[0].mxu0 %v6882
    %v7308 = vpop.f32.mrb[0].mxu0
    %v7309 = vadd.f32 %v7023, %v7308
    %v7310 = vpop.f32.mrb[0].mxu0
    %7311 = vmatprep.mubr.f32.mxu0 %v7044
    %7312 = vmatmul.mubr.f32.gmra.mrb[0].mxu0 %v6884
    %v7313 = vpop.f32.mrb[0].mxu0
    %v7314 = vadd.f32 %v7023, %v7313
    %v7315 = vpop.f32.mrb[0].mxu0
    %7316 = vmatprep.mubr.f32.mxu0 %v7047
    %7317 = vmatmul.mubr.f32.gmra.mrb[0].mxu0 %v6886
    %v7318 = vpop.f32.mrb[0].mxu0
    %v7319 = vadd.f32 %v7023, %v7318
    %v7320 = vpop.f32.mrb[0].mxu0
    %7321 = vmatprep.mubr.f32.mxu0 %v7050
    %7322 = vmatmul.mubr.f32.gmra.mrb[0].mxu0 %v6888
    %v7323 = vpop.f32.mrb[0].mxu0
    %v7324 = vadd.f32 %v7023, %v7323
    %v7325 = vpop.f32.mrb[0].mxu0
    %7326 = vmatprep.mubr.f32.mxu0 %v7053
    %7327 = vmatmul.mubr.f32.gmra.mrb[0].mxu0 %v6890
    %v7328 = vpop.f32.mrb[0].mxu0
    %v7329 = vadd.f32 %v7023, %v7328
    %v7330 = vpop.f32.mrb[0].mxu0
    %7331 = vmatprep.mubr.f32.mxu0 %v7056
    %7332 = vmatmul.mubr.f32.gmra.mrb[0].mxu0 %v6892
    %v7333 = vpop.f32.mrb[0].mxu0
    %v7334 = vadd.f32 %v7023, %v7333
    %v7335 = vpop.f32.mrb[0].mxu0
    %7336 = vmatprep.mubr.f32.mxu0 %v7059
    %7337 = vmatmul.mubr.f32.gmra.mrb[0].mxu0 %v6894
    %v7338 = vpop.f32.mrb[0].mxu0
    %v7339 = vadd.f32 %v7023, %v7338
    %v7340 = vpop.f32.mrb[0].mxu0
    %7341 = vmatprep.mubr.f32.mxu0 %v7062
    %7342 = vmatmul.mubr.f32.gmra.mrb[0].mxu0 %v6896
    %v7343 = vpop.f32.mrb[0].mxu0
    %v7344 = vadd.f32 %v7023, %v7343
    %v7345 = vpop.f32.mrb[0].mxu0
    %7346 = vmatprep.mubr.f32.mxu0 %v7065
    %7347 = vmatmul.mubr.f32.gmra.mrb[0].mxu0 %v6898
    %v7348 = vpop.f32.mrb[0].mxu0
    %v7349 = vadd.f32 %v7023, %v7348
    %v7350 = vpop.f32.mrb[0].mxu0
    %7351 = vmatprep.mubr.f32.mxu0 %v7068
    %7352 = vmatmul.mubr.f32.gmra.mrb[0].mxu0 %v6900
    %v7353 = vpop.f32.mrb[0].mxu0
    %v7354 = vadd.f32 %v7023, %v7353
    %v7355 = vpop.f32.mrb[0].mxu0
    %7356 = vmatprep.mubr.f32.mxu0 %v7071
    %7357 = vmatmul.mubr.f32.gmra.mrb[0].mxu0 %v6902
    %v7358 = vpop.f32.mrb[0].mxu0
    %v7359 = vadd.f32 %v7023, %v7358
    %v7360 = vpop.f32.mrb[0].mxu0
    %7361 = vmatprep.mubr.f32.mxu0 %v7074
    %7362 = vmatmul.mubr.f32.gmra.mrb[0].mxu0 %v6904
    %v7363 = vpop.f32.mrb[0].mxu0
    %v7364 = vadd.f32 %v7023, %v7363
    %v7365 = vpop.f32.mrb[0].mxu0
    %7366 = vmatprep.mubr.f32.mxu0 %v7077
    %7367 = vmatmul.mubr.f32.gmra.mrb[0].mxu0 %v6906
    %v7368 = vpop.f32.mrb[0].mxu0
    %v7369 = vadd.f32 %v7023, %v7368
    %v7370 = vpop.f32.mrb[0].mxu0
    %7371 = vmatprep.mubr.f32.mxu0 %v7080
    %7372 = vmatmul.mubr.f32.gmra.mrb[0].mxu0 %v6908
    %v7373 = vpop.f32.mrb[0].mxu0
    %v7374 = vadd.f32 %v7023, %v7373
    %v7375 = vpop.f32.mrb[0].mxu0
    %7376 = vmatprep.mubr.f32.mxu0 %v7083
    %7377 = vmatmul.mubr.f32.gmra.mrb[0].mxu0 %v6910
    %v7378 = vpop.f32.mrb[0].mxu0
    %v7379 = vadd.f32 %v7023, %v7378
    %v7380 = vpop.f32.mrb[0].mxu0
    %7381 = vmatprep.mubr.f32.mxu0 %v7086
    %7382 = vmatmul.mubr.f32.gmra.mrb[0].mxu0 %v6912
    %v7383 = vpop.f32.mrb[0].mxu0
    %v7384 = vadd.f32 %v7023, %v7383
    %v7385 = vpop.f32.mrb[0].mxu0
    %7386 = vmatprep.mubr.f32.mxu0 %v7089
    %7387 = vmatmul.mubr.f32.gmra.mrb[0].mxu0 %v6914
    %v7388 = vpop.f32.mrb[0].mxu0
    %v7389 = vadd.f32 %v7023, %v7388
    %v7390 = vpop.f32.mrb[0].mxu0
    %7391 = vmatprep.mubr.f32.mxu0 %v7092
    %7392 = vmatmul.mubr.f32.gmra.mrb[0].mxu0 %v6916
    %v7393 = vpop.f32.mrb[0].mxu0
    %v7394 = vadd.f32 %v7023, %v7393
    %v7395 = vpop.f32.mrb[0].mxu0
    %7396 = vmatprep.mubr.f32.mxu0 %v7095
    %7397 = vmatmul.mubr.f32.gmra.mrb[0].mxu0 %v6918
    %v7398 = vpop.f32.mrb[0].mxu0
    %v7399 = vadd.f32 %v7023, %v7398
    %v7400 = vpop.f32.mrb[0].mxu0
    %7401 = vmatprep.mubr.f32.mxu0 %v7098
    %7402 = vmatmul.mubr.f32.gmra.mrb[0].mxu0 %v6920
    %v7403 = vpop.f32.mrb[0].mxu0
    %v7404 = vadd.f32 %v7023, %v7403
    %v7405 = vpop.f32.mrb[0].mxu0
    %7406 = vmatprep.mubr.f32.mxu0 %v7101
    %7407 = vmatmul.mubr.f32.gmra.mrb[0].mxu0 %v6922
    %v7408 = vpop.f32.mrb[0].mxu0
    %v7409 = vadd.f32 %v7023, %v7408
    %v7410 = vpop.f32.mrb[0].mxu0
    %7411 = vmatprep.mubr.f32.mxu0 %v7104
    %7412 = vmatmul.mubr.f32.gmra.mrb[0].mxu0 %v6924
    %v7413 = vpop.f32.mrb[0].mxu0
    %v7414 = vadd.f32 %v7023, %v7413
    %v7415 = vpop.f32.mrb[0].mxu0
    %7416 = vmatprep.mubr.f32.mxu0 %v7107
    %7417 = vmatmul.mubr.f32.gmra.mrb[0].mxu0 %v6926
    %v7418 = vpop.f32.mrb[0].mxu0
    %v7419 = vadd.f32 %v7023, %v7418
    %v7420 = vpop.f32.mrb[0].mxu0
    %7421 = vmatprep.mubr.f32.mxu0 %v7110
    %7422 = vmatmul.mubr.f32.gmra.mrb[0].mxu0 %v6928
    %v7423 = vpop.f32.mrb[0].mxu0
    %v7424 = vadd.f32 %v7023, %v7423
    %v7425 = vpop.f32.mrb[0].mxu0
    %7426 = vmatprep.mubr.f32.mxu0 %v7113
    %7427 = vmatmul.mubr.f32.gmra.mrb[0].mxu0 %v6930
    %v7428 = vpop.f32.mrb[0].mxu0
    %v7429 = vadd.f32 %v7023, %v7428
    %v7430 = vpop.f32.mrb[0].mxu0
    %7431 = vmatprep.mubr.f32.mxu0 %v7116
    %7432 = vmatmul.mubr.f32.gmra.mrb[0].mxu0 %v6932
    %v7433 = vpop.f32.mrb[0].mxu0
    %v7434 = vadd.f32 %v7023, %v7433
    %v7435 = vpop.f32.mrb[0].mxu0
    %7436 = vmatprep.mubr.f32.mxu0 %v7119
    %7437 = vmatmul.mubr.f32.gmra.mrb[0].mxu0 %v6934
    %v7438 = vpop.f32.mrb[0].mxu0
    %v7439 = vadd.f32 %v7023, %v7438
    %v7440 = vpop.f32.mrb[0].mxu0
    %7441 = vmatprep.mubr.f32.mxu0 %v7122
    %7442 = vmatmul.mubr.f32.gmra.mrb[0].mxu0 %v6936
    %v7443 = vpop.f32.mrb[0].mxu0
    %v7444 = vadd.f32 %v7023, %v7443
    %v7445 = vpop.f32.mrb[0].mxu0
    %7446 = vmatprep.mubr.f32.mxu0 %v7125
    %7447 = vmatmul.mubr.f32.gmra.mrb[0].mxu0 %v6938
    %v7448 = vpop.f32.mrb[0].mxu0
    %v7449 = vadd.f32 %v7023, %v7448
    %v7450 = vpop.f32.mrb[0].mxu0
    %7451 = vmatprep.mubr.f32.mxu0 %v7128
    %7452 = vmatmul.mubr.f32.gmra.mrb[0].mxu0 %v6940
    %v7453 = vpop.f32.mrb[0].mxu0
    %v7454 = vadd.f32 %v7023, %v7453
    %v7455 = vpop.f32.mrb[0].mxu0
    %7456 = vmatprep.mubr.f32.mxu0 %v7131
    %7457 = vmatmul.mubr.f32.gmra.mrb[0].mxu0 %v6942
    %v7458 = vpop.f32.mrb[0].mxu0
    %v7459 = vadd.f32 %v7023, %v7458
    %v7460 = vpop.f32.mrb[0].mxu0
    %7461 = vmatprep.mubr.f32.mxu0 %v7134
    %7462 = vmatmul.mubr.f32.gmra.mrb[0].mxu0 %v6944
    %v7463 = vpop.f32.mrb[0].mxu0
    %v7464 = vadd.f32 %v7023, %v7463
    %v7465 = vpop.f32.mrb[0].mxu0
    %7466 = vmatprep.mubr.f32.mxu0 %v7137
    %7467 = vmatmul.mubr.f32.gmra.mrb[0].mxu0 %v6946
    %v7468 = vpop.f32.mrb[0].mxu0
    %v7469 = vadd.f32 %v7023, %v7468
    %v7470 = vpop.f32.mrb[0].mxu0
    %7471 = vmatprep.mubr.f32.mxu0 %v7140
    %7472 = vmatmul.mubr.f32.gmra.mrb[0].mxu0 %v6948
    %v7473 = vpop.f32.mrb[0].mxu0
    %v7474 = vadd.f32 %v7023, %v7473
    %v7475 = vpop.f32.mrb[0].mxu0
    %7476 = vmatprep.mubr.f32.mxu0 %v7143
    %7477 = vmatmul.mubr.f32.gmra.mrb[0].mxu0 %v6950
    %v7478 = vpop.f32.mrb[0].mxu0
    %v7479 = vadd.f32 %v7023, %v7478
    %v7480 = vpop.f32.mrb[0].mxu0
    %7481 = vmatprep.mubr.f32.mxu0 %v7146
    %7482 = vmatmul.mubr.f32.gmra.mrb[0].mxu0 %v6952
    %v7483 = vpop.f32.mrb[0].mxu0
    %v7484 = vadd.f32 %v7023, %v7483
    %v7485 = vpop.f32.mrb[0].mxu0
    %7486 = vmatprep.mubr.f32.mxu0 %v7149
    %7487 = vmatmul.mubr.f32.gmra.mrb[0].mxu0 %v6954
    %v7488 = vpop.f32.mrb[0].mxu0
    %v7489 = vadd.f32 %v7023, %v7488
    %v7490 = vpop.f32.mrb[0].mxu0
    %7491 = vmatprep.mubr.f32.mxu0 %v7152
    %7492 = vmatmul.mubr.f32.gmra.mrb[0].mxu0 %v6956
    %v7493 = vpop.f32.mrb[0].mxu0
    %v7494 = vadd.f32 %v7023, %v7493
    %v7495 = vpop.f32.mrb[0].mxu0
    %7496 = vmatprep.mubr.f32.mxu0 %v7155
    %7497 = vmatmul.mubr.f32.gmra.mrb[0].mxu0 %v6958
    %v7498 = vpop.f32.mrb[0].mxu0
    %v7499 = vadd.f32 %v7023, %v7498
    %v7500 = vpop.f32.mrb[0].mxu0
    %7501 = vmatprep.mubr.f32.mxu0 %v7158
    %7502 = vmatmul.mubr.f32.gmra.mrb[0].mxu0 %v6960
    %v7503 = vpop.f32.mrb[0].mxu0
    %v7504 = vadd.f32 %v7023, %v7503
    %v7505 = vpop.f32.mrb[0].mxu0
    %7506 = vmatprep.mubr.f32.mxu0 %v7161
    %7507 = vmatmul.mubr.f32.gmra.mrb[0].mxu0 %v6962
    %v7508 = vpop.f32.mrb[0].mxu0
    %v7509 = vadd.f32 %v7023, %v7508
    %v7510 = vpop.f32.mrb[0].mxu0
    %7511 = vmatprep.mubr.f32.mxu0 %v7164
    %7512 = vmatmul.mubr.f32.gmra.mrb[0].mxu0 %v6964
    %v7513 = vpop.f32.mrb[0].mxu0
    %v7514 = vadd.f32 %v7023, %v7513
    %v7515 = vpop.f32.mrb[0].mxu0
    %7516 = vmatprep.mubr.f32.mxu0 %v7167
    %7517 = vmatmul.mubr.f32.gmra.mrb[0].mxu0 %v6966
    %v7518 = vpop.f32.mrb[0].mxu0
    %v7519 = vadd.f32 %v7023, %v7518
    %v7520 = vpop.f32.mrb[0].mxu0
    %7521 = vmatprep.mubr.f32.mxu0 %v7170
    %7522 = vmatmul.mubr.f32.gmra.mrb[0].mxu0 %v6968
    %v7523 = vpop.f32.mrb[0].mxu0
    %v7524 = vadd.f32 %v7023, %v7523
    %v7525 = vpop.f32.mrb[0].mxu0
    %7526 = vmatprep.mubr.f32.mxu0 %v7173
    %7527 = vmatmul.mubr.f32.gmra.mrb[0].mxu0 %v6970
    %v7528 = vpop.f32.mrb[0].mxu0
    %v7529 = vadd.f32 %v7023, %v7528
    %v7530 = vpop.f32.mrb[0].mxu0
    %7531 = vmatprep.mubr.f32.mxu0 %v7176
    %7532 = vmatmul.mubr.f32.gmra.mrb[0].mxu0 %v6972
    %v7533 = vpop.f32.mrb[0].mxu0
    %v7534 = vadd.f32 %v7023, %v7533
    %v7535 = vpop.f32.mrb[0].mxu0
    %7536 = vmatprep.mubr.f32.mxu0 %v7179
    %7537 = vmatmul.mubr.f32.gmra.mrb[0].mxu0 %v6974
    %v7538 = vpop.f32.mrb[0].mxu0
    %v7539 = vadd.f32 %v7023, %v7538
    %v7540 = vpop.f32.mrb[0].mxu0
    %7541 = vmatprep.mubr.f32.mxu0 %v7182
    %7542 = vmatmul.mubr.f32.gmra.mrb[0].mxu0 %v6976
    %v7543 = vpop.f32.mrb[0].mxu0
    %v7544 = vadd.f32 %v7023, %v7543
    %v7545 = vpop.f32.mrb[0].mxu0
    %7546 = vmatprep.mubr.f32.mxu0 %v7185
    %7547 = vmatmul.mubr.f32.gmra.mrb[0].mxu0 %v6978
    %v7548 = vpop.f32.mrb[0].mxu0
    %v7549 = vadd.f32 %v7023, %v7548
    %v7550 = vpop.f32.mrb[0].mxu0
    %7551 = vmatprep.mubr.f32.mxu0 %v7188
    %7552 = vmatmul.mubr.f32.gmra.mrb[0].mxu0 %v6980
    %v7553 = vpop.f32.mrb[0].mxu0
    %v7554 = vadd.f32 %v7023, %v7553
    %v7555 = vpop.f32.mrb[0].mxu0
    %7556 = vmatprep.mubr.f32.mxu0 %v7191
    %7557 = vmatmul.mubr.f32.gmra.mrb[0].mxu0 %v6982
    %v7558 = vpop.f32.mrb[0].mxu0
    %v7559 = vadd.f32 %v7023, %v7558
    %v7560 = vpop.f32.mrb[0].mxu0
    %7561 = vmatprep.mubr.f32.mxu0 %v7194
    %7562 = vmatmul.mubr.f32.gmra.mrb[0].mxu0 %v6984
    %v7563 = vpop.f32.mrb[0].mxu0
    %v7564 = vadd.f32 %v7023, %v7563
    %v7565 = vpop.f32.mrb[0].mxu0
    %7566 = vmatprep.mubr.f32.mxu0 %v7197
    %7567 = vmatmul.mubr.f32.gmra.mrb[0].mxu0 %v6986
    %v7568 = vpop.f32.mrb[0].mxu0
    %v7569 = vadd.f32 %v7023, %v7568
    %v7570 = vpop.f32.mrb[0].mxu0
    %7571 = vmatprep.mubr.f32.mxu0 %v7200
    %7572 = vmatmul.mubr.f32.gmra.mrb[0].mxu0 %v6988
    %v7573 = vpop.f32.mrb[0].mxu0
    %v7574 = vadd.f32 %v7023, %v7573
    %v7575 = vpop.f32.mrb[0].mxu0
    %7576 = vmatprep.mubr.f32.mxu0 %v7203
    %7577 = vmatmul.mubr.f32.gmra.mrb[0].mxu0 %v6990
    %v7578 = vpop.f32.mrb[0].mxu0
    %v7579 = vadd.f32 %v7023, %v7578
    %v7580 = vpop.f32.mrb[0].mxu0
    %7581 = vmatprep.mubr.f32.mxu0 %v7206
    %7582 = vmatmul.mubr.f32.gmra.mrb[0].mxu0 %v6992
    %v7583 = vpop.f32.mrb[0].mxu0
    %v7584 = vadd.f32 %v7023, %v7583
    %v7585 = vpop.f32.mrb[0].mxu0
    %7586 = vmatprep.mubr.f32.mxu0 %v7209
    %7587 = vmatmul.mubr.f32.gmra.mrb[0].mxu0 %v6994
    %v7588 = vpop.f32.mrb[0].mxu0
    %v7589 = vadd.f32 %v7023, %v7588
    %v7590 = vpop.f32.mrb[0].mxu0
    %7591 = vmatprep.mubr.f32.mxu0 %v7212
    %7592 = vmatmul.mubr.f32.gmra.mrb[0].mxu0 %v6996
    %v7593 = vpop.f32.mrb[0].mxu0
    %v7594 = vadd.f32 %v7023, %v7593
    %v7595 = vpop.f32.mrb[0].mxu0
    %7596 = vmatprep.mubr.f32.mxu0 %v7215
    %7597 = vmatmul.mubr.f32.gmra.mrb[0].mxu0 %v6998
    %v7598 = vpop.f32.mrb[0].mxu0
    %v7599 = vadd.f32 %v7023, %v7598
    %v7600 = vpop.f32.mrb[0].mxu0
    %7601 = vdwg.mxu0
    %v7602 = vmax.f32 %v7284, 0.0
    %v7603 = vmax.f32 %v7289, 0.0
    %v7604 = vmax.f32 %v7294, 0.0
    %v7605 = vmax.f32 %v7299, 0.0
    %v7606 = vmax.f32 %v7304, 0.0
    %v7607 = vmax.f32 %v7309, 0.0
    %v7608 = vmax.f32 %v7314, 0.0
    %v7609 = vmax.f32 %v7319, 0.0
    %v7610 = vmax.f32 %v7324, 0.0
    %v7611 = vmax.f32 %v7329, 0.0
    %v7612 = vmax.f32 %v7334, 0.0
    %v7613 = vmax.f32 %v7339, 0.0
    %v7614 = vmax.f32 %v7344, 0.0
    %v7615 = vmax.f32 %v7349, 0.0
    %v7616 = vmax.f32 %v7354, 0.0
    %v7617 = vmax.f32 %v7359, 0.0
    %v7618 = vmax.f32 %v7364, 0.0
    %v7619 = vmax.f32 %v7369, 0.0
    %v7620 = vmax.f32 %v7374, 0.0
    %v7621 = vmax.f32 %v7379, 0.0
    %v7622 = vmax.f32 %v7384, 0.0
    %v7623 = vmax.f32 %v7389, 0.0
    %v7624 = vmax.f32 %v7394, 0.0
    %v7625 = vmax.f32 %v7399, 0.0
    %v7626 = vmax.f32 %v7404, 0.0
    %v7627 = vmax.f32 %v7409, 0.0
    %v7628 = vmax.f32 %v7414, 0.0
    %v7629 = vmax.f32 %v7419, 0.0
    %v7630 = vmax.f32 %v7424, 0.0
    %v7631 = vmax.f32 %v7429, 0.0
    %v7632 = vmax.f32 %v7434, 0.0
    %v7633 = vmax.f32 %v7439, 0.0
    %v7634 = vmax.f32 %v7444, 0.0
    %v7635 = vmax.f32 %v7449, 0.0
    %v7636 = vmax.f32 %v7454, 0.0
    %v7637 = vmax.f32 %v7459, 0.0
    %v7638 = vmax.f32 %v7464, 0.0
    %v7639 = vmax.f32 %v7469, 0.0
    %v7640 = vmax.f32 %v7474, 0.0
    %v7641 = vmax.f32 %v7479, 0.0
    %v7642 = vmax.f32 %v7484, 0.0
    %v7643 = vmax.f32 %v7489, 0.0
    %v7644 = vmax.f32 %v7494, 0.0
    %v7645 = vmax.f32 %v7499, 0.0
    %v7646 = vmax.f32 %v7504, 0.0
    %v7647 = vmax.f32 %v7509, 0.0
    %v7648 = vmax.f32 %v7514, 0.0
    %v7649 = vmax.f32 %v7519, 0.0
    %v7650 = vmax.f32 %v7524, 0.0
    %v7651 = vmax.f32 %v7529, 0.0
    %v7652 = vmax.f32 %v7534, 0.0
    %v7653 = vmax.f32 %v7539, 0.0
    %v7654 = vmax.f32 %v7544, 0.0
    %v7655 = vmax.f32 %v7549, 0.0
    %v7656 = vmax.f32 %v7554, 0.0
    %v7657 = vmax.f32 %v7559, 0.0
    %v7658 = vmax.f32 %v7564, 0.0
    %v7659 = vmax.f32 %v7569, 0.0
    %v7660 = vmax.f32 %v7574, 0.0
    %v7661 = vmax.f32 %v7579, 0.0
    %v7662 = vmax.f32 %v7584, 0.0
    %v7663 = vmax.f32 %v7589, 0.0
    %v7664 = vmax.f32 %v7594, 0.0
    %v7665 = vmax.f32 %v7599, 0.0
    %vm7666 = vcmask 261120
    %7667 = vst.msk [vmem:[#allocation5] sm:$0xff] %vm7666, %v7602
    %7668 = vst.msk [vmem:[#allocation5 + $0x8] sm:$0xff] %vm7666, %v7603
    %7669 = vst.msk [vmem:[#allocation5 + $0x10] sm:$0xff] %vm7666, %v7604
    %7670 = vst.msk [vmem:[#allocation5 + $0x18] sm:$0xff] %vm7666, %v7605
    %7671 = vst.msk [vmem:[#allocation5 + $0x20] sm:$0xff] %vm7666, %v7606
    %7672 = vst.msk [vmem:[#allocation5 + $0x28] sm:$0xff] %vm7666, %v7607
    %7673 = vst.msk [vmem:[#allocation5 + $0x30] sm:$0xff] %vm7666, %v7608
    %7674 = vst.msk [vmem:[#allocation5 + $0x38] sm:$0xff] %vm7666, %v7609
    %7675 = vst.msk [vmem:[#allocation5 + $0x40] sm:$0xff] %vm7666, %v7610
    %7676 = vst.msk [vmem:[#allocation5 + $0x48] sm:$0xff] %vm7666, %v7611
    %7677 = vst.msk [vmem:[#allocation5 + $0x50] sm:$0xff] %vm7666, %v7612
    %7678 = vst.msk [vmem:[#allocation5 + $0x58] sm:$0xff] %vm7666, %v7613
    %7679 = vst.msk [vmem:[#allocation5 + $0x60] sm:$0xff] %vm7666, %v7614
    %7680 = vst.msk [vmem:[#allocation5 + $0x68] sm:$0xff] %vm7666, %v7615
    %7681 = vst.msk [vmem:[#allocation5 + $0x70] sm:$0xff] %vm7666, %v7616
    %7682 = vst.msk [vmem:[#allocation5 + $0x78] sm:$0xff] %vm7666, %v7617
    %7683 = vst.msk [vmem:[#allocation5 + $0x80] sm:$0xff] %vm7666, %v7618
    %7684 = vst.msk [vmem:[#allocation5 + $0x88] sm:$0xff] %vm7666, %v7619
    %7685 = vst.msk [vmem:[#allocation5 + $0x90] sm:$0xff] %vm7666, %v7620
    %7686 = vst.msk [vmem:[#allocation5 + $0x98] sm:$0xff] %vm7666, %v7621
    %7687 = vst.msk [vmem:[#allocation5 + $0xa0] sm:$0xff] %vm7666, %v7622
    %7688 = vst.msk [vmem:[#allocation5 + $0xa8] sm:$0xff] %vm7666, %v7623
    %7689 = vst.msk [vmem:[#allocation5 + $0xb0] sm:$0xff] %vm7666, %v7624
    %7690 = vst.msk [vmem:[#allocation5 + $0xb8] sm:$0xff] %vm7666, %v7625
    %7691 = vst.msk [vmem:[#allocation5 + $0xc0] sm:$0xff] %vm7666, %v7626
    %7692 = vst.msk [vmem:[#allocation5 + $0xc8] sm:$0xff] %vm7666, %v7627
    %7693 = vst.msk [vmem:[#allocation5 + $0xd0] sm:$0xff] %vm7666, %v7628
    %7694 = vst.msk [vmem:[#allocation5 + $0xd8] sm:$0xff] %vm7666, %v7629
    %7695 = vst.msk [vmem:[#allocation5 + $0xe0] sm:$0xff] %vm7666, %v7630
    %7696 = vst.msk [vmem:[#allocation5 + $0xe8] sm:$0xff] %vm7666, %v7631
    %7697 = vst.msk [vmem:[#allocation5 + $0xf0] sm:$0xff] %vm7666, %v7632
    %7698 = vst.msk [vmem:[#allocation5 + $0xf8] sm:$0xff] %vm7666, %v7633
    %7699 = vst.msk [vmem:[#allocation5 + $0x100] sm:$0xff] %vm7666, %v7634
    %7700 = vst.msk [vmem:[#allocation5 + $0x108] sm:$0xff] %vm7666, %v7635
    %7701 = vst.msk [vmem:[#allocation5 + $0x110] sm:$0xff] %vm7666, %v7636
    %7702 = vst.msk [vmem:[#allocation5 + $0x118] sm:$0xff] %vm7666, %v7637
    %7703 = vst.msk [vmem:[#allocation5 + $0x120] sm:$0xff] %vm7666, %v7638
    %7704 = vst.msk [vmem:[#allocation5 + $0x128] sm:$0xff] %vm7666, %v7639
    %7705 = vst.msk [vmem:[#allocation5 + $0x130] sm:$0xff] %vm7666, %v7640
    %7706 = vst.msk [vmem:[#allocation5 + $0x138] sm:$0xff] %vm7666, %v7641
    %7707 = vst.msk [vmem:[#allocation5 + $0x140] sm:$0xff] %vm7666, %v7642
    %7708 = vst.msk [vmem:[#allocation5 + $0x148] sm:$0xff] %vm7666, %v7643
    %7709 = vst.msk [vmem:[#allocation5 + $0x150] sm:$0xff] %vm7666, %v7644
    %7710 = vst.msk [vmem:[#allocation5 + $0x158] sm:$0xff] %vm7666, %v7645
    %7711 = vst.msk [vmem:[#allocation5 + $0x160] sm:$0xff] %vm7666, %v7646
    %7712 = vst.msk [vmem:[#allocation5 + $0x168] sm:$0xff] %vm7666, %v7647
    %7713 = vst.msk [vmem:[#allocation5 + $0x170] sm:$0xff] %vm7666, %v7648
    %7714 = vst.msk [vmem:[#allocation5 + $0x178] sm:$0xff] %vm7666, %v7649
    %7715 = vst.msk [vmem:[#allocation5 + $0x180] sm:$0xff] %vm7666, %v7650
    %7716 = vst.msk [vmem:[#allocation5 + $0x188] sm:$0xff] %vm7666, %v7651
    %7717 = vst.msk [vmem:[#allocation5 + $0x190] sm:$0xff] %vm7666, %v7652
    %7718 = vst.msk [vmem:[#allocation5 + $0x198] sm:$0xff] %vm7666, %v7653
    %7719 = vst.msk [vmem:[#allocation5 + $0x1a0] sm:$0xff] %vm7666, %v7654
    %7720 = vst.msk [vmem:[#allocation5 + $0x1a8] sm:$0xff] %vm7666, %v7655
    %7721 = vst.msk [vmem:[#allocation5 + $0x1b0] sm:$0xff] %vm7666, %v7656
    %7722 = vst.msk [vmem:[#allocation5 + $0x1b8] sm:$0xff] %vm7666, %v7657
    %7723 = vst.msk [vmem:[#allocation5 + $0x1c0] sm:$0xff] %vm7666, %v7658
    %7724 = vst.msk [vmem:[#allocation5 + $0x1c8] sm:$0xff] %vm7666, %v7659
    %7725 = vst.msk [vmem:[#allocation5 + $0x1d0] sm:$0xff] %vm7666, %v7660
    %7726 = vst.msk [vmem:[#allocation5 + $0x1d8] sm:$0xff] %vm7666, %v7661
    %7727 = vst.msk [vmem:[#allocation5 + $0x1e0] sm:$0xff] %vm7666, %v7662
    %7728 = vst.msk [vmem:[#allocation5 + $0x1e8] sm:$0xff] %vm7666, %v7663
    %7729 = vst.msk [vmem:[#allocation5 + $0x1f0] sm:$0xff] %vm7666, %v7664
    %7730 = vst.msk [vmem:[#allocation5 + $0x1f8] sm:$0xff] %vm7666, %v7665
    %7731 = vst.msk [vmem:[#allocation6] sm:$0xff] %vm7666, 0.0
    %vm7732 = vcmask 254976
    %7733 = vst.msk [vmem:[#allocation6 + $0x8] sm:$0x3] %vm7732, 0.0
    %7734 = vst.msk [vmem:[#allocation6 + $0xa0] sm:$0xff] %vm7666, 0.0
    %7735 = vst.msk [vmem:[#allocation6 + $0xa8] sm:$0x3] %vm7732, 0.0
    %s7736 = scalar_lea.vmem [#allocation6], 144
    %7737 = vst.msk [vmem:[%s7736] sm:$0xff] %vm7666, 0.0
    %7738 = vst.msk [vmem:[%s7736 + $0x8] sm:$0x3] %vm7732, 0.0
    %7739 = vst.msk [vmem:[%s7736 + $0xa0] sm:$0xff] %vm7666, 0.0
    %7740 = vst.msk [vmem:[%s7736 + $0xa8] sm:$0x3] %vm7732, 0.0
    %vm7741 = vcmask 253952
    %7742 = vst.msk [vmem:[#allocation6] sm:$0x1] %vm7741, 0.0
    %7743 = vst.msk [vmem:[#allocation6 + $0x10] sm:$0x1] %vm7741, 0.0
    %7744 = vst.msk [vmem:[#allocation6 + $0x20] sm:$0x1] %vm7741, 0.0
    %7745 = vst.msk [vmem:[#allocation6 + $0x30] sm:$0x1] %vm7741, 0.0
    %7746 = vst.msk [vmem:[#allocation6 + $0x40] sm:$0x1] %vm7741, 0.0
    %7747 = vst.msk [vmem:[#allocation6 + $0x50] sm:$0x1] %vm7741, 0.0
    %7748 = vst.msk [vmem:[#allocation6 + $0x60] sm:$0x1] %vm7741, 0.0
    %7749 = vst.msk [vmem:[#allocation6 + $0x70] sm:$0x1] %vm7741, 0.0
    %7750 = vst.msk [vmem:[#allocation6 + $0x80] sm:$0x1] %vm7741, 0.0
    %7751 = vst.msk [vmem:[#allocation6 + $0x90] sm:$0x1] %vm7741, 0.0
    %7752 = vst.msk [vmem:[#allocation6 + $0xa0] sm:$0x1] %vm7741, 0.0
    %7753 = vst.msk [vmem:[#allocation6 + $0xb0] sm:$0x1] %vm7741, 0.0
    %7754 = vst.msk [vmem:[#allocation6 + $0xc0] sm:$0x1] %vm7741, 0.0
    %7755 = vst.msk [vmem:[#allocation6 + $0xd0] sm:$0x1] %vm7741, 0.0
    %7756 = vst.msk [vmem:[#allocation6 + $0xe0] sm:$0x1] %vm7741, 0.0
    %7757 = vst.msk [vmem:[#allocation6 + $0xf0] sm:$0x1] %vm7741, 0.0
    %7758 = vst.msk [vmem:[#allocation6 + $0x100] sm:$0x1] %vm7741, 0.0
    %7759 = vst.msk [vmem:[#allocation6 + $0x110] sm:$0x1] %vm7741, 0.0
    %7760 = vst.msk [vmem:[#allocation6 + $0x120] sm:$0x1] %vm7741, 0.0
    %7761 = vst.msk [vmem:[#allocation6 + $0x130] sm:$0x1] %vm7741, 0.0
    %7762 = vst.msk [vmem:[#allocation6 + $0x9] sm:$0x1] %vm7741, 0.0
    %7763 = vst.msk [vmem:[#allocation6 + $0x19] sm:$0x1] %vm7741, 0.0
    %7764 = vst.msk [vmem:[#allocation6 + $0x29] sm:$0x1] %vm7741, 0.0
    %7765 = vst.msk [vmem:[#allocation6 + $0x39] sm:$0x1] %vm7741, 0.0
    %7766 = vst.msk [vmem:[#allocation6 + $0x49] sm:$0x1] %vm7741, 0.0
    %7767 = vst.msk [vmem:[#allocation6 + $0x59] sm:$0x1] %vm7741, 0.0
    %7768 = vst.msk [vmem:[#allocation6 + $0x69] sm:$0x1] %vm7741, 0.0
    %7769 = vst.msk [vmem:[#allocation6 + $0x79] sm:$0x1] %vm7741, 0.0
    %7770 = vst.msk [vmem:[#allocation6 + $0x89] sm:$0x1] %vm7741, 0.0
    %7771 = vst.msk [vmem:[#allocation6 + $0x99] sm:$0x1] %vm7741, 0.0
    %7772 = vst.msk [vmem:[#allocation6 + $0xa9] sm:$0x1] %vm7741, 0.0
    %7773 = vst.msk [vmem:[#allocation6 + $0xb9] sm:$0x1] %vm7741, 0.0
    %7774 = vst.msk [vmem:[#allocation6 + $0xc9] sm:$0x1] %vm7741, 0.0
    %7775 = vst.msk [vmem:[#allocation6 + $0xd9] sm:$0x1] %vm7741, 0.0
    %7776 = vst.msk [vmem:[#allocation6 + $0xe9] sm:$0x1] %vm7741, 0.0
    %7777 = vst.msk [vmem:[#allocation6 + $0xf9] sm:$0x1] %vm7741, 0.0
    %7778 = vst.msk [vmem:[#allocation6 + $0x109] sm:$0x1] %vm7741, 0.0
    %7779 = vst.msk [vmem:[#allocation6 + $0x119] sm:$0x1] %vm7741, 0.0
    %7780 = vst.msk [vmem:[#allocation6 + $0x129] sm:$0x1] %vm7741, 0.0
    %7781 = vst.msk [vmem:[#allocation6 + $0x139] sm:$0x1] %vm7741, 0.0
    %v7782 = vld [vmem:[#allocation5] ss:$2 sm:$0xff]
    %s7783 = scalar_lea.vmem [#allocation5], 16
    %v7784 = vld [vmem:[%s7783] ss:$2 sm:$0xff]
    %s7785 = scalar_lea.vmem [#allocation5], 32
    %v7786 = vld [vmem:[%s7785] ss:$2 sm:$0xff]
    %s7787 = scalar_lea.vmem [#allocation5], 48
    %v7788 = vld [vmem:[%s7787] ss:$2 sm:$0xff]
    %s7789 = scalar_lea.vmem [#allocation5], 64
    %v7790 = vld [vmem:[%s7789] ss:$2 sm:$0xff]
    %s7791 = scalar_lea.vmem [#allocation5], 80
    %v7792 = vld [vmem:[%s7791] ss:$2 sm:$0xff]
    %s7793 = scalar_lea.vmem [#allocation5], 96
    %v7794 = vld [vmem:[%s7793] ss:$2 sm:$0xff]
    %s7795 = scalar_lea.vmem [#allocation5], 112
    %v7796 = vld [vmem:[%s7795] ss:$2 sm:$0xff]
    %s7797 = scalar_lea.vmem [#allocation5], 128
    %v7798 = vld [vmem:[%s7797] ss:$2 sm:$0xff]
    %s7799 = scalar_lea.vmem [#allocation5], 144
    %v7800 = vld [vmem:[%s7799] ss:$2 sm:$0xff]
    %s7801 = scalar_lea.vmem [#allocation5], 160
    %v7802 = vld [vmem:[%s7801] ss:$2 sm:$0xff]
    %s7803 = scalar_lea.vmem [#allocation5], 176
    %v7804 = vld [vmem:[%s7803] ss:$2 sm:$0xff]
    %s7805 = scalar_lea.vmem [#allocation5], 192
    %v7806 = vld [vmem:[%s7805] ss:$2 sm:$0xff]
    %s7807 = scalar_lea.vmem [#allocation5], 208
    %v7808 = vld [vmem:[%s7807] ss:$2 sm:$0xff]
    %s7809 = scalar_lea.vmem [#allocation5], 224
    %v7810 = vld [vmem:[%s7809] ss:$2 sm:$0xff]
    %s7811 = scalar_lea.vmem [#allocation5], 240
    %v7812 = vld [vmem:[%s7811] ss:$2 sm:$0xff]
    %s7813 = scalar_lea.vmem [#allocation5], 256
    %v7814 = vld [vmem:[%s7813] ss:$2 sm:$0xff]
    %s7815 = scalar_lea.vmem [#allocation5], 272
    %v7816 = vld [vmem:[%s7815] ss:$2 sm:$0xff]
    %s7817 = scalar_lea.vmem [#allocation5], 288
    %v7818 = vld [vmem:[%s7817] ss:$2 sm:$0xff]
    %s7819 = scalar_lea.vmem [#allocation5], 304
    %v7820 = vld [vmem:[%s7819] ss:$2 sm:$0xff]
    %s7821 = scalar_lea.vmem [#allocation5], 320
    %v7822 = vld [vmem:[%s7821] ss:$2 sm:$0xff]
    %s7823 = scalar_lea.vmem [#allocation5], 336
    %v7824 = vld [vmem:[%s7823] ss:$2 sm:$0xff]
    %s7825 = scalar_lea.vmem [#allocation5], 352
    %v7826 = vld [vmem:[%s7825] ss:$2 sm:$0xff]
    %s7827 = scalar_lea.vmem [#allocation5], 368
    %v7828 = vld [vmem:[%s7827] ss:$2 sm:$0xff]
    %s7829 = scalar_lea.vmem [#allocation5], 384
    %v7830 = vld [vmem:[%s7829] ss:$2 sm:$0xff]
    %s7831 = scalar_lea.vmem [#allocation5], 400
    %v7832 = vld [vmem:[%s7831] ss:$2 sm:$0xff]
    %s7833 = scalar_lea.vmem [#allocation5], 416
    %v7834 = vld [vmem:[%s7833] ss:$2 sm:$0xff]
    %s7835 = scalar_lea.vmem [#allocation5], 432
    %v7836 = vld [vmem:[%s7835] ss:$2 sm:$0xff]
    %s7837 = scalar_lea.vmem [#allocation5], 448
    %v7838 = vld [vmem:[%s7837] ss:$2 sm:$0xff]
    %s7839 = scalar_lea.vmem [#allocation5], 464
    %v7840 = vld [vmem:[%s7839] ss:$2 sm:$0xff]
    %s7841 = scalar_lea.vmem [#allocation5], 480
    %v7842 = vld [vmem:[%s7841] ss:$2 sm:$0xff]
    %s7843 = scalar_lea.vmem [#allocation5], 496
    %v7844 = vld [vmem:[%s7843] ss:$2 sm:$0xff]
    %s7845 = scalar_lea.vmem [#allocation5], 1
    %v7846 = vld [vmem:[%s7845] ss:$2 sm:$0xff]
    %s7847 = scalar_lea.vmem [#allocation5], 17
    %v7848 = vld [vmem:[%s7847] ss:$2 sm:$0xff]
    %s7849 = scalar_lea.vmem [#allocation5], 33
    %v7850 = vld [vmem:[%s7849] ss:$2 sm:$0xff]
    %s7851 = scalar_lea.vmem [#allocation5], 49
    %v7852 = vld [vmem:[%s7851] ss:$2 sm:$0xff]
    %s7853 = scalar_lea.vmem [#allocation5], 65
    %v7854 = vld [vmem:[%s7853] ss:$2 sm:$0xff]
    %s7855 = scalar_lea.vmem [#allocation5], 81
    %v7856 = vld [vmem:[%s7855] ss:$2 sm:$0xff]
    %s7857 = scalar_lea.vmem [#allocation5], 97
    %v7858 = vld [vmem:[%s7857] ss:$2 sm:$0xff]
    %s7859 = scalar_lea.vmem [#allocation5], 113
    %v7860 = vld [vmem:[%s7859] ss:$2 sm:$0xff]
    %s7861 = scalar_lea.vmem [#allocation5], 129
    %v7862 = vld [vmem:[%s7861] ss:$2 sm:$0xff]
    %s7863 = scalar_lea.vmem [#allocation5], 145
    %v7864 = vld [vmem:[%s7863] ss:$2 sm:$0xff]
    %s7865 = scalar_lea.vmem [#allocation5], 161
    %v7866 = vld [vmem:[%s7865] ss:$2 sm:$0xff]
    %s7867 = scalar_lea.vmem [#allocation5], 177
    %v7868 = vld [vmem:[%s7867] ss:$2 sm:$0xff]
    %s7869 = scalar_lea.vmem [#allocation5], 193
    %v7870 = vld [vmem:[%s7869] ss:$2 sm:$0xff]
    %s7871 = scalar_lea.vmem [#allocation5], 209
    %v7872 = vld [vmem:[%s7871] ss:$2 sm:$0xff]
    %s7873 = scalar_lea.vmem [#allocation5], 225
    %v7874 = vld [vmem:[%s7873] ss:$2 sm:$0xff]
    %s7875 = scalar_lea.vmem [#allocation5], 241
    %v7876 = vld [vmem:[%s7875] ss:$2 sm:$0xff]
    %s7877 = scalar_lea.vmem [#allocation5], 257
    %v7878 = vld [vmem:[%s7877] ss:$2 sm:$0xff]
    %s7879 = scalar_lea.vmem [#allocation5], 273
    %v7880 = vld [vmem:[%s7879] ss:$2 sm:$0xff]
    %s7881 = scalar_lea.vmem [#allocation5], 289
    %v7882 = vld [vmem:[%s7881] ss:$2 sm:$0xff]
    %s7883 = scalar_lea.vmem [#allocation5], 305
    %v7884 = vld [vmem:[%s7883] ss:$2 sm:$0xff]
    %s7885 = scalar_lea.vmem [#allocation5], 321
    %v7886 = vld [vmem:[%s7885] ss:$2 sm:$0xff]
    %s7887 = scalar_lea.vmem [#allocation5], 337
    %v7888 = vld [vmem:[%s7887] ss:$2 sm:$0xff]
    %s7889 = scalar_lea.vmem [#allocation5], 353
    %v7890 = vld [vmem:[%s7889] ss:$2 sm:$0xff]
    %s7891 = scalar_lea.vmem [#allocation5], 369
    %v7892 = vld [vmem:[%s7891] ss:$2 sm:$0xff]
    %s7893 = scalar_lea.vmem [#allocation5], 385
    %v7894 = vld [vmem:[%s7893] ss:$2 sm:$0xff]
    %s7895 = scalar_lea.vmem [#allocation5], 401
    %v7896 = vld [vmem:[%s7895] ss:$2 sm:$0xff]
    %s7897 = scalar_lea.vmem [#allocation5], 417
    %v7898 = vld [vmem:[%s7897] ss:$2 sm:$0xff]
    %s7899 = scalar_lea.vmem [#allocation5], 433
    %v7900 = vld [vmem:[%s7899] ss:$2 sm:$0xff]
    %s7901 = scalar_lea.vmem [#allocation5], 449
    %v7902 = vld [vmem:[%s7901] ss:$2 sm:$0xff]
    %s7903 = scalar_lea.vmem [#allocation5], 465
    %v7904 = vld [vmem:[%s7903] ss:$2 sm:$0xff]
    %s7905 = scalar_lea.vmem [#allocation5], 481
    %v7906 = vld [vmem:[%s7905] ss:$2 sm:$0xff]
    %s7907 = scalar_lea.vmem [#allocation5], 497
    %v7908 = vld [vmem:[%s7907] ss:$2 sm:$0xff]
    %v7909 = vmax.f32 %v7782, %v7846
    %v7910 = vmax.f32 %v7784, %v7848
    %v7911 = vmax.f32 %v7786, %v7850
    %v7912 = vmax.f32 %v7788, %v7852
    %v7913 = vmax.f32 %v7790, %v7854
    %v7914 = vmax.f32 %v7792, %v7856
    %v7915 = vmax.f32 %v7794, %v7858
    %v7916 = vmax.f32 %v7796, %v7860
    %v7917 = vmax.f32 %v7798, %v7862
    %v7918 = vmax.f32 %v7800, %v7864
    %v7919 = vmax.f32 %v7802, %v7866
    %v7920 = vmax.f32 %v7804, %v7868
    %v7921 = vmax.f32 %v7806, %v7870
    %v7922 = vmax.f32 %v7808, %v7872
    %v7923 = vmax.f32 %v7810, %v7874
    %v7924 = vmax.f32 %v7812, %v7876
    %v7925 = vmax.f32 %v7814, %v7878
    %v7926 = vmax.f32 %v7816, %v7880
    %v7927 = vmax.f32 %v7818, %v7882
    %v7928 = vmax.f32 %v7820, %v7884
    %v7929 = vmax.f32 %v7822, %v7886
    %v7930 = vmax.f32 %v7824, %v7888
    %v7931 = vmax.f32 %v7826, %v7890
    %v7932 = vmax.f32 %v7828, %v7892
    %v7933 = vmax.f32 %v7830, %v7894
    %v7934 = vmax.f32 %v7832, %v7896
    %v7935 = vmax.f32 %v7834, %v7898
    %v7936 = vmax.f32 %v7836, %v7900
    %v7937 = vmax.f32 %v7838, %v7902
    %v7938 = vmax.f32 %v7840, %v7904
    %v7939 = vmax.f32 %v7842, %v7906
    %v7940 = vmax.f32 %v7844, %v7908
    %v7941 = vsel %vm7666, %v7909, -inf
    %v7942 = vsel %vm7666, %v7910, -inf
    %v7943 = vmax.f32 %v7941, %v7942
    %v7944 = vsel %vm7666, %v7911, -inf
    %v7945 = vsel %vm7666, %v7912, -inf
    %v7946 = vmax.f32 %v7944, %v7945
    %v7947 = vsel %vm7666, %v7913, -inf
    %v7948 = vsel %vm7666, %v7914, -inf
    %v7949 = vmax.f32 %v7947, %v7948
    %v7950 = vsel %vm7666, %v7915, -inf
    %v7951 = vsel %vm7666, %v7916, -inf
    %v7952 = vmax.f32 %v7950, %v7951
    %v7953 = vsel %vm7666, %v7917, -inf
    %v7954 = vsel %vm7666, %v7918, -inf
    %v7955 = vmax.f32 %v7953, %v7954
    %v7956 = vsel %vm7666, %v7919, -inf
    %v7957 = vsel %vm7666, %v7920, -inf
    %v7958 = vmax.f32 %v7956, %v7957
    %v7959 = vsel %vm7666, %v7921, -inf
    %v7960 = vsel %vm7666, %v7922, -inf
    %v7961 = vmax.f32 %v7959, %v7960
    %v7962 = vsel %vm7666, %v7923, -inf
    %v7963 = vsel %vm7666, %v7924, -inf
    %v7964 = vmax.f32 %v7962, %v7963
    %v7965 = vsel %vm7666, %v7925, -inf
    %v7966 = vsel %vm7666, %v7926, -inf
    %v7967 = vmax.f32 %v7965, %v7966
    %v7968 = vsel %vm7666, %v7927, -inf
    %v7969 = vsel %vm7666, %v7928, -inf
    %v7970 = vmax.f32 %v7968, %v7969
    %v7971 = vsel %vm7666, %v7929, -inf
    %v7972 = vsel %vm7666, %v7930, -inf
    %v7973 = vmax.f32 %v7971, %v7972
    %v7974 = vsel %vm7666, %v7931, -inf
    %v7975 = vsel %vm7666, %v7932, -inf
    %v7976 = vmax.f32 %v7974, %v7975
    %v7977 = vsel %vm7666, %v7933, -inf
    %v7978 = vsel %vm7666, %v7934, -inf
    %v7979 = vmax.f32 %v7977, %v7978
    %v7980 = vsel %vm7666, %v7935, -inf
    %v7981 = vsel %vm7666, %v7936, -inf
    %v7982 = vmax.f32 %v7980, %v7981
    %v7983 = vsel %vm7666, %v7937, -inf
    %v7984 = vsel %vm7666, %v7938, -inf
    %v7985 = vmax.f32 %v7983, %v7984
    %v7986 = vsel %vm7666, %v7939, -inf
    %v7987 = vsel %vm7666, %v7940, -inf
    %v7988 = vmax.f32 %v7986, %v7987
    %s7989 = scalar_lea.vmem [#allocation6], 16
    %7990 = vst.msk [vmem:[%s7989 + $0x1] sm:$0xff] %vm7666, %v7943
    %7991 = vst.msk [vmem:[%s7989 + $0x11] sm:$0xff] %vm7666, %v7946
    %7992 = vst.msk [vmem:[%s7989 + $0x21] sm:$0xff] %vm7666, %v7949
    %7993 = vst.msk [vmem:[%s7989 + $0x31] sm:$0xff] %vm7666, %v7952
    %7994 = vst.msk [vmem:[%s7989 + $0x41] sm:$0xff] %vm7666, %v7955
    %7995 = vst.msk [vmem:[%s7989 + $0x51] sm:$0xff] %vm7666, %v7958
    %7996 = vst.msk [vmem:[%s7989 + $0x61] sm:$0xff] %vm7666, %v7961
    %7997 = vst.msk [vmem:[%s7989 + $0x71] sm:$0xff] %vm7666, %v7964
    %7998 = vst.msk [vmem:[%s7989 + $0xa1] sm:$0xff] %vm7666, %v7967
    %7999 = vst.msk [vmem:[%s7989 + $0xb1] sm:$0xff] %vm7666, %v7970
    %8000 = vst.msk [vmem:[%s7989 + $0xc1] sm:$0xff] %vm7666, %v7973
    %8001 = vst.msk [vmem:[%s7989 + $0xd1] sm:$0xff] %vm7666, %v7976
    %8002 = vst.msk [vmem:[%s7989 + $0xe1] sm:$0xff] %vm7666, %v7979
    %8003 = vst.msk [vmem:[%s7989 + $0xf1] sm:$0xff] %vm7666, %v7982
    %8004 = vst.msk [vmem:[%s7989 + $0x101] sm:$0xff] %vm7666, %v7985
    %8005 = vst.msk [vmem:[%s7989 + $0x111] sm:$0xff] %vm7666, %v7988
    %v8006 = vld [vmem:[#allocation6] sm:$0xff]
    %v8007 = vld [vmem:[#allocation6 + $0x10] sm:$0xff]
    %v8008 = vld [vmem:[#allocation6 + $0x20] sm:$0xff]
    %v8009 = vld [vmem:[#allocation6 + $0x30] sm:$0xff]
    %v8010 = vld [vmem:[#allocation6 + $0x40] sm:$0xff]
    %v8011 = vld [vmem:[#allocation6 + $0x50] sm:$0xff]
    %v8012 = vld [vmem:[#allocation6 + $0x60] sm:$0xff]
    %v8013 = vld [vmem:[#allocation6 + $0x70] sm:$0xff]
    %v8014 = vld [vmem:[#allocation6 + $0xa0] sm:$0xff]
    %v8015 = vld [vmem:[#allocation6 + $0xb0] sm:$0xff]
    %v8016 = vld [vmem:[#allocation6 + $0xc0] sm:$0xff]
    %v8017 = vld [vmem:[#allocation6 + $0xd0] sm:$0xff]
    %v8018 = vld [vmem:[#allocation6 + $0xe0] sm:$0xff]
    %v8019 = vld [vmem:[#allocation6 + $0xf0] sm:$0xff]
    %v8020 = vld [vmem:[#allocation6 + $0x100] sm:$0xff]
    %v8021 = vld [vmem:[#allocation6 + $0x110] sm:$0xff]
    %8022 = vst.msk [vmem:[#allocation7] sm:$0xff] %vm7666, %v8006
    %8023 = vst.msk [vmem:[#allocation7 + $0x18] sm:$0xff] %vm7666, %v8007
    %8024 = vst.msk [vmem:[#allocation7 + $0x30] sm:$0xff] %vm7666, %v8008
    %8025 = vst.msk [vmem:[#allocation7 + $0x48] sm:$0xff] %vm7666, %v8009
    %8026 = vst.msk [vmem:[#allocation7 + $0x60] sm:$0xff] %vm7666, %v8010
    %8027 = vst.msk [vmem:[#allocation7 + $0x78] sm:$0xff] %vm7666, %v8011
    %8028 = vst.msk [vmem:[#allocation7 + $0x90] sm:$0xff] %vm7666, %v8012
    %8029 = vst.msk [vmem:[#allocation7 + $0xa8] sm:$0xff] %vm7666, %v8013
    %8030 = vst.msk [vmem:[#allocation7 + $0xc0] sm:$0xff] %vm7666, %v8014
    %8031 = vst.msk [vmem:[#allocation7 + $0xd8] sm:$0xff] %vm7666, %v8015
    %8032 = vst.msk [vmem:[#allocation7 + $0xf0] sm:$0xff] %vm7666, %v8016
    %8033 = vst.msk [vmem:[#allocation7 + $0x108] sm:$0xff] %vm7666, %v8017
    %8034 = vst.msk [vmem:[#allocation7 + $0x120] sm:$0xff] %vm7666, %v8018
    %8035 = vst.msk [vmem:[#allocation7 + $0x138] sm:$0xff] %vm7666, %v8019
    %8036 = vst.msk [vmem:[#allocation7 + $0x150] sm:$0xff] %vm7666, %v8020
    %8037 = vst.msk [vmem:[#allocation7 + $0x168] sm:$0xff] %vm7666, %v8021
    %v8038 = vld [vmem:[#allocation6 + $0x1] sm:$0xff]
    %v8039 = vld [vmem:[#allocation6 + $0x11] sm:$0xff]
    %v8040 = vld [vmem:[#allocation6 + $0x21] sm:$0xff]
    %v8041 = vld [vmem:[#allocation6 + $0x31] sm:$0xff]
    %v8042 = vld [vmem:[#allocation6 + $0x41] sm:$0xff]
    %v8043 = vld [vmem:[#allocation6 + $0x51] sm:$0xff]
    %v8044 = vld [vmem:[#allocation6 + $0x61] sm:$0xff]
    %v8045 = vld [vmem:[#allocation6 + $0x71] sm:$0xff]
    %v8046 = vld [vmem:[#allocation6 + $0xa1] sm:$0xff]
    %v8047 = vld [vmem:[#allocation6 + $0xb1] sm:$0xff]
    %v8048 = vld [vmem:[#allocation6 + $0xc1] sm:$0xff]
    %v8049 = vld [vmem:[#allocation6 + $0xd1] sm:$0xff]
    %v8050 = vld [vmem:[#allocation6 + $0xe1] sm:$0xff]
    %v8051 = vld [vmem:[#allocation6 + $0xf1] sm:$0xff]
    %v8052 = vld [vmem:[#allocation6 + $0x101] sm:$0xff]
    %v8053 = vld [vmem:[#allocation6 + $0x111] sm:$0xff]
    %8070 = vrot.lane.b32.xlu0 %v8038, 32
    %v8071 = vpop.permute.xlu0 %8070
    %8072 = vrot.lane.b32.xlu0 %v8039, 32
    %v8073 = vpop.permute.xlu0 %8072
    %8074 = vrot.lane.b32.xlu0 %v8040, 32
    %v8075 = vpop.permute.xlu0 %8074
    %8076 = vrot.lane.b32.xlu0 %v8041, 32
    %v8077 = vpop.permute.xlu0 %8076
    %8078 = vrot.lane.b32.xlu0 %v8042, 32
    %v8079 = vpop.permute.xlu0 %8078
    %8080 = vrot.lane.b32.xlu0 %v8043, 32
    %v8081 = vpop.permute.xlu0 %8080
    %8082 = vrot.lane.b32.xlu0 %v8044, 32
    %v8083 = vpop.permute.xlu0 %8082
    %8084 = vrot.lane.b32.xlu0 %v8045, 32
    %v8085 = vpop.permute.xlu0 %8084
    %8086 = vrot.lane.b32.xlu0 %v8046, 32
    %v8087 = vpop.permute.xlu0 %8086
    %8088 = vrot.lane.b32.xlu0 %v8047, 32
    %v8089 = vpop.permute.xlu0 %8088
    %8090 = vrot.lane.b32.xlu0 %v8048, 32
    %v8091 = vpop.permute.xlu0 %8090
    %8092 = vrot.lane.b32.xlu0 %v8049, 32
    %v8093 = vpop.permute.xlu0 %8092
    %8094 = vrot.lane.b32.xlu0 %v8050, 32
    %v8095 = vpop.permute.xlu0 %8094
    %8096 = vrot.lane.b32.xlu0 %v8051, 32
    %v8097 = vpop.permute.xlu0 %8096
    %8098 = vrot.lane.b32.xlu0 %v8052, 32
    %v8099 = vpop.permute.xlu0 %8098
    %8100 = vrot.lane.b32.xlu0 %v8053, 32
    %v8101 = vpop.permute.xlu0 %8100
    %vm8118 = vcmask 523520
    %8119 = vst.msk [vmem:[#allocation7] sm:$0xff] %vm8118, %v8071
    %8120 = vst.msk [vmem:[#allocation7 + $0x18] sm:$0xff] %vm8118, %v8073
    %8121 = vst.msk [vmem:[#allocation7 + $0x30] sm:$0xff] %vm8118, %v8075
    %8122 = vst.msk [vmem:[#allocation7 + $0x48] sm:$0xff] %vm8118, %v8077
    %8123 = vst.msk [vmem:[#allocation7 + $0x60] sm:$0xff] %vm8118, %v8079
    %8124 = vst.msk [vmem:[#allocation7 + $0x78] sm:$0xff] %vm8118, %v8081
    %8125 = vst.msk [vmem:[#allocation7 + $0x90] sm:$0xff] %vm8118, %v8083
    %8126 = vst.msk [vmem:[#allocation7 + $0xa8] sm:$0xff] %vm8118, %v8085
    %8127 = vst.msk [vmem:[#allocation7 + $0xc0] sm:$0xff] %vm8118, %v8087
    %8128 = vst.msk [vmem:[#allocation7 + $0xd8] sm:$0xff] %vm8118, %v8089
    %8129 = vst.msk [vmem:[#allocation7 + $0xf0] sm:$0xff] %vm8118, %v8091
    %8130 = vst.msk [vmem:[#allocation7 + $0x108] sm:$0xff] %vm8118, %v8093
    %8131 = vst.msk [vmem:[#allocation7 + $0x120] sm:$0xff] %vm8118, %v8095
    %8132 = vst.msk [vmem:[#allocation7 + $0x138] sm:$0xff] %vm8118, %v8097
    %8133 = vst.msk [vmem:[#allocation7 + $0x150] sm:$0xff] %vm8118, %v8099
    %8134 = vst.msk [vmem:[#allocation7 + $0x168] sm:$0xff] %vm8118, %v8101
    %v8135 = vld [vmem:[#allocation6 + $0x2] sm:$0xff]
    %v8136 = vld [vmem:[#allocation6 + $0x12] sm:$0xff]
    %v8137 = vld [vmem:[#allocation6 + $0x22] sm:$0xff]
    %v8138 = vld [vmem:[#allocation6 + $0x32] sm:$0xff]
    %v8139 = vld [vmem:[#allocation6 + $0x42] sm:$0xff]
    %v8140 = vld [vmem:[#allocation6 + $0x52] sm:$0xff]
    %v8141 = vld [vmem:[#allocation6 + $0x62] sm:$0xff]
    %v8142 = vld [vmem:[#allocation6 + $0x72] sm:$0xff]
    %v8143 = vld [vmem:[#allocation6 + $0xa2] sm:$0xff]
    %v8144 = vld [vmem:[#allocation6 + $0xb2] sm:$0xff]
    %v8145 = vld [vmem:[#allocation6 + $0xc2] sm:$0xff]
    %v8146 = vld [vmem:[#allocation6 + $0xd2] sm:$0xff]
    %v8147 = vld [vmem:[#allocation6 + $0xe2] sm:$0xff]
    %v8148 = vld [vmem:[#allocation6 + $0xf2] sm:$0xff]
    %v8149 = vld [vmem:[#allocation6 + $0x102] sm:$0xff]
    %v8150 = vld [vmem:[#allocation6 + $0x112] sm:$0xff]
    %8167 = vrot.lane.b32.xlu0 %v8135, 64
    %v8168 = vpop.permute.xlu0 %8167
    %8169 = vrot.lane.b32.xlu0 %v8136, 64
    %v8170 = vpop.permute.xlu0 %8169
    %8171 = vrot.lane.b32.xlu0 %v8137, 64
    %v8172 = vpop.permute.xlu0 %8171
    %8173 = vrot.lane.b32.xlu0 %v8138, 64
    %v8174 = vpop.permute.xlu0 %8173
    %8175 = vrot.lane.b32.xlu0 %v8139, 64
    %v8176 = vpop.permute.xlu0 %8175
    %8177 = vrot.lane.b32.xlu0 %v8140, 64
    %v8178 = vpop.permute.xlu0 %8177
    %8179 = vrot.lane.b32.xlu0 %v8141, 64
    %v8180 = vpop.permute.xlu0 %8179
    %8181 = vrot.lane.b32.xlu0 %v8142, 64
    %v8182 = vpop.permute.xlu0 %8181
    %8183 = vrot.lane.b32.xlu0 %v8143, 64
    %v8184 = vpop.permute.xlu0 %8183
    %8185 = vrot.lane.b32.xlu0 %v8144, 64
    %v8186 = vpop.permute.xlu0 %8185
    %8187 = vrot.lane.b32.xlu0 %v8145, 64
    %v8188 = vpop.permute.xlu0 %8187
    %8189 = vrot.lane.b32.xlu0 %v8146, 64
    %v8190 = vpop.permute.xlu0 %8189
    %8191 = vrot.lane.b32.xlu0 %v8147, 64
    %v8192 = vpop.permute.xlu0 %8191
    %8193 = vrot.lane.b32.xlu0 %v8148, 64
    %v8194 = vpop.permute.xlu0 %8193
    %8195 = vrot.lane.b32.xlu0 %v8149, 64
    %v8196 = vpop.permute.xlu0 %8195
    %8197 = vrot.lane.b32.xlu0 %v8150, 64
    %v8198 = vpop.permute.xlu0 %8197
    %vm8215 = vcmask 785920
    %8216 = vst.msk [vmem:[#allocation7] sm:$0xff] %vm8215, %v8168
    %8217 = vst.msk [vmem:[#allocation7 + $0x18] sm:$0xff] %vm8215, %v8170
    %8218 = vst.msk [vmem:[#allocation7 + $0x30] sm:$0xff] %vm8215, %v8172
    %8219 = vst.msk [vmem:[#allocation7 + $0x48] sm:$0xff] %vm8215, %v8174
    %8220 = vst.msk [vmem:[#allocation7 + $0x60] sm:$0xff] %vm8215, %v8176
    %8221 = vst.msk [vmem:[#allocation7 + $0x78] sm:$0xff] %vm8215, %v8178
    %8222 = vst.msk [vmem:[#allocation7 + $0x90] sm:$0xff] %vm8215, %v8180
    %8223 = vst.msk [vmem:[#allocation7 + $0xa8] sm:$0xff] %vm8215, %v8182
    %8224 = vst.msk [vmem:[#allocation7 + $0xc0] sm:$0xff] %vm8215, %v8184
    %8225 = vst.msk [vmem:[#allocation7 + $0xd8] sm:$0xff] %vm8215, %v8186
    %8226 = vst.msk [vmem:[#allocation7 + $0xf0] sm:$0xff] %vm8215, %v8188
    %8227 = vst.msk [vmem:[#allocation7 + $0x108] sm:$0xff] %vm8215, %v8190
    %8228 = vst.msk [vmem:[#allocation7 + $0x120] sm:$0xff] %vm8215, %v8192
    %8229 = vst.msk [vmem:[#allocation7 + $0x138] sm:$0xff] %vm8215, %v8194
    %8230 = vst.msk [vmem:[#allocation7 + $0x150] sm:$0xff] %vm8215, %v8196
    %8231 = vst.msk [vmem:[#allocation7 + $0x168] sm:$0xff] %vm8215, %v8198
    %v8232 = vld [vmem:[%s7989] sm:$0xff]
    %v8233 = vld [vmem:[%s7989 + $0x10] sm:$0xff]
    %v8234 = vld [vmem:[%s7989 + $0x20] sm:$0xff]
    %v8235 = vld [vmem:[%s7989 + $0x30] sm:$0xff]
    %v8236 = vld [vmem:[%s7989 + $0x40] sm:$0xff]
    %v8237 = vld [vmem:[%s7989 + $0x50] sm:$0xff]
    %v8238 = vld [vmem:[%s7989 + $0x60] sm:$0xff]
    %v8239 = vld [vmem:[%s7989 + $0x70] sm:$0xff]
    %v8240 = vld [vmem:[%s7989 + $0xa0] sm:$0xff]
    %v8241 = vld [vmem:[%s7989 + $0xb0] sm:$0xff]
    %v8242 = vld [vmem:[%s7989 + $0xc0] sm:$0xff]
    %v8243 = vld [vmem:[%s7989 + $0xd0] sm:$0xff]
    %v8244 = vld [vmem:[%s7989 + $0xe0] sm:$0xff]
    %v8245 = vld [vmem:[%s7989 + $0xf0] sm:$0xff]
    %v8246 = vld [vmem:[%s7989 + $0x100] sm:$0xff]
    %v8247 = vld [vmem:[%s7989 + $0x110] sm:$0xff]
    %8264 = vrot.lane.b32.xlu0 %v8232, 96
    %v8265 = vpop.permute.xlu0 %8264
    %8266 = vrot.lane.b32.xlu0 %v8233, 96
    %v8267 = vpop.permute.xlu0 %8266
    %8268 = vrot.lane.b32.xlu0 %v8234, 96
    %v8269 = vpop.permute.xlu0 %8268
    %8270 = vrot.lane.b32.xlu0 %v8235, 96
    %v8271 = vpop.permute.xlu0 %8270
    %8272 = vrot.lane.b32.xlu0 %v8236, 96
    %v8273 = vpop.permute.xlu0 %8272
    %8274 = vrot.lane.b32.xlu0 %v8237, 96
    %v8275 = vpop.permute.xlu0 %8274
    %8276 = vrot.lane.b32.xlu0 %v8238, 96
    %v8277 = vpop.permute.xlu0 %8276
    %8278 = vrot.lane.b32.xlu0 %v8239, 96
    %v8279 = vpop.permute.xlu0 %8278
    %8280 = vrot.lane.b32.xlu0 %v8240, 96
    %v8281 = vpop.permute.xlu0 %8280
    %8282 = vrot.lane.b32.xlu0 %v8241, 96
    %v8283 = vpop.permute.xlu0 %8282
    %8284 = vrot.lane.b32.xlu0 %v8242, 96
    %v8285 = vpop.permute.xlu0 %8284
    %8286 = vrot.lane.b32.xlu0 %v8243, 96
    %v8287 = vpop.permute.xlu0 %8286
    %8288 = vrot.lane.b32.xlu0 %v8244, 96
    %v8289 = vpop.permute.xlu0 %8288
    %8290 = vrot.lane.b32.xlu0 %v8245, 96
    %v8291 = vpop.permute.xlu0 %8290
    %8292 = vrot.lane.b32.xlu0 %v8246, 96
    %v8293 = vpop.permute.xlu0 %8292
    %8294 = vrot.lane.b32.xlu0 %v8247, 96
    %v8295 = vpop.permute.xlu0 %8294
    %vm8312 = vcmask 1048320
    %8313 = vst.msk [vmem:[#allocation7] sm:$0xff] %vm8312, %v8265
    %8314 = vst.msk [vmem:[#allocation7 + $0x18] sm:$0xff] %vm8312, %v8267
    %8315 = vst.msk [vmem:[#allocation7 + $0x30] sm:$0xff] %vm8312, %v8269
    %8316 = vst.msk [vmem:[#allocation7 + $0x48] sm:$0xff] %vm8312, %v8271
    %8317 = vst.msk [vmem:[#allocation7 + $0x60] sm:$0xff] %vm8312, %v8273
    %8318 = vst.msk [vmem:[#allocation7 + $0x78] sm:$0xff] %vm8312, %v8275
    %8319 = vst.msk [vmem:[#allocation7 + $0x90] sm:$0xff] %vm8312, %v8277
    %8320 = vst.msk [vmem:[#allocation7 + $0xa8] sm:$0xff] %vm8312, %v8279
    %8321 = vst.msk [vmem:[#allocation7 + $0xc0] sm:$0xff] %vm8312, %v8281
    %8322 = vst.msk [vmem:[#allocation7 + $0xd8] sm:$0xff] %vm8312, %v8283
    %8323 = vst.msk [vmem:[#allocation7 + $0xf0] sm:$0xff] %vm8312, %v8285
    %8324 = vst.msk [vmem:[#allocation7 + $0x108] sm:$0xff] %vm8312, %v8287
    %8325 = vst.msk [vmem:[#allocation7 + $0x120] sm:$0xff] %vm8312, %v8289
    %8326 = vst.msk [vmem:[#allocation7 + $0x138] sm:$0xff] %vm8312, %v8291
    %8327 = vst.msk [vmem:[#allocation7 + $0x150] sm:$0xff] %vm8312, %v8293
    %8328 = vst.msk [vmem:[#allocation7 + $0x168] sm:$0xff] %vm8312, %v8295
    %v8329 = vld [vmem:[%s7989 + $0x1] sm:$0xff]
    %v8330 = vld [vmem:[%s7989 + $0x11] sm:$0xff]
    %v8331 = vld [vmem:[%s7989 + $0x21] sm:$0xff]
    %v8332 = vld [vmem:[%s7989 + $0x31] sm:$0xff]
    %v8333 = vld [vmem:[%s7989 + $0x41] sm:$0xff]
    %v8334 = vld [vmem:[%s7989 + $0x51] sm:$0xff]
    %v8335 = vld [vmem:[%s7989 + $0x61] sm:$0xff]
    %v8336 = vld [vmem:[%s7989 + $0x71] sm:$0xff]
    %v8337 = vld [vmem:[%s7989 + $0xa1] sm:$0xff]
    %v8338 = vld [vmem:[%s7989 + $0xb1] sm:$0xff]
    %v8339 = vld [vmem:[%s7989 + $0xc1] sm:$0xff]
    %v8340 = vld [vmem:[%s7989 + $0xd1] sm:$0xff]
    %v8341 = vld [vmem:[%s7989 + $0xe1] sm:$0xff]
    %v8342 = vld [vmem:[%s7989 + $0xf1] sm:$0xff]
    %v8343 = vld [vmem:[%s7989 + $0x101] sm:$0xff]
    %v8344 = vld [vmem:[%s7989 + $0x111] sm:$0xff]
    %8345 = vst.msk [vmem:[#allocation7 + $0x8] sm:$0xff] %vm7666, %v8329
    %8346 = vst.msk [vmem:[#allocation7 + $0x20] sm:$0xff] %vm7666, %v8330
    %8347 = vst.msk [vmem:[#allocation7 + $0x38] sm:$0xff] %vm7666, %v8331
    %8348 = vst.msk [vmem:[#allocation7 + $0x50] sm:$0xff] %vm7666, %v8332
    %8349 = vst.msk [vmem:[#allocation7 + $0x68] sm:$0xff] %vm7666, %v8333
    %8350 = vst.msk [vmem:[#allocation7 + $0x80] sm:$0xff] %vm7666, %v8334
    %8351 = vst.msk [vmem:[#allocation7 + $0x98] sm:$0xff] %vm7666, %v8335
    %8352 = vst.msk [vmem:[#allocation7 + $0xb0] sm:$0xff] %vm7666, %v8336
    %8353 = vst.msk [vmem:[#allocation7 + $0xc8] sm:$0xff] %vm7666, %v8337
    %8354 = vst.msk [vmem:[#allocation7 + $0xe0] sm:$0xff] %vm7666, %v8338
    %8355 = vst.msk [vmem:[#allocation7 + $0xf8] sm:$0xff] %vm7666, %v8339
    %8356 = vst.msk [vmem:[#allocation7 + $0x110] sm:$0xff] %vm7666, %v8340
    %8357 = vst.msk [vmem:[#allocation7 + $0x128] sm:$0xff] %vm7666, %v8341
    %8358 = vst.msk [vmem:[#allocation7 + $0x140] sm:$0xff] %vm7666, %v8342
    %8359 = vst.msk [vmem:[#allocation7 + $0x158] sm:$0xff] %vm7666, %v8343
    %8360 = vst.msk [vmem:[#allocation7 + $0x170] sm:$0xff] %vm7666, %v8344
    %v8361 = vld [vmem:[%s7989 + $0x2] sm:$0xff]
    %v8362 = vld [vmem:[%s7989 + $0x12] sm:$0xff]
    %v8363 = vld [vmem:[%s7989 + $0x22] sm:$0xff]
    %v8364 = vld [vmem:[%s7989 + $0x32] sm:$0xff]
    %v8365 = vld [vmem:[%s7989 + $0x42] sm:$0xff]
    %v8366 = vld [vmem:[%s7989 + $0x52] sm:$0xff]
    %v8367 = vld [vmem:[%s7989 + $0x62] sm:$0xff]
    %v8368 = vld [vmem:[%s7989 + $0x72] sm:$0xff]
    %v8369 = vld [vmem:[%s7989 + $0xa2] sm:$0xff]
    %v8370 = vld [vmem:[%s7989 + $0xb2] sm:$0xff]
    %v8371 = vld [vmem:[%s7989 + $0xc2] sm:$0xff]
    %v8372 = vld [vmem:[%s7989 + $0xd2] sm:$0xff]
    %v8373 = vld [vmem:[%s7989 + $0xe2] sm:$0xff]
    %v8374 = vld [vmem:[%s7989 + $0xf2] sm:$0xff]
    %v8375 = vld [vmem:[%s7989 + $0x102] sm:$0xff]
    %v8376 = vld [vmem:[%s7989 + $0x112] sm:$0xff]
    %8393 = vrot.lane.b32.xlu0 %v8361, 32
    %v8394 = vpop.permute.xlu0 %8393
    %8395 = vrot.lane.b32.xlu0 %v8362, 32
    %v8396 = vpop.permute.xlu0 %8395
    %8397 = vrot.lane.b32.xlu0 %v8363, 32
    %v8398 = vpop.permute.xlu0 %8397
    %8399 = vrot.lane.b32.xlu0 %v8364, 32
    %v8400 = vpop.permute.xlu0 %8399
    %8401 = vrot.lane.b32.xlu0 %v8365, 32
    %v8402 = vpop.permute.xlu0 %8401
    %8403 = vrot.lane.b32.xlu0 %v8366, 32
    %v8404 = vpop.permute.xlu0 %8403
    %8405 = vrot.lane.b32.xlu0 %v8367, 32
    %v8406 = vpop.permute.xlu0 %8405
    %8407 = vrot.lane.b32.xlu0 %v8368, 32
    %v8408 = vpop.permute.xlu0 %8407
    %8409 = vrot.lane.b32.xlu0 %v8369, 32
    %v8410 = vpop.permute.xlu0 %8409
    %8411 = vrot.lane.b32.xlu0 %v8370, 32
    %v8412 = vpop.permute.xlu0 %8411
    %8413 = vrot.lane.b32.xlu0 %v8371, 32
    %v8414 = vpop.permute.xlu0 %8413
    %8415 = vrot.lane.b32.xlu0 %v8372, 32
    %v8416 = vpop.permute.xlu0 %8415
    %8417 = vrot.lane.b32.xlu0 %v8373, 32
    %v8418 = vpop.permute.xlu0 %8417
    %8419 = vrot.lane.b32.xlu0 %v8374, 32
    %v8420 = vpop.permute.xlu0 %8419
    %8421 = vrot.lane.b32.xlu0 %v8375, 32
    %v8422 = vpop.permute.xlu0 %8421
    %8423 = vrot.lane.b32.xlu0 %v8376, 32
    %v8424 = vpop.permute.xlu0 %8423
    %8441 = vst.msk [vmem:[#allocation7 + $0x8] sm:$0xff] %vm8118, %v8394
    %8442 = vst.msk [vmem:[#allocation7 + $0x20] sm:$0xff] %vm8118, %v8396
    %8443 = vst.msk [vmem:[#allocation7 + $0x38] sm:$0xff] %vm8118, %v8398
    %8444 = vst.msk [vmem:[#allocation7 + $0x50] sm:$0xff] %vm8118, %v8400
    %8445 = vst.msk [vmem:[#allocation7 + $0x68] sm:$0xff] %vm8118, %v8402
    %8446 = vst.msk [vmem:[#allocation7 + $0x80] sm:$0xff] %vm8118, %v8404
    %8447 = vst.msk [vmem:[#allocation7 + $0x98] sm:$0xff] %vm8118, %v8406
    %8448 = vst.msk [vmem:[#allocation7 + $0xb0] sm:$0xff] %vm8118, %v8408
    %8449 = vst.msk [vmem:[#allocation7 + $0xc8] sm:$0xff] %vm8118, %v8410
    %8450 = vst.msk [vmem:[#allocation7 + $0xe0] sm:$0xff] %vm8118, %v8412
    %8451 = vst.msk [vmem:[#allocation7 + $0xf8] sm:$0xff] %vm8118, %v8414
    %8452 = vst.msk [vmem:[#allocation7 + $0x110] sm:$0xff] %vm8118, %v8416
    %8453 = vst.msk [vmem:[#allocation7 + $0x128] sm:$0xff] %vm8118, %v8418
    %8454 = vst.msk [vmem:[#allocation7 + $0x140] sm:$0xff] %vm8118, %v8420
    %8455 = vst.msk [vmem:[#allocation7 + $0x158] sm:$0xff] %vm8118, %v8422
    %8456 = vst.msk [vmem:[#allocation7 + $0x170] sm:$0xff] %vm8118, %v8424
    %s8457 = scalar_lea.vmem [#allocation6], 32
    %v8458 = vld [vmem:[%s8457] sm:$0xff]
    %v8459 = vld [vmem:[%s8457 + $0x10] sm:$0xff]
    %v8460 = vld [vmem:[%s8457 + $0x20] sm:$0xff]
    %v8461 = vld [vmem:[%s8457 + $0x30] sm:$0xff]
    %v8462 = vld [vmem:[%s8457 + $0x40] sm:$0xff]
    %v8463 = vld [vmem:[%s8457 + $0x50] sm:$0xff]
    %v8464 = vld [vmem:[%s8457 + $0x60] sm:$0xff]
    %v8465 = vld [vmem:[%s8457 + $0x70] sm:$0xff]
    %v8466 = vld [vmem:[%s8457 + $0xa0] sm:$0xff]
    %v8467 = vld [vmem:[%s8457 + $0xb0] sm:$0xff]
    %v8468 = vld [vmem:[%s8457 + $0xc0] sm:$0xff]
    %v8469 = vld [vmem:[%s8457 + $0xd0] sm:$0xff]
    %v8470 = vld [vmem:[%s8457 + $0xe0] sm:$0xff]
    %v8471 = vld [vmem:[%s8457 + $0xf0] sm:$0xff]
    %v8472 = vld [vmem:[%s8457 + $0x100] sm:$0xff]
    %v8473 = vld [vmem:[%s8457 + $0x110] sm:$0xff]
    %8490 = vrot.lane.b32.xlu0 %v8458, 64
    %v8491 = vpop.permute.xlu0 %8490
    %8492 = vrot.lane.b32.xlu0 %v8459, 64
    %v8493 = vpop.permute.xlu0 %8492
    %8494 = vrot.lane.b32.xlu0 %v8460, 64
    %v8495 = vpop.permute.xlu0 %8494
    %8496 = vrot.lane.b32.xlu0 %v8461, 64
    %v8497 = vpop.permute.xlu0 %8496
    %8498 = vrot.lane.b32.xlu0 %v8462, 64
    %v8499 = vpop.permute.xlu0 %8498
    %8500 = vrot.lane.b32.xlu0 %v8463, 64
    %v8501 = vpop.permute.xlu0 %8500
    %8502 = vrot.lane.b32.xlu0 %v8464, 64
    %v8503 = vpop.permute.xlu0 %8502
    %8504 = vrot.lane.b32.xlu0 %v8465, 64
    %v8505 = vpop.permute.xlu0 %8504
    %8506 = vrot.lane.b32.xlu0 %v8466, 64
    %v8507 = vpop.permute.xlu0 %8506
    %8508 = vrot.lane.b32.xlu0 %v8467, 64
    %v8509 = vpop.permute.xlu0 %8508
    %8510 = vrot.lane.b32.xlu0 %v8468, 64
    %v8511 = vpop.permute.xlu0 %8510
    %8512 = vrot.lane.b32.xlu0 %v8469, 64
    %v8513 = vpop.permute.xlu0 %8512
    %8514 = vrot.lane.b32.xlu0 %v8470, 64
    %v8515 = vpop.permute.xlu0 %8514
    %8516 = vrot.lane.b32.xlu0 %v8471, 64
    %v8517 = vpop.permute.xlu0 %8516
    %8518 = vrot.lane.b32.xlu0 %v8472, 64
    %v8519 = vpop.permute.xlu0 %8518
    %8520 = vrot.lane.b32.xlu0 %v8473, 64
    %v8521 = vpop.permute.xlu0 %8520
    %8538 = vst.msk [vmem:[#allocation7 + $0x8] sm:$0xff] %vm8215, %v8491
    %8539 = vst.msk [vmem:[#allocation7 + $0x20] sm:$0xff] %vm8215, %v8493
    %8540 = vst.msk [vmem:[#allocation7 + $0x38] sm:$0xff] %vm8215, %v8495
    %8541 = vst.msk [vmem:[#allocation7 + $0x50] sm:$0xff] %vm8215, %v8497
    %8542 = vst.msk [vmem:[#allocation7 + $0x68] sm:$0xff] %vm8215, %v8499
    %8543 = vst.msk [vmem:[#allocation7 + $0x80] sm:$0xff] %vm8215, %v8501
    %8544 = vst.msk [vmem:[#allocation7 + $0x98] sm:$0xff] %vm8215, %v8503
    %8545 = vst.msk [vmem:[#allocation7 + $0xb0] sm:$0xff] %vm8215, %v8505
    %8546 = vst.msk [vmem:[#allocation7 + $0xc8] sm:$0xff] %vm8215, %v8507
    %8547 = vst.msk [vmem:[#allocation7 + $0xe0] sm:$0xff] %vm8215, %v8509
    %8548 = vst.msk [vmem:[#allocation7 + $0xf8] sm:$0xff] %vm8215, %v8511
    %8549 = vst.msk [vmem:[#allocation7 + $0x110] sm:$0xff] %vm8215, %v8513
    %8550 = vst.msk [vmem:[#allocation7 + $0x128] sm:$0xff] %vm8215, %v8515
    %8551 = vst.msk [vmem:[#allocation7 + $0x140] sm:$0xff] %vm8215, %v8517
    %8552 = vst.msk [vmem:[#allocation7 + $0x158] sm:$0xff] %vm8215, %v8519
    %8553 = vst.msk [vmem:[#allocation7 + $0x170] sm:$0xff] %vm8215, %v8521
    %v8554 = vld [vmem:[%s8457 + $0x1] sm:$0xff]
    %v8555 = vld [vmem:[%s8457 + $0x11] sm:$0xff]
    %v8556 = vld [vmem:[%s8457 + $0x21] sm:$0xff]
    %v8557 = vld [vmem:[%s8457 + $0x31] sm:$0xff]
    %v8558 = vld [vmem:[%s8457 + $0x41] sm:$0xff]
    %v8559 = vld [vmem:[%s8457 + $0x51] sm:$0xff]
    %v8560 = vld [vmem:[%s8457 + $0x61] sm:$0xff]
    %v8561 = vld [vmem:[%s8457 + $0x71] sm:$0xff]
    %v8562 = vld [vmem:[%s8457 + $0xa1] sm:$0xff]
    %v8563 = vld [vmem:[%s8457 + $0xb1] sm:$0xff]
    %v8564 = vld [vmem:[%s8457 + $0xc1] sm:$0xff]
    %v8565 = vld [vmem:[%s8457 + $0xd1] sm:$0xff]
    %v8566 = vld [vmem:[%s8457 + $0xe1] sm:$0xff]
    %v8567 = vld [vmem:[%s8457 + $0xf1] sm:$0xff]
    %v8568 = vld [vmem:[%s8457 + $0x101] sm:$0xff]
    %v8569 = vld [vmem:[%s8457 + $0x111] sm:$0xff]
    %8586 = vrot.lane.b32.xlu0 %v8554, 96
    %v8587 = vpop.permute.xlu0 %8586
    %8588 = vrot.lane.b32.xlu0 %v8555, 96
    %v8589 = vpop.permute.xlu0 %8588
    %8590 = vrot.lane.b32.xlu0 %v8556, 96
    %v8591 = vpop.permute.xlu0 %8590
    %8592 = vrot.lane.b32.xlu0 %v8557, 96
    %v8593 = vpop.permute.xlu0 %8592
    %8594 = vrot.lane.b32.xlu0 %v8558, 96
    %v8595 = vpop.permute.xlu0 %8594
    %8596 = vrot.lane.b32.xlu0 %v8559, 96
    %v8597 = vpop.permute.xlu0 %8596
    %8598 = vrot.lane.b32.xlu0 %v8560, 96
    %v8599 = vpop.permute.xlu0 %8598
    %8600 = vrot.lane.b32.xlu0 %v8561, 96
    %v8601 = vpop.permute.xlu0 %8600
    %8602 = vrot.lane.b32.xlu0 %v8562, 96
    %v8603 = vpop.permute.xlu0 %8602
    %8604 = vrot.lane.b32.xlu0 %v8563, 96
    %v8605 = vpop.permute.xlu0 %8604
    %8606 = vrot.lane.b32.xlu0 %v8564, 96
    %v8607 = vpop.permute.xlu0 %8606
    %8608 = vrot.lane.b32.xlu0 %v8565, 96
    %v8609 = vpop.permute.xlu0 %8608
    %8610 = vrot.lane.b32.xlu0 %v8566, 96
    %v8611 = vpop.permute.xlu0 %8610
    %8612 = vrot.lane.b32.xlu0 %v8567, 96
    %v8613 = vpop.permute.xlu0 %8612
    %8614 = vrot.lane.b32.xlu0 %v8568, 96
    %v8615 = vpop.permute.xlu0 %8614
    %8616 = vrot.lane.b32.xlu0 %v8569, 96
    %v8617 = vpop.permute.xlu0 %8616
    %8634 = vst.msk [vmem:[#allocation7 + $0x8] sm:$0xff] %vm8312, %v8587
    %8635 = vst.msk [vmem:[#allocation7 + $0x20] sm:$0xff] %vm8312, %v8589
    %8636 = vst.msk [vmem:[#allocation7 + $0x38] sm:$0xff] %vm8312, %v8591
    %8637 = vst.msk [vmem:[#allocation7 + $0x50] sm:$0xff] %vm8312, %v8593
    %8638 = vst.msk [vmem:[#allocation7 + $0x68] sm:$0xff] %vm8312, %v8595
    %8639 = vst.msk [vmem:[#allocation7 + $0x80] sm:$0xff] %vm8312, %v8597
    %8640 = vst.msk [vmem:[#allocation7 + $0x98] sm:$0xff] %vm8312, %v8599
    %8641 = vst.msk [vmem:[#allocation7 + $0xb0] sm:$0xff] %vm8312, %v8601
    %8642 = vst.msk [vmem:[#allocation7 + $0xc8] sm:$0xff] %vm8312, %v8603
    %8643 = vst.msk [vmem:[#allocation7 + $0xe0] sm:$0xff] %vm8312, %v8605
    %8644 = vst.msk [vmem:[#allocation7 + $0xf8] sm:$0xff] %vm8312, %v8607
    %8645 = vst.msk [vmem:[#allocation7 + $0x110] sm:$0xff] %vm8312, %v8609
    %8646 = vst.msk [vmem:[#allocation7 + $0x128] sm:$0xff] %vm8312, %v8611
    %8647 = vst.msk [vmem:[#allocation7 + $0x140] sm:$0xff] %vm8312, %v8613
    %8648 = vst.msk [vmem:[#allocation7 + $0x158] sm:$0xff] %vm8312, %v8615
    %8649 = vst.msk [vmem:[#allocation7 + $0x170] sm:$0xff] %vm8312, %v8617
    %v8650 = vld [vmem:[%s8457 + $0x2] sm:$0xff]
    %v8651 = vld [vmem:[%s8457 + $0x12] sm:$0xff]
    %v8652 = vld [vmem:[%s8457 + $0x22] sm:$0xff]
    %v8653 = vld [vmem:[%s8457 + $0x32] sm:$0xff]
    %v8654 = vld [vmem:[%s8457 + $0x42] sm:$0xff]
    %v8655 = vld [vmem:[%s8457 + $0x52] sm:$0xff]
    %v8656 = vld [vmem:[%s8457 + $0x62] sm:$0xff]
    %v8657 = vld [vmem:[%s8457 + $0x72] sm:$0xff]
    %v8658 = vld [vmem:[%s8457 + $0xa2] sm:$0xff]
    %v8659 = vld [vmem:[%s8457 + $0xb2] sm:$0xff]
    %v8660 = vld [vmem:[%s8457 + $0xc2] sm:$0xff]
    %v8661 = vld [vmem:[%s8457 + $0xd2] sm:$0xff]
    %v8662 = vld [vmem:[%s8457 + $0xe2] sm:$0xff]
    %v8663 = vld [vmem:[%s8457 + $0xf2] sm:$0xff]
    %v8664 = vld [vmem:[%s8457 + $0x102] sm:$0xff]
    %v8665 = vld [vmem:[%s8457 + $0x112] sm:$0xff]
    %8666 = vst.msk [vmem:[#allocation7 + $0x10] sm:$0xff] %vm7666, %v8650
    %8667 = vst.msk [vmem:[#allocation7 + $0x28] sm:$0xff] %vm7666, %v8651
    %8668 = vst.msk [vmem:[#allocation7 + $0x40] sm:$0xff] %vm7666, %v8652
    %8669 = vst.msk [vmem:[#allocation7 + $0x58] sm:$0xff] %vm7666, %v8653
    %8670 = vst.msk [vmem:[#allocation7 + $0x70] sm:$0xff] %vm7666, %v8654
    %8671 = vst.msk [vmem:[#allocation7 + $0x88] sm:$0xff] %vm7666, %v8655
    %8672 = vst.msk [vmem:[#allocation7 + $0xa0] sm:$0xff] %vm7666, %v8656
    %8673 = vst.msk [vmem:[#allocation7 + $0xb8] sm:$0xff] %vm7666, %v8657
    %8674 = vst.msk [vmem:[#allocation7 + $0xd0] sm:$0xff] %vm7666, %v8658
    %8675 = vst.msk [vmem:[#allocation7 + $0xe8] sm:$0xff] %vm7666, %v8659
    %8676 = vst.msk [vmem:[#allocation7 + $0x100] sm:$0xff] %vm7666, %v8660
    %8677 = vst.msk [vmem:[#allocation7 + $0x118] sm:$0xff] %vm7666, %v8661
    %8678 = vst.msk [vmem:[#allocation7 + $0x130] sm:$0xff] %vm7666, %v8662
    %8679 = vst.msk [vmem:[#allocation7 + $0x148] sm:$0xff] %vm7666, %v8663
    %8680 = vst.msk [vmem:[#allocation7 + $0x160] sm:$0xff] %vm7666, %v8664
    %8681 = vst.msk [vmem:[#allocation7 + $0x178] sm:$0xff] %vm7666, %v8665
    %v8682 = vld [vmem:[#allocation7] sm:$0xff]
    %v8683 = vld [vmem:[#allocation7 + $0x8] sm:$0xff]
    %v8684 = vld [vmem:[#allocation7 + $0x10] sm:$0xff]
    %v8685 = vld [vmem:[#allocation7 + $0x18] sm:$0xff]
    %v8686 = vld [vmem:[#allocation7 + $0x20] sm:$0xff]
    %v8687 = vld [vmem:[#allocation7 + $0x28] sm:$0xff]
    %v8688 = vld [vmem:[#allocation7 + $0x30] sm:$0xff]
    %v8689 = vld [vmem:[#allocation7 + $0x38] sm:$0xff]
    %v8690 = vld [vmem:[#allocation7 + $0x40] sm:$0xff]
    %v8691 = vld [vmem:[#allocation7 + $0x48] sm:$0xff]
    %v8692 = vld [vmem:[#allocation7 + $0x50] sm:$0xff]
    %v8693 = vld [vmem:[#allocation7 + $0x58] sm:$0xff]
    %v8694 = vld [vmem:[#allocation7 + $0x60] sm:$0xff]
    %v8695 = vld [vmem:[#allocation7 + $0x68] sm:$0xff]
    %v8696 = vld [vmem:[#allocation7 + $0x70] sm:$0xff]
    %v8697 = vld [vmem:[#allocation7 + $0x78] sm:$0xff]
    %v8698 = vld [vmem:[#allocation7 + $0x80] sm:$0xff]
    %v8699 = vld [vmem:[#allocation7 + $0x88] sm:$0xff]
    %v8700 = vld [vmem:[#allocation7 + $0x90] sm:$0xff]
    %v8701 = vld [vmem:[#allocation7 + $0x98] sm:$0xff]
    %v8702 = vld [vmem:[#allocation7 + $0xa0] sm:$0xff]
    %v8703 = vld [vmem:[#allocation7 + $0xa8] sm:$0xff]
    %v8704 = vld [vmem:[#allocation7 + $0xb0] sm:$0xff]
    %v8705 = vld [vmem:[#allocation7 + $0xb8] sm:$0xff]
    %v8706 = vld [vmem:[#allocation7 + $0xc0] sm:$0xff]
    %v8707 = vld [vmem:[#allocation7 + $0xc8] sm:$0xff]
    %v8708 = vld [vmem:[#allocation7 + $0xd0] sm:$0xff]
    %v8709 = vld [vmem:[#allocation7 + $0xd8] sm:$0xff]
    %v8710 = vld [vmem:[#allocation7 + $0xe0] sm:$0xff]
    %v8711 = vld [vmem:[#allocation7 + $0xe8] sm:$0xff]
    %v8712 = vld [vmem:[#allocation7 + $0xf0] sm:$0xff]
    %v8713 = vld [vmem:[#allocation7 + $0xf8] sm:$0xff]
    %v8714 = vld [vmem:[#allocation7 + $0x100] sm:$0xff]
    %v8715 = vld [vmem:[#allocation7 + $0x108] sm:$0xff]
    %v8716 = vld [vmem:[#allocation7 + $0x110] sm:$0xff]
    %v8717 = vld [vmem:[#allocation7 + $0x118] sm:$0xff]
    %v8718 = vld [vmem:[#allocation7 + $0x120] sm:$0xff]
    %v8719 = vld [vmem:[#allocation7 + $0x128] sm:$0xff]
    %v8720 = vld [vmem:[#allocation7 + $0x130] sm:$0xff]
    %v8721 = vld [vmem:[#allocation7 + $0x138] sm:$0xff]
    %v8722 = vld [vmem:[#allocation7 + $0x140] sm:$0xff]
    %v8723 = vld [vmem:[#allocation7 + $0x148] sm:$0xff]
    %v8724 = vld [vmem:[#allocation7 + $0x150] sm:$0xff]
    %v8725 = vld [vmem:[#allocation7 + $0x158] sm:$0xff]
    %v8726 = vld [vmem:[#allocation7 + $0x160] sm:$0xff]
    %v8727 = vld [vmem:[#allocation7 + $0x168] sm:$0xff]
    %v8728 = vld [vmem:[#allocation7 + $0x170] sm:$0xff]
    %v8729 = vld [vmem:[#allocation7 + $0x178] sm:$0xff]
    %v8730 = vld [vmem:[%s5] sm:$0xff]
    %v8731 = vld [vmem:[%s5 + $0x8] sm:$0xff]
    %v8732 = vld [vmem:[%s5 + $0x10] sm:$0xff]
    %v8733 = vld [vmem:[%s5 + $0x18] sm:$0xff]
    %v8734 = vld [vmem:[%s5 + $0x20] sm:$0xff]
    %v8735 = vld [vmem:[%s5 + $0x28] sm:$0xff]
    %v8736 = vld [vmem:[%s5 + $0x30] sm:$0xff]
    %v8737 = vld [vmem:[%s5 + $0x38] sm:$0xff]
    %v8738 = vld [vmem:[%s5 + $0x40] sm:$0xff]
    %v8739 = vld [vmem:[%s5 + $0x48] sm:$0xff]
    %v8740 = vld [vmem:[%s5 + $0x50] sm:$0xff]
    %v8741 = vld [vmem:[%s5 + $0x58] sm:$0xff]
    %v8742 = vld [vmem:[%s5 + $0x60] sm:$0xff]
    %v8743 = vld [vmem:[%s5 + $0x68] sm:$0xff]
    %v8744 = vld [vmem:[%s5 + $0x70] sm:$0xff]
    %v8745 = vld [vmem:[%s5 + $0x78] sm:$0xff]
    %v8746 = vld [vmem:[%s5 + $0x80] sm:$0xff]
    %v8747 = vld [vmem:[%s5 + $0x88] sm:$0xff]
    %v8748 = vld [vmem:[%s5 + $0x90] sm:$0xff]
    %v8749 = vld [vmem:[%s5 + $0x98] sm:$0xff]
    %v8750 = vld [vmem:[%s5 + $0xa0] sm:$0xff]
    %v8751 = vld [vmem:[%s5 + $0xa8] sm:$0xff]
    %v8752 = vld [vmem:[%s5 + $0xb0] sm:$0xff]
    %v8753 = vld [vmem:[%s5 + $0xb8] sm:$0xff]
    %v8754 = vld [vmem:[%s5 + $0xc0] sm:$0xff]
    %v8755 = vld [vmem:[%s5 + $0xc8] sm:$0xff]
    %v8756 = vld [vmem:[%s5 + $0xd0] sm:$0xff]
    %v8757 = vld [vmem:[%s5 + $0xd8] sm:$0xff]
    %v8758 = vld [vmem:[%s5 + $0xe0] sm:$0xff]
    %v8759 = vld [vmem:[%s5 + $0xe8] sm:$0xff]
    %v8760 = vld [vmem:[%s5 + $0xf0] sm:$0xff]
    %v8761 = vld [vmem:[%s5 + $0xf8] sm:$0xff]
    %v8762 = vld [vmem:[%s5 + $0x100] sm:$0xff]
    %v8763 = vld [vmem:[%s5 + $0x108] sm:$0xff]
    %v8764 = vld [vmem:[%s5 + $0x110] sm:$0xff]
    %v8765 = vld [vmem:[%s5 + $0x118] sm:$0xff]
    %v8766 = vld [vmem:[%s6] sm:$0x1]
    %v8768 = vlaneseq
    %v8769 = vshrl.u32 %v8768, 7
    %v8770 = vsub.s32 0, %v8769
    %v8771 = vrot.slane %v8766, %v8770
    %v8774 = vsel %vm7666, %v8684, 0
    %v8777 = vsel %vm7666, %v8687, 0
    %v8780 = vsel %vm7666, %v8690, 0
    %v8783 = vsel %vm7666, %v8693, 0
    %v8786 = vsel %vm7666, %v8696, 0
    %v8789 = vsel %vm7666, %v8699, 0
    %v8792 = vsel %vm7666, %v8702, 0
    %v8795 = vsel %vm7666, %v8705, 0
    %v8798 = vsel %vm7666, %v8708, 0
    %v8801 = vsel %vm7666, %v8711, 0
    %v8804 = vsel %vm7666, %v8714, 0
    %v8807 = vsel %vm7666, %v8717, 0
    %v8810 = vsel %vm7666, %v8720, 0
    %v8813 = vsel %vm7666, %v8723, 0
    %v8816 = vsel %vm7666, %v8726, 0
    %v8819 = vsel %vm7666, %v8729, 0
    %8821 = vmatprep.subr.mxu0 0.0
    %8822 = vmatpush1.msra.mxu0 %v8730
    %8823 = vmatprep.subr.mxu0 0.0
    %8824 = vmatpush1.msra.mxu0 %v8731
    %8825 = vmatprep.subr.mxu0 0.0
    %8826 = vmatpush1.msra.mxu0 %v8732
    %8827 = vmatprep.subr.mxu0 0.0
    %8828 = vmatpush1.msra.mxu0 %v8733
    %8829 = vmatprep.subr.mxu0 0.0
    %8830 = vmatpush1.msra.mxu0 %v8734
    %8831 = vmatprep.subr.mxu0 0.0
    %8832 = vmatpush1.msra.mxu0 %v8735
    %8833 = vmatprep.subr.mxu0 0.0
    %8834 = vmatpush1.msra.mxu0 %v8736
    %8835 = vmatprep.subr.mxu0 0.0
    %8836 = vmatpush1.msra.mxu0 %v8737
    %8837 = vmatprep.subr.mxu0 0.0
    %8838 = vmatpush1.msra.mxu0 %v8738
    %8839 = vmatprep.subr.mxu0 0.0
    %8840 = vmatpush1.msra.mxu0 %v8739
    %8841 = vmatprep.subr.mxu0 0.0
    %8842 = vmatpush1.msra.mxu0 %v8740
    %8843 = vmatprep.subr.mxu0 0.0
    %8844 = vmatpush1.msra.mxu0 %v8741
    %8845 = vmatprep.subr.mxu0 0.0
    %8846 = vmatpush1.msra.mxu0 %v8742
    %8847 = vmatprep.subr.mxu0 0.0
    %8848 = vmatpush1.msra.mxu0 %v8743
    %8849 = vmatprep.subr.mxu0 0.0
    %8850 = vmatpush1.msra.mxu0 %v8744
    %8851 = vmatprep.subr.mxu0 0.0
    %8852 = vmatpush1.msra.mxu0 %v8745
    %8853 = vmatprep.subr.mxu0 0.0
    %8854 = vmatpush1.msra.mxu0 %v8746
    %8855 = vmatprep.subr.mxu0 0.0
    %8856 = vmatpush1.msra.mxu0 %v8747
    %8857 = vmatprep.subr.mxu0 0.0
    %8858 = vmatpush1.msra.mxu0 %v8748
    %8859 = vmatprep.subr.mxu0 0.0
    %8860 = vmatpush1.msra.mxu0 %v8749
    %8861 = vmatprep.subr.mxu0 0.0
    %8862 = vmatpush1.msra.mxu0 %v8750
    %8863 = vmatprep.subr.mxu0 0.0
    %8864 = vmatpush1.msra.mxu0 %v8751
    %8865 = vmatprep.subr.mxu0 0.0
    %8866 = vmatpush1.msra.mxu0 %v8752
    %8867 = vmatprep.subr.mxu0 0.0
    %8868 = vmatpush1.msra.mxu0 %v8753
    %8869 = vmatprep.subr.mxu0 0.0
    %8870 = vmatpush1.msra.mxu0 %v8754
    %8871 = vmatprep.subr.mxu0 0.0
    %8872 = vmatpush1.msra.mxu0 %v8755
    %8873 = vmatprep.subr.mxu0 0.0
    %8874 = vmatpush1.msra.mxu0 %v8756
    %8875 = vmatprep.subr.mxu0 0.0
    %8876 = vmatpush1.msra.mxu0 %v8757
    %8877 = vmatprep.subr.mxu0 0.0
    %8878 = vmatpush1.msra.mxu0 %v8758
    %8879 = vmatprep.subr.mxu0 0.0
    %8880 = vmatpush1.msra.mxu0 %v8759
    %8881 = vmatprep.subr.mxu0 0.0
    %8882 = vmatpush1.msra.mxu0 %v8760
    %8883 = vmatprep.subr.mxu0 0.0
    %8884 = vmatpush1.msra.mxu0 %v8761
    %8885 = vmatprep.mubr.f32.mxu0 %v8683
    %8886 = vmatmul.mubr.f32.gmra.mrb[0].mxu0 %v8682
    %v8887 = vpop.f32.mrb[0].mxu0
    %v8888 = vadd.f32 %v8771, %v8887
    %v8889 = vpop.f32.mrb[0].mxu0
    %8890 = vmatprep.mubr.f32.mxu0 %v8686
    %8891 = vmatmul.mubr.f32.gmra.mrb[0].mxu0 %v8685
    %v8892 = vpop.f32.mrb[0].mxu0
    %v8893 = vadd.f32 %v8771, %v8892
    %v8894 = vpop.f32.mrb[0].mxu0
    %8895 = vmatprep.mubr.f32.mxu0 %v8689
    %8896 = vmatmul.mubr.f32.gmra.mrb[0].mxu0 %v8688
    %v8897 = vpop.f32.mrb[0].mxu0
    %v8898 = vadd.f32 %v8771, %v8897
    %v8899 = vpop.f32.mrb[0].mxu0
    %8900 = vmatprep.mubr.f32.mxu0 %v8692
    %8901 = vmatmul.mubr.f32.gmra.mrb[0].mxu0 %v8691
    %v8902 = vpop.f32.mrb[0].mxu0
    %v8903 = vadd.f32 %v8771, %v8902
    %v8904 = vpop.f32.mrb[0].mxu0
    %8905 = vmatprep.mubr.f32.mxu0 %v8695
    %8906 = vmatmul.mubr.f32.gmra.mrb[0].mxu0 %v8694
    %v8907 = vpop.f32.mrb[0].mxu0
    %v8908 = vadd.f32 %v8771, %v8907
    %v8909 = vpop.f32.mrb[0].mxu0
    %8910 = vmatprep.mubr.f32.mxu0 %v8698
    %8911 = vmatmul.mubr.f32.gmra.mrb[0].mxu0 %v8697
    %v8912 = vpop.f32.mrb[0].mxu0
    %v8913 = vadd.f32 %v8771, %v8912
    %v8914 = vpop.f32.mrb[0].mxu0
    %8915 = vmatprep.mubr.f32.mxu0 %v8701
    %8916 = vmatmul.mubr.f32.gmra.mrb[0].mxu0 %v8700
    %v8917 = vpop.f32.mrb[0].mxu0
    %v8918 = vadd.f32 %v8771, %v8917
    %v8919 = vpop.f32.mrb[0].mxu0
    %8920 = vmatprep.mubr.f32.mxu0 %v8704
    %8921 = vmatmul.mubr.f32.gmra.mrb[0].mxu0 %v8703
    %v8922 = vpop.f32.mrb[0].mxu0
    %v8923 = vadd.f32 %v8771, %v8922
    %v8924 = vpop.f32.mrb[0].mxu0
    %8925 = vmatprep.mubr.f32.mxu0 %v8707
    %8926 = vmatmul.mubr.f32.gmra.mrb[0].mxu0 %v8706
    %v8927 = vpop.f32.mrb[0].mxu0
    %v8928 = vadd.f32 %v8771, %v8927
    %v8929 = vpop.f32.mrb[0].mxu0
    %8930 = vmatprep.mubr.f32.mxu0 %v8710
    %8931 = vmatmul.mubr.f32.gmra.mrb[0].mxu0 %v8709
    %v8932 = vpop.f32.mrb[0].mxu0
    %v8933 = vadd.f32 %v8771, %v8932
    %v8934 = vpop.f32.mrb[0].mxu0
    %8935 = vmatprep.mubr.f32.mxu0 %v8713
    %8936 = vmatmul.mubr.f32.gmra.mrb[0].mxu0 %v8712
    %v8937 = vpop.f32.mrb[0].mxu0
    %v8938 = vadd.f32 %v8771, %v8937
    %v8939 = vpop.f32.mrb[0].mxu0
    %8940 = vmatprep.mubr.f32.mxu0 %v8716
    %8941 = vmatmul.mubr.f32.gmra.mrb[0].mxu0 %v8715
    %v8942 = vpop.f32.mrb[0].mxu0
    %v8943 = vadd.f32 %v8771, %v8942
    %v8944 = vpop.f32.mrb[0].mxu0
    %8945 = vmatprep.mubr.f32.mxu0 %v8719
    %8946 = vmatmul.mubr.f32.gmra.mrb[0].mxu0 %v8718
    %v8947 = vpop.f32.mrb[0].mxu0
    %v8948 = vadd.f32 %v8771, %v8947
    %v8949 = vpop.f32.mrb[0].mxu0
    %8950 = vmatprep.mubr.f32.mxu0 %v8722
    %8951 = vmatmul.mubr.f32.gmra.mrb[0].mxu0 %v8721
    %v8952 = vpop.f32.mrb[0].mxu0
    %v8953 = vadd.f32 %v8771, %v8952
    %v8954 = vpop.f32.mrb[0].mxu0
    %8955 = vmatprep.mubr.f32.mxu0 %v8725
    %8956 = vmatmul.mubr.f32.gmra.mrb[0].mxu0 %v8724
    %v8957 = vpop.f32.mrb[0].mxu0
    %v8958 = vadd.f32 %v8771, %v8957
    %v8959 = vpop.f32.mrb[0].mxu0
    %8960 = vmatprep.mubr.f32.mxu0 %v8728
    %8961 = vmatmul.mubr.f32.gmra.mrb[0].mxu0 %v8727
    %v8962 = vpop.f32.mrb[0].mxu0
    %v8963 = vadd.f32 %v8771, %v8962
    %v8964 = vpop.f32.mrb[0].mxu0
    %8965 = vdwg.mxu0
    %8966 = vmatprep.subr.mxu0 0.0
    %8967 = vmatpush1.msra.mxu0 %v8762
    %8968 = vmatprep.subr.mxu0 0.0
    %8969 = vmatpush1.msra.mxu0 %v8763
    %8970 = vmatprep.subr.mxu0 0.0
    %8971 = vmatpush1.msra.mxu0 %v8764
    %8972 = vmatprep.subr.mxu0 0.0
    %8973 = vmatpush1.msra.mxu0 %v8765
    %8974 = vmatprep.subr.mxu0 0.0
    %8975 = vmatpush1.msra.mxu0 0.0
    %8976 = vmatprep.subr.mxu0 0.0
    %8977 = vmatpush1.msra.mxu0 0.0
    %8978 = vmatprep.subr.mxu0 0.0
    %8979 = vmatpush1.msra.mxu0 0.0
    %8980 = vmatprep.subr.mxu0 0.0
    %8981 = vmatpush1.msra.mxu0 0.0
    %8982 = vmatprep.subr.mxu0 0.0
    %8983 = vmatpush1.msra.mxu0 0.0
    %8984 = vmatprep.subr.mxu0 0.0
    %8985 = vmatpush1.msra.mxu0 0.0
    %8986 = vmatprep.subr.mxu0 0.0
    %8987 = vmatpush1.msra.mxu0 0.0
    %8988 = vmatprep.subr.mxu0 0.0
    %8989 = vmatpush1.msra.mxu0 0.0
    %8990 = vmatprep.subr.mxu0 0.0
    %8991 = vmatpush1.msra.mxu0 0.0
    %8992 = vmatprep.subr.mxu0 0.0
    %8993 = vmatpush1.msra.mxu0 0.0
    %8994 = vmatprep.subr.mxu0 0.0
    %8995 = vmatpush1.msra.mxu0 0.0
    %8996 = vmatprep.subr.mxu0 0.0
    %8997 = vmatpush1.msra.mxu0 0.0
    %8998 = vmatprep.subr.mxu0 0.0
    %8999 = vmatpush1.msra.mxu0 0.0
    %9000 = vmatprep.subr.mxu0 0.0
    %9001 = vmatpush1.msra.mxu0 0.0
    %9002 = vmatprep.subr.mxu0 0.0
    %9003 = vmatpush1.msra.mxu0 0.0
    %9004 = vmatprep.subr.mxu0 0.0
    %9005 = vmatpush1.msra.mxu0 0.0
    %9006 = vmatprep.subr.mxu0 0.0
    %9007 = vmatpush1.msra.mxu0 0.0
    %9008 = vmatprep.subr.mxu0 0.0
    %9009 = vmatpush1.msra.mxu0 0.0
    %9010 = vmatprep.subr.mxu0 0.0
    %9011 = vmatpush1.msra.mxu0 0.0
    %9012 = vmatprep.subr.mxu0 0.0
    %9013 = vmatpush1.msra.mxu0 0.0
    %9014 = vmatprep.subr.mxu0 0.0
    %9015 = vmatpush1.msra.mxu0 0.0
    %9016 = vmatprep.subr.mxu0 0.0
    %9017 = vmatpush1.msra.mxu0 0.0
    %9018 = vmatprep.subr.mxu0 0.0
    %9019 = vmatpush1.msra.mxu0 0.0
    %9020 = vmatprep.subr.mxu0 0.0
    %9021 = vmatpush1.msra.mxu0 0.0
    %9022 = vmatprep.subr.mxu0 0.0
    %9023 = vmatpush1.msra.mxu0 0.0
    %9024 = vmatprep.subr.mxu0 0.0
    %9025 = vmatpush1.msra.mxu0 0.0
    %9026 = vmatprep.subr.mxu0 0.0
    %9027 = vmatpush1.msra.mxu0 0.0
    %9028 = vmatprep.subr.mxu0 0.0
    %9029 = vmatpush1.msra.mxu0 0.0
    %9030 = vmatprep.mubr.f32.mxu0 0.0
    %9031 = vmatmul.mubr.f32.gmra.mrb[0].mxu0 %v8774
    %v9032 = vpop.f32.mrb[0].mxu0
    %v9033 = vadd.f32 %v8888, %v9032
    %v9034 = vpop.f32.mrb[0].mxu0
    %9035 = vmatprep.mubr.f32.mxu0 0.0
    %9036 = vmatmul.mubr.f32.gmra.mrb[0].mxu0 %v8777
    %v9037 = vpop.f32.mrb[0].mxu0
    %v9038 = vadd.f32 %v8893, %v9037
    %v9039 = vpop.f32.mrb[0].mxu0
    %9040 = vmatprep.mubr.f32.mxu0 0.0
    %9041 = vmatmul.mubr.f32.gmra.mrb[0].mxu0 %v8780
    %v9042 = vpop.f32.mrb[0].mxu0
    %v9043 = vadd.f32 %v8898, %v9042
    %v9044 = vpop.f32.mrb[0].mxu0
    %9045 = vmatprep.mubr.f32.mxu0 0.0
    %9046 = vmatmul.mubr.f32.gmra.mrb[0].mxu0 %v8783
    %v9047 = vpop.f32.mrb[0].mxu0
    %v9048 = vadd.f32 %v8903, %v9047
    %v9049 = vpop.f32.mrb[0].mxu0
    %9050 = vmatprep.mubr.f32.mxu0 0.0
    %9051 = vmatmul.mubr.f32.gmra.mrb[0].mxu0 %v8786
    %v9052 = vpop.f32.mrb[0].mxu0
    %v9053 = vadd.f32 %v8908, %v9052
    %v9054 = vpop.f32.mrb[0].mxu0
    %9055 = vmatprep.mubr.f32.mxu0 0.0
    %9056 = vmatmul.mubr.f32.gmra.mrb[0].mxu0 %v8789
    %v9057 = vpop.f32.mrb[0].mxu0
    %v9058 = vadd.f32 %v8913, %v9057
    %v9059 = vpop.f32.mrb[0].mxu0
    %9060 = vmatprep.mubr.f32.mxu0 0.0
    %9061 = vmatmul.mubr.f32.gmra.mrb[0].mxu0 %v8792
    %v9062 = vpop.f32.mrb[0].mxu0
    %v9063 = vadd.f32 %v8918, %v9062
    %v9064 = vpop.f32.mrb[0].mxu0
    %9065 = vmatprep.mubr.f32.mxu0 0.0
    %9066 = vmatmul.mubr.f32.gmra.mrb[0].mxu0 %v8795
    %v9067 = vpop.f32.mrb[0].mxu0
    %v9068 = vadd.f32 %v8923, %v9067
    %v9069 = vpop.f32.mrb[0].mxu0
    %9070 = vmatprep.mubr.f32.mxu0 0.0
    %9071 = vmatmul.mubr.f32.gmra.mrb[0].mxu0 %v8798
    %v9072 = vpop.f32.mrb[0].mxu0
    %v9073 = vadd.f32 %v8928, %v9072
    %v9074 = vpop.f32.mrb[0].mxu0
    %9075 = vmatprep.mubr.f32.mxu0 0.0
    %9076 = vmatmul.mubr.f32.gmra.mrb[0].mxu0 %v8801
    %v9077 = vpop.f32.mrb[0].mxu0
    %v9078 = vadd.f32 %v8933, %v9077
    %v9079 = vpop.f32.mrb[0].mxu0
    %9080 = vmatprep.mubr.f32.mxu0 0.0
    %9081 = vmatmul.mubr.f32.gmra.mrb[0].mxu0 %v8804
    %v9082 = vpop.f32.mrb[0].mxu0
    %v9083 = vadd.f32 %v8938, %v9082
    %v9084 = vpop.f32.mrb[0].mxu0
    %9085 = vmatprep.mubr.f32.mxu0 0.0
    %9086 = vmatmul.mubr.f32.gmra.mrb[0].mxu0 %v8807
    %v9087 = vpop.f32.mrb[0].mxu0
    %v9088 = vadd.f32 %v8943, %v9087
    %v9089 = vpop.f32.mrb[0].mxu0
    %9090 = vmatprep.mubr.f32.mxu0 0.0
    %9091 = vmatmul.mubr.f32.gmra.mrb[0].mxu0 %v8810
    %v9092 = vpop.f32.mrb[0].mxu0
    %v9093 = vadd.f32 %v8948, %v9092
    %v9094 = vpop.f32.mrb[0].mxu0
    %9095 = vmatprep.mubr.f32.mxu0 0.0
    %9096 = vmatmul.mubr.f32.gmra.mrb[0].mxu0 %v8813
    %v9097 = vpop.f32.mrb[0].mxu0
    %v9098 = vadd.f32 %v8953, %v9097
    %v9099 = vpop.f32.mrb[0].mxu0
    %9100 = vmatprep.mubr.f32.mxu0 0.0
    %9101 = vmatmul.mubr.f32.gmra.mrb[0].mxu0 %v8816
    %v9102 = vpop.f32.mrb[0].mxu0
    %v9103 = vadd.f32 %v8958, %v9102
    %v9104 = vpop.f32.mrb[0].mxu0
    %9105 = vmatprep.mubr.f32.mxu0 0.0
    %9106 = vmatmul.mubr.f32.gmra.mrb[0].mxu0 %v8819
    %v9107 = vpop.f32.mrb[0].mxu0
    %v9108 = vadd.f32 %v8963, %v9107
    %v9109 = vpop.f32.mrb[0].mxu0
    %9110 = vdwg.mxu0
    %v9111 = vmax.f32 %v9033, 0.0
    %v9112 = vmax.f32 %v9038, 0.0
    %v9113 = vmax.f32 %v9043, 0.0
    %v9114 = vmax.f32 %v9048, 0.0
    %v9115 = vmax.f32 %v9053, 0.0
    %v9116 = vmax.f32 %v9058, 0.0
    %v9117 = vmax.f32 %v9063, 0.0
    %v9118 = vmax.f32 %v9068, 0.0
    %v9119 = vmax.f32 %v9073, 0.0
    %v9120 = vmax.f32 %v9078, 0.0
    %v9121 = vmax.f32 %v9083, 0.0
    %v9122 = vmax.f32 %v9088, 0.0
    %v9123 = vmax.f32 %v9093, 0.0
    %v9124 = vmax.f32 %v9098, 0.0
    %v9125 = vmax.f32 %v9103, 0.0
    %v9126 = vmax.f32 %v9108, 0.0
    %vm9127 = vcmask 523264
    %9128 = vst.msk [vmem:[#allocation8] sm:$0xff] %vm9127, %v9111
    %9129 = vst.msk [vmem:[#allocation8 + $0x8] sm:$0xff] %vm9127, %v9112
    %9130 = vst.msk [vmem:[#allocation8 + $0x10] sm:$0xff] %vm9127, %v9113
    %9131 = vst.msk [vmem:[#allocation8 + $0x18] sm:$0xff] %vm9127, %v9114
    %9132 = vst.msk [vmem:[#allocation8 + $0x20] sm:$0xff] %vm9127, %v9115
    %9133 = vst.msk [vmem:[#allocation8 + $0x28] sm:$0xff] %vm9127, %v9116
    %9134 = vst.msk [vmem:[#allocation8 + $0x30] sm:$0xff] %vm9127, %v9117
    %9135 = vst.msk [vmem:[#allocation8 + $0x38] sm:$0xff] %vm9127, %v9118
    %9136 = vst.msk [vmem:[#allocation8 + $0x40] sm:$0xff] %vm9127, %v9119
    %9137 = vst.msk [vmem:[#allocation8 + $0x48] sm:$0xff] %vm9127, %v9120
    %9138 = vst.msk [vmem:[#allocation8 + $0x50] sm:$0xff] %vm9127, %v9121
    %9139 = vst.msk [vmem:[#allocation8 + $0x58] sm:$0xff] %vm9127, %v9122
    %9140 = vst.msk [vmem:[#allocation8 + $0x60] sm:$0xff] %vm9127, %v9123
    %9141 = vst.msk [vmem:[#allocation8 + $0x68] sm:$0xff] %vm9127, %v9124
    %9142 = vst.msk [vmem:[#allocation8 + $0x70] sm:$0xff] %vm9127, %v9125
    %9143 = vst.msk [vmem:[#allocation8 + $0x78] sm:$0xff] %vm9127, %v9126
    %v9144 = vld [vmem:[#allocation8] ss:$2 sm:$0xf]
    %s9145 = scalar_lea.vmem [#allocation8], 8
    %v9146 = vld [vmem:[%s9145] ss:$2 sm:$0xf]
    %s9147 = scalar_lea.vmem [#allocation8], 16
    %v9148 = vld [vmem:[%s9147] ss:$2 sm:$0xf]
    %s9149 = scalar_lea.vmem [#allocation8], 24
    %v9150 = vld [vmem:[%s9149] ss:$2 sm:$0xf]
    %s9151 = scalar_lea.vmem [#allocation8], 32
    %v9152 = vld [vmem:[%s9151] ss:$2 sm:$0xf]
    %s9153 = scalar_lea.vmem [#allocation8], 40
    %v9154 = vld [vmem:[%s9153] ss:$2 sm:$0xf]
    %s9155 = scalar_lea.vmem [#allocation8], 48
    %v9156 = vld [vmem:[%s9155] ss:$2 sm:$0xf]
    %s9157 = scalar_lea.vmem [#allocation8], 56
    %v9158 = vld [vmem:[%s9157] ss:$2 sm:$0xf]
    %s9159 = scalar_lea.vmem [#allocation8], 64
    %v9160 = vld [vmem:[%s9159] ss:$2 sm:$0xf]
    %s9161 = scalar_lea.vmem [#allocation8], 72
    %v9162 = vld [vmem:[%s9161] ss:$2 sm:$0xf]
    %s9163 = scalar_lea.vmem [#allocation8], 80
    %v9164 = vld [vmem:[%s9163] ss:$2 sm:$0xf]
    %s9165 = scalar_lea.vmem [#allocation8], 88
    %v9166 = vld [vmem:[%s9165] ss:$2 sm:$0xf]
    %s9167 = scalar_lea.vmem [#allocation8], 96
    %v9168 = vld [vmem:[%s9167] ss:$2 sm:$0xf]
    %s9169 = scalar_lea.vmem [#allocation8], 104
    %v9170 = vld [vmem:[%s9169] ss:$2 sm:$0xf]
    %s9171 = scalar_lea.vmem [#allocation8], 112
    %v9172 = vld [vmem:[%s9171] ss:$2 sm:$0xf]
    %s9173 = scalar_lea.vmem [#allocation8], 120
    %v9174 = vld [vmem:[%s9173] ss:$2 sm:$0xf]
    %s9175 = scalar_lea.vmem [#allocation8], 1
    %v9176 = vld [vmem:[%s9175] ss:$2 sm:$0xf]
    %s9177 = scalar_lea.vmem [#allocation8], 9
    %v9178 = vld [vmem:[%s9177] ss:$2 sm:$0xf]
    %s9179 = scalar_lea.vmem [#allocation8], 17
    %v9180 = vld [vmem:[%s9179] ss:$2 sm:$0xf]
    %s9181 = scalar_lea.vmem [#allocation8], 25
    %v9182 = vld [vmem:[%s9181] ss:$2 sm:$0xf]
    %s9183 = scalar_lea.vmem [#allocation8], 33
    %v9184 = vld [vmem:[%s9183] ss:$2 sm:$0xf]
    %s9185 = scalar_lea.vmem [#allocation8], 41
    %v9186 = vld [vmem:[%s9185] ss:$2 sm:$0xf]
    %s9187 = scalar_lea.vmem [#allocation8], 49
    %v9188 = vld [vmem:[%s9187] ss:$2 sm:$0xf]
    %s9189 = scalar_lea.vmem [#allocation8], 57
    %v9190 = vld [vmem:[%s9189] ss:$2 sm:$0xf]
    %s9191 = scalar_lea.vmem [#allocation8], 65
    %v9192 = vld [vmem:[%s9191] ss:$2 sm:$0xf]
    %s9193 = scalar_lea.vmem [#allocation8], 73
    %v9194 = vld [vmem:[%s9193] ss:$2 sm:$0xf]
    %s9195 = scalar_lea.vmem [#allocation8], 81
    %v9196 = vld [vmem:[%s9195] ss:$2 sm:$0xf]
    %s9197 = scalar_lea.vmem [#allocation8], 89
    %v9198 = vld [vmem:[%s9197] ss:$2 sm:$0xf]
    %s9199 = scalar_lea.vmem [#allocation8], 97
    %v9200 = vld [vmem:[%s9199] ss:$2 sm:$0xf]
    %s9201 = scalar_lea.vmem [#allocation8], 105
    %v9202 = vld [vmem:[%s9201] ss:$2 sm:$0xf]
    %s9203 = scalar_lea.vmem [#allocation8], 113
    %v9204 = vld [vmem:[%s9203] ss:$2 sm:$0xf]
    %s9205 = scalar_lea.vmem [#allocation8], 121
    %v9206 = vld [vmem:[%s9205] ss:$2 sm:$0xf]
    %v9207 = vmax.f32 %v9144, %v9176
    %v9208 = vmax.f32 %v9146, %v9178
    %v9209 = vmax.f32 %v9148, %v9180
    %v9210 = vmax.f32 %v9150, %v9182
    %v9211 = vmax.f32 %v9152, %v9184
    %v9212 = vmax.f32 %v9154, %v9186
    %v9213 = vmax.f32 %v9156, %v9188
    %v9214 = vmax.f32 %v9158, %v9190
    %v9215 = vmax.f32 %v9160, %v9192
    %v9216 = vmax.f32 %v9162, %v9194
    %v9217 = vmax.f32 %v9164, %v9196
    %v9218 = vmax.f32 %v9166, %v9198
    %v9219 = vmax.f32 %v9168, %v9200
    %v9220 = vmax.f32 %v9170, %v9202
    %v9221 = vmax.f32 %v9172, %v9204
    %v9222 = vmax.f32 %v9174, %v9206
    %vm9223 = vcmask 519168
    %v9224 = vsel %vm9223, %v9207, -inf
    %v9225 = vsel %vm9223, %v9208, -inf
    %v9226 = vmax.f32 %v9224, %v9225
    %v9227 = vsel %vm9223, %v9209, -inf
    %v9228 = vsel %vm9223, %v9210, -inf
    %v9229 = vmax.f32 %v9227, %v9228
    %v9230 = vsel %vm9223, %v9211, -inf
    %v9231 = vsel %vm9223, %v9212, -inf
    %v9232 = vmax.f32 %v9230, %v9231
    %v9233 = vsel %vm9223, %v9213, -inf
    %v9234 = vsel %vm9223, %v9214, -inf
    %v9235 = vmax.f32 %v9233, %v9234
    %v9236 = vsel %vm9223, %v9215, -inf
    %v9237 = vsel %vm9223, %v9216, -inf
    %v9238 = vmax.f32 %v9236, %v9237
    %v9239 = vsel %vm9223, %v9217, -inf
    %v9240 = vsel %vm9223, %v9218, -inf
    %v9241 = vmax.f32 %v9239, %v9240
    %v9242 = vsel %vm9223, %v9219, -inf
    %v9243 = vsel %vm9223, %v9220, -inf
    %v9244 = vmax.f32 %v9242, %v9243
    %v9245 = vsel %vm9223, %v9221, -inf
    %v9246 = vsel %vm9223, %v9222, -inf
    %v9247 = vmax.f32 %v9245, %v9246
    %v9251 = vunpack.c.l.s4 1983009808
    %v9252 = vunpack.c.0.s8 %v9251
    %v9253 = vlaneseq
    %v9254 = vshrl.u32 %v9253, 7
    %v9255 = vsub.s32 %v9252, %v9254
    %v9256 = vrot.slane %v9226, %v9255
    %v9258 = vunpack.c.l.s4 1983009808
    %v9259 = vunpack.c.0.s8 %v9258
    %v9260 = vlaneseq
    %v9261 = vshrl.u32 %v9260, 7
    %v9262 = vsub.s32 %v9259, %v9261
    %v9263 = vrot.slane %v9238, %v9262
    %vm9264 = vcmask 1044484
    %v9265 = vsel %vm9264, %v9256, %v9256
    %vm9266 = vcmask 1046534
    %v9267 = vsel %vm9266, %v9256, %v9265
    %v9268 = vrot.slane %v9263, 7
    %vm9269 = vcmask 1041409
    %v9270 = vsel %vm9269, %v9268, %v9267
    %vm9271 = vcmask 1043459
    %v9272 = vsel %vm9271, %v9268, %v9270
    %vm9273 = vcmask 1045509
    %v9274 = vsel %vm9273, %v9268, %v9272
    %vm9275 = vcmask 1047559
    %v9276 = vsel %vm9275, %v9268, %v9274
    %vm9278 = vcmask 517120
    %9279 = vst.msk [vmem:[#allocation9] sm:$0x3] %vm9278, %v9276
    %v9280 = vrot.slane %v9256, 1
    %v9281 = vsel %vm9264, %v9280, %v9280
    %v9282 = vsel %vm9266, %v9280, %v9281
    %v9283 = vsel %vm9269, %v9263, %v9282
    %v9284 = vsel %vm9271, %v9263, %v9283
    %v9285 = vsel %vm9273, %v9263, %v9284
    %v9286 = vsel %vm9275, %v9263, %v9285
    %9287 = vrot.lane.b32.xlu0 %v9286, 64
    %v9288 = vpop.permute.xlu0 %9287
    %vm9290 = vcmask 1041920
    %9291 = vst.msk [vmem:[#allocation9] sm:$0x3] %vm9290, %v9288
    %v9292 = vcombine.high %v9256, %v9256
    %v9293 = vcombine.high %v9263, %v9263
    %v9294 = vsel %vm9264, %v9292, %v9292
    %v9295 = vsel %vm9266, %v9292, %v9294
    %v9296 = vrot.slane %v9293, 7
    %v9297 = vsel %vm9269, %v9296, %v9295
    %v9298 = vsel %vm9271, %v9296, %v9297
    %v9299 = vsel %vm9273, %v9296, %v9298
    %v9300 = vsel %vm9275, %v9296, %v9299
    %9302 = vst.msk [vmem:[#allocation9 + $0x2] sm:$0x3] %vm9278, %v9300
    %v9303 = vrot.slane %v9292, 1
    %v9304 = vsel %vm9264, %v9303, %v9303
    %v9305 = vsel %vm9266, %v9303, %v9304
    %v9306 = vsel %vm9269, %v9293, %v9305
    %v9307 = vsel %vm9271, %v9293, %v9306
    %v9308 = vsel %vm9273, %v9293, %v9307
    %v9309 = vsel %vm9275, %v9293, %v9308
    %9310 = vrot.lane.b32.xlu0 %v9309, 64
    %v9311 = vpop.permute.xlu0 %9310
    %9313 = vst.msk [vmem:[#allocation9 + $0x2] sm:$0x3] %vm9290, %v9311
    %v9317 = vunpack.c.l.s4 1983009808
    %v9318 = vunpack.c.0.s8 %v9317
    %v9319 = vlaneseq
    %v9320 = vshrl.u32 %v9319, 7
    %v9321 = vsub.s32 %v9318, %v9320
    %v9322 = vrot.slane %v9229, %v9321
    %v9324 = vunpack.c.l.s4 1983009808
    %v9325 = vunpack.c.0.s8 %v9324
    %v9326 = vlaneseq
    %v9327 = vshrl.u32 %v9326, 7
    %v9328 = vsub.s32 %v9325, %v9327
    %v9329 = vrot.slane %v9241, %v9328
    %v9330 = vsel %vm9264, %v9322, %v9322
    %v9331 = vsel %vm9266, %v9322, %v9330
    %v9332 = vrot.slane %v9329, 7
    %v9333 = vsel %vm9269, %v9332, %v9331
    %v9334 = vsel %vm9271, %v9332, %v9333
    %v9335 = vsel %vm9273, %v9332, %v9334
    %v9336 = vsel %vm9275, %v9332, %v9335
    %9338 = vst.msk [vmem:[#allocation9 + $0x4] sm:$0x3] %vm9278, %v9336
    %v9339 = vrot.slane %v9322, 1
    %v9340 = vsel %vm9264, %v9339, %v9339
    %v9341 = vsel %vm9266, %v9339, %v9340
    %v9342 = vsel %vm9269, %v9329, %v9341
    %v9343 = vsel %vm9271, %v9329, %v9342
    %v9344 = vsel %vm9273, %v9329, %v9343
    %v9345 = vsel %vm9275, %v9329, %v9344
    %9346 = vrot.lane.b32.xlu0 %v9345, 64
    %v9347 = vpop.permute.xlu0 %9346
    %9349 = vst.msk [vmem:[#allocation9 + $0x4] sm:$0x3] %vm9290, %v9347
    %v9350 = vcombine.high %v9322, %v9322
    %v9351 = vcombine.high %v9329, %v9329
    %v9352 = vsel %vm9264, %v9350, %v9350
    %v9353 = vsel %vm9266, %v9350, %v9352
    %v9354 = vrot.slane %v9351, 7
    %v9355 = vsel %vm9269, %v9354, %v9353
    %v9356 = vsel %vm9271, %v9354, %v9355
    %v9357 = vsel %vm9273, %v9354, %v9356
    %v9358 = vsel %vm9275, %v9354, %v9357
    %9360 = vst.msk [vmem:[#allocation9 + $0x6] sm:$0x3] %vm9278, %v9358
    %v9361 = vrot.slane %v9350, 1
    %v9362 = vsel %vm9264, %v9361, %v9361
    %v9363 = vsel %vm9266, %v9361, %v9362
    %v9364 = vsel %vm9269, %v9351, %v9363
    %v9365 = vsel %vm9271, %v9351, %v9364
    %v9366 = vsel %vm9273, %v9351, %v9365
    %v9367 = vsel %vm9275, %v9351, %v9366
    %9368 = vrot.lane.b32.xlu0 %v9367, 64
    %v9369 = vpop.permute.xlu0 %9368
    %9371 = vst.msk [vmem:[#allocation9 + $0x6] sm:$0x3] %vm9290, %v9369
    %v9375 = vunpack.c.l.s4 1983009808
    %v9376 = vunpack.c.0.s8 %v9375
    %v9377 = vlaneseq
    %v9378 = vshrl.u32 %v9377, 7
    %v9379 = vsub.s32 %v9376, %v9378
    %v9380 = vrot.slane %v9232, %v9379
    %v9382 = vunpack.c.l.s4 1983009808
    %v9383 = vunpack.c.0.s8 %v9382
    %v9384 = vlaneseq
    %v9385 = vshrl.u32 %v9384, 7
    %v9386 = vsub.s32 %v9383, %v9385
    %v9387 = vrot.slane %v9244, %v9386
    %v9388 = vsel %vm9264, %v9380, %v9380
    %v9389 = vsel %vm9266, %v9380, %v9388
    %v9390 = vrot.slane %v9387, 7
    %v9391 = vsel %vm9269, %v9390, %v9389
    %v9392 = vsel %vm9271, %v9390, %v9391
    %v9393 = vsel %vm9273, %v9390, %v9392
    %v9394 = vsel %vm9275, %v9390, %v9393
    %9396 = vst.msk [vmem:[#allocation9 + $0x8] sm:$0x3] %vm9278, %v9394
    %v9397 = vrot.slane %v9380, 1
    %v9398 = vsel %vm9264, %v9397, %v9397
    %v9399 = vsel %vm9266, %v9397, %v9398
    %v9400 = vsel %vm9269, %v9387, %v9399
    %v9401 = vsel %vm9271, %v9387, %v9400
    %v9402 = vsel %vm9273, %v9387, %v9401
    %v9403 = vsel %vm9275, %v9387, %v9402
    %9404 = vrot.lane.b32.xlu0 %v9403, 64
    %v9405 = vpop.permute.xlu0 %9404
    %9407 = vst.msk [vmem:[#allocation9 + $0x8] sm:$0x3] %vm9290, %v9405
    %v9408 = vcombine.high %v9380, %v9380
    %v9409 = vcombine.high %v9387, %v9387
    %v9410 = vsel %vm9264, %v9408, %v9408
    %v9411 = vsel %vm9266, %v9408, %v9410
    %v9412 = vrot.slane %v9409, 7
    %v9413 = vsel %vm9269, %v9412, %v9411
    %v9414 = vsel %vm9271, %v9412, %v9413
    %v9415 = vsel %vm9273, %v9412, %v9414
    %v9416 = vsel %vm9275, %v9412, %v9415
    %9418 = vst.msk [vmem:[#allocation9 + $0xa] sm:$0x3] %vm9278, %v9416
    %v9419 = vrot.slane %v9408, 1
    %v9420 = vsel %vm9264, %v9419, %v9419
    %v9421 = vsel %vm9266, %v9419, %v9420
    %v9422 = vsel %vm9269, %v9409, %v9421
    %v9423 = vsel %vm9271, %v9409, %v9422
    %v9424 = vsel %vm9273, %v9409, %v9423
    %v9425 = vsel %vm9275, %v9409, %v9424
    %9426 = vrot.lane.b32.xlu0 %v9425, 64
    %v9427 = vpop.permute.xlu0 %9426
    %9429 = vst.msk [vmem:[#allocation9 + $0xa] sm:$0x3] %vm9290, %v9427
    %v9433 = vunpack.c.l.s4 1983009808
    %v9434 = vunpack.c.0.s8 %v9433
    %v9435 = vlaneseq
    %v9436 = vshrl.u32 %v9435, 7
    %v9437 = vsub.s32 %v9434, %v9436
    %v9438 = vrot.slane %v9235, %v9437
    %v9440 = vunpack.c.l.s4 1983009808
    %v9441 = vunpack.c.0.s8 %v9440
    %v9442 = vlaneseq
    %v9443 = vshrl.u32 %v9442, 7
    %v9444 = vsub.s32 %v9441, %v9443
    %v9445 = vrot.slane %v9247, %v9444
    %v9446 = vsel %vm9264, %v9438, %v9438
    %v9447 = vsel %vm9266, %v9438, %v9446
    %v9448 = vrot.slane %v9445, 7
    %v9449 = vsel %vm9269, %v9448, %v9447
    %v9450 = vsel %vm9271, %v9448, %v9449
    %v9451 = vsel %vm9273, %v9448, %v9450
    %v9452 = vsel %vm9275, %v9448, %v9451
    %9454 = vst.msk [vmem:[#allocation9 + $0xc] sm:$0x3] %vm9278, %v9452
    %v9455 = vrot.slane %v9438, 1
    %v9456 = vsel %vm9264, %v9455, %v9455
    %v9457 = vsel %vm9266, %v9455, %v9456
    %v9458 = vsel %vm9269, %v9445, %v9457
    %v9459 = vsel %vm9271, %v9445, %v9458
    %v9460 = vsel %vm9273, %v9445, %v9459
    %v9461 = vsel %vm9275, %v9445, %v9460
    %9462 = vrot.lane.b32.xlu0 %v9461, 64
    %v9463 = vpop.permute.xlu0 %9462
    %9465 = vst.msk [vmem:[#allocation9 + $0xc] sm:$0x3] %vm9290, %v9463
    %v9466 = vcombine.high %v9438, %v9438
    %v9467 = vcombine.high %v9445, %v9445
    %v9468 = vsel %vm9264, %v9466, %v9466
    %v9469 = vsel %vm9266, %v9466, %v9468
    %v9470 = vrot.slane %v9467, 7
    %v9471 = vsel %vm9269, %v9470, %v9469
    %v9472 = vsel %vm9271, %v9470, %v9471
    %v9473 = vsel %vm9273, %v9470, %v9472
    %v9474 = vsel %vm9275, %v9470, %v9473
    %9476 = vst.msk [vmem:[#allocation9 + $0xe] sm:$0x3] %vm9278, %v9474
    %v9477 = vrot.slane %v9466, 1
    %v9478 = vsel %vm9264, %v9477, %v9477
    %v9479 = vsel %vm9266, %v9477, %v9478
    %v9480 = vsel %vm9269, %v9467, %v9479
    %v9481 = vsel %vm9271, %v9467, %v9480
    %v9482 = vsel %vm9273, %v9467, %v9481
    %v9483 = vsel %vm9275, %v9467, %v9482
    %9484 = vrot.lane.b32.xlu0 %v9483, 64
    %v9485 = vpop.permute.xlu0 %9484
    %9487 = vst.msk [vmem:[#allocation9 + $0xe] sm:$0x3] %vm9290, %v9485
    %v9488 = vld [vmem:[#allocation9] sm:$0xff]
    %v9489 = vld [vmem:[#allocation9 + $0x8] sm:$0xff]
    %v9490 = vld [vmem:[%s7] sm:$0xff]
    %v9491 = vld [vmem:[%s7 + $0x8] sm:$0xff]
    %v9492 = vld [vmem:[%s7 + $0x10] sm:$0xff]
    %v9493 = vld [vmem:[%s7 + $0x18] sm:$0xff]
    %v9494 = vld [vmem:[%s7 + $0x20] sm:$0xff]
    %v9495 = vld [vmem:[%s7 + $0x28] sm:$0xff]
    %v9496 = vld [vmem:[%s7 + $0x30] sm:$0xff]
    %v9497 = vld [vmem:[%s7 + $0x38] sm:$0xff]
    %v9498 = vld [vmem:[%s7 + $0x40] sm:$0xff]
    %v9499 = vld [vmem:[%s7 + $0x48] sm:$0xff]
    %v9500 = vld [vmem:[%s7 + $0x50] sm:$0xff]
    %v9501 = vld [vmem:[%s7 + $0x58] sm:$0xff]
    %v9502 = vld [vmem:[%s7 + $0x60] sm:$0xff]
    %v9503 = vld [vmem:[%s7 + $0x68] sm:$0xff]
    %v9504 = vld [vmem:[%s7 + $0x70] sm:$0xff]
    %v9505 = vld [vmem:[%s7 + $0x78] sm:$0xff]
    %v9506 = vld [vmem:[%s7 + $0x80] sm:$0xff]
    %v9507 = vld [vmem:[%s7 + $0x88] sm:$0xff]
    %v9508 = vld [vmem:[%s7 + $0x90] sm:$0xff]
    %v9509 = vld [vmem:[%s7 + $0x98] sm:$0xff]
    %v9510 = vld [vmem:[%s7 + $0xa0] sm:$0xff]
    %v9511 = vld [vmem:[%s7 + $0xa8] sm:$0xff]
    %v9512 = vld [vmem:[%s7 + $0xb0] sm:$0xff]
    %v9513 = vld [vmem:[%s7 + $0xb8] sm:$0xff]
    %v9514 = vld [vmem:[%s7 + $0xc0] sm:$0xff]
    %v9515 = vld [vmem:[%s7 + $0xc8] sm:$0xff]
    %v9516 = vld [vmem:[%s7 + $0xd0] sm:$0xff]
    %v9517 = vld [vmem:[%s7 + $0xd8] sm:$0xff]
    %v9518 = vld [vmem:[%s7 + $0xe0] sm:$0xff]
    %v9519 = vld [vmem:[%s7 + $0xe8] sm:$0xff]
    %v9520 = vld [vmem:[%s7 + $0xf0] sm:$0xff]
    %v9521 = vld [vmem:[%s7 + $0xf8] sm:$0xff]
    %v9522 = vld [vmem:[%s7 + $0x100] sm:$0xff]
    %v9523 = vld [vmem:[%s7 + $0x108] sm:$0xff]
    %v9524 = vld [vmem:[%s7 + $0x110] sm:$0xff]
    %v9525 = vld [vmem:[%s7 + $0x118] sm:$0xff]
    %v9526 = vld [vmem:[%s7 + $0x120] sm:$0xff]
    %v9527 = vld [vmem:[%s7 + $0x128] sm:$0xff]
    %v9528 = vld [vmem:[%s7 + $0x130] sm:$0xff]
    %v9529 = vld [vmem:[%s7 + $0x138] sm:$0xff]
    %v9530 = vld [vmem:[%s7 + $0x140] sm:$0xff]
    %v9531 = vld [vmem:[%s7 + $0x148] sm:$0xff]
    %v9532 = vld [vmem:[%s7 + $0x150] sm:$0xff]
    %v9533 = vld [vmem:[%s7 + $0x158] sm:$0xff]
    %v9534 = vld [vmem:[%s7 + $0x160] sm:$0xff]
    %v9535 = vld [vmem:[%s7 + $0x168] sm:$0xff]
    %v9536 = vld [vmem:[%s7 + $0x170] sm:$0xff]
    %v9537 = vld [vmem:[%s7 + $0x178] sm:$0xff]
    %v9538 = vld [vmem:[%s7 + $0x180] sm:$0xff]
    %v9539 = vld [vmem:[%s7 + $0x188] sm:$0xff]
    %v9540 = vld [vmem:[%s7 + $0x190] sm:$0xff]
    %v9541 = vld [vmem:[%s7 + $0x198] sm:$0xff]
    %v9542 = vld [vmem:[%s7 + $0x1a0] sm:$0xff]
    %v9543 = vld [vmem:[%s7 + $0x1a8] sm:$0xff]
    %v9544 = vld [vmem:[%s7 + $0x1b0] sm:$0xff]
    %v9545 = vld [vmem:[%s7 + $0x1b8] sm:$0xff]
    %v9546 = vld [vmem:[%s7 + $0x1c0] sm:$0xff]
    %v9547 = vld [vmem:[%s7 + $0x1c8] sm:$0xff]
    %v9548 = vld [vmem:[%s7 + $0x1d0] sm:$0xff]
    %v9549 = vld [vmem:[%s7 + $0x1d8] sm:$0xff]
    %v9550 = vld [vmem:[%s7 + $0x1e0] sm:$0xff]
    %v9551 = vld [vmem:[%s7 + $0x1e8] sm:$0xff]
    %v9552 = vld [vmem:[%s7 + $0x1f0] sm:$0xff]
    %v9553 = vld [vmem:[%s7 + $0x1f8] sm:$0xff]
    %v9554 = vld [vmem:[%s7 + $0x200] sm:$0xff]
    %v9555 = vld [vmem:[%s7 + $0x208] sm:$0xff]
    %v9556 = vld [vmem:[%s7 + $0x210] sm:$0xff]
    %v9557 = vld [vmem:[%s7 + $0x218] sm:$0xff]
    %v9558 = vld [vmem:[%s7 + $0x220] sm:$0xff]
    %v9559 = vld [vmem:[%s7 + $0x228] sm:$0xff]
    %v9560 = vld [vmem:[%s7 + $0x230] sm:$0xff]
    %v9561 = vld [vmem:[%s7 + $0x238] sm:$0xff]
    %v9562 = vld [vmem:[%s7 + $0x240] sm:$0xff]
    %v9563 = vld [vmem:[%s7 + $0x248] sm:$0xff]
    %v9564 = vld [vmem:[%s7 + $0x250] sm:$0xff]
    %v9565 = vld [vmem:[%s7 + $0x258] sm:$0xff]
    %v9566 = vld [vmem:[%s7 + $0x260] sm:$0xff]
    %v9567 = vld [vmem:[%s7 + $0x268] sm:$0xff]
    %v9568 = vld [vmem:[%s7 + $0x270] sm:$0xff]
    %v9569 = vld [vmem:[%s7 + $0x278] sm:$0xff]
    %v9570 = vld [vmem:[%s7 + $0x280] sm:$0xff]
    %v9571 = vld [vmem:[%s7 + $0x288] sm:$0xff]
    %v9572 = vld [vmem:[%s7 + $0x290] sm:$0xff]
    %v9573 = vld [vmem:[%s7 + $0x298] sm:$0xff]
    %v9574 = vld [vmem:[%s7 + $0x2a0] sm:$0xff]
    %v9575 = vld [vmem:[%s7 + $0x2a8] sm:$0xff]
    %v9576 = vld [vmem:[%s7 + $0x2b0] sm:$0xff]
    %v9577 = vld [vmem:[%s7 + $0x2b8] sm:$0xff]
    %v9578 = vld [vmem:[%s7 + $0x2c0] sm:$0xff]
    %v9579 = vld [vmem:[%s7 + $0x2c8] sm:$0xff]
    %v9580 = vld [vmem:[%s7 + $0x2d0] sm:$0xff]
    %v9581 = vld [vmem:[%s7 + $0x2d8] sm:$0xff]
    %v9582 = vld [vmem:[%s7 + $0x2e0] sm:$0xff]
    %v9583 = vld [vmem:[%s7 + $0x2e8] sm:$0xff]
    %v9584 = vld [vmem:[%s7 + $0x2f0] sm:$0xff]
    %v9585 = vld [vmem:[%s7 + $0x2f8] sm:$0xff]
    %v9586 = vld [vmem:[%s7 + $0x300] sm:$0xff]
    %v9587 = vld [vmem:[%s7 + $0x308] sm:$0xff]
    %v9588 = vld [vmem:[%s7 + $0x310] sm:$0xff]
    %v9589 = vld [vmem:[%s7 + $0x318] sm:$0xff]
    %v9590 = vld [vmem:[%s7 + $0x320] sm:$0xff]
    %v9591 = vld [vmem:[%s7 + $0x328] sm:$0xff]
    %v9592 = vld [vmem:[%s7 + $0x330] sm:$0xff]
    %v9593 = vld [vmem:[%s7 + $0x338] sm:$0xff]
    %v9594 = vld [vmem:[%s7 + $0x340] sm:$0xff]
    %v9595 = vld [vmem:[%s7 + $0x348] sm:$0xff]
    %v9596 = vld [vmem:[%s7 + $0x350] sm:$0xff]
    %v9597 = vld [vmem:[%s7 + $0x358] sm:$0xff]
    %v9598 = vld [vmem:[%s7 + $0x360] sm:$0xff]
    %v9599 = vld [vmem:[%s7 + $0x368] sm:$0xff]
    %v9600 = vld [vmem:[%s7 + $0x370] sm:$0xff]
    %v9601 = vld [vmem:[%s7 + $0x378] sm:$0xff]
    %v9602 = vld [vmem:[%s7 + $0x380] sm:$0xff]
    %v9603 = vld [vmem:[%s7 + $0x388] sm:$0xff]
    %v9604 = vld [vmem:[%s7 + $0x390] sm:$0xff]
    %v9605 = vld [vmem:[%s7 + $0x398] sm:$0xff]
    %v9606 = vld [vmem:[%s7 + $0x3a0] sm:$0xff]
    %v9607 = vld [vmem:[%s7 + $0x3a8] sm:$0xff]
    %v9608 = vld [vmem:[%s7 + $0x3b0] sm:$0xff]
    %v9609 = vld [vmem:[%s7 + $0x3b8] sm:$0xff]
    %v9610 = vld [vmem:[%s7 + $0x3c0] sm:$0xff]
    %v9611 = vld [vmem:[%s7 + $0x3c8] sm:$0xff]
    %v9612 = vld [vmem:[%s7 + $0x3d0] sm:$0xff]
    %v9613 = vld [vmem:[%s7 + $0x3d8] sm:$0xff]
    %v9614 = vld [vmem:[%s7 + $0x3e0] sm:$0xff]
    %v9615 = vld [vmem:[%s7 + $0x3e8] sm:$0xff]
    %v9616 = vld [vmem:[%s7 + $0x3f0] sm:$0xff]
    %v9617 = vld [vmem:[%s7 + $0x3f8] sm:$0xff]
    %v9618 = vld [vmem:[%s7 + $0x400] sm:$0xff]
    %v9619 = vld [vmem:[%s7 + $0x408] sm:$0xff]
    %v9620 = vld [vmem:[%s7 + $0x410] sm:$0xff]
    %v9621 = vld [vmem:[%s7 + $0x418] sm:$0xff]
    %v9622 = vld [vmem:[%s7 + $0x420] sm:$0xff]
    %v9623 = vld [vmem:[%s7 + $0x428] sm:$0xff]
    %v9624 = vld [vmem:[%s7 + $0x430] sm:$0xff]
    %v9625 = vld [vmem:[%s7 + $0x438] sm:$0xff]
    %v9626 = vld [vmem:[%s7 + $0x440] sm:$0xff]
    %v9627 = vld [vmem:[%s7 + $0x448] sm:$0xff]
    %v9628 = vld [vmem:[%s7 + $0x450] sm:$0xff]
    %v9629 = vld [vmem:[%s7 + $0x458] sm:$0xff]
    %v9630 = vld [vmem:[%s7 + $0x460] sm:$0xff]
    %v9631 = vld [vmem:[%s7 + $0x468] sm:$0xff]
    %v9632 = vld [vmem:[%s7 + $0x470] sm:$0xff]
    %v9633 = vld [vmem:[%s7 + $0x478] sm:$0xff]
    %v9634 = vld [vmem:[%s7 + $0x480] sm:$0xff]
    %v9635 = vld [vmem:[%s7 + $0x488] sm:$0xff]
    %v9636 = vld [vmem:[%s7 + $0x490] sm:$0xff]
    %v9637 = vld [vmem:[%s7 + $0x498] sm:$0xff]
    %v9638 = vld [vmem:[%s7 + $0x4a0] sm:$0xff]
    %v9639 = vld [vmem:[%s7 + $0x4a8] sm:$0xff]
    %v9640 = vld [vmem:[%s7 + $0x4b0] sm:$0xff]
    %v9641 = vld [vmem:[%s7 + $0x4b8] sm:$0xff]
    %v9642 = vld [vmem:[%s7 + $0x4c0] sm:$0xff]
    %v9643 = vld [vmem:[%s7 + $0x4c8] sm:$0xff]
    %v9644 = vld [vmem:[%s7 + $0x4d0] sm:$0xff]
    %v9645 = vld [vmem:[%s7 + $0x4d8] sm:$0xff]
    %v9646 = vld [vmem:[%s7 + $0x4e0] sm:$0xff]
    %v9647 = vld [vmem:[%s7 + $0x4e8] sm:$0xff]
    %v9648 = vld [vmem:[%s7 + $0x4f0] sm:$0xff]
    %v9649 = vld [vmem:[%s7 + $0x4f8] sm:$0xff]
    %v9650 = vld [vmem:[%s7 + $0x500] sm:$0xff]
    %v9651 = vld [vmem:[%s7 + $0x508] sm:$0xff]
    %v9652 = vld [vmem:[%s7 + $0x510] sm:$0xff]
    %v9653 = vld [vmem:[%s7 + $0x518] sm:$0xff]
    %v9654 = vld [vmem:[%s7 + $0x520] sm:$0xff]
    %v9655 = vld [vmem:[%s7 + $0x528] sm:$0xff]
    %v9656 = vld [vmem:[%s7 + $0x530] sm:$0xff]
    %v9657 = vld [vmem:[%s7 + $0x538] sm:$0xff]
    %v9658 = vld [vmem:[%s7 + $0x540] sm:$0xff]
    %v9659 = vld [vmem:[%s7 + $0x548] sm:$0xff]
    %v9660 = vld [vmem:[%s7 + $0x550] sm:$0xff]
    %v9661 = vld [vmem:[%s7 + $0x558] sm:$0xff]
    %v9662 = vld [vmem:[%s7 + $0x560] sm:$0xff]
    %v9663 = vld [vmem:[%s7 + $0x568] sm:$0xff]
    %v9664 = vld [vmem:[%s7 + $0x570] sm:$0xff]
    %v9665 = vld [vmem:[%s7 + $0x578] sm:$0xff]
    %v9666 = vld [vmem:[%s7 + $0x580] sm:$0xff]
    %v9667 = vld [vmem:[%s7 + $0x588] sm:$0xff]
    %v9668 = vld [vmem:[%s7 + $0x590] sm:$0xff]
    %v9669 = vld [vmem:[%s7 + $0x598] sm:$0xff]
    %v9670 = vld [vmem:[%s7 + $0x5a0] sm:$0xff]
    %v9671 = vld [vmem:[%s7 + $0x5a8] sm:$0xff]
    %v9672 = vld [vmem:[%s7 + $0x5b0] sm:$0xff]
    %v9673 = vld [vmem:[%s7 + $0x5b8] sm:$0xff]
    %v9674 = vld [vmem:[%s7 + $0x5c0] sm:$0xff]
    %v9675 = vld [vmem:[%s7 + $0x5c8] sm:$0xff]
    %v9676 = vld [vmem:[%s7 + $0x5d0] sm:$0xff]
    %v9677 = vld [vmem:[%s7 + $0x5d8] sm:$0xff]
    %v9678 = vld [vmem:[%s7 + $0x5e0] sm:$0xff]
    %v9679 = vld [vmem:[%s7 + $0x5e8] sm:$0xff]
    %v9680 = vld [vmem:[%s7 + $0x5f0] sm:$0xff]
    %v9681 = vld [vmem:[%s7 + $0x5f8] sm:$0xff]
    %v9682 = vld [vmem:[%s7 + $0x600] sm:$0xff]
    %v9683 = vld [vmem:[%s7 + $0x608] sm:$0xff]
    %v9684 = vld [vmem:[%s7 + $0x610] sm:$0xff]
    %v9685 = vld [vmem:[%s7 + $0x618] sm:$0xff]
    %v9686 = vld [vmem:[%s7 + $0x620] sm:$0xff]
    %v9687 = vld [vmem:[%s7 + $0x628] sm:$0xff]
    %v9688 = vld [vmem:[%s7 + $0x630] sm:$0xff]
    %v9689 = vld [vmem:[%s7 + $0x638] sm:$0xff]
    %v9690 = vld [vmem:[%s7 + $0x640] sm:$0xff]
    %v9691 = vld [vmem:[%s7 + $0x648] sm:$0xff]
    %v9692 = vld [vmem:[%s7 + $0x650] sm:$0xff]
    %v9693 = vld [vmem:[%s7 + $0x658] sm:$0xff]
    %v9694 = vld [vmem:[%s7 + $0x660] sm:$0xff]
    %v9695 = vld [vmem:[%s7 + $0x668] sm:$0xff]
    %v9696 = vld [vmem:[%s7 + $0x670] sm:$0xff]
    %v9697 = vld [vmem:[%s7 + $0x678] sm:$0xff]
    %v9698 = vld [vmem:[%s7 + $0x680] sm:$0xff]
    %v9699 = vld [vmem:[%s7 + $0x688] sm:$0xff]
    %v9700 = vld [vmem:[%s7 + $0x690] sm:$0xff]
    %v9701 = vld [vmem:[%s7 + $0x698] sm:$0xff]
    %v9702 = vld [vmem:[%s7 + $0x6a0] sm:$0xff]
    %v9703 = vld [vmem:[%s7 + $0x6a8] sm:$0xff]
    %v9704 = vld [vmem:[%s7 + $0x6b0] sm:$0xff]
    %v9705 = vld [vmem:[%s7 + $0x6b8] sm:$0xff]
    %v9706 = vld [vmem:[%s7 + $0x6c0] sm:$0xff]
    %v9707 = vld [vmem:[%s7 + $0x6c8] sm:$0xff]
    %v9708 = vld [vmem:[%s7 + $0x6d0] sm:$0xff]
    %v9709 = vld [vmem:[%s7 + $0x6d8] sm:$0xff]
    %v9710 = vld [vmem:[%s7 + $0x6e0] sm:$0xff]
    %v9711 = vld [vmem:[%s7 + $0x6e8] sm:$0xff]
    %v9712 = vld [vmem:[%s7 + $0x6f0] sm:$0xff]
    %v9713 = vld [vmem:[%s7 + $0x6f8] sm:$0xff]
    %v9714 = vld [vmem:[%s7 + $0x700] sm:$0xff]
    %v9715 = vld [vmem:[%s7 + $0x708] sm:$0xff]
    %v9716 = vld [vmem:[%s7 + $0x710] sm:$0xff]
    %v9717 = vld [vmem:[%s7 + $0x718] sm:$0xff]
    %v9718 = vld [vmem:[%s7 + $0x720] sm:$0xff]
    %v9719 = vld [vmem:[%s7 + $0x728] sm:$0xff]
    %v9720 = vld [vmem:[%s7 + $0x730] sm:$0xff]
    %v9721 = vld [vmem:[%s7 + $0x738] sm:$0xff]
    %v9722 = vld [vmem:[%s7 + $0x740] sm:$0xff]
    %v9723 = vld [vmem:[%s7 + $0x748] sm:$0xff]
    %v9724 = vld [vmem:[%s7 + $0x750] sm:$0xff]
    %v9725 = vld [vmem:[%s7 + $0x758] sm:$0xff]
    %v9726 = vld [vmem:[%s7 + $0x760] sm:$0xff]
    %v9727 = vld [vmem:[%s7 + $0x768] sm:$0xff]
    %v9728 = vld [vmem:[%s7 + $0x770] sm:$0xff]
    %v9729 = vld [vmem:[%s7 + $0x778] sm:$0xff]
    %v9730 = vld [vmem:[%s7 + $0x780] sm:$0xff]
    %v9731 = vld [vmem:[%s7 + $0x788] sm:$0xff]
    %v9732 = vld [vmem:[%s7 + $0x790] sm:$0xff]
    %v9733 = vld [vmem:[%s7 + $0x798] sm:$0xff]
    %v9734 = vld [vmem:[%s7 + $0x7a0] sm:$0xff]
    %v9735 = vld [vmem:[%s7 + $0x7a8] sm:$0xff]
    %v9736 = vld [vmem:[%s7 + $0x7b0] sm:$0xff]
    %v9737 = vld [vmem:[%s7 + $0x7b8] sm:$0xff]
    %v9738 = vld [vmem:[%s7 + $0x7c0] sm:$0xff]
    %v9739 = vld [vmem:[%s7 + $0x7c8] sm:$0xff]
    %v9740 = vld [vmem:[%s7 + $0x7d0] sm:$0xff]
    %v9741 = vld [vmem:[%s7 + $0x7d8] sm:$0xff]
    %v9742 = vld [vmem:[%s7 + $0x7e0] sm:$0xff]
    %v9743 = vld [vmem:[%s7 + $0x7e8] sm:$0xff]
    %v9744 = vld [vmem:[%s7 + $0x7f0] sm:$0xff]
    %v9745 = vld [vmem:[%s7 + $0x7f8] sm:$0xff]
    %v9746 = vld [vmem:[%s7 + $0x800] sm:$0xff]
    %v9747 = vld [vmem:[%s7 + $0x808] sm:$0xff]
    %v9748 = vld [vmem:[%s7 + $0x810] sm:$0xff]
    %v9749 = vld [vmem:[%s7 + $0x818] sm:$0xff]
    %v9750 = vld [vmem:[%s7 + $0x820] sm:$0xff]
    %v9751 = vld [vmem:[%s7 + $0x828] sm:$0xff]
    %v9752 = vld [vmem:[%s7 + $0x830] sm:$0xff]
    %v9753 = vld [vmem:[%s7 + $0x838] sm:$0xff]
    %v9754 = vld [vmem:[%s7 + $0x840] sm:$0xff]
    %v9755 = vld [vmem:[%s7 + $0x848] sm:$0xff]
    %v9756 = vld [vmem:[%s7 + $0x850] sm:$0xff]
    %v9757 = vld [vmem:[%s7 + $0x858] sm:$0xff]
    %v9758 = vld [vmem:[%s7 + $0x860] sm:$0xff]
    %v9759 = vld [vmem:[%s7 + $0x868] sm:$0xff]
    %v9760 = vld [vmem:[%s7 + $0x870] sm:$0xff]
    %v9761 = vld [vmem:[%s7 + $0x878] sm:$0xff]
    %v9762 = vld [vmem:[%s7 + $0x880] sm:$0xff]
    %v9763 = vld [vmem:[%s7 + $0x888] sm:$0xff]
    %v9764 = vld [vmem:[%s7 + $0x890] sm:$0xff]
    %v9765 = vld [vmem:[%s7 + $0x898] sm:$0xff]
    %v9766 = vld [vmem:[%s7 + $0x8a0] sm:$0xff]
    %v9767 = vld [vmem:[%s7 + $0x8a8] sm:$0xff]
    %v9768 = vld [vmem:[%s7 + $0x8b0] sm:$0xff]
    %v9769 = vld [vmem:[%s7 + $0x8b8] sm:$0xff]
    %v9770 = vld [vmem:[%s7 + $0x8c0] sm:$0xff]
    %v9771 = vld [vmem:[%s7 + $0x8c8] sm:$0xff]
    %v9772 = vld [vmem:[%s7 + $0x8d0] sm:$0xff]
    %v9773 = vld [vmem:[%s7 + $0x8d8] sm:$0xff]
    %v9774 = vld [vmem:[%s7 + $0x8e0] sm:$0xff]
    %v9775 = vld [vmem:[%s7 + $0x8e8] sm:$0xff]
    %v9776 = vld [vmem:[%s7 + $0x8f0] sm:$0xff]
    %v9777 = vld [vmem:[%s7 + $0x8f8] sm:$0xff]
    %v9778 = vld [vmem:[%s7 + $0x900] sm:$0xff]
    %v9779 = vld [vmem:[%s7 + $0x908] sm:$0xff]
    %v9780 = vld [vmem:[%s7 + $0x910] sm:$0xff]
    %v9781 = vld [vmem:[%s7 + $0x918] sm:$0xff]
    %v9782 = vld [vmem:[%s7 + $0x920] sm:$0xff]
    %v9783 = vld [vmem:[%s7 + $0x928] sm:$0xff]
    %v9784 = vld [vmem:[%s7 + $0x930] sm:$0xff]
    %v9785 = vld [vmem:[%s7 + $0x938] sm:$0xff]
    %v9786 = vld [vmem:[%s7 + $0x940] sm:$0xff]
    %v9787 = vld [vmem:[%s7 + $0x948] sm:$0xff]
    %v9788 = vld [vmem:[%s7 + $0x950] sm:$0xff]
    %v9789 = vld [vmem:[%s7 + $0x958] sm:$0xff]
    %v9790 = vld [vmem:[%s7 + $0x960] sm:$0xff]
    %v9791 = vld [vmem:[%s7 + $0x968] sm:$0xff]
    %v9792 = vld [vmem:[%s7 + $0x970] sm:$0xff]
    %v9793 = vld [vmem:[%s7 + $0x978] sm:$0xff]
    %v9794 = vld [vmem:[%s7 + $0x980] sm:$0xff]
    %v9795 = vld [vmem:[%s7 + $0x988] sm:$0xff]
    %v9796 = vld [vmem:[%s7 + $0x990] sm:$0xff]
    %v9797 = vld [vmem:[%s7 + $0x998] sm:$0xff]
    %v9798 = vld [vmem:[%s7 + $0x9a0] sm:$0xff]
    %v9799 = vld [vmem:[%s7 + $0x9a8] sm:$0xff]
    %v9800 = vld [vmem:[%s7 + $0x9b0] sm:$0xff]
    %v9801 = vld [vmem:[%s7 + $0x9b8] sm:$0xff]
    %v9802 = vld [vmem:[%s7 + $0x9c0] sm:$0xff]
    %v9803 = vld [vmem:[%s7 + $0x9c8] sm:$0xff]
    %v9804 = vld [vmem:[%s7 + $0x9d0] sm:$0xff]
    %v9805 = vld [vmem:[%s7 + $0x9d8] sm:$0xff]
    %v9806 = vld [vmem:[%s7 + $0x9e0] sm:$0xff]
    %v9807 = vld [vmem:[%s7 + $0x9e8] sm:$0xff]
    %v9808 = vld [vmem:[%s7 + $0x9f0] sm:$0xff]
    %v9809 = vld [vmem:[%s7 + $0x9f8] sm:$0xff]
    %v9810 = vld [vmem:[%s7 + $0xa00] sm:$0xff]
    %v9811 = vld [vmem:[%s7 + $0xa08] sm:$0xff]
    %v9812 = vld [vmem:[%s7 + $0xa10] sm:$0xff]
    %v9813 = vld [vmem:[%s7 + $0xa18] sm:$0xff]
    %v9814 = vld [vmem:[%s7 + $0xa20] sm:$0xff]
    %v9815 = vld [vmem:[%s7 + $0xa28] sm:$0xff]
    %v9816 = vld [vmem:[%s7 + $0xa30] sm:$0xff]
    %v9817 = vld [vmem:[%s7 + $0xa38] sm:$0xff]
    %v9818 = vld [vmem:[%s7 + $0xa40] sm:$0xff]
    %v9819 = vld [vmem:[%s7 + $0xa48] sm:$0xff]
    %v9820 = vld [vmem:[%s7 + $0xa50] sm:$0xff]
    %v9821 = vld [vmem:[%s7 + $0xa58] sm:$0xff]
    %v9822 = vld [vmem:[%s7 + $0xa60] sm:$0xff]
    %v9823 = vld [vmem:[%s7 + $0xa68] sm:$0xff]
    %v9824 = vld [vmem:[%s7 + $0xa70] sm:$0xff]
    %v9825 = vld [vmem:[%s7 + $0xa78] sm:$0xff]
    %v9826 = vld [vmem:[%s7 + $0xa80] sm:$0xff]
    %v9827 = vld [vmem:[%s7 + $0xa88] sm:$0xff]
    %v9828 = vld [vmem:[%s7 + $0xa90] sm:$0xff]
    %v9829 = vld [vmem:[%s7 + $0xa98] sm:$0xff]
    %v9830 = vld [vmem:[%s7 + $0xaa0] sm:$0xff]
    %v9831 = vld [vmem:[%s7 + $0xaa8] sm:$0xff]
    %v9832 = vld [vmem:[%s7 + $0xab0] sm:$0xff]
    %v9833 = vld [vmem:[%s7 + $0xab8] sm:$0xff]
    %v9834 = vld [vmem:[%s7 + $0xac0] sm:$0xff]
    %v9835 = vld [vmem:[%s7 + $0xac8] sm:$0xff]
    %v9836 = vld [vmem:[%s7 + $0xad0] sm:$0xff]
    %v9837 = vld [vmem:[%s7 + $0xad8] sm:$0xff]
    %v9838 = vld [vmem:[%s7 + $0xae0] sm:$0xff]
    %v9839 = vld [vmem:[%s7 + $0xae8] sm:$0xff]
    %v9840 = vld [vmem:[%s7 + $0xaf0] sm:$0xff]
    %v9841 = vld [vmem:[%s7 + $0xaf8] sm:$0xff]
    %v9842 = vld [vmem:[%s7 + $0xb00] sm:$0xff]
    %v9843 = vld [vmem:[%s7 + $0xb08] sm:$0xff]
    %v9844 = vld [vmem:[%s7 + $0xb10] sm:$0xff]
    %v9845 = vld [vmem:[%s7 + $0xb18] sm:$0xff]
    %v9846 = vld [vmem:[%s7 + $0xb20] sm:$0xff]
    %v9847 = vld [vmem:[%s7 + $0xb28] sm:$0xff]
    %v9848 = vld [vmem:[%s7 + $0xb30] sm:$0xff]
    %v9849 = vld [vmem:[%s7 + $0xb38] sm:$0xff]
    %v9850 = vld [vmem:[%s7 + $0xb40] sm:$0xff]
    %v9851 = vld [vmem:[%s7 + $0xb48] sm:$0xff]
    %v9852 = vld [vmem:[%s7 + $0xb50] sm:$0xff]
    %v9853 = vld [vmem:[%s7 + $0xb58] sm:$0xff]
    %v9854 = vld [vmem:[%s7 + $0xb60] sm:$0xff]
    %v9855 = vld [vmem:[%s7 + $0xb68] sm:$0xff]
    %v9856 = vld [vmem:[%s7 + $0xb70] sm:$0xff]
    %v9857 = vld [vmem:[%s7 + $0xb78] sm:$0xff]
    %v9858 = vld [vmem:[%s7 + $0xb80] sm:$0xff]
    %v9859 = vld [vmem:[%s7 + $0xb88] sm:$0xff]
    %v9860 = vld [vmem:[%s7 + $0xb90] sm:$0xff]
    %v9861 = vld [vmem:[%s7 + $0xb98] sm:$0xff]
    %v9862 = vld [vmem:[%s7 + $0xba0] sm:$0xff]
    %v9863 = vld [vmem:[%s7 + $0xba8] sm:$0xff]
    %v9864 = vld [vmem:[%s7 + $0xbb0] sm:$0xff]
    %v9865 = vld [vmem:[%s7 + $0xbb8] sm:$0xff]
    %v9866 = vld [vmem:[%s7 + $0xbc0] sm:$0xff]
    %v9867 = vld [vmem:[%s7 + $0xbc8] sm:$0xff]
    %v9868 = vld [vmem:[%s7 + $0xbd0] sm:$0xff]
    %v9869 = vld [vmem:[%s7 + $0xbd8] sm:$0xff]
    %v9870 = vld [vmem:[%s7 + $0xbe0] sm:$0xff]
    %v9871 = vld [vmem:[%s7 + $0xbe8] sm:$0xff]
    %v9872 = vld [vmem:[%s7 + $0xbf0] sm:$0xff]
    %v9873 = vld [vmem:[%s7 + $0xbf8] sm:$0xff]
    %v9874 = vld [vmem:[%s7 + $0xc00] sm:$0xff]
    %v9875 = vld [vmem:[%s7 + $0xc08] sm:$0xff]
    %v9876 = vld [vmem:[%s7 + $0xc10] sm:$0xff]
    %v9877 = vld [vmem:[%s7 + $0xc18] sm:$0xff]
    %v9878 = vld [vmem:[%s7 + $0xc20] sm:$0xff]
    %v9879 = vld [vmem:[%s7 + $0xc28] sm:$0xff]
    %v9880 = vld [vmem:[%s7 + $0xc30] sm:$0xff]
    %v9881 = vld [vmem:[%s7 + $0xc38] sm:$0xff]
    %v9882 = vld [vmem:[%s7 + $0xc40] sm:$0xff]
    %v9883 = vld [vmem:[%s7 + $0xc48] sm:$0xff]
    %v9884 = vld [vmem:[%s7 + $0xc50] sm:$0xff]
    %v9885 = vld [vmem:[%s7 + $0xc58] sm:$0xff]
    %v9886 = vld [vmem:[%s7 + $0xc60] sm:$0xff]
    %v9887 = vld [vmem:[%s7 + $0xc68] sm:$0xff]
    %v9888 = vld [vmem:[%s7 + $0xc70] sm:$0xff]
    %v9889 = vld [vmem:[%s7 + $0xc78] sm:$0xff]
    %v9890 = vld [vmem:[%s7 + $0xc80] sm:$0xff]
    %v9891 = vld [vmem:[%s7 + $0xc88] sm:$0xff]
    %v9892 = vld [vmem:[%s7 + $0xc90] sm:$0xff]
    %v9893 = vld [vmem:[%s7 + $0xc98] sm:$0xff]
    %v9894 = vld [vmem:[%s7 + $0xca0] sm:$0xff]
    %v9895 = vld [vmem:[%s7 + $0xca8] sm:$0xff]
    %v9896 = vld [vmem:[%s7 + $0xcb0] sm:$0xff]
    %v9897 = vld [vmem:[%s7 + $0xcb8] sm:$0xff]
    %v9898 = vld [vmem:[%s7 + $0xcc0] sm:$0xff]
    %v9899 = vld [vmem:[%s7 + $0xcc8] sm:$0xff]
    %v9900 = vld [vmem:[%s7 + $0xcd0] sm:$0xff]
    %v9901 = vld [vmem:[%s7 + $0xcd8] sm:$0xff]
    %v9902 = vld [vmem:[%s7 + $0xce0] sm:$0xff]
    %v9903 = vld [vmem:[%s7 + $0xce8] sm:$0xff]
    %v9904 = vld [vmem:[%s7 + $0xcf0] sm:$0xff]
    %v9905 = vld [vmem:[%s7 + $0xcf8] sm:$0xff]
    %v9906 = vld [vmem:[%s7 + $0xd00] sm:$0xff]
    %v9907 = vld [vmem:[%s7 + $0xd08] sm:$0xff]
    %v9908 = vld [vmem:[%s7 + $0xd10] sm:$0xff]
    %v9909 = vld [vmem:[%s7 + $0xd18] sm:$0xff]
    %v9910 = vld [vmem:[%s7 + $0xd20] sm:$0xff]
    %v9911 = vld [vmem:[%s7 + $0xd28] sm:$0xff]
    %v9912 = vld [vmem:[%s7 + $0xd30] sm:$0xff]
    %v9913 = vld [vmem:[%s7 + $0xd38] sm:$0xff]
    %v9914 = vld [vmem:[%s7 + $0xd40] sm:$0xff]
    %v9915 = vld [vmem:[%s7 + $0xd48] sm:$0xff]
    %v9916 = vld [vmem:[%s7 + $0xd50] sm:$0xff]
    %v9917 = vld [vmem:[%s7 + $0xd58] sm:$0xff]
    %v9918 = vld [vmem:[%s7 + $0xd60] sm:$0xff]
    %v9919 = vld [vmem:[%s7 + $0xd68] sm:$0xff]
    %v9920 = vld [vmem:[%s7 + $0xd70] sm:$0xff]
    %v9921 = vld [vmem:[%s7 + $0xd78] sm:$0xff]
    %v9922 = vld [vmem:[%s7 + $0xd80] sm:$0xff]
    %v9923 = vld [vmem:[%s7 + $0xd88] sm:$0xff]
    %v9924 = vld [vmem:[%s7 + $0xd90] sm:$0xff]
    %v9925 = vld [vmem:[%s7 + $0xd98] sm:$0xff]
    %v9926 = vld [vmem:[%s7 + $0xda0] sm:$0xff]
    %v9927 = vld [vmem:[%s7 + $0xda8] sm:$0xff]
    %v9928 = vld [vmem:[%s7 + $0xdb0] sm:$0xff]
    %v9929 = vld [vmem:[%s7 + $0xdb8] sm:$0xff]
    %v9930 = vld [vmem:[%s7 + $0xdc0] sm:$0xff]
    %v9931 = vld [vmem:[%s7 + $0xdc8] sm:$0xff]
    %v9932 = vld [vmem:[%s7 + $0xdd0] sm:$0xff]
    %v9933 = vld [vmem:[%s7 + $0xdd8] sm:$0xff]
    %v9934 = vld [vmem:[%s7 + $0xde0] sm:$0xff]
    %v9935 = vld [vmem:[%s7 + $0xde8] sm:$0xff]
    %v9936 = vld [vmem:[%s7 + $0xdf0] sm:$0xff]
    %v9937 = vld [vmem:[%s7 + $0xdf8] sm:$0xff]
    %v9938 = vld [vmem:[%s7 + $0xe00] sm:$0xff]
    %v9939 = vld [vmem:[%s7 + $0xe08] sm:$0xff]
    %v9940 = vld [vmem:[%s7 + $0xe10] sm:$0xff]
    %v9941 = vld [vmem:[%s7 + $0xe18] sm:$0xff]
    %v9942 = vld [vmem:[%s7 + $0xe20] sm:$0xff]
    %v9943 = vld [vmem:[%s7 + $0xe28] sm:$0xff]
    %v9944 = vld [vmem:[%s7 + $0xe30] sm:$0xff]
    %v9945 = vld [vmem:[%s7 + $0xe38] sm:$0xff]
    %v9946 = vld [vmem:[%s7 + $0xe40] sm:$0xff]
    %v9947 = vld [vmem:[%s7 + $0xe48] sm:$0xff]
    %v9948 = vld [vmem:[%s7 + $0xe50] sm:$0xff]
    %v9949 = vld [vmem:[%s7 + $0xe58] sm:$0xff]
    %v9950 = vld [vmem:[%s7 + $0xe60] sm:$0xff]
    %v9951 = vld [vmem:[%s7 + $0xe68] sm:$0xff]
    %v9952 = vld [vmem:[%s7 + $0xe70] sm:$0xff]
    %v9953 = vld [vmem:[%s7 + $0xe78] sm:$0xff]
    %v9954 = vld [vmem:[%s7 + $0xe80] sm:$0xff]
    %v9955 = vld [vmem:[%s7 + $0xe88] sm:$0xff]
    %v9956 = vld [vmem:[%s7 + $0xe90] sm:$0xff]
    %v9957 = vld [vmem:[%s7 + $0xe98] sm:$0xff]
    %v9958 = vld [vmem:[%s7 + $0xea0] sm:$0xff]
    %v9959 = vld [vmem:[%s7 + $0xea8] sm:$0xff]
    %v9960 = vld [vmem:[%s7 + $0xeb0] sm:$0xff]
    %v9961 = vld [vmem:[%s7 + $0xeb8] sm:$0xff]
    %v9962 = vld [vmem:[%s7 + $0xec0] sm:$0xff]
    %v9963 = vld [vmem:[%s7 + $0xec8] sm:$0xff]
    %v9964 = vld [vmem:[%s7 + $0xed0] sm:$0xff]
    %v9965 = vld [vmem:[%s7 + $0xed8] sm:$0xff]
    %v9966 = vld [vmem:[%s7 + $0xee0] sm:$0xff]
    %v9967 = vld [vmem:[%s7 + $0xee8] sm:$0xff]
    %v9968 = vld [vmem:[%s7 + $0xef0] sm:$0xff]
    %v9969 = vld [vmem:[%s7 + $0xef8] sm:$0xff]
    %v9970 = vld [vmem:[%s7 + $0xf00] sm:$0xff]
    %v9971 = vld [vmem:[%s7 + $0xf08] sm:$0xff]
    %v9972 = vld [vmem:[%s7 + $0xf10] sm:$0xff]
    %v9973 = vld [vmem:[%s7 + $0xf18] sm:$0xff]
    %v9974 = vld [vmem:[%s7 + $0xf20] sm:$0xff]
    %v9975 = vld [vmem:[%s7 + $0xf28] sm:$0xff]
    %v9976 = vld [vmem:[%s7 + $0xf30] sm:$0xff]
    %v9977 = vld [vmem:[%s7 + $0xf38] sm:$0xff]
    %v9978 = vld [vmem:[%s7 + $0xf40] sm:$0xff]
    %v9979 = vld [vmem:[%s7 + $0xf48] sm:$0xff]
    %v9980 = vld [vmem:[%s7 + $0xf50] sm:$0xff]
    %v9981 = vld [vmem:[%s7 + $0xf58] sm:$0xff]
    %v9982 = vld [vmem:[%s7 + $0xf60] sm:$0xff]
    %v9983 = vld [vmem:[%s7 + $0xf68] sm:$0xff]
    %v9984 = vld [vmem:[%s7 + $0xf70] sm:$0xff]
    %v9985 = vld [vmem:[%s7 + $0xf78] sm:$0xff]
    %v9986 = vld [vmem:[%s7 + $0xf80] sm:$0xff]
    %v9987 = vld [vmem:[%s7 + $0xf88] sm:$0xff]
    %v9988 = vld [vmem:[%s7 + $0xf90] sm:$0xff]
    %v9989 = vld [vmem:[%s7 + $0xf98] sm:$0xff]
    %v9990 = vld [vmem:[%s7 + $0xfa0] sm:$0xff]
    %v9991 = vld [vmem:[%s7 + $0xfa8] sm:$0xff]
    %v9992 = vld [vmem:[%s7 + $0xfb0] sm:$0xff]
    %v9993 = vld [vmem:[%s7 + $0xfb8] sm:$0xff]
    %v9994 = vld [vmem:[%s7 + $0xfc0] sm:$0xff]
    %v9995 = vld [vmem:[%s7 + $0xfc8] sm:$0xff]
    %v9996 = vld [vmem:[%s7 + $0xfd0] sm:$0xff]
    %v9997 = vld [vmem:[%s7 + $0xfd8] sm:$0xff]
    %v9998 = vld [vmem:[%s7 + $0xfe0] sm:$0xff]
    %v9999 = vld [vmem:[%s7 + $0xfe8] sm:$0xff]
    %v10000 = vld [vmem:[%s7 + $0xff0] sm:$0xff]
    %v10001 = vld [vmem:[%s7 + $0xff8] sm:$0xff]
    %v10002 = vld [vmem:[%s8] sm:$0xf]
    %v10004 = vlaneseq
    %v10005 = vshrl.u32 %v10004, 7
    %v10006 = vsub.s32 0, %v10005
    %v10007 = vrot.slane %v10002, %v10006
    %v10008 = vlaneseq
    %v10009 = vshrl.u32 %v10008, 7
    %v10010 = vsub.s32 1, %v10009
    %v10011 = vrot.slane %v10002, %v10010
    %v10012 = vlaneseq
    %v10013 = vshrl.u32 %v10012, 7
    %v10014 = vsub.s32 2, %v10013
    %v10015 = vrot.slane %v10002, %v10014
    %v10016 = vlaneseq
    %v10017 = vshrl.u32 %v10016, 7
    %v10018 = vsub.s32 3, %v10017
    %v10019 = vrot.slane %v10002, %v10018
    %v10026 = vcombine.high %v9488, %v9488
    %v10028 = vunpack.c.l.s4 1983009808
    %v10029 = vunpack.c.0.s8 %v10028
    %v10030 = vlaneseq
    %v10031 = vshrl.u32 %v10030, 7
    %v10032 = vsub.s32 %v10029, %v10031
    %v10033 = vrot.slane %v9488, %v10032
    %v10035 = vunpack.c.l.s4 1983009808
    %v10036 = vunpack.c.0.s8 %v10035
    %v10037 = vlaneseq
    %v10038 = vshrl.u32 %v10037, 7
    %v10039 = vsub.s32 %v10036, %v10038
    %v10040 = vrot.slane %v10026, %v10039
    %v10041 = vcombine.high %v10033, %v10033
    %v10042 = vcombine.high %v10040, %v10040
    %v10043 = vcombine.high %v9489, %v9489
    %v10045 = vunpack.c.l.s4 1983009808
    %v10046 = vunpack.c.0.s8 %v10045
    %v10047 = vlaneseq
    %v10048 = vshrl.u32 %v10047, 7
    %v10049 = vsub.s32 %v10046, %v10048
    %v10050 = vrot.slane %v9489, %v10049
    %v10052 = vunpack.c.l.s4 1983009808
    %v10053 = vunpack.c.0.s8 %v10052
    %v10054 = vlaneseq
    %v10055 = vshrl.u32 %v10054, 7
    %v10056 = vsub.s32 %v10053, %v10055
    %v10057 = vrot.slane %v10043, %v10056
    %v10058 = vcombine.high %v10050, %v10050
    %v10059 = vcombine.high %v10057, %v10057
    %10068 = vmatprep.subr.mxu0 %v9491
    %10069 = vmatpush1.msra.mxu0 %v9490
    %10070 = vmatprep.subr.mxu0 %v9495
    %10071 = vmatpush1.msra.mxu0 %v9494
    %10072 = vmatprep.subr.mxu0 %v9499
    %10073 = vmatpush1.msra.mxu0 %v9498
    %10074 = vmatprep.subr.mxu0 %v9503
    %10075 = vmatpush1.msra.mxu0 %v9502
    %10076 = vmatprep.subr.mxu0 %v9507
    %10077 = vmatpush1.msra.mxu0 %v9506
    %10078 = vmatprep.subr.mxu0 %v9511
    %10079 = vmatpush1.msra.mxu0 %v9510
    %10080 = vmatprep.subr.mxu0 %v9515
    %10081 = vmatpush1.msra.mxu0 %v9514
    %10082 = vmatprep.subr.mxu0 %v9519
    %10083 = vmatpush1.msra.mxu0 %v9518
    %10084 = vmatprep.subr.mxu0 %v9523
    %10085 = vmatpush1.msra.mxu0 %v9522
    %10086 = vmatprep.subr.mxu0 %v9527
    %10087 = vmatpush1.msra.mxu0 %v9526
    %10088 = vmatprep.subr.mxu0 %v9531
    %10089 = vmatpush1.msra.mxu0 %v9530
    %10090 = vmatprep.subr.mxu0 %v9535
    %10091 = vmatpush1.msra.mxu0 %v9534
    %10092 = vmatprep.subr.mxu0 %v9539
    %10093 = vmatpush1.msra.mxu0 %v9538
    %10094 = vmatprep.subr.mxu0 %v9543
    %10095 = vmatpush1.msra.mxu0 %v9542
    %10096 = vmatprep.subr.mxu0 %v9547
    %10097 = vmatpush1.msra.mxu0 %v9546
    %10098 = vmatprep.subr.mxu0 %v9551
    %10099 = vmatpush1.msra.mxu0 %v9550
    %10100 = vmatprep.subr.mxu0 %v9555
    %10101 = vmatpush1.msra.mxu0 %v9554
    %10102 = vmatprep.subr.mxu0 %v9559
    %10103 = vmatpush1.msra.mxu0 %v9558
    %10104 = vmatprep.subr.mxu0 %v9563
    %10105 = vmatpush1.msra.mxu0 %v9562
    %10106 = vmatprep.subr.mxu0 %v9567
    %10107 = vmatpush1.msra.mxu0 %v9566
    %10108 = vmatprep.subr.mxu0 %v9571
    %10109 = vmatpush1.msra.mxu0 %v9570
    %10110 = vmatprep.subr.mxu0 %v9575
    %10111 = vmatpush1.msra.mxu0 %v9574
    %10112 = vmatprep.subr.mxu0 %v9579
    %10113 = vmatpush1.msra.mxu0 %v9578
    %10114 = vmatprep.subr.mxu0 %v9583
    %10115 = vmatpush1.msra.mxu0 %v9582
    %10116 = vmatprep.subr.mxu0 %v9587
    %10117 = vmatpush1.msra.mxu0 %v9586
    %10118 = vmatprep.subr.mxu0 %v9591
    %10119 = vmatpush1.msra.mxu0 %v9590
    %10120 = vmatprep.subr.mxu0 %v9595
    %10121 = vmatpush1.msra.mxu0 %v9594
    %10122 = vmatprep.subr.mxu0 %v9599
    %10123 = vmatpush1.msra.mxu0 %v9598
    %10124 = vmatprep.subr.mxu0 %v9603
    %10125 = vmatpush1.msra.mxu0 %v9602
    %10126 = vmatprep.subr.mxu0 %v9607
    %10127 = vmatpush1.msra.mxu0 %v9606
    %10128 = vmatprep.subr.mxu0 %v9611
    %10129 = vmatpush1.msra.mxu0 %v9610
    %10130 = vmatprep.subr.mxu0 %v9615
    %10131 = vmatpush1.msra.mxu0 %v9614
    %10132 = vmatprep.mubr.f32.mxu0 %v10041
    %10133 = vmatmul.mubr.f32.gmra.mrb[0].mxu0 %v10033
    %v10134 = vpop.f32.mrb[0].mxu0
    %v10135 = vadd.f32 %v10007, %v10134
    %v10136 = vpop.f32.mrb[0].mxu0
    %v10137 = vadd.f32 %v10011, %v10136
    %10138 = vdwg.mxu0
    %10139 = vmatprep.subr.mxu0 %v9619
    %10140 = vmatpush1.msra.mxu0 %v9618
    %10141 = vmatprep.subr.mxu0 %v9623
    %10142 = vmatpush1.msra.mxu0 %v9622
    %10143 = vmatprep.subr.mxu0 %v9627
    %10144 = vmatpush1.msra.mxu0 %v9626
    %10145 = vmatprep.subr.mxu0 %v9631
    %10146 = vmatpush1.msra.mxu0 %v9630
    %10147 = vmatprep.subr.mxu0 %v9635
    %10148 = vmatpush1.msra.mxu0 %v9634
    %10149 = vmatprep.subr.mxu0 %v9639
    %10150 = vmatpush1.msra.mxu0 %v9638
    %10151 = vmatprep.subr.mxu0 %v9643
    %10152 = vmatpush1.msra.mxu0 %v9642
    %10153 = vmatprep.subr.mxu0 %v9647
    %10154 = vmatpush1.msra.mxu0 %v9646
    %10155 = vmatprep.subr.mxu0 %v9651
    %10156 = vmatpush1.msra.mxu0 %v9650
    %10157 = vmatprep.subr.mxu0 %v9655
    %10158 = vmatpush1.msra.mxu0 %v9654
    %10159 = vmatprep.subr.mxu0 %v9659
    %10160 = vmatpush1.msra.mxu0 %v9658
    %10161 = vmatprep.subr.mxu0 %v9663
    %10162 = vmatpush1.msra.mxu0 %v9662
    %10163 = vmatprep.subr.mxu0 %v9667
    %10164 = vmatpush1.msra.mxu0 %v9666
    %10165 = vmatprep.subr.mxu0 %v9671
    %10166 = vmatpush1.msra.mxu0 %v9670
    %10167 = vmatprep.subr.mxu0 %v9675
    %10168 = vmatpush1.msra.mxu0 %v9674
    %10169 = vmatprep.subr.mxu0 %v9679
    %10170 = vmatpush1.msra.mxu0 %v9678
    %10171 = vmatprep.subr.mxu0 %v9683
    %10172 = vmatpush1.msra.mxu0 %v9682
    %10173 = vmatprep.subr.mxu0 %v9687
    %10174 = vmatpush1.msra.mxu0 %v9686
    %10175 = vmatprep.subr.mxu0 %v9691
    %10176 = vmatpush1.msra.mxu0 %v9690
    %10177 = vmatprep.subr.mxu0 %v9695
    %10178 = vmatpush1.msra.mxu0 %v9694
    %10179 = vmatprep.subr.mxu0 %v9699
    %10180 = vmatpush1.msra.mxu0 %v9698
    %10181 = vmatprep.subr.mxu0 %v9703
    %10182 = vmatpush1.msra.mxu0 %v9702
    %10183 = vmatprep.subr.mxu0 %v9707
    %10184 = vmatpush1.msra.mxu0 %v9706
    %10185 = vmatprep.subr.mxu0 %v9711
    %10186 = vmatpush1.msra.mxu0 %v9710
    %10187 = vmatprep.subr.mxu0 %v9715
    %10188 = vmatpush1.msra.mxu0 %v9714
    %10189 = vmatprep.subr.mxu0 %v9719
    %10190 = vmatpush1.msra.mxu0 %v9718
    %10191 = vmatprep.subr.mxu0 %v9723
    %10192 = vmatpush1.msra.mxu0 %v9722
    %10193 = vmatprep.subr.mxu0 %v9727
    %10194 = vmatpush1.msra.mxu0 %v9726
    %10195 = vmatprep.subr.mxu0 %v9731
    %10196 = vmatpush1.msra.mxu0 %v9730
    %10197 = vmatprep.subr.mxu0 %v9735
    %10198 = vmatpush1.msra.mxu0 %v9734
    %10199 = vmatprep.subr.mxu0 %v9739
    %10200 = vmatpush1.msra.mxu0 %v9738
    %10201 = vmatprep.subr.mxu0 %v9743
    %10202 = vmatpush1.msra.mxu0 %v9742
    %10203 = vmatprep.mubr.f32.mxu0 %v10042
    %10204 = vmatmul.mubr.f32.gmra.mrb[0].mxu0 %v10040
    %v10205 = vpop.f32.mrb[0].mxu0
    %v10206 = vadd.f32 %v10135, %v10205
    %v10207 = vpop.f32.mrb[0].mxu0
    %v10208 = vadd.f32 %v10137, %v10207
    %10209 = vdwg.mxu0
    %10210 = vmatprep.subr.mxu0 %v9747
    %10211 = vmatpush1.msra.mxu0 %v9746
    %10212 = vmatprep.subr.mxu0 %v9751
    %10213 = vmatpush1.msra.mxu0 %v9750
    %10214 = vmatprep.subr.mxu0 %v9755
    %10215 = vmatpush1.msra.mxu0 %v9754
    %10216 = vmatprep.subr.mxu0 %v9759
    %10217 = vmatpush1.msra.mxu0 %v9758
    %10218 = vmatprep.subr.mxu0 %v9763
    %10219 = vmatpush1.msra.mxu0 %v9762
    %10220 = vmatprep.subr.mxu0 %v9767
    %10221 = vmatpush1.msra.mxu0 %v9766
    %10222 = vmatprep.subr.mxu0 %v9771
    %10223 = vmatpush1.msra.mxu0 %v9770
    %10224 = vmatprep.subr.mxu0 %v9775
    %10225 = vmatpush1.msra.mxu0 %v9774
    %10226 = vmatprep.subr.mxu0 %v9779
    %10227 = vmatpush1.msra.mxu0 %v9778
    %10228 = vmatprep.subr.mxu0 %v9783
    %10229 = vmatpush1.msra.mxu0 %v9782
    %10230 = vmatprep.subr.mxu0 %v9787
    %10231 = vmatpush1.msra.mxu0 %v9786
    %10232 = vmatprep.subr.mxu0 %v9791
    %10233 = vmatpush1.msra.mxu0 %v9790
    %10234 = vmatprep.subr.mxu0 %v9795
    %10235 = vmatpush1.msra.mxu0 %v9794
    %10236 = vmatprep.subr.mxu0 %v9799
    %10237 = vmatpush1.msra.mxu0 %v9798
    %10238 = vmatprep.subr.mxu0 %v9803
    %10239 = vmatpush1.msra.mxu0 %v9802
    %10240 = vmatprep.subr.mxu0 %v9807
    %10241 = vmatpush1.msra.mxu0 %v9806
    %10242 = vmatprep.subr.mxu0 %v9811
    %10243 = vmatpush1.msra.mxu0 %v9810
    %10244 = vmatprep.subr.mxu0 %v9815
    %10245 = vmatpush1.msra.mxu0 %v9814
    %10246 = vmatprep.subr.mxu0 %v9819
    %10247 = vmatpush1.msra.mxu0 %v9818
    %10248 = vmatprep.subr.mxu0 %v9823
    %10249 = vmatpush1.msra.mxu0 %v9822
    %10250 = vmatprep.subr.mxu0 %v9827
    %10251 = vmatpush1.msra.mxu0 %v9826
    %10252 = vmatprep.subr.mxu0 %v9831
    %10253 = vmatpush1.msra.mxu0 %v9830
    %10254 = vmatprep.subr.mxu0 %v9835
    %10255 = vmatpush1.msra.mxu0 %v9834
    %10256 = vmatprep.subr.mxu0 %v9839
    %10257 = vmatpush1.msra.mxu0 %v9838
    %10258 = vmatprep.subr.mxu0 %v9843
    %10259 = vmatpush1.msra.mxu0 %v9842
    %10260 = vmatprep.subr.mxu0 %v9847
    %10261 = vmatpush1.msra.mxu0 %v9846
    %10262 = vmatprep.subr.mxu0 %v9851
    %10263 = vmatpush1.msra.mxu0 %v9850
    %10264 = vmatprep.subr.mxu0 %v9855
    %10265 = vmatpush1.msra.mxu0 %v9854
    %10266 = vmatprep.subr.mxu0 %v9859
    %10267 = vmatpush1.msra.mxu0 %v9858
    %10268 = vmatprep.subr.mxu0 %v9863
    %10269 = vmatpush1.msra.mxu0 %v9862
    %10270 = vmatprep.subr.mxu0 %v9867
    %10271 = vmatpush1.msra.mxu0 %v9866
    %10272 = vmatprep.subr.mxu0 %v9871
    %10273 = vmatpush1.msra.mxu0 %v9870
    %10274 = vmatprep.mubr.f32.mxu0 %v10058
    %10275 = vmatmul.mubr.f32.gmra.mrb[0].mxu0 %v10050
    %v10276 = vpop.f32.mrb[0].mxu0
    %v10277 = vadd.f32 %v10206, %v10276
    %v10278 = vpop.f32.mrb[0].mxu0
    %v10279 = vadd.f32 %v10208, %v10278
    %10280 = vdwg.mxu0
    %10281 = vmatprep.subr.mxu0 %v9875
    %10282 = vmatpush1.msra.mxu0 %v9874
    %10283 = vmatprep.subr.mxu0 %v9879
    %10284 = vmatpush1.msra.mxu0 %v9878
    %10285 = vmatprep.subr.mxu0 %v9883
    %10286 = vmatpush1.msra.mxu0 %v9882
    %10287 = vmatprep.subr.mxu0 %v9887
    %10288 = vmatpush1.msra.mxu0 %v9886
    %10289 = vmatprep.subr.mxu0 %v9891
    %10290 = vmatpush1.msra.mxu0 %v9890
    %10291 = vmatprep.subr.mxu0 %v9895
    %10292 = vmatpush1.msra.mxu0 %v9894
    %10293 = vmatprep.subr.mxu0 %v9899
    %10294 = vmatpush1.msra.mxu0 %v9898
    %10295 = vmatprep.subr.mxu0 %v9903
    %10296 = vmatpush1.msra.mxu0 %v9902
    %10297 = vmatprep.subr.mxu0 %v9907
    %10298 = vmatpush1.msra.mxu0 %v9906
    %10299 = vmatprep.subr.mxu0 %v9911
    %10300 = vmatpush1.msra.mxu0 %v9910
    %10301 = vmatprep.subr.mxu0 %v9915
    %10302 = vmatpush1.msra.mxu0 %v9914
    %10303 = vmatprep.subr.mxu0 %v9919
    %10304 = vmatpush1.msra.mxu0 %v9918
    %10305 = vmatprep.subr.mxu0 %v9923
    %10306 = vmatpush1.msra.mxu0 %v9922
    %10307 = vmatprep.subr.mxu0 %v9927
    %10308 = vmatpush1.msra.mxu0 %v9926
    %10309 = vmatprep.subr.mxu0 %v9931
    %10310 = vmatpush1.msra.mxu0 %v9930
    %10311 = vmatprep.subr.mxu0 %v9935
    %10312 = vmatpush1.msra.mxu0 %v9934
    %10313 = vmatprep.subr.mxu0 %v9939
    %10314 = vmatpush1.msra.mxu0 %v9938
    %10315 = vmatprep.subr.mxu0 %v9943
    %10316 = vmatpush1.msra.mxu0 %v9942
    %10317 = vmatprep.subr.mxu0 %v9947
    %10318 = vmatpush1.msra.mxu0 %v9946
    %10319 = vmatprep.subr.mxu0 %v9951
    %10320 = vmatpush1.msra.mxu0 %v9950
    %10321 = vmatprep.subr.mxu0 %v9955
    %10322 = vmatpush1.msra.mxu0 %v9954
    %10323 = vmatprep.subr.mxu0 %v9959
    %10324 = vmatpush1.msra.mxu0 %v9958
    %10325 = vmatprep.subr.mxu0 %v9963
    %10326 = vmatpush1.msra.mxu0 %v9962
    %10327 = vmatprep.subr.mxu0 %v9967
    %10328 = vmatpush1.msra.mxu0 %v9966
    %10329 = vmatprep.subr.mxu0 %v9971
    %10330 = vmatpush1.msra.mxu0 %v9970
    %10331 = vmatprep.subr.mxu0 %v9975
    %10332 = vmatpush1.msra.mxu0 %v9974
    %10333 = vmatprep.subr.mxu0 %v9979
    %10334 = vmatpush1.msra.mxu0 %v9978
    %10335 = vmatprep.subr.mxu0 %v9983
    %10336 = vmatpush1.msra.mxu0 %v9982
    %10337 = vmatprep.subr.mxu0 %v9987
    %10338 = vmatpush1.msra.mxu0 %v9986
    %10339 = vmatprep.subr.mxu0 %v9991
    %10340 = vmatpush1.msra.mxu0 %v9990
    %10341 = vmatprep.subr.mxu0 %v9995
    %10342 = vmatpush1.msra.mxu0 %v9994
    %10343 = vmatprep.subr.mxu0 %v9999
    %10344 = vmatpush1.msra.mxu0 %v9998
    %10345 = vmatprep.mubr.f32.mxu0 %v10059
    %10346 = vmatmul.mubr.f32.gmra.mrb[0].mxu0 %v10057
    %v10347 = vpop.f32.mrb[0].mxu0
    %v10348 = vadd.f32 %v10277, %v10347
    %v10349 = vpop.f32.mrb[0].mxu0
    %v10350 = vadd.f32 %v10279, %v10349
    %10351 = vdwg.mxu0
    %10352 = vmatprep.subr.mxu0 %v9493
    %10353 = vmatpush1.msra.mxu0 %v9492
    %10354 = vmatprep.subr.mxu0 %v9497
    %10355 = vmatpush1.msra.mxu0 %v9496
    %10356 = vmatprep.subr.mxu0 %v9501
    %10357 = vmatpush1.msra.mxu0 %v9500
    %10358 = vmatprep.subr.mxu0 %v9505
    %10359 = vmatpush1.msra.mxu0 %v9504
    %10360 = vmatprep.subr.mxu0 %v9509
    %10361 = vmatpush1.msra.mxu0 %v9508
    %10362 = vmatprep.subr.mxu0 %v9513
    %10363 = vmatpush1.msra.mxu0 %v9512
    %10364 = vmatprep.subr.mxu0 %v9517
    %10365 = vmatpush1.msra.mxu0 %v9516
    %10366 = vmatprep.subr.mxu0 %v9521
    %10367 = vmatpush1.msra.mxu0 %v9520
    %10368 = vmatprep.subr.mxu0 %v9525
    %10369 = vmatpush1.msra.mxu0 %v9524
    %10370 = vmatprep.subr.mxu0 %v9529
    %10371 = vmatpush1.msra.mxu0 %v9528
    %10372 = vmatprep.subr.mxu0 %v9533
    %10373 = vmatpush1.msra.mxu0 %v9532
    %10374 = vmatprep.subr.mxu0 %v9537
    %10375 = vmatpush1.msra.mxu0 %v9536
    %10376 = vmatprep.subr.mxu0 %v9541
    %10377 = vmatpush1.msra.mxu0 %v9540
    %10378 = vmatprep.subr.mxu0 %v9545
    %10379 = vmatpush1.msra.mxu0 %v9544
    %10380 = vmatprep.subr.mxu0 %v9549
    %10381 = vmatpush1.msra.mxu0 %v9548
    %10382 = vmatprep.subr.mxu0 %v9553
    %10383 = vmatpush1.msra.mxu0 %v9552
    %10384 = vmatprep.subr.mxu0 %v9557
    %10385 = vmatpush1.msra.mxu0 %v9556
    %10386 = vmatprep.subr.mxu0 %v9561
    %10387 = vmatpush1.msra.mxu0 %v9560
    %10388 = vmatprep.subr.mxu0 %v9565
    %10389 = vmatpush1.msra.mxu0 %v9564
    %10390 = vmatprep.subr.mxu0 %v9569
    %10391 = vmatpush1.msra.mxu0 %v9568
    %10392 = vmatprep.subr.mxu0 %v9573
    %10393 = vmatpush1.msra.mxu0 %v9572
    %10394 = vmatprep.subr.mxu0 %v9577
    %10395 = vmatpush1.msra.mxu0 %v9576
    %10396 = vmatprep.subr.mxu0 %v9581
    %10397 = vmatpush1.msra.mxu0 %v9580
    %10398 = vmatprep.subr.mxu0 %v9585
    %10399 = vmatpush1.msra.mxu0 %v9584
    %10400 = vmatprep.subr.mxu0 %v9589
    %10401 = vmatpush1.msra.mxu0 %v9588
    %10402 = vmatprep.subr.mxu0 %v9593
    %10403 = vmatpush1.msra.mxu0 %v9592
    %10404 = vmatprep.subr.mxu0 %v9597
    %10405 = vmatpush1.msra.mxu0 %v9596
    %10406 = vmatprep.subr.mxu0 %v9601
    %10407 = vmatpush1.msra.mxu0 %v9600
    %10408 = vmatprep.subr.mxu0 %v9605
    %10409 = vmatpush1.msra.mxu0 %v9604
    %10410 = vmatprep.subr.mxu0 %v9609
    %10411 = vmatpush1.msra.mxu0 %v9608
    %10412 = vmatprep.subr.mxu0 %v9613
    %10413 = vmatpush1.msra.mxu0 %v9612
    %10414 = vmatprep.subr.mxu0 %v9617
    %10415 = vmatpush1.msra.mxu0 %v9616
    %10416 = vmatprep.mubr.f32.mxu0 %v10041
    %10417 = vmatmul.mubr.f32.gmra.mrb[0].mxu0 %v10033
    %v10418 = vpop.f32.mrb[0].mxu0
    %v10419 = vadd.f32 %v10015, %v10418
    %v10420 = vpop.f32.mrb[0].mxu0
    %v10421 = vadd.f32 %v10019, %v10420
    %10422 = vdwg.mxu0
    %10423 = vmatprep.subr.mxu0 %v9621
    %10424 = vmatpush1.msra.mxu0 %v9620
    %10425 = vmatprep.subr.mxu0 %v9625
    %10426 = vmatpush1.msra.mxu0 %v9624
    %10427 = vmatprep.subr.mxu0 %v9629
    %10428 = vmatpush1.msra.mxu0 %v9628
    %10429 = vmatprep.subr.mxu0 %v9633
    %10430 = vmatpush1.msra.mxu0 %v9632
    %10431 = vmatprep.subr.mxu0 %v9637
    %10432 = vmatpush1.msra.mxu0 %v9636
    %10433 = vmatprep.subr.mxu0 %v9641
    %10434 = vmatpush1.msra.mxu0 %v9640
    %10435 = vmatprep.subr.mxu0 %v9645
    %10436 = vmatpush1.msra.mxu0 %v9644
    %10437 = vmatprep.subr.mxu0 %v9649
    %10438 = vmatpush1.msra.mxu0 %v9648
    %10439 = vmatprep.subr.mxu0 %v9653
    %10440 = vmatpush1.msra.mxu0 %v9652
    %10441 = vmatprep.subr.mxu0 %v9657
    %10442 = vmatpush1.msra.mxu0 %v9656
    %10443 = vmatprep.subr.mxu0 %v9661
    %10444 = vmatpush1.msra.mxu0 %v9660
    %10445 = vmatprep.subr.mxu0 %v9665
    %10446 = vmatpush1.msra.mxu0 %v9664
    %10447 = vmatprep.subr.mxu0 %v9669
    %10448 = vmatpush1.msra.mxu0 %v9668
    %10449 = vmatprep.subr.mxu0 %v9673
    %10450 = vmatpush1.msra.mxu0 %v9672
    %10451 = vmatprep.subr.mxu0 %v9677
    %10452 = vmatpush1.msra.mxu0 %v9676
    %10453 = vmatprep.subr.mxu0 %v9681
    %10454 = vmatpush1.msra.mxu0 %v9680
    %10455 = vmatprep.subr.mxu0 %v9685
    %10456 = vmatpush1.msra.mxu0 %v9684
    %10457 = vmatprep.subr.mxu0 %v9689
    %10458 = vmatpush1.msra.mxu0 %v9688
    %10459 = vmatprep.subr.mxu0 %v9693
    %10460 = vmatpush1.msra.mxu0 %v9692
    %10461 = vmatprep.subr.mxu0 %v9697
    %10462 = vmatpush1.msra.mxu0 %v9696
    %10463 = vmatprep.subr.mxu0 %v9701
    %10464 = vmatpush1.msra.mxu0 %v9700
    %10465 = vmatprep.subr.mxu0 %v9705
    %10466 = vmatpush1.msra.mxu0 %v9704
    %10467 = vmatprep.subr.mxu0 %v9709
    %10468 = vmatpush1.msra.mxu0 %v9708
    %10469 = vmatprep.subr.mxu0 %v9713
    %10470 = vmatpush1.msra.mxu0 %v9712
    %10471 = vmatprep.subr.mxu0 %v9717
    %10472 = vmatpush1.msra.mxu0 %v9716
    %10473 = vmatprep.subr.mxu0 %v9721
    %10474 = vmatpush1.msra.mxu0 %v9720
    %10475 = vmatprep.subr.mxu0 %v9725
    %10476 = vmatpush1.msra.mxu0 %v9724
    %10477 = vmatprep.subr.mxu0 %v9729
    %10478 = vmatpush1.msra.mxu0 %v9728
    %10479 = vmatprep.subr.mxu0 %v9733
    %10480 = vmatpush1.msra.mxu0 %v9732
    %10481 = vmatprep.subr.mxu0 %v9737
    %10482 = vmatpush1.msra.mxu0 %v9736
    %10483 = vmatprep.subr.mxu0 %v9741
    %10484 = vmatpush1.msra.mxu0 %v9740
    %10485 = vmatprep.subr.mxu0 %v9745
    %10486 = vmatpush1.msra.mxu0 %v9744
    %10487 = vmatprep.mubr.f32.mxu0 %v10042
    %10488 = vmatmul.mubr.f32.gmra.mrb[0].mxu0 %v10040
    %v10489 = vpop.f32.mrb[0].mxu0
    %v10490 = vadd.f32 %v10419, %v10489
    %v10491 = vpop.f32.mrb[0].mxu0
    %v10492 = vadd.f32 %v10421, %v10491
    %10493 = vdwg.mxu0
    %10494 = vmatprep.subr.mxu0 %v9749
    %10495 = vmatpush1.msra.mxu0 %v9748
    %10496 = vmatprep.subr.mxu0 %v9753
    %10497 = vmatpush1.msra.mxu0 %v9752
    %10498 = vmatprep.subr.mxu0 %v9757
    %10499 = vmatpush1.msra.mxu0 %v9756
    %10500 = vmatprep.subr.mxu0 %v9761
    %10501 = vmatpush1.msra.mxu0 %v9760
    %10502 = vmatprep.subr.mxu0 %v9765
    %10503 = vmatpush1.msra.mxu0 %v9764
    %10504 = vmatprep.subr.mxu0 %v9769
    %10505 = vmatpush1.msra.mxu0 %v9768
    %10506 = vmatprep.subr.mxu0 %v9773
    %10507 = vmatpush1.msra.mxu0 %v9772
    %10508 = vmatprep.subr.mxu0 %v9777
    %10509 = vmatpush1.msra.mxu0 %v9776
    %10510 = vmatprep.subr.mxu0 %v9781
    %10511 = vmatpush1.msra.mxu0 %v9780
    %10512 = vmatprep.subr.mxu0 %v9785
    %10513 = vmatpush1.msra.mxu0 %v9784
    %10514 = vmatprep.subr.mxu0 %v9789
    %10515 = vmatpush1.msra.mxu0 %v9788
    %10516 = vmatprep.subr.mxu0 %v9793
    %10517 = vmatpush1.msra.mxu0 %v9792
    %10518 = vmatprep.subr.mxu0 %v9797
    %10519 = vmatpush1.msra.mxu0 %v9796
    %10520 = vmatprep.subr.mxu0 %v9801
    %10521 = vmatpush1.msra.mxu0 %v9800
    %10522 = vmatprep.subr.mxu0 %v9805
    %10523 = vmatpush1.msra.mxu0 %v9804
    %10524 = vmatprep.subr.mxu0 %v9809
    %10525 = vmatpush1.msra.mxu0 %v9808
    %10526 = vmatprep.subr.mxu0 %v9813
    %10527 = vmatpush1.msra.mxu0 %v9812
    %10528 = vmatprep.subr.mxu0 %v9817
    %10529 = vmatpush1.msra.mxu0 %v9816
    %10530 = vmatprep.subr.mxu0 %v9821
    %10531 = vmatpush1.msra.mxu0 %v9820
    %10532 = vmatprep.subr.mxu0 %v9825
    %10533 = vmatpush1.msra.mxu0 %v9824
    %10534 = vmatprep.subr.mxu0 %v9829
    %10535 = vmatpush1.msra.mxu0 %v9828
    %10536 = vmatprep.subr.mxu0 %v9833
    %10537 = vmatpush1.msra.mxu0 %v9832
    %10538 = vmatprep.subr.mxu0 %v9837
    %10539 = vmatpush1.msra.mxu0 %v9836
    %10540 = vmatprep.subr.mxu0 %v9841
    %10541 = vmatpush1.msra.mxu0 %v9840
    %10542 = vmatprep.subr.mxu0 %v9845
    %10543 = vmatpush1.msra.mxu0 %v9844
    %10544 = vmatprep.subr.mxu0 %v9849
    %10545 = vmatpush1.msra.mxu0 %v9848
    %10546 = vmatprep.subr.mxu0 %v9853
    %10547 = vmatpush1.msra.mxu0 %v9852
    %10548 = vmatprep.subr.mxu0 %v9857
    %10549 = vmatpush1.msra.mxu0 %v9856
    %10550 = vmatprep.subr.mxu0 %v9861
    %10551 = vmatpush1.msra.mxu0 %v9860
    %10552 = vmatprep.subr.mxu0 %v9865
    %10553 = vmatpush1.msra.mxu0 %v9864
    %10554 = vmatprep.subr.mxu0 %v9869
    %10555 = vmatpush1.msra.mxu0 %v9868
    %10556 = vmatprep.subr.mxu0 %v9873
    %10557 = vmatpush1.msra.mxu0 %v9872
    %10558 = vmatprep.mubr.f32.mxu0 %v10058
    %10559 = vmatmul.mubr.f32.gmra.mrb[0].mxu0 %v10050
    %v10560 = vpop.f32.mrb[0].mxu0
    %v10561 = vadd.f32 %v10490, %v10560
    %v10562 = vpop.f32.mrb[0].mxu0
    %v10563 = vadd.f32 %v10492, %v10562
    %10564 = vdwg.mxu0
    %10565 = vmatprep.subr.mxu0 %v9877
    %10566 = vmatpush1.msra.mxu0 %v9876
    %10567 = vmatprep.subr.mxu0 %v9881
    %10568 = vmatpush1.msra.mxu0 %v9880
    %10569 = vmatprep.subr.mxu0 %v9885
    %10570 = vmatpush1.msra.mxu0 %v9884
    %10571 = vmatprep.subr.mxu0 %v9889
    %10572 = vmatpush1.msra.mxu0 %v9888
    %10573 = vmatprep.subr.mxu0 %v9893
    %10574 = vmatpush1.msra.mxu0 %v9892
    %10575 = vmatprep.subr.mxu0 %v9897
    %10576 = vmatpush1.msra.mxu0 %v9896
    %10577 = vmatprep.subr.mxu0 %v9901
    %10578 = vmatpush1.msra.mxu0 %v9900
    %10579 = vmatprep.subr.mxu0 %v9905
    %10580 = vmatpush1.msra.mxu0 %v9904
    %10581 = vmatprep.subr.mxu0 %v9909
    %10582 = vmatpush1.msra.mxu0 %v9908
    %10583 = vmatprep.subr.mxu0 %v9913
    %10584 = vmatpush1.msra.mxu0 %v9912
    %10585 = vmatprep.subr.mxu0 %v9917
    %10586 = vmatpush1.msra.mxu0 %v9916
    %10587 = vmatprep.subr.mxu0 %v9921
    %10588 = vmatpush1.msra.mxu0 %v9920
    %10589 = vmatprep.subr.mxu0 %v9925
    %10590 = vmatpush1.msra.mxu0 %v9924
    %10591 = vmatprep.subr.mxu0 %v9929
    %10592 = vmatpush1.msra.mxu0 %v9928
    %10593 = vmatprep.subr.mxu0 %v9933
    %10594 = vmatpush1.msra.mxu0 %v9932
    %10595 = vmatprep.subr.mxu0 %v9937
    %10596 = vmatpush1.msra.mxu0 %v9936
    %10597 = vmatprep.subr.mxu0 %v9941
    %10598 = vmatpush1.msra.mxu0 %v9940
    %10599 = vmatprep.subr.mxu0 %v9945
    %10600 = vmatpush1.msra.mxu0 %v9944
    %10601 = vmatprep.subr.mxu0 %v9949
    %10602 = vmatpush1.msra.mxu0 %v9948
    %10603 = vmatprep.subr.mxu0 %v9953
    %10604 = vmatpush1.msra.mxu0 %v9952
    %10605 = vmatprep.subr.mxu0 %v9957
    %10606 = vmatpush1.msra.mxu0 %v9956
    %10607 = vmatprep.subr.mxu0 %v9961
    %10608 = vmatpush1.msra.mxu0 %v9960
    %10609 = vmatprep.subr.mxu0 %v9965
    %10610 = vmatpush1.msra.mxu0 %v9964
    %10611 = vmatprep.subr.mxu0 %v9969
    %10612 = vmatpush1.msra.mxu0 %v9968
    %10613 = vmatprep.subr.mxu0 %v9973
    %10614 = vmatpush1.msra.mxu0 %v9972
    %10615 = vmatprep.subr.mxu0 %v9977
    %10616 = vmatpush1.msra.mxu0 %v9976
    %10617 = vmatprep.subr.mxu0 %v9981
    %10618 = vmatpush1.msra.mxu0 %v9980
    %10619 = vmatprep.subr.mxu0 %v9985
    %10620 = vmatpush1.msra.mxu0 %v9984
    %10621 = vmatprep.subr.mxu0 %v9989
    %10622 = vmatpush1.msra.mxu0 %v9988
    %10623 = vmatprep.subr.mxu0 %v9993
    %10624 = vmatpush1.msra.mxu0 %v9992
    %10625 = vmatprep.subr.mxu0 %v9997
    %10626 = vmatpush1.msra.mxu0 %v9996
    %10627 = vmatprep.subr.mxu0 %v10001
    %10628 = vmatpush1.msra.mxu0 %v10000
    %10629 = vmatprep.mubr.f32.mxu0 %v10059
    %10630 = vmatmul.mubr.f32.gmra.mrb[0].mxu0 %v10057
    %v10631 = vpop.f32.mrb[0].mxu0
    %v10632 = vadd.f32 %v10561, %v10631
    %v10633 = vpop.f32.mrb[0].mxu0
    %v10634 = vadd.f32 %v10563, %v10633
    %10635 = vdwg.mxu0
    %v10636 = vmax.f32 %v10348, 0.0
    %v10637 = vmax.f32 %v10350, 0.0
    %v10638 = vmax.f32 %v10632, 0.0
    %v10639 = vmax.f32 %v10634, 0.0
    %v10640 = vld [vmem:[%s9] sm:$0xff]
    %v10641 = vld [vmem:[%s9 + $0x8] sm:$0xff]
    %v10642 = vld [vmem:[%s9 + $0x10] sm:$0xff]
    %v10643 = vld [vmem:[%s9 + $0x18] sm:$0xff]
    %v10644 = vld [vmem:[%s9 + $0x20] sm:$0xff]
    %v10645 = vld [vmem:[%s9 + $0x28] sm:$0xff]
    %v10646 = vld [vmem:[%s9 + $0x30] sm:$0xff]
    %v10647 = vld [vmem:[%s9 + $0x38] sm:$0xff]
    %v10648 = vld [vmem:[%s9 + $0x40] sm:$0xff]
    %v10649 = vld [vmem:[%s9 + $0x48] sm:$0xff]
    %v10650 = vld [vmem:[%s9 + $0x50] sm:$0xff]
    %v10651 = vld [vmem:[%s9 + $0x58] sm:$0xff]
    %v10652 = vld [vmem:[%s9 + $0x60] sm:$0xff]
    %v10653 = vld [vmem:[%s9 + $0x68] sm:$0xff]
    %v10654 = vld [vmem:[%s9 + $0x70] sm:$0xff]
    %v10655 = vld [vmem:[%s9 + $0x78] sm:$0xff]
    %v10656 = vld [vmem:[%s9 + $0x80] sm:$0xff]
    %v10657 = vld [vmem:[%s9 + $0x88] sm:$0xff]
    %v10658 = vld [vmem:[%s9 + $0x90] sm:$0xff]
    %v10659 = vld [vmem:[%s9 + $0x98] sm:$0xff]
    %v10660 = vld [vmem:[%s9 + $0xa0] sm:$0xff]
    %v10661 = vld [vmem:[%s9 + $0xa8] sm:$0xff]
    %v10662 = vld [vmem:[%s9 + $0xb0] sm:$0xff]
    %v10663 = vld [vmem:[%s9 + $0xb8] sm:$0xff]
    %v10664 = vld [vmem:[%s9 + $0xc0] sm:$0xff]
    %v10665 = vld [vmem:[%s9 + $0xc8] sm:$0xff]
    %v10666 = vld [vmem:[%s9 + $0xd0] sm:$0xff]
    %v10667 = vld [vmem:[%s9 + $0xd8] sm:$0xff]
    %v10668 = vld [vmem:[%s9 + $0xe0] sm:$0xff]
    %v10669 = vld [vmem:[%s9 + $0xe8] sm:$0xff]
    %v10670 = vld [vmem:[%s9 + $0xf0] sm:$0xff]
    %v10671 = vld [vmem:[%s9 + $0xf8] sm:$0xff]
    %v10672 = vld [vmem:[%s9 + $0x100] sm:$0xff]
    %v10673 = vld [vmem:[%s9 + $0x108] sm:$0xff]
    %v10674 = vld [vmem:[%s9 + $0x110] sm:$0xff]
    %v10675 = vld [vmem:[%s9 + $0x118] sm:$0xff]
    %v10676 = vld [vmem:[%s9 + $0x120] sm:$0xff]
    %v10677 = vld [vmem:[%s9 + $0x128] sm:$0xff]
    %v10678 = vld [vmem:[%s9 + $0x130] sm:$0xff]
    %v10679 = vld [vmem:[%s9 + $0x138] sm:$0xff]
    %v10680 = vld [vmem:[%s9 + $0x140] sm:$0xff]
    %v10681 = vld [vmem:[%s9 + $0x148] sm:$0xff]
    %v10682 = vld [vmem:[%s9 + $0x150] sm:$0xff]
    %v10683 = vld [vmem:[%s9 + $0x158] sm:$0xff]
    %v10684 = vld [vmem:[%s9 + $0x160] sm:$0xff]
    %v10685 = vld [vmem:[%s9 + $0x168] sm:$0xff]
    %v10686 = vld [vmem:[%s9 + $0x170] sm:$0xff]
    %v10687 = vld [vmem:[%s9 + $0x178] sm:$0xff]
    %v10688 = vld [vmem:[%s9 + $0x180] sm:$0xff]
    %v10689 = vld [vmem:[%s9 + $0x188] sm:$0xff]
    %v10690 = vld [vmem:[%s9 + $0x190] sm:$0xff]
    %v10691 = vld [vmem:[%s9 + $0x198] sm:$0xff]
    %v10692 = vld [vmem:[%s9 + $0x1a0] sm:$0xff]
    %v10693 = vld [vmem:[%s9 + $0x1a8] sm:$0xff]
    %v10694 = vld [vmem:[%s9 + $0x1b0] sm:$0xff]
    %v10695 = vld [vmem:[%s9 + $0x1b8] sm:$0xff]
    %v10696 = vld [vmem:[%s9 + $0x1c0] sm:$0xff]
    %v10697 = vld [vmem:[%s9 + $0x1c8] sm:$0xff]
    %v10698 = vld [vmem:[%s9 + $0x1d0] sm:$0xff]
    %v10699 = vld [vmem:[%s9 + $0x1d8] sm:$0xff]
    %v10700 = vld [vmem:[%s9 + $0x1e0] sm:$0xff]
    %v10701 = vld [vmem:[%s9 + $0x1e8] sm:$0xff]
    %v10702 = vld [vmem:[%s9 + $0x1f0] sm:$0xf]
    %v10703 = vld [vmem:[%s10] sm:$0x1]
    %v10705 = vlaneseq
    %v10706 = vshrl.u32 %v10705, 7
    %v10707 = vsub.s32 0, %v10706
    %v10708 = vrot.slane %v10703, %v10707
    %vm10710 = vcmask 949248
    %v10712 = vsel %vm10710, %v10639, 0
    %vm10714 = vcmask 1043456
    %v10716 = vsel %vm10714, %v10702, 0
    %10718 = vmatprep.subr.mxu0 0.0
    %10719 = vmatpush1.msra.mxu0 %v10640
    %10720 = vmatprep.subr.mxu0 0.0
    %10721 = vmatpush1.msra.mxu0 %v10641
    %10722 = vmatprep.subr.mxu0 0.0
    %10723 = vmatpush1.msra.mxu0 %v10642
    %10724 = vmatprep.subr.mxu0 0.0
    %10725 = vmatpush1.msra.mxu0 %v10643
    %10726 = vmatprep.subr.mxu0 0.0
    %10727 = vmatpush1.msra.mxu0 %v10644
    %10728 = vmatprep.subr.mxu0 0.0
    %10729 = vmatpush1.msra.mxu0 %v10645
    %10730 = vmatprep.subr.mxu0 0.0
    %10731 = vmatpush1.msra.mxu0 %v10646
    %10732 = vmatprep.subr.mxu0 0.0
    %10733 = vmatpush1.msra.mxu0 %v10647
    %10734 = vmatprep.subr.mxu0 0.0
    %10735 = vmatpush1.msra.mxu0 %v10648
    %10736 = vmatprep.subr.mxu0 0.0
    %10737 = vmatpush1.msra.mxu0 %v10649
    %10738 = vmatprep.subr.mxu0 0.0
    %10739 = vmatpush1.msra.mxu0 %v10650
    %10740 = vmatprep.subr.mxu0 0.0
    %10741 = vmatpush1.msra.mxu0 %v10651
    %10742 = vmatprep.subr.mxu0 0.0
    %10743 = vmatpush1.msra.mxu0 %v10652
    %10744 = vmatprep.subr.mxu0 0.0
    %10745 = vmatpush1.msra.mxu0 %v10653
    %10746 = vmatprep.subr.mxu0 0.0
    %10747 = vmatpush1.msra.mxu0 %v10654
    %10748 = vmatprep.subr.mxu0 0.0
    %10749 = vmatpush1.msra.mxu0 %v10655
    %10750 = vmatprep.subr.mxu0 0.0
    %10751 = vmatpush1.msra.mxu0 %v10656
    %10752 = vmatprep.subr.mxu0 0.0
    %10753 = vmatpush1.msra.mxu0 %v10657
    %10754 = vmatprep.subr.mxu0 0.0
    %10755 = vmatpush1.msra.mxu0 %v10658
    %10756 = vmatprep.subr.mxu0 0.0
    %10757 = vmatpush1.msra.mxu0 %v10659
    %10758 = vmatprep.subr.mxu0 0.0
    %10759 = vmatpush1.msra.mxu0 %v10660
    %10760 = vmatprep.subr.mxu0 0.0
    %10761 = vmatpush1.msra.mxu0 %v10661
    %10762 = vmatprep.subr.mxu0 0.0
    %10763 = vmatpush1.msra.mxu0 %v10662
    %10764 = vmatprep.subr.mxu0 0.0
    %10765 = vmatpush1.msra.mxu0 %v10663
    %10766 = vmatprep.subr.mxu0 0.0
    %10767 = vmatpush1.msra.mxu0 %v10664
    %10768 = vmatprep.subr.mxu0 0.0
    %10769 = vmatpush1.msra.mxu0 %v10665
    %10770 = vmatprep.subr.mxu0 0.0
    %10771 = vmatpush1.msra.mxu0 %v10666
    %10772 = vmatprep.subr.mxu0 0.0
    %10773 = vmatpush1.msra.mxu0 %v10667
    %10774 = vmatprep.subr.mxu0 0.0
    %10775 = vmatpush1.msra.mxu0 %v10668
    %10776 = vmatprep.subr.mxu0 0.0
    %10777 = vmatpush1.msra.mxu0 %v10669
    %10778 = vmatprep.subr.mxu0 0.0
    %10779 = vmatpush1.msra.mxu0 %v10670
    %10780 = vmatprep.subr.mxu0 0.0
    %10781 = vmatpush1.msra.mxu0 %v10671
    %10782 = vmatprep.mubr.f32.mxu0 %v10637
    %10783 = vmatmul.mubr.f32.gmra.mrb[0].mxu0 %v10636
    %v10784 = vpop.f32.mrb[0].mxu0
    %v10785 = vadd.f32 %v10708, %v10784
    %v10786 = vpop.f32.mrb[0].mxu0
    %10787 = vdwg.mxu0
    %10788 = vmatprep.subr.mxu0 0.0
    %10789 = vmatpush1.msra.mxu0 %v10672
    %10790 = vmatprep.subr.mxu0 0.0
    %10791 = vmatpush1.msra.mxu0 %v10673
    %10792 = vmatprep.subr.mxu0 0.0
    %10793 = vmatpush1.msra.mxu0 %v10674
    %10794 = vmatprep.subr.mxu0 0.0
    %10795 = vmatpush1.msra.mxu0 %v10675
    %10796 = vmatprep.subr.mxu0 0.0
    %10797 = vmatpush1.msra.mxu0 %v10676
    %10798 = vmatprep.subr.mxu0 0.0
    %10799 = vmatpush1.msra.mxu0 %v10677
    %10800 = vmatprep.subr.mxu0 0.0
    %10801 = vmatpush1.msra.mxu0 %v10678
    %10802 = vmatprep.subr.mxu0 0.0
    %10803 = vmatpush1.msra.mxu0 %v10679
    %10804 = vmatprep.subr.mxu0 0.0
    %10805 = vmatpush1.msra.mxu0 %v10680
    %10806 = vmatprep.subr.mxu0 0.0
    %10807 = vmatpush1.msra.mxu0 %v10681
    %10808 = vmatprep.subr.mxu0 0.0
    %10809 = vmatpush1.msra.mxu0 %v10682
    %10810 = vmatprep.subr.mxu0 0.0
    %10811 = vmatpush1.msra.mxu0 %v10683
    %10812 = vmatprep.subr.mxu0 0.0
    %10813 = vmatpush1.msra.mxu0 %v10684
    %10814 = vmatprep.subr.mxu0 0.0
    %10815 = vmatpush1.msra.mxu0 %v10685
    %10816 = vmatprep.subr.mxu0 0.0
    %10817 = vmatpush1.msra.mxu0 %v10686
    %10818 = vmatprep.subr.mxu0 0.0
    %10819 = vmatpush1.msra.mxu0 %v10687
    %10820 = vmatprep.subr.mxu0 0.0
    %10821 = vmatpush1.msra.mxu0 %v10688
    %10822 = vmatprep.subr.mxu0 0.0
    %10823 = vmatpush1.msra.mxu0 %v10689
    %10824 = vmatprep.subr.mxu0 0.0
    %10825 = vmatpush1.msra.mxu0 %v10690
    %10826 = vmatprep.subr.mxu0 0.0
    %10827 = vmatpush1.msra.mxu0 %v10691
    %10828 = vmatprep.subr.mxu0 0.0
    %10829 = vmatpush1.msra.mxu0 %v10692
    %10830 = vmatprep.subr.mxu0 0.0
    %10831 = vmatpush1.msra.mxu0 %v10693
    %10832 = vmatprep.subr.mxu0 0.0
    %10833 = vmatpush1.msra.mxu0 %v10694
    %10834 = vmatprep.subr.mxu0 0.0
    %10835 = vmatpush1.msra.mxu0 %v10695
    %10836 = vmatprep.subr.mxu0 0.0
    %10837 = vmatpush1.msra.mxu0 %v10696
    %10838 = vmatprep.subr.mxu0 0.0
    %10839 = vmatpush1.msra.mxu0 %v10697
    %10840 = vmatprep.subr.mxu0 0.0
    %10841 = vmatpush1.msra.mxu0 %v10698
    %10842 = vmatprep.subr.mxu0 0.0
    %10843 = vmatpush1.msra.mxu0 %v10699
    %10844 = vmatprep.subr.mxu0 0.0
    %10845 = vmatpush1.msra.mxu0 %v10700
    %10846 = vmatprep.subr.mxu0 0.0
    %10847 = vmatpush1.msra.mxu0 %v10701
    %10848 = vmatprep.subr.mxu0 0.0
    %10849 = vmatpush1.msra.mxu0 %v10716
    %10850 = vmatprep.subr.mxu0 0.0
    %10851 = vmatpush1.msra.mxu0 0.0
    %10852 = vmatprep.mubr.f32.mxu0 %v10712
    %10853 = vmatmul.mubr.f32.gmra.mrb[0].mxu0 %v10638
    %v10854 = vpop.f32.mrb[0].mxu0
    %v10855 = vadd.f32 %v10785, %v10854
    %v10856 = vpop.f32.mrb[0].mxu0
    %10857 = vdwg.mxu0
    %vm10858 = vcmask 74752
    %10859 = vst.msk [vmem:[#allocation10] sm:$0x3] %vm10858, %v10855
    // Predicated region
    $region46: #{mycnn_forward.1} parent=1 // pred_check
      _
    $region47: #{mycnn_forward.1} parent=1 // pred_check_branch
      %10861 = sbr.rel (0) target = $region49
    $region48: #{mycnn_forward.1} parent=1 // pred_region
      %s10863 = ssub.s32 32, 32
      %10864 = vsyncadd [#allocation11], %s10863
      %s10866 = sshll.u32 [#allocation10], 4
      %s10867 = int_to_ptr.vmem [resolvable:$true] %s10866
      %10869 = dma.vmem_to_hbm [thread:$0]  %s10867, 32, %s11, [#allocation11]
    $region49: #{mycnn_forward.1} parent=1 // pred_fallthru
      _
    // Predicated region
    $region50: #{mycnn_forward.1} parent=1 // pred_check
      _
    $region51: #{mycnn_forward.1} parent=1 // pred_check_branch
      %10871 = sbr.rel (0) target = $region53
    $region52: #{mycnn_forward.1} parent=1 // pred_region
      %10872 = dma.done [#allocation11], 32
    $region53: #{mycnn_forward.1} parent=1 // pred_fallthru
      _
    %10873 = vsyncpa [#allocation11], 1

</llo_original>
